<compile_context>
chip_gen: v7x
topology: tpu7x:2x2x1
jax: 0.10.0
libtpu: 0.0.40
codegen_flags: <defaults>
</compile_context>

<pallas_src>
import functools
import math

import jax
import jax.numpy as jnp
from jax.experimental import pallas as pl
from jax.experimental.pallas import tpu as pltpu


# ----------------------------------------------------------------------------- kernel
def _decoder_stack_kernel(
    x_ref, ctx_ref,
    wq_s_ref, bq_s_ref, wk_s_ref, bk_s_ref, wv_s_ref, bv_s_ref,
    wo_s_ref, bo_s_ref, g1_ref, bt1_ref,
    wq_c_ref, bq_c_ref, wk_c_ref, bk_c_ref, wv_c_ref, bv_c_ref,
    wo_c_ref, bo_c_ref, g2_ref, bt2_ref,
    w1_ref, b1_ref, w2_ref, b2_ref, g3_ref, bt3_ref,
    gf_ref, btf_ref,
    o_ref, *, n_layers, n_heads, dh, eps, final_norm):
    """Whole decoder stack for ONE batch element, fully VMEM-resident.

    x_ref:(L,D) query source, ctx_ref:(S,D) key/value source.
    Per-layer weights are stacked along a leading layer axis:
      wq/wk/wv/wo:(NL,D,D) or (NL,F,D)/(NL,D,F), biases / LN params:(NL,1,D|F).
    Final LN params gf/btf:(1,D).  Output:(L,D).
    """
    f32 = jnp.float32

    def layer_norm(y, g, b):
        mu = jnp.mean(y, axis=-1, keepdims=True)
        var = jnp.mean(jnp.square(y - mu), axis=-1, keepdims=True)
        return (y - mu) * jax.lax.rsqrt(var + eps) * g + b

    def mha(x_in, kv_in, wq, bq, wk, bk, wv, bv, wo, bo):
        # Full-width projections (MXU friendly).  1/sqrt(dh) is pre-folded into wq/bq.
        cd = wq.dtype
        q = jnp.dot(x_in.astype(cd), wq, preferred_element_type=f32) + bq     # (L, D)
        k = jnp.dot(kv_in.astype(cd), wk, preferred_element_type=f32) + bk    # (S, D)
        v = jnp.dot(kv_in.astype(cd), wv, preferred_element_type=f32) + bv    # (S, D)
        acc = jnp.zeros(x_in.shape, dtype=f32)
        for h in range(n_heads):                       # static unroll over heads
            lo, hi = h * dh, (h + 1) * dh
            qh, kh, vh = q[:, lo:hi], k[:, lo:hi], v[:, lo:hi]
            # scores: contract the last dims directly (no explicit K transpose)
            s = jax.lax.dot_general(qh, kh, (((1,), (1,)), ((), ())),
                                    preferred_element_type=f32)               # (L, S)
            s = s - jnp.max(s, axis=-1, keepdims=True)
            p = jnp.exp(s)
            # NOTE: EUP approx reciprocal (free slot); swap for exact division if
            # bit-tight parity with torch.softmax is required.
            p = p * pl.reciprocal(jnp.sum(p, axis=-1, keepdims=True), approx=True)
            oh = jnp.dot(p.astype(cd), vh.astype(cd),
                         preferred_element_type=f32)                          # (L, dh)
            # concat_h(o_h) @ Wo  ==  sum_h o_h @ Wo[h*dh:(h+1)*dh, :]
            acc = acc + jnp.dot(oh.astype(cd), wo[lo:hi, :],
                                preferred_element_type=f32)                   # (L, D)
        return x_in + acc + bo

    x = x_ref[...].astype(f32)        # (L, D)  -- resident across ALL layers
    ctx = ctx_ref[...].astype(f32)    # (S, D)

    for l in range(n_layers):         # static unroll over layers
        # --- self attention + norm1
        y = mha(x, x,
                wq_s_ref[l], bq_s_ref[l], wk_s_ref[l], bk_s_ref[l],
                wv_s_ref[l], bv_s_ref[l], wo_s_ref[l], bo_s_ref[l])
        x = layer_norm(y, g1_ref[l], bt1_ref[l])
        # --- cross attention + norm2
        y = mha(x, ctx,
                wq_c_ref[l], bq_c_ref[l], wk_c_ref[l], bk_c_ref[l],
                wv_c_ref[l], bv_c_ref[l], wo_c_ref[l], bo_c_ref[l])
        x = layer_norm(y, g2_ref[l], bt2_ref[l])
        # --- pointwise FFN (kernel_size=1 convs) + norm3
        w1 = w1_ref[l]
        w2 = w2_ref[l]
        h1 = jnp.maximum(jnp.dot(x.astype(w1.dtype), w1,
                                 preferred_element_type=f32) + b1_ref[l], 0.0)
        y = x + jnp.dot(h1.astype(w2.dtype), w2,
                        preferred_element_type=f32) + b2_ref[l]
        x = layer_norm(y, g3_ref[l], bt3_ref[l])

    if final_norm:                    # final LayerNorm fused as an epilogue
        x = layer_norm(x, gf_ref[...], btf_ref[...])

    o_ref[...] = x.astype(o_ref.dtype)


# ----------------------------------------------------------------------------- param prep
def prepare_params(params, n_heads, compute_dtype=jnp.float32):
    """One-time layout prep (done OUTSIDE the forward call):
      * stack per-layer weights along a leading layer axis,
      * fold the 1/sqrt(dh) attention scale into Wq / bq,
      * reshape biases / LayerNorm params to (1, D) rows,
      * optionally cast matmul weights to `compute_dtype` (e.g. jnp.bfloat16 on
        v6e/v7x); accumulation & epilogues stay f32 inside the kernel.
    Returns a dict containing arrays only (jit-friendly pytree)."""
    layers = params["layers"]
    d_model = layers[0]["ff_w1"].shape[0]
    d_ff = layers[0]["ff_w1"].shape[1]
    dh = d_model // n_heads
    scale = 1.0 / math.sqrt(dh)

    def stack(fn):
        return jnp.stack([fn(lp) for lp in layers])

    def attn(which, suf):
        return {
            "wq" + suf: stack(lambda p: (p[which]["wq"] * scale).astype(compute_dtype)),
            "bq" + suf: stack(lambda p: (p[which]["bq"] * scale).reshape(1, d_model).astype(jnp.float32)),
            "wk" + suf: stack(lambda p: p[which]["wk"].astype(compute_dtype)),
            "bk" + suf: stack(lambda p: p[which]["bk"].reshape(1, d_model).astype(jnp.float32)),
            "wv" + suf: stack(lambda p: p[which]["wv"].astype(compute_dtype)),
            "bv" + suf: stack(lambda p: p[which]["bv"].reshape(1, d_model).astype(jnp.float32)),
            "wo" + suf: stack(lambda p: p[which]["wo"].astype(compute_dtype)),
            "bo" + suf: stack(lambda p: p[which]["bo"].reshape(1, d_model).astype(jnp.float32)),
        }

    def norm(which):
        return (stack(lambda p: p[which]["gamma"].reshape(1, d_model).astype(jnp.float32)),
                stack(lambda p: p[which]["beta"].reshape(1, d_model).astype(jnp.float32)))

    prep = {}
    prep.update(attn("self_attn", "_s"))
    prep.update(attn("cross_attn", "_c"))
    prep["g1"], prep["bt1"] = norm("norm1")
    prep["g2"], prep["bt2"] = norm("norm2")
    prep["g3"], prep["bt3"] = norm("norm3")
    prep["w1"] = stack(lambda p: p["ff_w1"].astype(compute_dtype))
    prep["b1"] = stack(lambda p: p["ff_b1"].reshape(1, d_ff).astype(jnp.float32))
    prep["w2"] = stack(lambda p: p["ff_w2"].astype(compute_dtype))
    prep["b2"] = stack(lambda p: p["ff_b2"].reshape(1, d_model).astype(jnp.float32))
    if params.get("norm") is not None:
        prep["gf"] = params["norm"]["gamma"].reshape(1, d_model).astype(jnp.float32)
        prep["btf"] = params["norm"]["beta"].reshape(1, d_model).astype(jnp.float32)
    else:
        prep["gf"] = jnp.ones((1, d_model), jnp.float32)
        prep["btf"] = jnp.zeros((1, d_model), jnp.float32)
    return prep


# ----------------------------------------------------------------------------- wrapper
def miss_decoder_forward(x, cross, prep, x_mask=None, cross_mask=None,
                         x_p=None, cross_p=None, *, n_heads, final_norm=True,
                         eps=1e-5):
    """Equivalent of missDecoder.forward with split=False, norm=LayerNorm (eval)."""
    if x_mask is not None or cross_mask is not None:
        # TODO(synk): attention masks are not wired into the fused kernel.
        raise NotImplementedError("attention masks are not supported")

    B, L, D = x.shape
    S = cross.shape[1]
    NL = prep["wq_s"].shape[0]
    F = prep["w1"].shape[-1]
    dh = D // n_heads

    kernel = functools.partial(_decoder_stack_kernel, n_layers=NL, n_heads=n_heads,
                               dh=dh, eps=eps, final_norm=final_norm)

    weight_order = ["wq_s", "bq_s", "wk_s", "bk_s", "wv_s", "bv_s", "wo_s", "bo_s",
                    "g1", "bt1",
                    "wq_c", "bq_c", "wk_c", "bk_c", "wv_c", "bv_c", "wo_c", "bo_c",
                    "g2", "bt2",
                    "w1", "b1", "w2", "b2", "g3", "bt3",
                    "gf", "btf"]
    weight_args = [prep[k] for k in weight_order]

    def const_map(ndim):
        return lambda b: (0,) * ndim

    in_specs = [
        pl.BlockSpec((None, L, D), lambda b: (b, 0, 0)),   # x     (batch squeezed)
        pl.BlockSpec((None, S, D), lambda b: (b, 0, 0)),   # cross (batch squeezed)
    ]
    # Constant-index, full-array weight blocks (loaded once, reused every grid step).
    # For much larger grids on v7x, add pipeline_mode=pl.Buffered(1) here to halve
    # the weight VMEM footprint.
    in_specs += [pl.BlockSpec(w.shape, const_map(w.ndim)) for w in weight_args]

    # Advisory cost hint so XLA schedules surrounding ops around the fused kernel.
    flops_layer = (4 * 2 * L * D * D + 4 * L * L * D                      # self-attn
                   + 2 * 2 * L * D * D + 2 * 2 * S * D * D + 4 * L * S * D  # cross-attn
                   + 4 * L * D * F)                                        # FFN
    cost = pl.CostEstimate(
        flops=int(B * NL * flops_layer),
        transcendentals=int(B * NL * n_heads * (L * L + L * S)),
        bytes_accessed=int(sum(a.size * a.dtype.itemsize
                               for a in (x, cross, x, *weight_args))))

    return pl.pallas_call(
        kernel,
        out_shape=jax.ShapeDtypeStruct((B, L, D), x.dtype),
        grid=(B,),
        in_specs=in_specs,
        out_specs=pl.BlockSpec((None, L, D), lambda b: (b, 0, 0)),
        compiler_params=pltpu.CompilerParams(
            dimension_semantics=("parallel",),          # B>=2 keeps both v7x TCs busy
            vmem_limit_bytes=48 * 1024 * 1024),         # safe on v5e/v6e/v7x
        cost_estimate=cost,
    )(x, cross, *weight_args)


# ----------------------------------------------------------------------------- params
def init_params(key, num_layers, d_model, d_ff, dtype=jnp.float32):
    def dense(key, fan_in, fan_out):
        w = 0.02 * jax.random.normal(key, (fan_in, fan_out), dtype=dtype)
        b = jnp.zeros((fan_out,), dtype=dtype)
        return w, b

    def attn_params(key):
        ks = jax.random.split(key, 4)
        wq, bq = dense(ks[0], d_model, d_model)
        wk, bk = dense(ks[1], d_model, d_model)
        wv, bv = dense(ks[2], d_model, d_model)
        wo, bo = dense(ks[3], d_model, d_model)
        return dict(wq=wq, bq=bq, wk=wk, bk=bk, wv=wv, bv=bv, wo=wo, bo=bo)

    def ln_params():
        return dict(gamma=jnp.ones((d_model,), dtype=dtype),
                    beta=jnp.zeros((d_model,), dtype=dtype))

    layers = []
    keys = jax.random.split(key, num_layers + 1)
    for lk in keys[:num_layers]:
        sk = jax.random.split(lk, 4)
        w1, b1 = dense(sk[2], d_model, d_ff)
        w2, b2 = dense(sk[3], d_ff, d_model)
        layers.append(dict(
            self_attn=attn_params(sk[0]),
            cross_attn=attn_params(sk[1]),
            ff_w1=w1, ff_b1=b1, ff_w2=w2, ff_b2=b2,
            norm1=ln_params(), norm2=ln_params(), norm3=ln_params(),
        ))
    return dict(layers=layers, norm=ln_params())


# ----------------------------------------------------------------------------- main
if __name__ == "__main__":
    B, L_tgt, L_src = 2, 8, 8
    D_MODEL, N_HEADS, D_FF, N_LAYERS = 32, 4, 64, 2

    root = jax.random.PRNGKey(0)
    k_x, k_cross, k_p = jax.random.split(root, 3)
    x = jax.random.normal(k_x, (B, L_tgt, D_MODEL), dtype=jnp.float32)
    cross = jax.random.normal(k_cross, (B, L_src, D_MODEL), dtype=jnp.float32)
    params = init_params(k_p, N_LAYERS, D_MODEL, D_FF)

    # One-time weight layout prep (stacking, scale folding, optional bf16 cast).
    prep = prepare_params(params, N_HEADS, compute_dtype=jnp.float32)

    fwd = jax.jit(functools.partial(miss_decoder_forward, n_heads=N_HEADS,
                                    final_norm=params["norm"] is not None))
    out = fwd(x, cross, prep)
    jax.block_until_ready(out)
    assert out.shape == (B, L_tgt, D_MODEL) and out.dtype == jnp.float32
    assert bool(jnp.all(jnp.isfinite(out)))
    print("KERNEL_OK")
</pallas_src>

<mosaic_0001>
module attributes {stable_mosaic.version = 11 : i64} {
  func.func @_decoder_stack_kernel(%arg0: i32, %arg1: memref<1x8x32xf32, #tpu.memory_space<vmem>>, %arg2: memref<1x8x32xf32, #tpu.memory_space<vmem>>, %arg3: memref<2x32x32xf32, #tpu.memory_space<vmem>>, %arg4: memref<2x1x32xf32, #tpu.memory_space<vmem>>, %arg5: memref<2x32x32xf32, #tpu.memory_space<vmem>>, %arg6: memref<2x1x32xf32, #tpu.memory_space<vmem>>, %arg7: memref<2x32x32xf32, #tpu.memory_space<vmem>>, %arg8: memref<2x1x32xf32, #tpu.memory_space<vmem>>, %arg9: memref<2x32x32xf32, #tpu.memory_space<vmem>>, %arg10: memref<2x1x32xf32, #tpu.memory_space<vmem>>, %arg11: memref<2x1x32xf32, #tpu.memory_space<vmem>>, %arg12: memref<2x1x32xf32, #tpu.memory_space<vmem>>, %arg13: memref<2x32x32xf32, #tpu.memory_space<vmem>>, %arg14: memref<2x1x32xf32, #tpu.memory_space<vmem>>, %arg15: memref<2x32x32xf32, #tpu.memory_space<vmem>>, %arg16: memref<2x1x32xf32, #tpu.memory_space<vmem>>, %arg17: memref<2x32x32xf32, #tpu.memory_space<vmem>>, %arg18: memref<2x1x32xf32, #tpu.memory_space<vmem>>, %arg19: memref<2x32x32xf32, #tpu.memory_space<vmem>>, %arg20: memref<2x1x32xf32, #tpu.memory_space<vmem>>, %arg21: memref<2x1x32xf32, #tpu.memory_space<vmem>>, %arg22: memref<2x1x32xf32, #tpu.memory_space<vmem>>, %arg23: memref<2x32x64xf32, #tpu.memory_space<vmem>>, %arg24: memref<2x1x64xf32, #tpu.memory_space<vmem>>, %arg25: memref<2x64x32xf32, #tpu.memory_space<vmem>>, %arg26: memref<2x1x32xf32, #tpu.memory_space<vmem>>, %arg27: memref<2x1x32xf32, #tpu.memory_space<vmem>>, %arg28: memref<2x1x32xf32, #tpu.memory_space<vmem>>, %arg29: memref<1x32xf32, #tpu.memory_space<vmem>>, %arg30: memref<1x32xf32, #tpu.memory_space<vmem>>, %arg31: memref<1x8x32xf32, #tpu.memory_space<vmem>>) attributes {dimension_semantics = [#tpu.dimension_semantics<parallel>], iteration_bounds = array<i64: 2>, scalar_prefetch = 0 : i64, scratch_operands = 0 : i64, tpu.core_type = #tpu.core_type<tc>, window_params = [{transform_indices = @transform_0, window_bounds = array<i64: 1, 8, 32>}, {transform_indices = @transform_1, window_bounds = array<i64: 1, 8, 32>}, {pipeline_mode = #tpu.pipeline_mode<synchronous>, transform_indices = @transform_2, window_bounds = array<i64: 2, 32, 32>}, {pipeline_mode = #tpu.pipeline_mode<synchronous>, transform_indices = @transform_3, window_bounds = array<i64: 2, 1, 32>}, {pipeline_mode = #tpu.pipeline_mode<synchronous>, transform_indices = @transform_4, window_bounds = array<i64: 2, 32, 32>}, {pipeline_mode = #tpu.pipeline_mode<synchronous>, transform_indices = @transform_5, window_bounds = array<i64: 2, 1, 32>}, {pipeline_mode = #tpu.pipeline_mode<synchronous>, transform_indices = @transform_6, window_bounds = array<i64: 2, 32, 32>}, {pipeline_mode = #tpu.pipeline_mode<synchronous>, transform_indices = @transform_7, window_bounds = array<i64: 2, 1, 32>}, {pipeline_mode = #tpu.pipeline_mode<synchronous>, transform_indices = @transform_8, window_bounds = array<i64: 2, 32, 32>}, {pipeline_mode = #tpu.pipeline_mode<synchronous>, transform_indices = @transform_9, window_bounds = array<i64: 2, 1, 32>}, {pipeline_mode = #tpu.pipeline_mode<synchronous>, transform_indices = @transform_10, window_bounds = array<i64: 2, 1, 32>}, {pipeline_mode = #tpu.pipeline_mode<synchronous>, transform_indices = @transform_11, window_bounds = array<i64: 2, 1, 32>}, {pipeline_mode = #tpu.pipeline_mode<synchronous>, transform_indices = @transform_12, window_bounds = array<i64: 2, 32, 32>}, {pipeline_mode = #tpu.pipeline_mode<synchronous>, transform_indices = @transform_13, window_bounds = array<i64: 2, 1, 32>}, {pipeline_mode = #tpu.pipeline_mode<synchronous>, transform_indices = @transform_14, window_bounds = array<i64: 2, 32, 32>}, {pipeline_mode = #tpu.pipeline_mode<synchronous>, transform_indices = @transform_15, window_bounds = array<i64: 2, 1, 32>}, {pipeline_mode = #tpu.pipeline_mode<synchronous>, transform_indices = @transform_16, window_bounds = array<i64: 2, 32, 32>}, {pipeline_mode = #tpu.pipeline_mode<synchronous>, transform_indices = @transform_17, window_bounds = array<i64: 2, 1, 32>}, {pipeline_mode = #tpu.pipeline_mode<synchronous>, transform_indices = @transform_18, window_bounds = array<i64: 2, 32, 32>}, {pipeline_mode = #tpu.pipeline_mode<synchronous>, transform_indices = @transform_19, window_bounds = array<i64: 2, 1, 32>}, {pipeline_mode = #tpu.pipeline_mode<synchronous>, transform_indices = @transform_20, window_bounds = array<i64: 2, 1, 32>}, {pipeline_mode = #tpu.pipeline_mode<synchronous>, transform_indices = @transform_21, window_bounds = array<i64: 2, 1, 32>}, {pipeline_mode = #tpu.pipeline_mode<synchronous>, transform_indices = @transform_22, window_bounds = array<i64: 2, 32, 64>}, {pipeline_mode = #tpu.pipeline_mode<synchronous>, transform_indices = @transform_23, window_bounds = array<i64: 2, 1, 64>}, {pipeline_mode = #tpu.pipeline_mode<synchronous>, transform_indices = @transform_24, window_bounds = array<i64: 2, 64, 32>}, {pipeline_mode = #tpu.pipeline_mode<synchronous>, transform_indices = @transform_25, window_bounds = array<i64: 2, 1, 32>}, {pipeline_mode = #tpu.pipeline_mode<synchronous>, transform_indices = @transform_26, window_bounds = array<i64: 2, 1, 32>}, {pipeline_mode = #tpu.pipeline_mode<synchronous>, transform_indices = @transform_27, window_bounds = array<i64: 2, 1, 32>}, {pipeline_mode = #tpu.pipeline_mode<synchronous>, transform_indices = @transform_28, window_bounds = array<i64: 1, 32>}, {pipeline_mode = #tpu.pipeline_mode<synchronous>, transform_indices = @transform_29, window_bounds = array<i64: 1, 32>}, {transform_indices = @transform_30, window_bounds = array<i64: 1, 8, 32>}]} {
    %c0 = arith.constant 0 : index
    %c0_0 = arith.constant 0 : index
    %c0_1 = arith.constant 0 : index
    %0 = vector.load %arg1[%c0, %c0_0, %c0_1] : memref<1x8x32xf32, #tpu.memory_space<vmem>>, vector<1x8x32xf32>
    %1 = vector.shape_cast %0 : vector<1x8x32xf32> to vector<8x32xf32>
    %c0_2 = arith.constant 0 : index
    %c0_3 = arith.constant 0 : index
    %c0_4 = arith.constant 0 : index
    %2 = vector.load %arg2[%c0_2, %c0_3, %c0_4] : memref<1x8x32xf32, #tpu.memory_space<vmem>>, vector<1x8x32xf32>
    %3 = vector.shape_cast %2 : vector<1x8x32xf32> to vector<8x32xf32>
    %c0_5 = arith.constant 0 : index
    %c0_6 = arith.constant 0 : index
    %c0_7 = arith.constant 0 : index
    %4 = vector.load %arg3[%c0_5, %c0_6, %c0_7] : memref<2x32x32xf32, #tpu.memory_space<vmem>>, vector<1x32x32xf32>
    %5 = vector.shape_cast %4 : vector<1x32x32xf32> to vector<32x32xf32>
    %c0_8 = arith.constant 0 : index
    %c0_9 = arith.constant 0 : index
    %c0_10 = arith.constant 0 : index
    %6 = vector.load %arg4[%c0_8, %c0_9, %c0_10] : memref<2x1x32xf32, #tpu.memory_space<vmem>>, vector<1x1x32xf32>
    %7 = vector.shape_cast %6 : vector<1x1x32xf32> to vector<1x32xf32>
    %c0_11 = arith.constant 0 : index
    %c0_12 = arith.constant 0 : index
    %c0_13 = arith.constant 0 : index
    %8 = vector.load %arg5[%c0_11, %c0_12, %c0_13] : memref<2x32x32xf32, #tpu.memory_space<vmem>>, vector<1x32x32xf32>
    %9 = vector.shape_cast %8 : vector<1x32x32xf32> to vector<32x32xf32>
    %c0_14 = arith.constant 0 : index
    %c0_15 = arith.constant 0 : index
    %c0_16 = arith.constant 0 : index
    %10 = vector.load %arg6[%c0_14, %c0_15, %c0_16] : memref<2x1x32xf32, #tpu.memory_space<vmem>>, vector<1x1x32xf32>
    %11 = vector.shape_cast %10 : vector<1x1x32xf32> to vector<1x32xf32>
    %c0_17 = arith.constant 0 : index
    %c0_18 = arith.constant 0 : index
    %c0_19 = arith.constant 0 : index
    %12 = vector.load %arg7[%c0_17, %c0_18, %c0_19] : memref<2x32x32xf32, #tpu.memory_space<vmem>>, vector<1x32x32xf32>
    %13 = vector.shape_cast %12 : vector<1x32x32xf32> to vector<32x32xf32>
    %c0_20 = arith.constant 0 : index
    %c0_21 = arith.constant 0 : index
    %c0_22 = arith.constant 0 : index
    %14 = vector.load %arg8[%c0_20, %c0_21, %c0_22] : memref<2x1x32xf32, #tpu.memory_space<vmem>>, vector<1x1x32xf32>
    %15 = vector.shape_cast %14 : vector<1x1x32xf32> to vector<1x32xf32>
    %c0_23 = arith.constant 0 : index
    %c0_24 = arith.constant 0 : index
    %c0_25 = arith.constant 0 : index
    %16 = vector.load %arg9[%c0_23, %c0_24, %c0_25] : memref<2x32x32xf32, #tpu.memory_space<vmem>>, vector<1x32x32xf32>
    %17 = vector.shape_cast %16 : vector<1x32x32xf32> to vector<32x32xf32>
    %c0_26 = arith.constant 0 : index
    %c0_27 = arith.constant 0 : index
    %c0_28 = arith.constant 0 : index
    %18 = vector.load %arg10[%c0_26, %c0_27, %c0_28] : memref<2x1x32xf32, #tpu.memory_space<vmem>>, vector<1x1x32xf32>
    %19 = vector.shape_cast %18 : vector<1x1x32xf32> to vector<1x32xf32>
    %cst = arith.constant dense<0.000000e+00> : vector<8x32xf32>
    %20 = tpu.matmul %1, %5, %cst {dimension_numbers = #tpu.dot_dimension_numbers<[1], [0], [0], [1], [0, 0, 1, 1], [], []>} : vector<8x32xf32>, vector<32x32xf32>, vector<8x32xf32> -> vector<8x32xf32>
    %21 = vector.broadcast %7 : vector<1x32xf32> to vector<8x32xf32>
    %22 = arith.addf %20, %21 : vector<8x32xf32>
    %cst_29 = arith.constant dense<0.000000e+00> : vector<8x32xf32>
    %23 = tpu.matmul %1, %9, %cst_29 {dimension_numbers = #tpu.dot_dimension_numbers<[1], [0], [0], [1], [0, 0, 1, 1], [], []>} : vector<8x32xf32>, vector<32x32xf32>, vector<8x32xf32> -> vector<8x32xf32>
    %24 = vector.broadcast %11 : vector<1x32xf32> to vector<8x32xf32>
    %25 = arith.addf %23, %24 : vector<8x32xf32>
    %cst_30 = arith.constant dense<0.000000e+00> : vector<8x32xf32>
    %26 = tpu.matmul %1, %13, %cst_30 {dimension_numbers = #tpu.dot_dimension_numbers<[1], [0], [0], [1], [0, 0, 1, 1], [], []>} : vector<8x32xf32>, vector<32x32xf32>, vector<8x32xf32> -> vector<8x32xf32>
    %27 = vector.broadcast %15 : vector<1x32xf32> to vector<8x32xf32>
    %28 = arith.addf %26, %27 : vector<8x32xf32>
    %cst_31 = arith.constant 0.000000e+00 : f32
    %29 = vector.broadcast %cst_31 : f32 to vector<8x32xf32>
    %30 = vector.extract_strided_slice %22 {offsets = [0, 0], sizes = [8, 8], strides = [1, 1]} : vector<8x32xf32> to vector<8x8xf32>
    %31 = vector.extract_strided_slice %25 {offsets = [0, 0], sizes = [8, 8], strides = [1, 1]} : vector<8x32xf32> to vector<8x8xf32>
    %32 = vector.extract_strided_slice %28 {offsets = [0, 0], sizes = [8, 8], strides = [1, 1]} : vector<8x32xf32> to vector<8x8xf32>
    %cst_32 = arith.constant dense<0.000000e+00> : vector<8x8xf32>
    %33 = tpu.matmul %30, %31, %cst_32 {dimension_numbers = #tpu.dot_dimension_numbers<[1], [1], [0], [0], [0, 0, 1, 0], [], []>} : vector<8x8xf32>, vector<8x8xf32>, vector<8x8xf32> -> vector<8x8xf32>
    %cst_33 = arith.constant dense<0xFF800000> : vector<8xf32>
    %34 = vector.multi_reduction <maximumf>, %33, %cst_33 [1] : vector<8x8xf32> to vector<8xf32>
    %35 = vector.shape_cast %34 : vector<8xf32> to vector<8x1xf32>
    %36 = vector.broadcast %35 : vector<8x1xf32> to vector<8x8xf32>
    %37 = arith.subf %33, %36 : vector<8x8xf32>
    %38 = math.exp %37 : vector<8x8xf32>
    %cst_34 = arith.constant dense<0.000000e+00> : vector<8xf32>
    %39 = vector.multi_reduction <add>, %38, %cst_34 [1] : vector<8x8xf32> to vector<8xf32>
    %40 = vector.shape_cast %39 : vector<8xf32> to vector<8x1xf32>
    %41 = tpu.reciprocal %40 {approx = true} : vector<8x1xf32> -> vector<8x1xf32>
    %42 = vector.broadcast %41 : vector<8x1xf32> to vector<8x8xf32>
    %43 = arith.mulf %38, %42 : vector<8x8xf32>
    %cst_35 = arith.constant dense<0.000000e+00> : vector<8x8xf32>
    %44 = tpu.matmul %43, %32, %cst_35 {dimension_numbers = #tpu.dot_dimension_numbers<[1], [0], [0], [1], [0, 0, 1, 1], [], []>} : vector<8x8xf32>, vector<8x8xf32>, vector<8x8xf32> -> vector<8x8xf32>
    %45 = vector.extract_strided_slice %17 {offsets = [0, 0], sizes = [8, 32], strides = [1, 1]} : vector<32x32xf32> to vector<8x32xf32>
    %cst_36 = arith.constant dense<0.000000e+00> : vector<8x32xf32>
    %46 = tpu.matmul %44, %45, %cst_36 {dimension_numbers = #tpu.dot_dimension_numbers<[1], [0], [0], [1], [0, 0, 1, 1], [], []>} : vector<8x8xf32>, vector<8x32xf32>, vector<8x32xf32> -> vector<8x32xf32>
    %47 = arith.addf %29, %46 : vector<8x32xf32>
    %48 = vector.extract_strided_slice %22 {offsets = [0, 8], sizes = [8, 8], strides = [1, 1]} : vector<8x32xf32> to vector<8x8xf32>
    %49 = vector.extract_strided_slice %25 {offsets = [0, 8], sizes = [8, 8], strides = [1, 1]} : vector<8x32xf32> to vector<8x8xf32>
    %50 = vector.extract_strided_slice %28 {offsets = [0, 8], sizes = [8, 8], strides = [1, 1]} : vector<8x32xf32> to vector<8x8xf32>
    %cst_37 = arith.constant dense<0.000000e+00> : vector<8x8xf32>
    %51 = tpu.matmul %48, %49, %cst_37 {dimension_numbers = #tpu.dot_dimension_numbers<[1], [1], [0], [0], [0, 0, 1, 0], [], []>} : vector<8x8xf32>, vector<8x8xf32>, vector<8x8xf32> -> vector<8x8xf32>
    %cst_38 = arith.constant dense<0xFF800000> : vector<8xf32>
    %52 = vector.multi_reduction <maximumf>, %51, %cst_38 [1] : vector<8x8xf32> to vector<8xf32>
    %53 = vector.shape_cast %52 : vector<8xf32> to vector<8x1xf32>
    %54 = vector.broadcast %53 : vector<8x1xf32> to vector<8x8xf32>
    %55 = arith.subf %51, %54 : vector<8x8xf32>
    %56 = math.exp %55 : vector<8x8xf32>
    %cst_39 = arith.constant dense<0.000000e+00> : vector<8xf32>
    %57 = vector.multi_reduction <add>, %56, %cst_39 [1] : vector<8x8xf32> to vector<8xf32>
    %58 = vector.shape_cast %57 : vector<8xf32> to vector<8x1xf32>
    %59 = tpu.reciprocal %58 {approx = true} : vector<8x1xf32> -> vector<8x1xf32>
    %60 = vector.broadcast %59 : vector<8x1xf32> to vector<8x8xf32>
    %61 = arith.mulf %56, %60 : vector<8x8xf32>
    %cst_40 = arith.constant dense<0.000000e+00> : vector<8x8xf32>
    %62 = tpu.matmul %61, %50, %cst_40 {dimension_numbers = #tpu.dot_dimension_numbers<[1], [0], [0], [1], [0, 0, 1, 1], [], []>} : vector<8x8xf32>, vector<8x8xf32>, vector<8x8xf32> -> vector<8x8xf32>
    %63 = vector.extract_strided_slice %17 {offsets = [8, 0], sizes = [8, 32], strides = [1, 1]} : vector<32x32xf32> to vector<8x32xf32>
    %cst_41 = arith.constant dense<0.000000e+00> : vector<8x32xf32>
    %64 = tpu.matmul %62, %63, %cst_41 {dimension_numbers = #tpu.dot_dimension_numbers<[1], [0], [0], [1], [0, 0, 1, 1], [], []>} : vector<8x8xf32>, vector<8x32xf32>, vector<8x32xf32> -> vector<8x32xf32>
    %65 = arith.addf %47, %64 : vector<8x32xf32>
    %66 = vector.extract_strided_slice %22 {offsets = [0, 16], sizes = [8, 8], strides = [1, 1]} : vector<8x32xf32> to vector<8x8xf32>
    %67 = vector.extract_strided_slice %25 {offsets = [0, 16], sizes = [8, 8], strides = [1, 1]} : vector<8x32xf32> to vector<8x8xf32>
    %68 = vector.extract_strided_slice %28 {offsets = [0, 16], sizes = [8, 8], strides = [1, 1]} : vector<8x32xf32> to vector<8x8xf32>
    %cst_42 = arith.constant dense<0.000000e+00> : vector<8x8xf32>
    %69 = tpu.matmul %66, %67, %cst_42 {dimension_numbers = #tpu.dot_dimension_numbers<[1], [1], [0], [0], [0, 0, 1, 0], [], []>} : vector<8x8xf32>, vector<8x8xf32>, vector<8x8xf32> -> vector<8x8xf32>
    %cst_43 = arith.constant dense<0xFF800000> : vector<8xf32>
    %70 = vector.multi_reduction <maximumf>, %69, %cst_43 [1] : vector<8x8xf32> to vector<8xf32>
    %71 = vector.shape_cast %70 : vector<8xf32> to vector<8x1xf32>
    %72 = vector.broadcast %71 : vector<8x1xf32> to vector<8x8xf32>
    %73 = arith.subf %69, %72 : vector<8x8xf32>
    %74 = math.exp %73 : vector<8x8xf32>
    %cst_44 = arith.constant dense<0.000000e+00> : vector<8xf32>
    %75 = vector.multi_reduction <add>, %74, %cst_44 [1] : vector<8x8xf32> to vector<8xf32>
    %76 = vector.shape_cast %75 : vector<8xf32> to vector<8x1xf32>
    %77 = tpu.reciprocal %76 {approx = true} : vector<8x1xf32> -> vector<8x1xf32>
    %78 = vector.broadcast %77 : vector<8x1xf32> to vector<8x8xf32>
    %79 = arith.mulf %74, %78 : vector<8x8xf32>
    %cst_45 = arith.constant dense<0.000000e+00> : vector<8x8xf32>
    %80 = tpu.matmul %79, %68, %cst_45 {dimension_numbers = #tpu.dot_dimension_numbers<[1], [0], [0], [1], [0, 0, 1, 1], [], []>} : vector<8x8xf32>, vector<8x8xf32>, vector<8x8xf32> -> vector<8x8xf32>
    %81 = vector.extract_strided_slice %17 {offsets = [16, 0], sizes = [8, 32], strides = [1, 1]} : vector<32x32xf32> to vector<8x32xf32>
    %cst_46 = arith.constant dense<0.000000e+00> : vector<8x32xf32>
    %82 = tpu.matmul %80, %81, %cst_46 {dimension_numbers = #tpu.dot_dimension_numbers<[1], [0], [0], [1], [0, 0, 1, 1], [], []>} : vector<8x8xf32>, vector<8x32xf32>, vector<8x32xf32> -> vector<8x32xf32>
    %83 = arith.addf %65, %82 : vector<8x32xf32>
    %84 = vector.extract_strided_slice %22 {offsets = [0, 24], sizes = [8, 8], strides = [1, 1]} : vector<8x32xf32> to vector<8x8xf32>
    %85 = vector.extract_strided_slice %25 {offsets = [0, 24], sizes = [8, 8], strides = [1, 1]} : vector<8x32xf32> to vector<8x8xf32>
    %86 = vector.extract_strided_slice %28 {offsets = [0, 24], sizes = [8, 8], strides = [1, 1]} : vector<8x32xf32> to vector<8x8xf32>
    %cst_47 = arith.constant dense<0.000000e+00> : vector<8x8xf32>
    %87 = tpu.matmul %84, %85, %cst_47 {dimension_numbers = #tpu.dot_dimension_numbers<[1], [1], [0], [0], [0, 0, 1, 0], [], []>} : vector<8x8xf32>, vector<8x8xf32>, vector<8x8xf32> -> vector<8x8xf32>
    %cst_48 = arith.constant dense<0xFF800000> : vector<8xf32>
    %88 = vector.multi_reduction <maximumf>, %87, %cst_48 [1] : vector<8x8xf32> to vector<8xf32>
    %89 = vector.shape_cast %88 : vector<8xf32> to vector<8x1xf32>
    %90 = vector.broadcast %89 : vector<8x1xf32> to vector<8x8xf32>
    %91 = arith.subf %87, %90 : vector<8x8xf32>
    %92 = math.exp %91 : vector<8x8xf32>
    %cst_49 = arith.constant dense<0.000000e+00> : vector<8xf32>
    %93 = vector.multi_reduction <add>, %92, %cst_49 [1] : vector<8x8xf32> to vector<8xf32>
    %94 = vector.shape_cast %93 : vector<8xf32> to vector<8x1xf32>
    %95 = tpu.reciprocal %94 {approx = true} : vector<8x1xf32> -> vector<8x1xf32>
    %96 = vector.broadcast %95 : vector<8x1xf32> to vector<8x8xf32>
    %97 = arith.mulf %92, %96 : vector<8x8xf32>
    %cst_50 = arith.constant dense<0.000000e+00> : vector<8x8xf32>
    %98 = tpu.matmul %97, %86, %cst_50 {dimension_numbers = #tpu.dot_dimension_numbers<[1], [0], [0], [1], [0, 0, 1, 1], [], []>} : vector<8x8xf32>, vector<8x8xf32>, vector<8x8xf32> -> vector<8x8xf32>
    %99 = vector.extract_strided_slice %17 {offsets = [24, 0], sizes = [8, 32], strides = [1, 1]} : vector<32x32xf32> to vector<8x32xf32>
    %cst_51 = arith.constant dense<0.000000e+00> : vector<8x32xf32>
    %100 = tpu.matmul %98, %99, %cst_51 {dimension_numbers = #tpu.dot_dimension_numbers<[1], [0], [0], [1], [0, 0, 1, 1], [], []>} : vector<8x8xf32>, vector<8x32xf32>, vector<8x32xf32> -> vector<8x32xf32>
    %101 = arith.addf %83, %100 : vector<8x32xf32>
    %102 = arith.addf %1, %101 : vector<8x32xf32>
    %103 = vector.broadcast %19 : vector<1x32xf32> to vector<8x32xf32>
    %104 = arith.addf %102, %103 : vector<8x32xf32>
    %c0_52 = arith.constant 0 : index
    %c0_53 = arith.constant 0 : index
    %c0_54 = arith.constant 0 : index
    %105 = vector.load %arg11[%c0_52, %c0_53, %c0_54] : memref<2x1x32xf32, #tpu.memory_space<vmem>>, vector<1x1x32xf32>
    %106 = vector.shape_cast %105 : vector<1x1x32xf32> to vector<1x32xf32>
    %c0_55 = arith.constant 0 : index
    %c0_56 = arith.constant 0 : index
    %c0_57 = arith.constant 0 : index
    %107 = vector.load %arg12[%c0_55, %c0_56, %c0_57] : memref<2x1x32xf32, #tpu.memory_space<vmem>>, vector<1x1x32xf32>
    %108 = vector.shape_cast %107 : vector<1x1x32xf32> to vector<1x32xf32>
    %cst_58 = arith.constant dense<0.000000e+00> : vector<8xf32>
    %109 = vector.multi_reduction <add>, %104, %cst_58 [1] : vector<8x32xf32> to vector<8xf32>
    %110 = vector.shape_cast %109 : vector<8xf32> to vector<8x1xf32>
    %cst_59 = arith.constant 3.200000e+01 : f32
    %111 = vector.broadcast %cst_59 : f32 to vector<8x1xf32>
    %112 = arith.divf %110, %111 : vector<8x1xf32>
    %113 = vector.broadcast %112 : vector<8x1xf32> to vector<8x32xf32>
    %114 = arith.subf %104, %113 : vector<8x32xf32>
    %115 = arith.mulf %114, %114 : vector<8x32xf32>
    %cst_60 = arith.constant dense<0.000000e+00> : vector<8xf32>
    %116 = vector.multi_reduction <add>, %115, %cst_60 [1] : vector<8x32xf32> to vector<8xf32>
    %117 = vector.shape_cast %116 : vector<8xf32> to vector<8x1xf32>
    %cst_61 = arith.constant 3.200000e+01 : f32
    %118 = vector.broadcast %cst_61 : f32 to vector<8x1xf32>
    %119 = arith.divf %117, %118 : vector<8x1xf32>
    %120 = vector.broadcast %112 : vector<8x1xf32> to vector<8x32xf32>
    %121 = arith.subf %104, %120 : vector<8x32xf32>
    %cst_62 = arith.constant 9.99999974E-6 : f32
    %122 = vector.broadcast %cst_62 : f32 to vector<8x1xf32>
    %123 = arith.addf %119, %122 : vector<8x1xf32>
    %124 = math.rsqrt %123 : vector<8x1xf32>
    %125 = vector.broadcast %124 : vector<8x1xf32> to vector<8x32xf32>
    %126 = arith.mulf %121, %125 : vector<8x32xf32>
    %127 = vector.broadcast %106 : vector<1x32xf32> to vector<8x32xf32>
    %128 = arith.mulf %126, %127 : vector<8x32xf32>
    %129 = vector.broadcast %108 : vector<1x32xf32> to vector<8x32xf32>
    %130 = arith.addf %128, %129 : vector<8x32xf32>
    %c0_63 = arith.constant 0 : index
    %c0_64 = arith.constant 0 : index
    %c0_65 = arith.constant 0 : index
    %131 = vector.load %arg13[%c0_63, %c0_64, %c0_65] : memref<2x32x32xf32, #tpu.memory_space<vmem>>, vector<1x32x32xf32>
    %132 = vector.shape_cast %131 : vector<1x32x32xf32> to vector<32x32xf32>
    %c0_66 = arith.constant 0 : index
    %c0_67 = arith.constant 0 : index
    %c0_68 = arith.constant 0 : index
    %133 = vector.load %arg14[%c0_66, %c0_67, %c0_68] : memref<2x1x32xf32, #tpu.memory_space<vmem>>, vector<1x1x32xf32>
    %134 = vector.shape_cast %133 : vector<1x1x32xf32> to vector<1x32xf32>
    %c0_69 = arith.constant 0 : index
    %c0_70 = arith.constant 0 : index
    %c0_71 = arith.constant 0 : index
    %135 = vector.load %arg15[%c0_69, %c0_70, %c0_71] : memref<2x32x32xf32, #tpu.memory_space<vmem>>, vector<1x32x32xf32>
    %136 = vector.shape_cast %135 : vector<1x32x32xf32> to vector<32x32xf32>
    %c0_72 = arith.constant 0 : index
    %c0_73 = arith.constant 0 : index
    %c0_74 = arith.constant 0 : index
    %137 = vector.load %arg16[%c0_72, %c0_73, %c0_74] : memref<2x1x32xf32, #tpu.memory_space<vmem>>, vector<1x1x32xf32>
    %138 = vector.shape_cast %137 : vector<1x1x32xf32> to vector<1x32xf32>
    %c0_75 = arith.constant 0 : index
    %c0_76 = arith.constant 0 : index
    %c0_77 = arith.constant 0 : index
    %139 = vector.load %arg17[%c0_75, %c0_76, %c0_77] : memref<2x32x32xf32, #tpu.memory_space<vmem>>, vector<1x32x32xf32>
    %140 = vector.shape_cast %139 : vector<1x32x32xf32> to vector<32x32xf32>
    %c0_78 = arith.constant 0 : index
    %c0_79 = arith.constant 0 : index
    %c0_80 = arith.constant 0 : index
    %141 = vector.load %arg18[%c0_78, %c0_79, %c0_80] : memref<2x1x32xf32, #tpu.memory_space<vmem>>, vector<1x1x32xf32>
    %142 = vector.shape_cast %141 : vector<1x1x32xf32> to vector<1x32xf32>
    %c0_81 = arith.constant 0 : index
    %c0_82 = arith.constant 0 : index
    %c0_83 = arith.constant 0 : index
    %143 = vector.load %arg19[%c0_81, %c0_82, %c0_83] : memref<2x32x32xf32, #tpu.memory_space<vmem>>, vector<1x32x32xf32>
    %144 = vector.shape_cast %143 : vector<1x32x32xf32> to vector<32x32xf32>
    %c0_84 = arith.constant 0 : index
    %c0_85 = arith.constant 0 : index
    %c0_86 = arith.constant 0 : index
    %145 = vector.load %arg20[%c0_84, %c0_85, %c0_86] : memref<2x1x32xf32, #tpu.memory_space<vmem>>, vector<1x1x32xf32>
    %146 = vector.shape_cast %145 : vector<1x1x32xf32> to vector<1x32xf32>
    %cst_87 = arith.constant dense<0.000000e+00> : vector<8x32xf32>
    %147 = tpu.matmul %130, %132, %cst_87 {dimension_numbers = #tpu.dot_dimension_numbers<[1], [0], [0], [1], [0, 0, 1, 1], [], []>} : vector<8x32xf32>, vector<32x32xf32>, vector<8x32xf32> -> vector<8x32xf32>
    %148 = vector.broadcast %134 : vector<1x32xf32> to vector<8x32xf32>
    %149 = arith.addf %147, %148 : vector<8x32xf32>
    %cst_88 = arith.constant dense<0.000000e+00> : vector<8x32xf32>
    %150 = tpu.matmul %3, %136, %cst_88 {dimension_numbers = #tpu.dot_dimension_numbers<[1], [0], [0], [1], [0, 0, 1, 1], [], []>} : vector<8x32xf32>, vector<32x32xf32>, vector<8x32xf32> -> vector<8x32xf32>
    %151 = vector.broadcast %138 : vector<1x32xf32> to vector<8x32xf32>
    %152 = arith.addf %150, %151 : vector<8x32xf32>
    %cst_89 = arith.constant dense<0.000000e+00> : vector<8x32xf32>
    %153 = tpu.matmul %3, %140, %cst_89 {dimension_numbers = #tpu.dot_dimension_numbers<[1], [0], [0], [1], [0, 0, 1, 1], [], []>} : vector<8x32xf32>, vector<32x32xf32>, vector<8x32xf32> -> vector<8x32xf32>
    %154 = vector.broadcast %142 : vector<1x32xf32> to vector<8x32xf32>
    %155 = arith.addf %153, %154 : vector<8x32xf32>
    %cst_90 = arith.constant 0.000000e+00 : f32
    %156 = vector.broadcast %cst_90 : f32 to vector<8x32xf32>
    %157 = vector.extract_strided_slice %149 {offsets = [0, 0], sizes = [8, 8], strides = [1, 1]} : vector<8x32xf32> to vector<8x8xf32>
    %158 = vector.extract_strided_slice %152 {offsets = [0, 0], sizes = [8, 8], strides = [1, 1]} : vector<8x32xf32> to vector<8x8xf32>
    %159 = vector.extract_strided_slice %155 {offsets = [0, 0], sizes = [8, 8], strides = [1, 1]} : vector<8x32xf32> to vector<8x8xf32>
    %cst_91 = arith.constant dense<0.000000e+00> : vector<8x8xf32>
    %160 = tpu.matmul %157, %158, %cst_91 {dimension_numbers = #tpu.dot_dimension_numbers<[1], [1], [0], [0], [0, 0, 1, 0], [], []>} : vector<8x8xf32>, vector<8x8xf32>, vector<8x8xf32> -> vector<8x8xf32>
    %cst_92 = arith.constant dense<0xFF800000> : vector<8xf32>
    %161 = vector.multi_reduction <maximumf>, %160, %cst_92 [1] : vector<8x8xf32> to vector<8xf32>
    %162 = vector.shape_cast %161 : vector<8xf32> to vector<8x1xf32>
    %163 = vector.broadcast %162 : vector<8x1xf32> to vector<8x8xf32>
    %164 = arith.subf %160, %163 : vector<8x8xf32>
    %165 = math.exp %164 : vector<8x8xf32>
    %cst_93 = arith.constant dense<0.000000e+00> : vector<8xf32>
    %166 = vector.multi_reduction <add>, %165, %cst_93 [1] : vector<8x8xf32> to vector<8xf32>
    %167 = vector.shape_cast %166 : vector<8xf32> to vector<8x1xf32>
    %168 = tpu.reciprocal %167 {approx = true} : vector<8x1xf32> -> vector<8x1xf32>
    %169 = vector.broadcast %168 : vector<8x1xf32> to vector<8x8xf32>
    %170 = arith.mulf %165, %169 : vector<8x8xf32>
    %cst_94 = arith.constant dense<0.000000e+00> : vector<8x8xf32>
    %171 = tpu.matmul %170, %159, %cst_94 {dimension_numbers = #tpu.dot_dimension_numbers<[1], [0], [0], [1], [0, 0, 1, 1], [], []>} : vector<8x8xf32>, vector<8x8xf32>, vector<8x8xf32> -> vector<8x8xf32>
    %172 = vector.extract_strided_slice %144 {offsets = [0, 0], sizes = [8, 32], strides = [1, 1]} : vector<32x32xf32> to vector<8x32xf32>
    %cst_95 = arith.constant dense<0.000000e+00> : vector<8x32xf32>
    %173 = tpu.matmul %171, %172, %cst_95 {dimension_numbers = #tpu.dot_dimension_numbers<[1], [0], [0], [1], [0, 0, 1, 1], [], []>} : vector<8x8xf32>, vector<8x32xf32>, vector<8x32xf32> -> vector<8x32xf32>
    %174 = arith.addf %156, %173 : vector<8x32xf32>
    %175 = vector.extract_strided_slice %149 {offsets = [0, 8], sizes = [8, 8], strides = [1, 1]} : vector<8x32xf32> to vector<8x8xf32>
    %176 = vector.extract_strided_slice %152 {offsets = [0, 8], sizes = [8, 8], strides = [1, 1]} : vector<8x32xf32> to vector<8x8xf32>
    %177 = vector.extract_strided_slice %155 {offsets = [0, 8], sizes = [8, 8], strides = [1, 1]} : vector<8x32xf32> to vector<8x8xf32>
    %cst_96 = arith.constant dense<0.000000e+00> : vector<8x8xf32>
    %178 = tpu.matmul %175, %176, %cst_96 {dimension_numbers = #tpu.dot_dimension_numbers<[1], [1], [0], [0], [0, 0, 1, 0], [], []>} : vector<8x8xf32>, vector<8x8xf32>, vector<8x8xf32> -> vector<8x8xf32>
    %cst_97 = arith.constant dense<0xFF800000> : vector<8xf32>
    %179 = vector.multi_reduction <maximumf>, %178, %cst_97 [1] : vector<8x8xf32> to vector<8xf32>
    %180 = vector.shape_cast %179 : vector<8xf32> to vector<8x1xf32>
    %181 = vector.broadcast %180 : vector<8x1xf32> to vector<8x8xf32>
    %182 = arith.subf %178, %181 : vector<8x8xf32>
    %183 = math.exp %182 : vector<8x8xf32>
    %cst_98 = arith.constant dense<0.000000e+00> : vector<8xf32>
    %184 = vector.multi_reduction <add>, %183, %cst_98 [1] : vector<8x8xf32> to vector<8xf32>
    %185 = vector.shape_cast %184 : vector<8xf32> to vector<8x1xf32>
    %186 = tpu.reciprocal %185 {approx = true} : vector<8x1xf32> -> vector<8x1xf32>
    %187 = vector.broadcast %186 : vector<8x1xf32> to vector<8x8xf32>
    %188 = arith.mulf %183, %187 : vector<8x8xf32>
    %cst_99 = arith.constant dense<0.000000e+00> : vector<8x8xf32>
    %189 = tpu.matmul %188, %177, %cst_99 {dimension_numbers = #tpu.dot_dimension_numbers<[1], [0], [0], [1], [0, 0, 1, 1], [], []>} : vector<8x8xf32>, vector<8x8xf32>, vector<8x8xf32> -> vector<8x8xf32>
    %190 = vector.extract_strided_slice %144 {offsets = [8, 0], sizes = [8, 32], strides = [1, 1]} : vector<32x32xf32> to vector<8x32xf32>
    %cst_100 = arith.constant dense<0.000000e+00> : vector<8x32xf32>
    %191 = tpu.matmul %189, %190, %cst_100 {dimension_numbers = #tpu.dot_dimension_numbers<[1], [0], [0], [1], [0, 0, 1, 1], [], []>} : vector<8x8xf32>, vector<8x32xf32>, vector<8x32xf32> -> vector<8x32xf32>
    %192 = arith.addf %174, %191 : vector<8x32xf32>
    %193 = vector.extract_strided_slice %149 {offsets = [0, 16], sizes = [8, 8], strides = [1, 1]} : vector<8x32xf32> to vector<8x8xf32>
    %194 = vector.extract_strided_slice %152 {offsets = [0, 16], sizes = [8, 8], strides = [1, 1]} : vector<8x32xf32> to vector<8x8xf32>
    %195 = vector.extract_strided_slice %155 {offsets = [0, 16], sizes = [8, 8], strides = [1, 1]} : vector<8x32xf32> to vector<8x8xf32>
    %cst_101 = arith.constant dense<0.000000e+00> : vector<8x8xf32>
    %196 = tpu.matmul %193, %194, %cst_101 {dimension_numbers = #tpu.dot_dimension_numbers<[1], [1], [0], [0], [0, 0, 1, 0], [], []>} : vector<8x8xf32>, vector<8x8xf32>, vector<8x8xf32> -> vector<8x8xf32>
    %cst_102 = arith.constant dense<0xFF800000> : vector<8xf32>
    %197 = vector.multi_reduction <maximumf>, %196, %cst_102 [1] : vector<8x8xf32> to vector<8xf32>
    %198 = vector.shape_cast %197 : vector<8xf32> to vector<8x1xf32>
    %199 = vector.broadcast %198 : vector<8x1xf32> to vector<8x8xf32>
    %200 = arith.subf %196, %199 : vector<8x8xf32>
    %201 = math.exp %200 : vector<8x8xf32>
    %cst_103 = arith.constant dense<0.000000e+00> : vector<8xf32>
    %202 = vector.multi_reduction <add>, %201, %cst_103 [1] : vector<8x8xf32> to vector<8xf32>
    %203 = vector.shape_cast %202 : vector<8xf32> to vector<8x1xf32>
    %204 = tpu.reciprocal %203 {approx = true} : vector<8x1xf32> -> vector<8x1xf32>
    %205 = vector.broadcast %204 : vector<8x1xf32> to vector<8x8xf32>
    %206 = arith.mulf %201, %205 : vector<8x8xf32>
    %cst_104 = arith.constant dense<0.000000e+00> : vector<8x8xf32>
    %207 = tpu.matmul %206, %195, %cst_104 {dimension_numbers = #tpu.dot_dimension_numbers<[1], [0], [0], [1], [0, 0, 1, 1], [], []>} : vector<8x8xf32>, vector<8x8xf32>, vector<8x8xf32> -> vector<8x8xf32>
    %208 = vector.extract_strided_slice %144 {offsets = [16, 0], sizes = [8, 32], strides = [1, 1]} : vector<32x32xf32> to vector<8x32xf32>
    %cst_105 = arith.constant dense<0.000000e+00> : vector<8x32xf32>
    %209 = tpu.matmul %207, %208, %cst_105 {dimension_numbers = #tpu.dot_dimension_numbers<[1], [0], [0], [1], [0, 0, 1, 1], [], []>} : vector<8x8xf32>, vector<8x32xf32>, vector<8x32xf32> -> vector<8x32xf32>
    %210 = arith.addf %192, %209 : vector<8x32xf32>
    %211 = vector.extract_strided_slice %149 {offsets = [0, 24], sizes = [8, 8], strides = [1, 1]} : vector<8x32xf32> to vector<8x8xf32>
    %212 = vector.extract_strided_slice %152 {offsets = [0, 24], sizes = [8, 8], strides = [1, 1]} : vector<8x32xf32> to vector<8x8xf32>
    %213 = vector.extract_strided_slice %155 {offsets = [0, 24], sizes = [8, 8], strides = [1, 1]} : vector<8x32xf32> to vector<8x8xf32>
    %cst_106 = arith.constant dense<0.000000e+00> : vector<8x8xf32>
    %214 = tpu.matmul %211, %212, %cst_106 {dimension_numbers = #tpu.dot_dimension_numbers<[1], [1], [0], [0], [0, 0, 1, 0], [], []>} : vector<8x8xf32>, vector<8x8xf32>, vector<8x8xf32> -> vector<8x8xf32>
    %cst_107 = arith.constant dense<0xFF800000> : vector<8xf32>
    %215 = vector.multi_reduction <maximumf>, %214, %cst_107 [1] : vector<8x8xf32> to vector<8xf32>
    %216 = vector.shape_cast %215 : vector<8xf32> to vector<8x1xf32>
    %217 = vector.broadcast %216 : vector<8x1xf32> to vector<8x8xf32>
    %218 = arith.subf %214, %217 : vector<8x8xf32>
    %219 = math.exp %218 : vector<8x8xf32>
    %cst_108 = arith.constant dense<0.000000e+00> : vector<8xf32>
    %220 = vector.multi_reduction <add>, %219, %cst_108 [1] : vector<8x8xf32> to vector<8xf32>
    %221 = vector.shape_cast %220 : vector<8xf32> to vector<8x1xf32>
    %222 = tpu.reciprocal %221 {approx = true} : vector<8x1xf32> -> vector<8x1xf32>
    %223 = vector.broadcast %222 : vector<8x1xf32> to vector<8x8xf32>
    %224 = arith.mulf %219, %223 : vector<8x8xf32>
    %cst_109 = arith.constant dense<0.000000e+00> : vector<8x8xf32>
    %225 = tpu.matmul %224, %213, %cst_109 {dimension_numbers = #tpu.dot_dimension_numbers<[1], [0], [0], [1], [0, 0, 1, 1], [], []>} : vector<8x8xf32>, vector<8x8xf32>, vector<8x8xf32> -> vector<8x8xf32>
    %226 = vector.extract_strided_slice %144 {offsets = [24, 0], sizes = [8, 32], strides = [1, 1]} : vector<32x32xf32> to vector<8x32xf32>
    %cst_110 = arith.constant dense<0.000000e+00> : vector<8x32xf32>
    %227 = tpu.matmul %225, %226, %cst_110 {dimension_numbers = #tpu.dot_dimension_numbers<[1], [0], [0], [1], [0, 0, 1, 1], [], []>} : vector<8x8xf32>, vector<8x32xf32>, vector<8x32xf32> -> vector<8x32xf32>
    %228 = arith.addf %210, %227 : vector<8x32xf32>
    %229 = arith.addf %130, %228 : vector<8x32xf32>
    %230 = vector.broadcast %146 : vector<1x32xf32> to vector<8x32xf32>
    %231 = arith.addf %229, %230 : vector<8x32xf32>
    %c0_111 = arith.constant 0 : index
    %c0_112 = arith.constant 0 : index
    %c0_113 = arith.constant 0 : index
    %232 = vector.load %arg21[%c0_111, %c0_112, %c0_113] : memref<2x1x32xf32, #tpu.memory_space<vmem>>, vector<1x1x32xf32>
    %233 = vector.shape_cast %232 : vector<1x1x32xf32> to vector<1x32xf32>
    %c0_114 = arith.constant 0 : index
    %c0_115 = arith.constant 0 : index
    %c0_116 = arith.constant 0 : index
    %234 = vector.load %arg22[%c0_114, %c0_115, %c0_116] : memref<2x1x32xf32, #tpu.memory_space<vmem>>, vector<1x1x32xf32>
    %235 = vector.shape_cast %234 : vector<1x1x32xf32> to vector<1x32xf32>
    %cst_117 = arith.constant dense<0.000000e+00> : vector<8xf32>
    %236 = vector.multi_reduction <add>, %231, %cst_117 [1] : vector<8x32xf32> to vector<8xf32>
    %237 = vector.shape_cast %236 : vector<8xf32> to vector<8x1xf32>
    %cst_118 = arith.constant 3.200000e+01 : f32
    %238 = vector.broadcast %cst_118 : f32 to vector<8x1xf32>
    %239 = arith.divf %237, %238 : vector<8x1xf32>
    %240 = vector.broadcast %239 : vector<8x1xf32> to vector<8x32xf32>
    %241 = arith.subf %231, %240 : vector<8x32xf32>
    %242 = arith.mulf %241, %241 : vector<8x32xf32>
    %cst_119 = arith.constant dense<0.000000e+00> : vector<8xf32>
    %243 = vector.multi_reduction <add>, %242, %cst_119 [1] : vector<8x32xf32> to vector<8xf32>
    %244 = vector.shape_cast %243 : vector<8xf32> to vector<8x1xf32>
    %cst_120 = arith.constant 3.200000e+01 : f32
    %245 = vector.broadcast %cst_120 : f32 to vector<8x1xf32>
    %246 = arith.divf %244, %245 : vector<8x1xf32>
    %247 = vector.broadcast %239 : vector<8x1xf32> to vector<8x32xf32>
    %248 = arith.subf %231, %247 : vector<8x32xf32>
    %cst_121 = arith.constant 9.99999974E-6 : f32
    %249 = vector.broadcast %cst_121 : f32 to vector<8x1xf32>
    %250 = arith.addf %246, %249 : vector<8x1xf32>
    %251 = math.rsqrt %250 : vector<8x1xf32>
    %252 = vector.broadcast %251 : vector<8x1xf32> to vector<8x32xf32>
    %253 = arith.mulf %248, %252 : vector<8x32xf32>
    %254 = vector.broadcast %233 : vector<1x32xf32> to vector<8x32xf32>
    %255 = arith.mulf %253, %254 : vector<8x32xf32>
    %256 = vector.broadcast %235 : vector<1x32xf32> to vector<8x32xf32>
    %257 = arith.addf %255, %256 : vector<8x32xf32>
    %c0_122 = arith.constant 0 : index
    %c0_123 = arith.constant 0 : index
    %c0_124 = arith.constant 0 : index
    %258 = vector.load %arg23[%c0_122, %c0_123, %c0_124] : memref<2x32x64xf32, #tpu.memory_space<vmem>>, vector<1x32x64xf32>
    %259 = vector.shape_cast %258 : vector<1x32x64xf32> to vector<32x64xf32>
    %c0_125 = arith.constant 0 : index
    %c0_126 = arith.constant 0 : index
    %c0_127 = arith.constant 0 : index
    %260 = vector.load %arg25[%c0_125, %c0_126, %c0_127] : memref<2x64x32xf32, #tpu.memory_space<vmem>>, vector<1x64x32xf32>
    %261 = vector.shape_cast %260 : vector<1x64x32xf32> to vector<64x32xf32>
    %cst_128 = arith.constant dense<0.000000e+00> : vector<8x64xf32>
    %262 = tpu.matmul %257, %259, %cst_128 {dimension_numbers = #tpu.dot_dimension_numbers<[1], [0], [0], [1], [0, 0, 1, 1], [], []>} : vector<8x32xf32>, vector<32x64xf32>, vector<8x64xf32> -> vector<8x64xf32>
    %c0_129 = arith.constant 0 : index
    %c0_130 = arith.constant 0 : index
    %c0_131 = arith.constant 0 : index
    %263 = vector.load %arg24[%c0_129, %c0_130, %c0_131] : memref<2x1x64xf32, #tpu.memory_space<vmem>>, vector<1x1x64xf32>
    %264 = vector.shape_cast %263 : vector<1x1x64xf32> to vector<1x64xf32>
    %265 = vector.broadcast %264 : vector<1x64xf32> to vector<8x64xf32>
    %266 = arith.addf %262, %265 : vector<8x64xf32>
    %cst_132 = arith.constant 0.000000e+00 : f32
    %267 = vector.broadcast %cst_132 : f32 to vector<8x64xf32>
    %268 = arith.maximumf %266, %267 : vector<8x64xf32>
    %cst_133 = arith.constant dense<0.000000e+00> : vector<8x32xf32>
    %269 = tpu.matmul %268, %261, %cst_133 {dimension_numbers = #tpu.dot_dimension_numbers<[1], [0], [0], [1], [0, 0, 1, 1], [], []>} : vector<8x64xf32>, vector<64x32xf32>, vector<8x32xf32> -> vector<8x32xf32>
    %270 = arith.addf %257, %269 : vector<8x32xf32>
    %c0_134 = arith.constant 0 : index
    %c0_135 = arith.constant 0 : index
    %c0_136 = arith.constant 0 : index
    %271 = vector.load %arg26[%c0_134, %c0_135, %c0_136] : memref<2x1x32xf32, #tpu.memory_space<vmem>>, vector<1x1x32xf32>
    %272 = vector.shape_cast %271 : vector<1x1x32xf32> to vector<1x32xf32>
    %273 = vector.broadcast %272 : vector<1x32xf32> to vector<8x32xf32>
    %274 = arith.addf %270, %273 : vector<8x32xf32>
    %c0_137 = arith.constant 0 : index
    %c0_138 = arith.constant 0 : index
    %c0_139 = arith.constant 0 : index
    %275 = vector.load %arg27[%c0_137, %c0_138, %c0_139] : memref<2x1x32xf32, #tpu.memory_space<vmem>>, vector<1x1x32xf32>
    %276 = vector.shape_cast %275 : vector<1x1x32xf32> to vector<1x32xf32>
    %c0_140 = arith.constant 0 : index
    %c0_141 = arith.constant 0 : index
    %c0_142 = arith.constant 0 : index
    %277 = vector.load %arg28[%c0_140, %c0_141, %c0_142] : memref<2x1x32xf32, #tpu.memory_space<vmem>>, vector<1x1x32xf32>
    %278 = vector.shape_cast %277 : vector<1x1x32xf32> to vector<1x32xf32>
    %cst_143 = arith.constant dense<0.000000e+00> : vector<8xf32>
    %279 = vector.multi_reduction <add>, %274, %cst_143 [1] : vector<8x32xf32> to vector<8xf32>
    %280 = vector.shape_cast %279 : vector<8xf32> to vector<8x1xf32>
    %cst_144 = arith.constant 3.200000e+01 : f32
    %281 = vector.broadcast %cst_144 : f32 to vector<8x1xf32>
    %282 = arith.divf %280, %281 : vector<8x1xf32>
    %283 = vector.broadcast %282 : vector<8x1xf32> to vector<8x32xf32>
    %284 = arith.subf %274, %283 : vector<8x32xf32>
    %285 = arith.mulf %284, %284 : vector<8x32xf32>
    %cst_145 = arith.constant dense<0.000000e+00> : vector<8xf32>
    %286 = vector.multi_reduction <add>, %285, %cst_145 [1] : vector<8x32xf32> to vector<8xf32>
    %287 = vector.shape_cast %286 : vector<8xf32> to vector<8x1xf32>
    %cst_146 = arith.constant 3.200000e+01 : f32
    %288 = vector.broadcast %cst_146 : f32 to vector<8x1xf32>
    %289 = arith.divf %287, %288 : vector<8x1xf32>
    %290 = vector.broadcast %282 : vector<8x1xf32> to vector<8x32xf32>
    %291 = arith.subf %274, %290 : vector<8x32xf32>
    %cst_147 = arith.constant 9.99999974E-6 : f32
    %292 = vector.broadcast %cst_147 : f32 to vector<8x1xf32>
    %293 = arith.addf %289, %292 : vector<8x1xf32>
    %294 = math.rsqrt %293 : vector<8x1xf32>
    %295 = vector.broadcast %294 : vector<8x1xf32> to vector<8x32xf32>
    %296 = arith.mulf %291, %295 : vector<8x32xf32>
    %297 = vector.broadcast %276 : vector<1x32xf32> to vector<8x32xf32>
    %298 = arith.mulf %296, %297 : vector<8x32xf32>
    %299 = vector.broadcast %278 : vector<1x32xf32> to vector<8x32xf32>
    %300 = arith.addf %298, %299 : vector<8x32xf32>
    %c1 = arith.constant 1 : index
    %c0_148 = arith.constant 0 : index
    %c0_149 = arith.constant 0 : index
    %301 = vector.load %arg3[%c1, %c0_148, %c0_149] : memref<2x32x32xf32, #tpu.memory_space<vmem>>, vector<1x32x32xf32>
    %302 = vector.shape_cast %301 : vector<1x32x32xf32> to vector<32x32xf32>
    %c1_150 = arith.constant 1 : index
    %c0_151 = arith.constant 0 : index
    %c0_152 = arith.constant 0 : index
    %303 = vector.load %arg4[%c1_150, %c0_151, %c0_152] : memref<2x1x32xf32, #tpu.memory_space<vmem>>, vector<1x1x32xf32>
    %304 = vector.shape_cast %303 : vector<1x1x32xf32> to vector<1x32xf32>
    %c1_153 = arith.constant 1 : index
    %c0_154 = arith.constant 0 : index
    %c0_155 = arith.constant 0 : index
    %305 = vector.load %arg5[%c1_153, %c0_154, %c0_155] : memref<2x32x32xf32, #tpu.memory_space<vmem>>, vector<1x32x32xf32>
    %306 = vector.shape_cast %305 : vector<1x32x32xf32> to vector<32x32xf32>
    %c1_156 = arith.constant 1 : index
    %c0_157 = arith.constant 0 : index
    %c0_158 = arith.constant 0 : index
    %307 = vector.load %arg6[%c1_156, %c0_157, %c0_158] : memref<2x1x32xf32, #tpu.memory_space<vmem>>, vector<1x1x32xf32>
    %308 = vector.shape_cast %307 : vector<1x1x32xf32> to vector<1x32xf32>
    %c1_159 = arith.constant 1 : index
    %c0_160 = arith.constant 0 : index
    %c0_161 = arith.constant 0 : index
    %309 = vector.load %arg7[%c1_159, %c0_160, %c0_161] : memref<2x32x32xf32, #tpu.memory_space<vmem>>, vector<1x32x32xf32>
    %310 = vector.shape_cast %309 : vector<1x32x32xf32> to vector<32x32xf32>
    %c1_162 = arith.constant 1 : index
    %c0_163 = arith.constant 0 : index
    %c0_164 = arith.constant 0 : index
    %311 = vector.load %arg8[%c1_162, %c0_163, %c0_164] : memref<2x1x32xf32, #tpu.memory_space<vmem>>, vector<1x1x32xf32>
    %312 = vector.shape_cast %311 : vector<1x1x32xf32> to vector<1x32xf32>
    %c1_165 = arith.constant 1 : index
    %c0_166 = arith.constant 0 : index
    %c0_167 = arith.constant 0 : index
    %313 = vector.load %arg9[%c1_165, %c0_166, %c0_167] : memref<2x32x32xf32, #tpu.memory_space<vmem>>, vector<1x32x32xf32>
    %314 = vector.shape_cast %313 : vector<1x32x32xf32> to vector<32x32xf32>
    %c1_168 = arith.constant 1 : index
    %c0_169 = arith.constant 0 : index
    %c0_170 = arith.constant 0 : index
    %315 = vector.load %arg10[%c1_168, %c0_169, %c0_170] : memref<2x1x32xf32, #tpu.memory_space<vmem>>, vector<1x1x32xf32>
    %316 = vector.shape_cast %315 : vector<1x1x32xf32> to vector<1x32xf32>
    %cst_171 = arith.constant dense<0.000000e+00> : vector<8x32xf32>
    %317 = tpu.matmul %300, %302, %cst_171 {dimension_numbers = #tpu.dot_dimension_numbers<[1], [0], [0], [1], [0, 0, 1, 1], [], []>} : vector<8x32xf32>, vector<32x32xf32>, vector<8x32xf32> -> vector<8x32xf32>
    %318 = vector.broadcast %304 : vector<1x32xf32> to vector<8x32xf32>
    %319 = arith.addf %317, %318 : vector<8x32xf32>
    %cst_172 = arith.constant dense<0.000000e+00> : vector<8x32xf32>
    %320 = tpu.matmul %300, %306, %cst_172 {dimension_numbers = #tpu.dot_dimension_numbers<[1], [0], [0], [1], [0, 0, 1, 1], [], []>} : vector<8x32xf32>, vector<32x32xf32>, vector<8x32xf32> -> vector<8x32xf32>
    %321 = vector.broadcast %308 : vector<1x32xf32> to vector<8x32xf32>
    %322 = arith.addf %320, %321 : vector<8x32xf32>
    %cst_173 = arith.constant dense<0.000000e+00> : vector<8x32xf32>
    %323 = tpu.matmul %300, %310, %cst_173 {dimension_numbers = #tpu.dot_dimension_numbers<[1], [0], [0], [1], [0, 0, 1, 1], [], []>} : vector<8x32xf32>, vector<32x32xf32>, vector<8x32xf32> -> vector<8x32xf32>
    %324 = vector.broadcast %312 : vector<1x32xf32> to vector<8x32xf32>
    %325 = arith.addf %323, %324 : vector<8x32xf32>
    %cst_174 = arith.constant 0.000000e+00 : f32
    %326 = vector.broadcast %cst_174 : f32 to vector<8x32xf32>
    %327 = vector.extract_strided_slice %319 {offsets = [0, 0], sizes = [8, 8], strides = [1, 1]} : vector<8x32xf32> to vector<8x8xf32>
    %328 = vector.extract_strided_slice %322 {offsets = [0, 0], sizes = [8, 8], strides = [1, 1]} : vector<8x32xf32> to vector<8x8xf32>
    %329 = vector.extract_strided_slice %325 {offsets = [0, 0], sizes = [8, 8], strides = [1, 1]} : vector<8x32xf32> to vector<8x8xf32>
    %cst_175 = arith.constant dense<0.000000e+00> : vector<8x8xf32>
    %330 = tpu.matmul %327, %328, %cst_175 {dimension_numbers = #tpu.dot_dimension_numbers<[1], [1], [0], [0], [0, 0, 1, 0], [], []>} : vector<8x8xf32>, vector<8x8xf32>, vector<8x8xf32> -> vector<8x8xf32>
    %cst_176 = arith.constant dense<0xFF800000> : vector<8xf32>
    %331 = vector.multi_reduction <maximumf>, %330, %cst_176 [1] : vector<8x8xf32> to vector<8xf32>
    %332 = vector.shape_cast %331 : vector<8xf32> to vector<8x1xf32>
    %333 = vector.broadcast %332 : vector<8x1xf32> to vector<8x8xf32>
    %334 = arith.subf %330, %333 : vector<8x8xf32>
    %335 = math.exp %334 : vector<8x8xf32>
    %cst_177 = arith.constant dense<0.000000e+00> : vector<8xf32>
    %336 = vector.multi_reduction <add>, %335, %cst_177 [1] : vector<8x8xf32> to vector<8xf32>
    %337 = vector.shape_cast %336 : vector<8xf32> to vector<8x1xf32>
    %338 = tpu.reciprocal %337 {approx = true} : vector<8x1xf32> -> vector<8x1xf32>
    %339 = vector.broadcast %338 : vector<8x1xf32> to vector<8x8xf32>
    %340 = arith.mulf %335, %339 : vector<8x8xf32>
    %cst_178 = arith.constant dense<0.000000e+00> : vector<8x8xf32>
    %341 = tpu.matmul %340, %329, %cst_178 {dimension_numbers = #tpu.dot_dimension_numbers<[1], [0], [0], [1], [0, 0, 1, 1], [], []>} : vector<8x8xf32>, vector<8x8xf32>, vector<8x8xf32> -> vector<8x8xf32>
    %342 = vector.extract_strided_slice %314 {offsets = [0, 0], sizes = [8, 32], strides = [1, 1]} : vector<32x32xf32> to vector<8x32xf32>
    %cst_179 = arith.constant dense<0.000000e+00> : vector<8x32xf32>
    %343 = tpu.matmul %341, %342, %cst_179 {dimension_numbers = #tpu.dot_dimension_numbers<[1], [0], [0], [1], [0, 0, 1, 1], [], []>} : vector<8x8xf32>, vector<8x32xf32>, vector<8x32xf32> -> vector<8x32xf32>
    %344 = arith.addf %326, %343 : vector<8x32xf32>
    %345 = vector.extract_strided_slice %319 {offsets = [0, 8], sizes = [8, 8], strides = [1, 1]} : vector<8x32xf32> to vector<8x8xf32>
    %346 = vector.extract_strided_slice %322 {offsets = [0, 8], sizes = [8, 8], strides = [1, 1]} : vector<8x32xf32> to vector<8x8xf32>
    %347 = vector.extract_strided_slice %325 {offsets = [0, 8], sizes = [8, 8], strides = [1, 1]} : vector<8x32xf32> to vector<8x8xf32>
    %cst_180 = arith.constant dense<0.000000e+00> : vector<8x8xf32>
    %348 = tpu.matmul %345, %346, %cst_180 {dimension_numbers = #tpu.dot_dimension_numbers<[1], [1], [0], [0], [0, 0, 1, 0], [], []>} : vector<8x8xf32>, vector<8x8xf32>, vector<8x8xf32> -> vector<8x8xf32>
    %cst_181 = arith.constant dense<0xFF800000> : vector<8xf32>
    %349 = vector.multi_reduction <maximumf>, %348, %cst_181 [1] : vector<8x8xf32> to vector<8xf32>
    %350 = vector.shape_cast %349 : vector<8xf32> to vector<8x1xf32>
    %351 = vector.broadcast %350 : vector<8x1xf32> to vector<8x8xf32>
    %352 = arith.subf %348, %351 : vector<8x8xf32>
    %353 = math.exp %352 : vector<8x8xf32>
    %cst_182 = arith.constant dense<0.000000e+00> : vector<8xf32>
    %354 = vector.multi_reduction <add>, %353, %cst_182 [1] : vector<8x8xf32> to vector<8xf32>
    %355 = vector.shape_cast %354 : vector<8xf32> to vector<8x1xf32>
    %356 = tpu.reciprocal %355 {approx = true} : vector<8x1xf32> -> vector<8x1xf32>
    %357 = vector.broadcast %356 : vector<8x1xf32> to vector<8x8xf32>
    %358 = arith.mulf %353, %357 : vector<8x8xf32>
    %cst_183 = arith.constant dense<0.000000e+00> : vector<8x8xf32>
    %359 = tpu.matmul %358, %347, %cst_183 {dimension_numbers = #tpu.dot_dimension_numbers<[1], [0], [0], [1], [0, 0, 1, 1], [], []>} : vector<8x8xf32>, vector<8x8xf32>, vector<8x8xf32> -> vector<8x8xf32>
    %360 = vector.extract_strided_slice %314 {offsets = [8, 0], sizes = [8, 32], strides = [1, 1]} : vector<32x32xf32> to vector<8x32xf32>
    %cst_184 = arith.constant dense<0.000000e+00> : vector<8x32xf32>
    %361 = tpu.matmul %359, %360, %cst_184 {dimension_numbers = #tpu.dot_dimension_numbers<[1], [0], [0], [1], [0, 0, 1, 1], [], []>} : vector<8x8xf32>, vector<8x32xf32>, vector<8x32xf32> -> vector<8x32xf32>
    %362 = arith.addf %344, %361 : vector<8x32xf32>
    %363 = vector.extract_strided_slice %319 {offsets = [0, 16], sizes = [8, 8], strides = [1, 1]} : vector<8x32xf32> to vector<8x8xf32>
    %364 = vector.extract_strided_slice %322 {offsets = [0, 16], sizes = [8, 8], strides = [1, 1]} : vector<8x32xf32> to vector<8x8xf32>
    %365 = vector.extract_strided_slice %325 {offsets = [0, 16], sizes = [8, 8], strides = [1, 1]} : vector<8x32xf32> to vector<8x8xf32>
    %cst_185 = arith.constant dense<0.000000e+00> : vector<8x8xf32>
    %366 = tpu.matmul %363, %364, %cst_185 {dimension_numbers = #tpu.dot_dimension_numbers<[1], [1], [0], [0], [0, 0, 1, 0], [], []>} : vector<8x8xf32>, vector<8x8xf32>, vector<8x8xf32> -> vector<8x8xf32>
    %cst_186 = arith.constant dense<0xFF800000> : vector<8xf32>
    %367 = vector.multi_reduction <maximumf>, %366, %cst_186 [1] : vector<8x8xf32> to vector<8xf32>
    %368 = vector.shape_cast %367 : vector<8xf32> to vector<8x1xf32>
    %369 = vector.broadcast %368 : vector<8x1xf32> to vector<8x8xf32>
    %370 = arith.subf %366, %369 : vector<8x8xf32>
    %371 = math.exp %370 : vector<8x8xf32>
    %cst_187 = arith.constant dense<0.000000e+00> : vector<8xf32>
    %372 = vector.multi_reduction <add>, %371, %cst_187 [1] : vector<8x8xf32> to vector<8xf32>
    %373 = vector.shape_cast %372 : vector<8xf32> to vector<8x1xf32>
    %374 = tpu.reciprocal %373 {approx = true} : vector<8x1xf32> -> vector<8x1xf32>
    %375 = vector.broadcast %374 : vector<8x1xf32> to vector<8x8xf32>
    %376 = arith.mulf %371, %375 : vector<8x8xf32>
    %cst_188 = arith.constant dense<0.000000e+00> : vector<8x8xf32>
    %377 = tpu.matmul %376, %365, %cst_188 {dimension_numbers = #tpu.dot_dimension_numbers<[1], [0], [0], [1], [0, 0, 1, 1], [], []>} : vector<8x8xf32>, vector<8x8xf32>, vector<8x8xf32> -> vector<8x8xf32>
    %378 = vector.extract_strided_slice %314 {offsets = [16, 0], sizes = [8, 32], strides = [1, 1]} : vector<32x32xf32> to vector<8x32xf32>
    %cst_189 = arith.constant dense<0.000000e+00> : vector<8x32xf32>
    %379 = tpu.matmul %377, %378, %cst_189 {dimension_numbers = #tpu.dot_dimension_numbers<[1], [0], [0], [1], [0, 0, 1, 1], [], []>} : vector<8x8xf32>, vector<8x32xf32>, vector<8x32xf32> -> vector<8x32xf32>
    %380 = arith.addf %362, %379 : vector<8x32xf32>
    %381 = vector.extract_strided_slice %319 {offsets = [0, 24], sizes = [8, 8], strides = [1, 1]} : vector<8x32xf32> to vector<8x8xf32>
    %382 = vector.extract_strided_slice %322 {offsets = [0, 24], sizes = [8, 8], strides = [1, 1]} : vector<8x32xf32> to vector<8x8xf32>
    %383 = vector.extract_strided_slice %325 {offsets = [0, 24], sizes = [8, 8], strides = [1, 1]} : vector<8x32xf32> to vector<8x8xf32>
    %cst_190 = arith.constant dense<0.000000e+00> : vector<8x8xf32>
    %384 = tpu.matmul %381, %382, %cst_190 {dimension_numbers = #tpu.dot_dimension_numbers<[1], [1], [0], [0], [0, 0, 1, 0], [], []>} : vector<8x8xf32>, vector<8x8xf32>, vector<8x8xf32> -> vector<8x8xf32>
    %cst_191 = arith.constant dense<0xFF800000> : vector<8xf32>
    %385 = vector.multi_reduction <maximumf>, %384, %cst_191 [1] : vector<8x8xf32> to vector<8xf32>
    %386 = vector.shape_cast %385 : vector<8xf32> to vector<8x1xf32>
    %387 = vector.broadcast %386 : vector<8x1xf32> to vector<8x8xf32>
    %388 = arith.subf %384, %387 : vector<8x8xf32>
    %389 = math.exp %388 : vector<8x8xf32>
    %cst_192 = arith.constant dense<0.000000e+00> : vector<8xf32>
    %390 = vector.multi_reduction <add>, %389, %cst_192 [1] : vector<8x8xf32> to vector<8xf32>
    %391 = vector.shape_cast %390 : vector<8xf32> to vector<8x1xf32>
    %392 = tpu.reciprocal %391 {approx = true} : vector<8x1xf32> -> vector<8x1xf32>
    %393 = vector.broadcast %392 : vector<8x1xf32> to vector<8x8xf32>
    %394 = arith.mulf %389, %393 : vector<8x8xf32>
    %cst_193 = arith.constant dense<0.000000e+00> : vector<8x8xf32>
    %395 = tpu.matmul %394, %383, %cst_193 {dimension_numbers = #tpu.dot_dimension_numbers<[1], [0], [0], [1], [0, 0, 1, 1], [], []>} : vector<8x8xf32>, vector<8x8xf32>, vector<8x8xf32> -> vector<8x8xf32>
    %396 = vector.extract_strided_slice %314 {offsets = [24, 0], sizes = [8, 32], strides = [1, 1]} : vector<32x32xf32> to vector<8x32xf32>
    %cst_194 = arith.constant dense<0.000000e+00> : vector<8x32xf32>
    %397 = tpu.matmul %395, %396, %cst_194 {dimension_numbers = #tpu.dot_dimension_numbers<[1], [0], [0], [1], [0, 0, 1, 1], [], []>} : vector<8x8xf32>, vector<8x32xf32>, vector<8x32xf32> -> vector<8x32xf32>
    %398 = arith.addf %380, %397 : vector<8x32xf32>
    %399 = arith.addf %300, %398 : vector<8x32xf32>
    %400 = vector.broadcast %316 : vector<1x32xf32> to vector<8x32xf32>
    %401 = arith.addf %399, %400 : vector<8x32xf32>
    %c1_195 = arith.constant 1 : index
    %c0_196 = arith.constant 0 : index
    %c0_197 = arith.constant 0 : index
    %402 = vector.load %arg11[%c1_195, %c0_196, %c0_197] : memref<2x1x32xf32, #tpu.memory_space<vmem>>, vector<1x1x32xf32>
    %403 = vector.shape_cast %402 : vector<1x1x32xf32> to vector<1x32xf32>
    %c1_198 = arith.constant 1 : index
    %c0_199 = arith.constant 0 : index
    %c0_200 = arith.constant 0 : index
    %404 = vector.load %arg12[%c1_198, %c0_199, %c0_200] : memref<2x1x32xf32, #tpu.memory_space<vmem>>, vector<1x1x32xf32>
    %405 = vector.shape_cast %404 : vector<1x1x32xf32> to vector<1x32xf32>
    %cst_201 = arith.constant dense<0.000000e+00> : vector<8xf32>
    %406 = vector.multi_reduction <add>, %401, %cst_201 [1] : vector<8x32xf32> to vector<8xf32>
    %407 = vector.shape_cast %406 : vector<8xf32> to vector<8x1xf32>
    %cst_202 = arith.constant 3.200000e+01 : f32
    %408 = vector.broadcast %cst_202 : f32 to vector<8x1xf32>
    %409 = arith.divf %407, %408 : vector<8x1xf32>
    %410 = vector.broadcast %409 : vector<8x1xf32> to vector<8x32xf32>
    %411 = arith.subf %401, %410 : vector<8x32xf32>
    %412 = arith.mulf %411, %411 : vector<8x32xf32>
    %cst_203 = arith.constant dense<0.000000e+00> : vector<8xf32>
    %413 = vector.multi_reduction <add>, %412, %cst_203 [1] : vector<8x32xf32> to vector<8xf32>
    %414 = vector.shape_cast %413 : vector<8xf32> to vector<8x1xf32>
    %cst_204 = arith.constant 3.200000e+01 : f32
    %415 = vector.broadcast %cst_204 : f32 to vector<8x1xf32>
    %416 = arith.divf %414, %415 : vector<8x1xf32>
    %417 = vector.broadcast %409 : vector<8x1xf32> to vector<8x32xf32>
    %418 = arith.subf %401, %417 : vector<8x32xf32>
    %cst_205 = arith.constant 9.99999974E-6 : f32
    %419 = vector.broadcast %cst_205 : f32 to vector<8x1xf32>
    %420 = arith.addf %416, %419 : vector<8x1xf32>
    %421 = math.rsqrt %420 : vector<8x1xf32>
    %422 = vector.broadcast %421 : vector<8x1xf32> to vector<8x32xf32>
    %423 = arith.mulf %418, %422 : vector<8x32xf32>
    %424 = vector.broadcast %403 : vector<1x32xf32> to vector<8x32xf32>
    %425 = arith.mulf %423, %424 : vector<8x32xf32>
    %426 = vector.broadcast %405 : vector<1x32xf32> to vector<8x32xf32>
    %427 = arith.addf %425, %426 : vector<8x32xf32>
    %c1_206 = arith.constant 1 : index
    %c0_207 = arith.constant 0 : index
    %c0_208 = arith.constant 0 : index
    %428 = vector.load %arg13[%c1_206, %c0_207, %c0_208] : memref<2x32x32xf32, #tpu.memory_space<vmem>>, vector<1x32x32xf32>
    %429 = vector.shape_cast %428 : vector<1x32x32xf32> to vector<32x32xf32>
    %c1_209 = arith.constant 1 : index
    %c0_210 = arith.constant 0 : index
    %c0_211 = arith.constant 0 : index
    %430 = vector.load %arg14[%c1_209, %c0_210, %c0_211] : memref<2x1x32xf32, #tpu.memory_space<vmem>>, vector<1x1x32xf32>
    %431 = vector.shape_cast %430 : vector<1x1x32xf32> to vector<1x32xf32>
    %c1_212 = arith.constant 1 : index
    %c0_213 = arith.constant 0 : index
    %c0_214 = arith.constant 0 : index
    %432 = vector.load %arg15[%c1_212, %c0_213, %c0_214] : memref<2x32x32xf32, #tpu.memory_space<vmem>>, vector<1x32x32xf32>
    %433 = vector.shape_cast %432 : vector<1x32x32xf32> to vector<32x32xf32>
    %c1_215 = arith.constant 1 : index
    %c0_216 = arith.constant 0 : index
    %c0_217 = arith.constant 0 : index
    %434 = vector.load %arg16[%c1_215, %c0_216, %c0_217] : memref<2x1x32xf32, #tpu.memory_space<vmem>>, vector<1x1x32xf32>
    %435 = vector.shape_cast %434 : vector<1x1x32xf32> to vector<1x32xf32>
    %c1_218 = arith.constant 1 : index
    %c0_219 = arith.constant 0 : index
    %c0_220 = arith.constant 0 : index
    %436 = vector.load %arg17[%c1_218, %c0_219, %c0_220] : memref<2x32x32xf32, #tpu.memory_space<vmem>>, vector<1x32x32xf32>
    %437 = vector.shape_cast %436 : vector<1x32x32xf32> to vector<32x32xf32>
    %c1_221 = arith.constant 1 : index
    %c0_222 = arith.constant 0 : index
    %c0_223 = arith.constant 0 : index
    %438 = vector.load %arg18[%c1_221, %c0_222, %c0_223] : memref<2x1x32xf32, #tpu.memory_space<vmem>>, vector<1x1x32xf32>
    %439 = vector.shape_cast %438 : vector<1x1x32xf32> to vector<1x32xf32>
    %c1_224 = arith.constant 1 : index
    %c0_225 = arith.constant 0 : index
    %c0_226 = arith.constant 0 : index
    %440 = vector.load %arg19[%c1_224, %c0_225, %c0_226] : memref<2x32x32xf32, #tpu.memory_space<vmem>>, vector<1x32x32xf32>
    %441 = vector.shape_cast %440 : vector<1x32x32xf32> to vector<32x32xf32>
    %c1_227 = arith.constant 1 : index
    %c0_228 = arith.constant 0 : index
    %c0_229 = arith.constant 0 : index
    %442 = vector.load %arg20[%c1_227, %c0_228, %c0_229] : memref<2x1x32xf32, #tpu.memory_space<vmem>>, vector<1x1x32xf32>
    %443 = vector.shape_cast %442 : vector<1x1x32xf32> to vector<1x32xf32>
    %cst_230 = arith.constant dense<0.000000e+00> : vector<8x32xf32>
    %444 = tpu.matmul %427, %429, %cst_230 {dimension_numbers = #tpu.dot_dimension_numbers<[1], [0], [0], [1], [0, 0, 1, 1], [], []>} : vector<8x32xf32>, vector<32x32xf32>, vector<8x32xf32> -> vector<8x32xf32>
    %445 = vector.broadcast %431 : vector<1x32xf32> to vector<8x32xf32>
    %446 = arith.addf %444, %445 : vector<8x32xf32>
    %cst_231 = arith.constant dense<0.000000e+00> : vector<8x32xf32>
    %447 = tpu.matmul %3, %433, %cst_231 {dimension_numbers = #tpu.dot_dimension_numbers<[1], [0], [0], [1], [0, 0, 1, 1], [], []>} : vector<8x32xf32>, vector<32x32xf32>, vector<8x32xf32> -> vector<8x32xf32>
    %448 = vector.broadcast %435 : vector<1x32xf32> to vector<8x32xf32>
    %449 = arith.addf %447, %448 : vector<8x32xf32>
    %cst_232 = arith.constant dense<0.000000e+00> : vector<8x32xf32>
    %450 = tpu.matmul %3, %437, %cst_232 {dimension_numbers = #tpu.dot_dimension_numbers<[1], [0], [0], [1], [0, 0, 1, 1], [], []>} : vector<8x32xf32>, vector<32x32xf32>, vector<8x32xf32> -> vector<8x32xf32>
    %451 = vector.broadcast %439 : vector<1x32xf32> to vector<8x32xf32>
    %452 = arith.addf %450, %451 : vector<8x32xf32>
    %cst_233 = arith.constant 0.000000e+00 : f32
    %453 = vector.broadcast %cst_233 : f32 to vector<8x32xf32>
    %454 = vector.extract_strided_slice %446 {offsets = [0, 0], sizes = [8, 8], strides = [1, 1]} : vector<8x32xf32> to vector<8x8xf32>
    %455 = vector.extract_strided_slice %449 {offsets = [0, 0], sizes = [8, 8], strides = [1, 1]} : vector<8x32xf32> to vector<8x8xf32>
    %456 = vector.extract_strided_slice %452 {offsets = [0, 0], sizes = [8, 8], strides = [1, 1]} : vector<8x32xf32> to vector<8x8xf32>
    %cst_234 = arith.constant dense<0.000000e+00> : vector<8x8xf32>
    %457 = tpu.matmul %454, %455, %cst_234 {dimension_numbers = #tpu.dot_dimension_numbers<[1], [1], [0], [0], [0, 0, 1, 0], [], []>} : vector<8x8xf32>, vector<8x8xf32>, vector<8x8xf32> -> vector<8x8xf32>
    %cst_235 = arith.constant dense<0xFF800000> : vector<8xf32>
    %458 = vector.multi_reduction <maximumf>, %457, %cst_235 [1] : vector<8x8xf32> to vector<8xf32>
    %459 = vector.shape_cast %458 : vector<8xf32> to vector<8x1xf32>
    %460 = vector.broadcast %459 : vector<8x1xf32> to vector<8x8xf32>
    %461 = arith.subf %457, %460 : vector<8x8xf32>
    %462 = math.exp %461 : vector<8x8xf32>
    %cst_236 = arith.constant dense<0.000000e+00> : vector<8xf32>
    %463 = vector.multi_reduction <add>, %462, %cst_236 [1] : vector<8x8xf32> to vector<8xf32>
    %464 = vector.shape_cast %463 : vector<8xf32> to vector<8x1xf32>
    %465 = tpu.reciprocal %464 {approx = true} : vector<8x1xf32> -> vector<8x1xf32>
    %466 = vector.broadcast %465 : vector<8x1xf32> to vector<8x8xf32>
    %467 = arith.mulf %462, %466 : vector<8x8xf32>
    %cst_237 = arith.constant dense<0.000000e+00> : vector<8x8xf32>
    %468 = tpu.matmul %467, %456, %cst_237 {dimension_numbers = #tpu.dot_dimension_numbers<[1], [0], [0], [1], [0, 0, 1, 1], [], []>} : vector<8x8xf32>, vector<8x8xf32>, vector<8x8xf32> -> vector<8x8xf32>
    %469 = vector.extract_strided_slice %441 {offsets = [0, 0], sizes = [8, 32], strides = [1, 1]} : vector<32x32xf32> to vector<8x32xf32>
    %cst_238 = arith.constant dense<0.000000e+00> : vector<8x32xf32>
    %470 = tpu.matmul %468, %469, %cst_238 {dimension_numbers = #tpu.dot_dimension_numbers<[1], [0], [0], [1], [0, 0, 1, 1], [], []>} : vector<8x8xf32>, vector<8x32xf32>, vector<8x32xf32> -> vector<8x32xf32>
    %471 = arith.addf %453, %470 : vector<8x32xf32>
    %472 = vector.extract_strided_slice %446 {offsets = [0, 8], sizes = [8, 8], strides = [1, 1]} : vector<8x32xf32> to vector<8x8xf32>
    %473 = vector.extract_strided_slice %449 {offsets = [0, 8], sizes = [8, 8], strides = [1, 1]} : vector<8x32xf32> to vector<8x8xf32>
    %474 = vector.extract_strided_slice %452 {offsets = [0, 8], sizes = [8, 8], strides = [1, 1]} : vector<8x32xf32> to vector<8x8xf32>
    %cst_239 = arith.constant dense<0.000000e+00> : vector<8x8xf32>
    %475 = tpu.matmul %472, %473, %cst_239 {dimension_numbers = #tpu.dot_dimension_numbers<[1], [1], [0], [0], [0, 0, 1, 0], [], []>} : vector<8x8xf32>, vector<8x8xf32>, vector<8x8xf32> -> vector<8x8xf32>
    %cst_240 = arith.constant dense<0xFF800000> : vector<8xf32>
    %476 = vector.multi_reduction <maximumf>, %475, %cst_240 [1] : vector<8x8xf32> to vector<8xf32>
    %477 = vector.shape_cast %476 : vector<8xf32> to vector<8x1xf32>
    %478 = vector.broadcast %477 : vector<8x1xf32> to vector<8x8xf32>
    %479 = arith.subf %475, %478 : vector<8x8xf32>
    %480 = math.exp %479 : vector<8x8xf32>
    %cst_241 = arith.constant dense<0.000000e+00> : vector<8xf32>
    %481 = vector.multi_reduction <add>, %480, %cst_241 [1] : vector<8x8xf32> to vector<8xf32>
    %482 = vector.shape_cast %481 : vector<8xf32> to vector<8x1xf32>
    %483 = tpu.reciprocal %482 {approx = true} : vector<8x1xf32> -> vector<8x1xf32>
    %484 = vector.broadcast %483 : vector<8x1xf32> to vector<8x8xf32>
    %485 = arith.mulf %480, %484 : vector<8x8xf32>
    %cst_242 = arith.constant dense<0.000000e+00> : vector<8x8xf32>
    %486 = tpu.matmul %485, %474, %cst_242 {dimension_numbers = #tpu.dot_dimension_numbers<[1], [0], [0], [1], [0, 0, 1, 1], [], []>} : vector<8x8xf32>, vector<8x8xf32>, vector<8x8xf32> -> vector<8x8xf32>
    %487 = vector.extract_strided_slice %441 {offsets = [8, 0], sizes = [8, 32], strides = [1, 1]} : vector<32x32xf32> to vector<8x32xf32>
    %cst_243 = arith.constant dense<0.000000e+00> : vector<8x32xf32>
    %488 = tpu.matmul %486, %487, %cst_243 {dimension_numbers = #tpu.dot_dimension_numbers<[1], [0], [0], [1], [0, 0, 1, 1], [], []>} : vector<8x8xf32>, vector<8x32xf32>, vector<8x32xf32> -> vector<8x32xf32>
    %489 = arith.addf %471, %488 : vector<8x32xf32>
    %490 = vector.extract_strided_slice %446 {offsets = [0, 16], sizes = [8, 8], strides = [1, 1]} : vector<8x32xf32> to vector<8x8xf32>
    %491 = vector.extract_strided_slice %449 {offsets = [0, 16], sizes = [8, 8], strides = [1, 1]} : vector<8x32xf32> to vector<8x8xf32>
    %492 = vector.extract_strided_slice %452 {offsets = [0, 16], sizes = [8, 8], strides = [1, 1]} : vector<8x32xf32> to vector<8x8xf32>
    %cst_244 = arith.constant dense<0.000000e+00> : vector<8x8xf32>
    %493 = tpu.matmul %490, %491, %cst_244 {dimension_numbers = #tpu.dot_dimension_numbers<[1], [1], [0], [0], [0, 0, 1, 0], [], []>} : vector<8x8xf32>, vector<8x8xf32>, vector<8x8xf32> -> vector<8x8xf32>
    %cst_245 = arith.constant dense<0xFF800000> : vector<8xf32>
    %494 = vector.multi_reduction <maximumf>, %493, %cst_245 [1] : vector<8x8xf32> to vector<8xf32>
    %495 = vector.shape_cast %494 : vector<8xf32> to vector<8x1xf32>
    %496 = vector.broadcast %495 : vector<8x1xf32> to vector<8x8xf32>
    %497 = arith.subf %493, %496 : vector<8x8xf32>
    %498 = math.exp %497 : vector<8x8xf32>
    %cst_246 = arith.constant dense<0.000000e+00> : vector<8xf32>
    %499 = vector.multi_reduction <add>, %498, %cst_246 [1] : vector<8x8xf32> to vector<8xf32>
    %500 = vector.shape_cast %499 : vector<8xf32> to vector<8x1xf32>
    %501 = tpu.reciprocal %500 {approx = true} : vector<8x1xf32> -> vector<8x1xf32>
    %502 = vector.broadcast %501 : vector<8x1xf32> to vector<8x8xf32>
    %503 = arith.mulf %498, %502 : vector<8x8xf32>
    %cst_247 = arith.constant dense<0.000000e+00> : vector<8x8xf32>
    %504 = tpu.matmul %503, %492, %cst_247 {dimension_numbers = #tpu.dot_dimension_numbers<[1], [0], [0], [1], [0, 0, 1, 1], [], []>} : vector<8x8xf32>, vector<8x8xf32>, vector<8x8xf32> -> vector<8x8xf32>
    %505 = vector.extract_strided_slice %441 {offsets = [16, 0], sizes = [8, 32], strides = [1, 1]} : vector<32x32xf32> to vector<8x32xf32>
    %cst_248 = arith.constant dense<0.000000e+00> : vector<8x32xf32>
    %506 = tpu.matmul %504, %505, %cst_248 {dimension_numbers = #tpu.dot_dimension_numbers<[1], [0], [0], [1], [0, 0, 1, 1], [], []>} : vector<8x8xf32>, vector<8x32xf32>, vector<8x32xf32> -> vector<8x32xf32>
    %507 = arith.addf %489, %506 : vector<8x32xf32>
    %508 = vector.extract_strided_slice %446 {offsets = [0, 24], sizes = [8, 8], strides = [1, 1]} : vector<8x32xf32> to vector<8x8xf32>
    %509 = vector.extract_strided_slice %449 {offsets = [0, 24], sizes = [8, 8], strides = [1, 1]} : vector<8x32xf32> to vector<8x8xf32>
    %510 = vector.extract_strided_slice %452 {offsets = [0, 24], sizes = [8, 8], strides = [1, 1]} : vector<8x32xf32> to vector<8x8xf32>
    %cst_249 = arith.constant dense<0.000000e+00> : vector<8x8xf32>
    %511 = tpu.matmul %508, %509, %cst_249 {dimension_numbers = #tpu.dot_dimension_numbers<[1], [1], [0], [0], [0, 0, 1, 0], [], []>} : vector<8x8xf32>, vector<8x8xf32>, vector<8x8xf32> -> vector<8x8xf32>
    %cst_250 = arith.constant dense<0xFF800000> : vector<8xf32>
    %512 = vector.multi_reduction <maximumf>, %511, %cst_250 [1] : vector<8x8xf32> to vector<8xf32>
    %513 = vector.shape_cast %512 : vector<8xf32> to vector<8x1xf32>
    %514 = vector.broadcast %513 : vector<8x1xf32> to vector<8x8xf32>
    %515 = arith.subf %511, %514 : vector<8x8xf32>
    %516 = math.exp %515 : vector<8x8xf32>
    %cst_251 = arith.constant dense<0.000000e+00> : vector<8xf32>
    %517 = vector.multi_reduction <add>, %516, %cst_251 [1] : vector<8x8xf32> to vector<8xf32>
    %518 = vector.shape_cast %517 : vector<8xf32> to vector<8x1xf32>
    %519 = tpu.reciprocal %518 {approx = true} : vector<8x1xf32> -> vector<8x1xf32>
    %520 = vector.broadcast %519 : vector<8x1xf32> to vector<8x8xf32>
    %521 = arith.mulf %516, %520 : vector<8x8xf32>
    %cst_252 = arith.constant dense<0.000000e+00> : vector<8x8xf32>
    %522 = tpu.matmul %521, %510, %cst_252 {dimension_numbers = #tpu.dot_dimension_numbers<[1], [0], [0], [1], [0, 0, 1, 1], [], []>} : vector<8x8xf32>, vector<8x8xf32>, vector<8x8xf32> -> vector<8x8xf32>
    %523 = vector.extract_strided_slice %441 {offsets = [24, 0], sizes = [8, 32], strides = [1, 1]} : vector<32x32xf32> to vector<8x32xf32>
    %cst_253 = arith.constant dense<0.000000e+00> : vector<8x32xf32>
    %524 = tpu.matmul %522, %523, %cst_253 {dimension_numbers = #tpu.dot_dimension_numbers<[1], [0], [0], [1], [0, 0, 1, 1], [], []>} : vector<8x8xf32>, vector<8x32xf32>, vector<8x32xf32> -> vector<8x32xf32>
    %525 = arith.addf %507, %524 : vector<8x32xf32>
    %526 = arith.addf %427, %525 : vector<8x32xf32>
    %527 = vector.broadcast %443 : vector<1x32xf32> to vector<8x32xf32>
    %528 = arith.addf %526, %527 : vector<8x32xf32>
    %c1_254 = arith.constant 1 : index
    %c0_255 = arith.constant 0 : index
    %c0_256 = arith.constant 0 : index
    %529 = vector.load %arg21[%c1_254, %c0_255, %c0_256] : memref<2x1x32xf32, #tpu.memory_space<vmem>>, vector<1x1x32xf32>
    %530 = vector.shape_cast %529 : vector<1x1x32xf32> to vector<1x32xf32>
    %c1_257 = arith.constant 1 : index
    %c0_258 = arith.constant 0 : index
    %c0_259 = arith.constant 0 : index
    %531 = vector.load %arg22[%c1_257, %c0_258, %c0_259] : memref<2x1x32xf32, #tpu.memory_space<vmem>>, vector<1x1x32xf32>
    %532 = vector.shape_cast %531 : vector<1x1x32xf32> to vector<1x32xf32>
    %cst_260 = arith.constant dense<0.000000e+00> : vector<8xf32>
    %533 = vector.multi_reduction <add>, %528, %cst_260 [1] : vector<8x32xf32> to vector<8xf32>
    %534 = vector.shape_cast %533 : vector<8xf32> to vector<8x1xf32>
    %cst_261 = arith.constant 3.200000e+01 : f32
    %535 = vector.broadcast %cst_261 : f32 to vector<8x1xf32>
    %536 = arith.divf %534, %535 : vector<8x1xf32>
    %537 = vector.broadcast %536 : vector<8x1xf32> to vector<8x32xf32>
    %538 = arith.subf %528, %537 : vector<8x32xf32>
    %539 = arith.mulf %538, %538 : vector<8x32xf32>
    %cst_262 = arith.constant dense<0.000000e+00> : vector<8xf32>
    %540 = vector.multi_reduction <add>, %539, %cst_262 [1] : vector<8x32xf32> to vector<8xf32>
    %541 = vector.shape_cast %540 : vector<8xf32> to vector<8x1xf32>
    %cst_263 = arith.constant 3.200000e+01 : f32
    %542 = vector.broadcast %cst_263 : f32 to vector<8x1xf32>
    %543 = arith.divf %541, %542 : vector<8x1xf32>
    %544 = vector.broadcast %536 : vector<8x1xf32> to vector<8x32xf32>
    %545 = arith.subf %528, %544 : vector<8x32xf32>
    %cst_264 = arith.constant 9.99999974E-6 : f32
    %546 = vector.broadcast %cst_264 : f32 to vector<8x1xf32>
    %547 = arith.addf %543, %546 : vector<8x1xf32>
    %548 = math.rsqrt %547 : vector<8x1xf32>
    %549 = vector.broadcast %548 : vector<8x1xf32> to vector<8x32xf32>
    %550 = arith.mulf %545, %549 : vector<8x32xf32>
    %551 = vector.broadcast %530 : vector<1x32xf32> to vector<8x32xf32>
    %552 = arith.mulf %550, %551 : vector<8x32xf32>
    %553 = vector.broadcast %532 : vector<1x32xf32> to vector<8x32xf32>
    %554 = arith.addf %552, %553 : vector<8x32xf32>
    %c1_265 = arith.constant 1 : index
    %c0_266 = arith.constant 0 : index
    %c0_267 = arith.constant 0 : index
    %555 = vector.load %arg23[%c1_265, %c0_266, %c0_267] : memref<2x32x64xf32, #tpu.memory_space<vmem>>, vector<1x32x64xf32>
    %556 = vector.shape_cast %555 : vector<1x32x64xf32> to vector<32x64xf32>
    %c1_268 = arith.constant 1 : index
    %c0_269 = arith.constant 0 : index
    %c0_270 = arith.constant 0 : index
    %557 = vector.load %arg25[%c1_268, %c0_269, %c0_270] : memref<2x64x32xf32, #tpu.memory_space<vmem>>, vector<1x64x32xf32>
    %558 = vector.shape_cast %557 : vector<1x64x32xf32> to vector<64x32xf32>
    %cst_271 = arith.constant dense<0.000000e+00> : vector<8x64xf32>
    %559 = tpu.matmul %554, %556, %cst_271 {dimension_numbers = #tpu.dot_dimension_numbers<[1], [0], [0], [1], [0, 0, 1, 1], [], []>} : vector<8x32xf32>, vector<32x64xf32>, vector<8x64xf32> -> vector<8x64xf32>
    %c1_272 = arith.constant 1 : index
    %c0_273 = arith.constant 0 : index
    %c0_274 = arith.constant 0 : index
    %560 = vector.load %arg24[%c1_272, %c0_273, %c0_274] : memref<2x1x64xf32, #tpu.memory_space<vmem>>, vector<1x1x64xf32>
    %561 = vector.shape_cast %560 : vector<1x1x64xf32> to vector<1x64xf32>
    %562 = vector.broadcast %561 : vector<1x64xf32> to vector<8x64xf32>
    %563 = arith.addf %559, %562 : vector<8x64xf32>
    %cst_275 = arith.constant 0.000000e+00 : f32
    %564 = vector.broadcast %cst_275 : f32 to vector<8x64xf32>
    %565 = arith.maximumf %563, %564 : vector<8x64xf32>
    %cst_276 = arith.constant dense<0.000000e+00> : vector<8x32xf32>
    %566 = tpu.matmul %565, %558, %cst_276 {dimension_numbers = #tpu.dot_dimension_numbers<[1], [0], [0], [1], [0, 0, 1, 1], [], []>} : vector<8x64xf32>, vector<64x32xf32>, vector<8x32xf32> -> vector<8x32xf32>
    %567 = arith.addf %554, %566 : vector<8x32xf32>
    %c1_277 = arith.constant 1 : index
    %c0_278 = arith.constant 0 : index
    %c0_279 = arith.constant 0 : index
    %568 = vector.load %arg26[%c1_277, %c0_278, %c0_279] : memref<2x1x32xf32, #tpu.memory_space<vmem>>, vector<1x1x32xf32>
    %569 = vector.shape_cast %568 : vector<1x1x32xf32> to vector<1x32xf32>
    %570 = vector.broadcast %569 : vector<1x32xf32> to vector<8x32xf32>
    %571 = arith.addf %567, %570 : vector<8x32xf32>
    %c1_280 = arith.constant 1 : index
    %c0_281 = arith.constant 0 : index
    %c0_282 = arith.constant 0 : index
    %572 = vector.load %arg27[%c1_280, %c0_281, %c0_282] : memref<2x1x32xf32, #tpu.memory_space<vmem>>, vector<1x1x32xf32>
    %573 = vector.shape_cast %572 : vector<1x1x32xf32> to vector<1x32xf32>
    %c1_283 = arith.constant 1 : index
    %c0_284 = arith.constant 0 : index
    %c0_285 = arith.constant 0 : index
    %574 = vector.load %arg28[%c1_283, %c0_284, %c0_285] : memref<2x1x32xf32, #tpu.memory_space<vmem>>, vector<1x1x32xf32>
    %575 = vector.shape_cast %574 : vector<1x1x32xf32> to vector<1x32xf32>
    %cst_286 = arith.constant dense<0.000000e+00> : vector<8xf32>
    %576 = vector.multi_reduction <add>, %571, %cst_286 [1] : vector<8x32xf32> to vector<8xf32>
    %577 = vector.shape_cast %576 : vector<8xf32> to vector<8x1xf32>
    %cst_287 = arith.constant 3.200000e+01 : f32
    %578 = vector.broadcast %cst_287 : f32 to vector<8x1xf32>
    %579 = arith.divf %577, %578 : vector<8x1xf32>
    %580 = vector.broadcast %579 : vector<8x1xf32> to vector<8x32xf32>
    %581 = arith.subf %571, %580 : vector<8x32xf32>
    %582 = arith.mulf %581, %581 : vector<8x32xf32>
    %cst_288 = arith.constant dense<0.000000e+00> : vector<8xf32>
    %583 = vector.multi_reduction <add>, %582, %cst_288 [1] : vector<8x32xf32> to vector<8xf32>
    %584 = vector.shape_cast %583 : vector<8xf32> to vector<8x1xf32>
    %cst_289 = arith.constant 3.200000e+01 : f32
    %585 = vector.broadcast %cst_289 : f32 to vector<8x1xf32>
    %586 = arith.divf %584, %585 : vector<8x1xf32>
    %587 = vector.broadcast %579 : vector<8x1xf32> to vector<8x32xf32>
    %588 = arith.subf %571, %587 : vector<8x32xf32>
    %cst_290 = arith.constant 9.99999974E-6 : f32
    %589 = vector.broadcast %cst_290 : f32 to vector<8x1xf32>
    %590 = arith.addf %586, %589 : vector<8x1xf32>
    %591 = math.rsqrt %590 : vector<8x1xf32>
    %592 = vector.broadcast %591 : vector<8x1xf32> to vector<8x32xf32>
    %593 = arith.mulf %588, %592 : vector<8x32xf32>
    %594 = vector.broadcast %573 : vector<1x32xf32> to vector<8x32xf32>
    %595 = arith.mulf %593, %594 : vector<8x32xf32>
    %596 = vector.broadcast %575 : vector<1x32xf32> to vector<8x32xf32>
    %597 = arith.addf %595, %596 : vector<8x32xf32>
    %c0_291 = arith.constant 0 : index
    %c0_292 = arith.constant 0 : index
    %598 = vector.load %arg29[%c0_291, %c0_292] : memref<1x32xf32, #tpu.memory_space<vmem>>, vector<1x32xf32>
    %c0_293 = arith.constant 0 : index
    %c0_294 = arith.constant 0 : index
    %599 = vector.load %arg30[%c0_293, %c0_294] : memref<1x32xf32, #tpu.memory_space<vmem>>, vector<1x32xf32>
    %cst_295 = arith.constant dense<0.000000e+00> : vector<8xf32>
    %600 = vector.multi_reduction <add>, %597, %cst_295 [1] : vector<8x32xf32> to vector<8xf32>
    %601 = vector.shape_cast %600 : vector<8xf32> to vector<8x1xf32>
    %cst_296 = arith.constant 3.200000e+01 : f32
    %602 = vector.broadcast %cst_296 : f32 to vector<8x1xf32>
    %603 = arith.divf %601, %602 : vector<8x1xf32>
    %604 = vector.broadcast %603 : vector<8x1xf32> to vector<8x32xf32>
    %605 = arith.subf %597, %604 : vector<8x32xf32>
    %606 = arith.mulf %605, %605 : vector<8x32xf32>
    %cst_297 = arith.constant dense<0.000000e+00> : vector<8xf32>
    %607 = vector.multi_reduction <add>, %606, %cst_297 [1] : vector<8x32xf32> to vector<8xf32>
    %608 = vector.shape_cast %607 : vector<8xf32> to vector<8x1xf32>
    %cst_298 = arith.constant 3.200000e+01 : f32
    %609 = vector.broadcast %cst_298 : f32 to vector<8x1xf32>
    %610 = arith.divf %608, %609 : vector<8x1xf32>
    %611 = vector.broadcast %603 : vector<8x1xf32> to vector<8x32xf32>
    %612 = arith.subf %597, %611 : vector<8x32xf32>
    %cst_299 = arith.constant 9.99999974E-6 : f32
    %613 = vector.broadcast %cst_299 : f32 to vector<8x1xf32>
    %614 = arith.addf %610, %613 : vector<8x1xf32>
    %615 = math.rsqrt %614 : vector<8x1xf32>
    %616 = vector.broadcast %615 : vector<8x1xf32> to vector<8x32xf32>
    %617 = arith.mulf %612, %616 : vector<8x32xf32>
    %618 = vector.broadcast %598 : vector<1x32xf32> to vector<8x32xf32>
    %619 = arith.mulf %617, %618 : vector<8x32xf32>
    %620 = vector.broadcast %599 : vector<1x32xf32> to vector<8x32xf32>
    %621 = arith.addf %619, %620 : vector<8x32xf32>
    %c0_300 = arith.constant 0 : index
    %c0_301 = arith.constant 0 : index
    %c0_302 = arith.constant 0 : index
    %622 = vector.load %arg31[%c0_300, %c0_301, %c0_302] : memref<1x8x32xf32, #tpu.memory_space<vmem>>, vector<1x8x32xf32>
    %623 = vector.shape_cast %622 : vector<1x8x32xf32> to vector<8x32xf32>
    %624 = vector.shape_cast %621 : vector<8x32xf32> to vector<1x8x32xf32>
    tpu.vector_store %arg31[%c0_300, %c0_301, %c0_302], %624 {strides = array<i32>} : memref<1x8x32xf32, #tpu.memory_space<vmem>>, vector<1x8x32xf32>,
    return
  }
  func.func @transform_0(%arg0: i32) -> (i32, i32, i32) {
    %c0_i32 = arith.constant 0 : i32
    %c0_i32_0 = arith.constant 0 : i32
    %c0_i32_1 = arith.constant 0 : i32
    return %arg0, %c0_i32, %c0_i32_0 : i32, i32, i32
  }
  func.func @transform_1(%arg0: i32) -> (i32, i32, i32) {
    %c0_i32 = arith.constant 0 : i32
    %c0_i32_0 = arith.constant 0 : i32
    %c0_i32_1 = arith.constant 0 : i32
    return %arg0, %c0_i32, %c0_i32_0 : i32, i32, i32
  }
  func.func @transform_2(%arg0: i32) -> (i32, i32, i32) {
    %c0_i32 = arith.constant 0 : i32
    %c0_i32_0 = arith.constant 0 : i32
    %c0_i32_1 = arith.constant 0 : i32
    %c0_i32_2 = arith.constant 0 : i32
    return %c0_i32, %c0_i32_0, %c0_i32_1 : i32, i32, i32
  }
  func.func @transform_3(%arg0: i32) -> (i32, i32, i32) {
    %c0_i32 = arith.constant 0 : i32
    %c0_i32_0 = arith.constant 0 : i32
    %c0_i32_1 = arith.constant 0 : i32
    %c0_i32_2 = arith.constant 0 : i32
    return %c0_i32, %c0_i32_0, %c0_i32_1 : i32, i32, i32
  }
  func.func @transform_4(%arg0: i32) -> (i32, i32, i32) {
    %c0_i32 = arith.constant 0 : i32
    %c0_i32_0 = arith.constant 0 : i32
    %c0_i32_1 = arith.constant 0 : i32
    %c0_i32_2 = arith.constant 0 : i32
    return %c0_i32, %c0_i32_0, %c0_i32_1 : i32, i32, i32
  }
  func.func @transform_5(%arg0: i32) -> (i32, i32, i32) {
    %c0_i32 = arith.constant 0 : i32
    %c0_i32_0 = arith.constant 0 : i32
    %c0_i32_1 = arith.constant 0 : i32
    %c0_i32_2 = arith.constant 0 : i32
    return %c0_i32, %c0_i32_0, %c0_i32_1 : i32, i32, i32
  }
  func.func @transform_6(%arg0: i32) -> (i32, i32, i32) {
    %c0_i32 = arith.constant 0 : i32
    %c0_i32_0 = arith.constant 0 : i32
    %c0_i32_1 = arith.constant 0 : i32
    %c0_i32_2 = arith.constant 0 : i32
    return %c0_i32, %c0_i32_0, %c0_i32_1 : i32, i32, i32
  }
  func.func @transform_7(%arg0: i32) -> (i32, i32, i32) {
    %c0_i32 = arith.constant 0 : i32
    %c0_i32_0 = arith.constant 0 : i32
    %c0_i32_1 = arith.constant 0 : i32
    %c0_i32_2 = arith.constant 0 : i32
    return %c0_i32, %c0_i32_0, %c0_i32_1 : i32, i32, i32
  }
  func.func @transform_8(%arg0: i32) -> (i32, i32, i32) {
    %c0_i32 = arith.constant 0 : i32
    %c0_i32_0 = arith.constant 0 : i32
    %c0_i32_1 = arith.constant 0 : i32
    %c0_i32_2 = arith.constant 0 : i32
    return %c0_i32, %c0_i32_0, %c0_i32_1 : i32, i32, i32
  }
  func.func @transform_9(%arg0: i32) -> (i32, i32, i32) {
    %c0_i32 = arith.constant 0 : i32
    %c0_i32_0 = arith.constant 0 : i32
    %c0_i32_1 = arith.constant 0 : i32
    %c0_i32_2 = arith.constant 0 : i32
    return %c0_i32, %c0_i32_0, %c0_i32_1 : i32, i32, i32
  }
  func.func @transform_10(%arg0: i32) -> (i32, i32, i32) {
    %c0_i32 = arith.constant 0 : i32
    %c0_i32_0 = arith.constant 0 : i32
    %c0_i32_1 = arith.constant 0 : i32
    %c0_i32_2 = arith.constant 0 : i32
    return %c0_i32, %c0_i32_0, %c0_i32_1 : i32, i32, i32
  }
  func.func @transform_11(%arg0: i32) -> (i32, i32, i32) {
    %c0_i32 = arith.constant 0 : i32
    %c0_i32_0 = arith.constant 0 : i32
    %c0_i32_1 = arith.constant 0 : i32
    %c0_i32_2 = arith.constant 0 : i32
    return %c0_i32, %c0_i32_0, %c0_i32_1 : i32, i32, i32
  }
  func.func @transform_12(%arg0: i32) -> (i32, i32, i32) {
    %c0_i32 = arith.constant 0 : i32
    %c0_i32_0 = arith.constant 0 : i32
    %c0_i32_1 = arith.constant 0 : i32
    %c0_i32_2 = arith.constant 0 : i32
    return %c0_i32, %c0_i32_0, %c0_i32_1 : i32, i32, i32
  }
  func.func @transform_13(%arg0: i32) -> (i32, i32, i32) {
    %c0_i32 = arith.constant 0 : i32
    %c0_i32_0 = arith.constant 0 : i32
    %c0_i32_1 = arith.constant 0 : i32
    %c0_i32_2 = arith.constant 0 : i32
    return %c0_i32, %c0_i32_0, %c0_i32_1 : i32, i32, i32
  }
  func.func @transform_14(%arg0: i32) -> (i32, i32, i32) {
    %c0_i32 = arith.constant 0 : i32
    %c0_i32_0 = arith.constant 0 : i32
    %c0_i32_1 = arith.constant 0 : i32
    %c0_i32_2 = arith.constant 0 : i32
    return %c0_i32, %c0_i32_0, %c0_i32_1 : i32, i32, i32
  }
  func.func @transform_15(%arg0: i32) -> (i32, i32, i32) {
    %c0_i32 = arith.constant 0 : i32
    %c0_i32_0 = arith.constant 0 : i32
    %c0_i32_1 = arith.constant 0 : i32
    %c0_i32_2 = arith.constant 0 : i32
    return %c0_i32, %c0_i32_0, %c0_i32_1 : i32, i32, i32
  }
  func.func @transform_16(%arg0: i32) -> (i32, i32, i32) {
    %c0_i32 = arith.constant 0 : i32
    %c0_i32_0 = arith.constant 0 : i32
    %c0_i32_1 = arith.constant 0 : i32
    %c0_i32_2 = arith.constant 0 : i32
    return %c0_i32, %c0_i32_0, %c0_i32_1 : i32, i32, i32
  }
  func.func @transform_17(%arg0: i32) -> (i32, i32, i32) {
    %c0_i32 = arith.constant 0 : i32
    %c0_i32_0 = arith.constant 0 : i32
    %c0_i32_1 = arith.constant 0 : i32
    %c0_i32_2 = arith.constant 0 : i32
    return %c0_i32, %c0_i32_0, %c0_i32_1 : i32, i32, i32
  }
  func.func @transform_18(%arg0: i32) -> (i32, i32, i32) {
    %c0_i32 = arith.constant 0 : i32
    %c0_i32_0 = arith.constant 0 : i32
    %c0_i32_1 = arith.constant 0 : i32
    %c0_i32_2 = arith.constant 0 : i32
    return %c0_i32, %c0_i32_0, %c0_i32_1 : i32, i32, i32
  }
  func.func @transform_19(%arg0: i32) -> (i32, i32, i32) {
    %c0_i32 = arith.constant 0 : i32
    %c0_i32_0 = arith.constant 0 : i32
    %c0_i32_1 = arith.constant 0 : i32
    %c0_i32_2 = arith.constant 0 : i32
    return %c0_i32, %c0_i32_0, %c0_i32_1 : i32, i32, i32
  }
  func.func @transform_20(%arg0: i32) -> (i32, i32, i32) {
    %c0_i32 = arith.constant 0 : i32
    %c0_i32_0 = arith.constant 0 : i32
    %c0_i32_1 = arith.constant 0 : i32
    %c0_i32_2 = arith.constant 0 : i32
    return %c0_i32, %c0_i32_0, %c0_i32_1 : i32, i32, i32
  }
  func.func @transform_21(%arg0: i32) -> (i32, i32, i32) {
    %c0_i32 = arith.constant 0 : i32
    %c0_i32_0 = arith.constant 0 : i32
    %c0_i32_1 = arith.constant 0 : i32
    %c0_i32_2 = arith.constant 0 : i32
    return %c0_i32, %c0_i32_0, %c0_i32_1 : i32, i32, i32
  }
  func.func @transform_22(%arg0: i32) -> (i32, i32, i32) {
    %c0_i32 = arith.constant 0 : i32
    %c0_i32_0 = arith.constant 0 : i32
    %c0_i32_1 = arith.constant 0 : i32
    %c0_i32_2 = arith.constant 0 : i32
    return %c0_i32, %c0_i32_0, %c0_i32_1 : i32, i32, i32
  }
  func.func @transform_23(%arg0: i32) -> (i32, i32, i32) {
    %c0_i32 = arith.constant 0 : i32
    %c0_i32_0 = arith.constant 0 : i32
    %c0_i32_1 = arith.constant 0 : i32
    %c0_i32_2 = arith.constant 0 : i32
    return %c0_i32, %c0_i32_0, %c0_i32_1 : i32, i32, i32
  }
  func.func @transform_24(%arg0: i32) -> (i32, i32, i32) {
    %c0_i32 = arith.constant 0 : i32
    %c0_i32_0 = arith.constant 0 : i32
    %c0_i32_1 = arith.constant 0 : i32
    %c0_i32_2 = arith.constant 0 : i32
    return %c0_i32, %c0_i32_0, %c0_i32_1 : i32, i32, i32
  }
  func.func @transform_25(%arg0: i32) -> (i32, i32, i32) {
    %c0_i32 = arith.constant 0 : i32
    %c0_i32_0 = arith.constant 0 : i32
    %c0_i32_1 = arith.constant 0 : i32
    %c0_i32_2 = arith.constant 0 : i32
    return %c0_i32, %c0_i32_0, %c0_i32_1 : i32, i32, i32
  }
  func.func @transform_26(%arg0: i32) -> (i32, i32, i32) {
    %c0_i32 = arith.constant 0 : i32
    %c0_i32_0 = arith.constant 0 : i32
    %c0_i32_1 = arith.constant 0 : i32
    %c0_i32_2 = arith.constant 0 : i32
    return %c0_i32, %c0_i32_0, %c0_i32_1 : i32, i32, i32
  }
  func.func @transform_27(%arg0: i32) -> (i32, i32, i32) {
    %c0_i32 = arith.constant 0 : i32
    %c0_i32_0 = arith.constant 0 : i32
    %c0_i32_1 = arith.constant 0 : i32
    %c0_i32_2 = arith.constant 0 : i32
    return %c0_i32, %c0_i32_0, %c0_i32_1 : i32, i32, i32
  }
  func.func @transform_28(%arg0: i32) -> (i32, i32) {
    %c0_i32 = arith.constant 0 : i32
    %c0_i32_0 = arith.constant 0 : i32
    %c0_i32_1 = arith.constant 0 : i32
    return %c0_i32, %c0_i32_0 : i32, i32
  }
  func.func @transform_29(%arg0: i32) -> (i32, i32) {
    %c0_i32 = arith.constant 0 : i32
    %c0_i32_0 = arith.constant 0 : i32
    %c0_i32_1 = arith.constant 0 : i32
    return %c0_i32, %c0_i32_0 : i32, i32
  }
  func.func @transform_30(%arg0: i32) -> (i32, i32, i32) {
    %c0_i32 = arith.constant 0 : i32
    %c0_i32_0 = arith.constant 0 : i32
    %c0_i32_1 = arith.constant 0 : i32
    return %arg0, %c0_i32, %c0_i32_0 : i32, i32, i32
  }
}

</mosaic_0001>

<llo_original>
// kernel: miss_decoder_forward.1
$region0: #{miss_decoder_forward.1}
  #allocation0 [shape = 'u32[]', space=smem, size = 0x4, offset = 0x4, fixed_abs, tag = 'smem constant byte address 0x4 - core index']
  #allocation1 [shape = 'u32[144,128]{1,0:T(1,128)}', space=vmem, size = 0x12000, scoped, tag = 'internal scratch']
  %s0 = inlined_call_operand.smem [shape: u32[31], index: -1, kind: input, shape index: {}]
  %s1 = sld [smem:[%s0]]
  %s2 = scalar_lea.smem %s0, 1
  %s3 = sld [smem:[%s2]]
  %s4 = scalar_lea.smem %s0, 2
  %s5 = sld [smem:[%s4]]
  %s6 = scalar_lea.smem %s0, 3
  %s7 = sld [smem:[%s6]]
  %s8 = scalar_lea.smem %s0, 4
  %s9 = sld [smem:[%s8]]
  %s10 = scalar_lea.smem %s0, 5
  %s11 = sld [smem:[%s10]]
  %s12 = scalar_lea.smem %s0, 6
  %s13 = sld [smem:[%s12]]
  %s14 = scalar_lea.smem %s0, 7
  %s15 = sld [smem:[%s14]]
  %s16 = scalar_lea.smem %s0, 8
  %s17 = sld [smem:[%s16]]
  %s18 = scalar_lea.smem %s0, 9
  %s19 = sld [smem:[%s18]]
  %s20 = scalar_lea.smem %s0, 10
  %s21 = sld [smem:[%s20]]
  %s22 = scalar_lea.smem %s0, 11
  %s23 = sld [smem:[%s22]]
  %s24 = scalar_lea.smem %s0, 12
  %s25 = sld [smem:[%s24]]
  %s26 = scalar_lea.smem %s0, 13
  %s27 = sld [smem:[%s26]]
  %s28 = scalar_lea.smem %s0, 14
  %s29 = sld [smem:[%s28]]
  %s30 = scalar_lea.smem %s0, 15
  %s31 = sld [smem:[%s30]]
  %s32 = scalar_lea.smem %s0, 16
  %s33 = sld [smem:[%s32]]
  %s34 = scalar_lea.smem %s0, 17
  %s35 = sld [smem:[%s34]]
  %s36 = scalar_lea.smem %s0, 18
  %s37 = sld [smem:[%s36]]
  %s38 = scalar_lea.smem %s0, 19
  %s39 = sld [smem:[%s38]]
  %s40 = scalar_lea.smem %s0, 20
  %s41 = sld [smem:[%s40]]
  %s42 = scalar_lea.smem %s0, 21
  %s43 = sld [smem:[%s42]]
  %s44 = scalar_lea.smem %s0, 22
  %s45 = sld [smem:[%s44]]
  %s46 = scalar_lea.smem %s0, 23
  %s47 = sld [smem:[%s46]]
  %s48 = scalar_lea.smem %s0, 24
  %s49 = sld [smem:[%s48]]
  %s50 = scalar_lea.smem %s0, 25
  %s51 = sld [smem:[%s50]]
  %s52 = scalar_lea.smem %s0, 26
  %s53 = sld [smem:[%s52]]
  %s54 = scalar_lea.smem %s0, 27
  %s55 = sld [smem:[%s54]]
  %s56 = scalar_lea.smem %s0, 28
  %s57 = sld [smem:[%s56]]
  %s58 = scalar_lea.smem %s0, 29
  %s59 = sld [smem:[%s58]]
  %s60 = scalar_lea.smem %s0, 30
  %s61 = sld [smem:[%s60]]
  %s62 = sld [smem:[#allocation0]]
  $region225: #{miss_decoder_forward.1} parent=0
    _
  %s64 = ssub.s32 1, %s62
  %s65 = scalar_select 0, %s64, %s62
  $region1: #{miss_decoder_forward.1} parent=0
    #allocation2 [shape = 'u8[8192]{0}', space=vmem, size = 0x2000, scoped, tag = 'input window, operand 0']
    #allocation3 [shape = 's32[2]{0}', space=sflag, size = 0x8, scoped, tag = 'scoped memory for miss_decoder_forward.1']
    #allocation4 [shape = 's32[2]{0}', space=sflag, size = 0x8, scoped, tag = 'scoped memory for miss_decoder_forward.1']
    #allocation5 [shape = 'u8[8192]{0}', space=vmem, size = 0x2000, scoped, tag = 'input window, operand 1']
    #allocation6 [shape = 's32[2]{0}', space=sflag, size = 0x8, scoped, tag = 'scoped memory for miss_decoder_forward.1']
    #allocation7 [shape = 'u8[32768]{0}', space=vmem, size = 0x8000, scoped, tag = 'input window, operand 8, single buffered']
    #allocation8 [shape = 'u8[32768]{0}', space=vmem, size = 0x8000, scoped, tag = 'input window, operand 12, single buffered']
    #allocation9 [shape = 's32[1]{0}', space=sflag, size = 0x4, scoped, tag = 'scoped memory for miss_decoder_forward.1']
    #allocation10 [shape = 'u8[32768]{0}', space=vmem, size = 0x8000, scoped, tag = 'input window, operand 14, single buffered']
    #allocation11 [shape = 'u8[1024]{0}', space=vmem, size = 0x400, scoped, tag = 'input window, operand 15, single buffered']
    #allocation12 [shape = 's32[1]{0}', space=sflag, size = 0x4, scoped, tag = 'scoped memory for miss_decoder_forward.1']
    #allocation13 [shape = 'u8[32768]{0}', space=vmem, size = 0x8000, scoped, tag = 'input window, operand 16, single buffered']
    #allocation14 [shape = 'u8[1024]{0}', space=vmem, size = 0x400, scoped, tag = 'input window, operand 17, single buffered']
    #allocation15 [shape = 's32[1]{0}', space=sflag, size = 0x4, scoped, tag = 'scoped memory for miss_decoder_forward.1']
    #allocation16 [shape = 'u8[32768]{0}', space=vmem, size = 0x8000, scoped, tag = 'input window, operand 18, single buffered']
    #allocation17 [shape = 'u8[1024]{0}', space=vmem, size = 0x400, scoped, tag = 'input window, operand 19, single buffered']
    #allocation18 [shape = 's32[1]{0}', space=sflag, size = 0x4, scoped, tag = 'scoped memory for miss_decoder_forward.1']
    #allocation19 [shape = 'u8[1024]{0}', space=vmem, size = 0x400, scoped, tag = 'input window, operand 20, single buffered']
    #allocation20 [shape = 'u8[1024]{0}', space=vmem, size = 0x400, scoped, tag = 'input window, operand 21, single buffered']
    #allocation21 [shape = 's32[1]{0}', space=sflag, size = 0x4, scoped, tag = 'scoped memory for miss_decoder_forward.1']
    #allocation22 [shape = 'u8[32768]{0}', space=vmem, size = 0x8000, scoped, tag = 'input window, operand 22, single buffered']
    #allocation23 [shape = 'u8[1024]{0}', space=vmem, size = 0x400, scoped, tag = 'input window, operand 23, single buffered']
    #allocation24 [shape = 's32[1]{0}', space=sflag, size = 0x4, scoped, tag = 'scoped memory for miss_decoder_forward.1']
    #allocation25 [shape = 'u8[1024]{0}', space=vmem, size = 0x400, scoped, tag = 'input window, operand 25, single buffered']
    #allocation26 [shape = 'u8[1024]{0}', space=vmem, size = 0x400, scoped, tag = 'input window, operand 26, single buffered']
    #allocation27 [shape = 's32[1]{0}', space=sflag, size = 0x4, scoped, tag = 'scoped memory for miss_decoder_forward.1']
    #allocation28 [shape = 'u8[1024]{0}', space=vmem, size = 0x400, scoped, tag = 'input window, operand 27, single buffered']
    #allocation29 [shape = 'u8[512]{0}', space=vmem, size = 0x400, scoped, tag = 'input window, operand 29, single buffered']
    #allocation30 [shape = 's32[1]{0}', space=sflag, size = 0x4, scoped, tag = 'scoped memory for miss_decoder_forward.1']
    #allocation31 [shape = 'u8[8192]{0}', space=vmem, size = 0x2000, scoped, tag = 'output window, operand 0']
    %66 = vsyncpa [#allocation3], 0
    %s67 = scalar_lea.sflag [#allocation3], 1
    %68 = vsyncpa %s67, 0
    %69 = vsyncpa [#allocation6], 0
    %s70 = scalar_lea.sflag [#allocation6], 1
    %71 = vsyncpa %s70, 0
    %72 = vsyncpa [#allocation9], 0
    %73 = vsyncpa [#allocation12], 0
    %74 = vsyncpa [#allocation15], 0
    %75 = vsyncpa [#allocation18], 0
    %76 = vsyncpa [#allocation21], 0
    %77 = vsyncpa [#allocation24], 0
    %78 = vsyncpa [#allocation27], 0
    %79 = vsyncpa [#allocation30], 0
    %80 = vsyncpa [#allocation4], 0
    %s81 = scalar_lea.sflag [#allocation4], 1
    %82 = vsyncpa %s81, 0
    loop: start=0, step=1, limit=4
    $region2: #{miss_decoder_forward.1} parent=1 // loop_pre_header
      _
    $region3: #{miss_decoder_forward.1} parent=1 // loop_header
      %s84 = sphi 0, %s88
      %p85 = scmp.ge.s32.totalorder %s84, 4
      %s94 = sphi 0, %s96
      %s97 = sphi 0, %s94
      %s98 = sphi 0, %s97
      %s114 = sphi 0, %s98
      %s120 = sphi 0, %s122
      %s123 = sphi 0, %s120
      %s124 = sphi 0, %s123
      %s140 = sphi 0, %s124
      %s144 = sphi 0, %s144
      %s146 = sphi 0, %s144
      %s147 = sphi 0, %s146
      %s161 = sphi 0, %s147
      %s165 = sphi 0, %s165
      %s167 = sphi 0, %s165
      %s168 = sphi 0, %s167
      %s182 = sphi 0, %s168
      %s186 = sphi 0, %s186
      %s188 = sphi 0, %s186
      %s189 = sphi 0, %s188
      %s203 = sphi 0, %s189
      %s207 = sphi 0, %s207
      %s209 = sphi 0, %s207
      %s210 = sphi 0, %s209
      %s224 = sphi 0, %s210
      %s228 = sphi 0, %s228
      %s230 = sphi 0, %s228
      %s231 = sphi 0, %s230
      %s245 = sphi 0, %s231
      %s249 = sphi 0, %s249
      %s251 = sphi 0, %s249
      %s252 = sphi 0, %s251
      %s266 = sphi 0, %s252
      %s270 = sphi 0, %s270
      %s272 = sphi 0, %s270
      %s273 = sphi 0, %s272
      %s287 = sphi 0, %s273
      %s291 = sphi 0, %s291
      %s293 = sphi 0, %s291
      %s294 = sphi 0, %s293
      %s308 = sphi 0, %s294
      %s312 = sphi 0, %s312
      %s314 = sphi 0, %s312
      %s315 = sphi 0, %s314
      %s329 = sphi 0, %s315
      %s333 = sphi 0, %s333
      %s335 = sphi 0, %s333
      %s336 = sphi 0, %s335
      %s350 = sphi 0, %s336
      %s354 = sphi 0, %s354
      %s356 = sphi 0, %s354
      %s357 = sphi 0, %s356
      %s371 = sphi 0, %s357
      %s375 = sphi 0, %s375
      %s377 = sphi 0, %s375
      %s378 = sphi 0, %s377
      %s392 = sphi 0, %s378
      %s396 = sphi 0, %s396
      %s398 = sphi 0, %s396
      %s399 = sphi 0, %s398
      %s413 = sphi 0, %s399
      %s417 = sphi 0, %s417
      %s419 = sphi 0, %s417
      %s420 = sphi 0, %s419
      %s434 = sphi 0, %s420
      %s438 = sphi 0, %s438
      %s440 = sphi 0, %s438
      %s441 = sphi 0, %s440
      %s455 = sphi 0, %s441
      %s459 = sphi 0, %s459
      %s461 = sphi 0, %s459
      %s462 = sphi 0, %s461
      %s476 = sphi 0, %s462
      %s480 = sphi 0, %s480
      %s482 = sphi 0, %s480
      %s483 = sphi 0, %s482
      %s497 = sphi 0, %s483
      %s501 = sphi 0, %s501
      %s503 = sphi 0, %s501
      %s504 = sphi 0, %s503
      %s518 = sphi 0, %s504
      %s522 = sphi 0, %s522
      %s524 = sphi 0, %s522
      %s525 = sphi 0, %s524
      %s539 = sphi 0, %s525
      %s543 = sphi 0, %s543
      %s545 = sphi 0, %s543
      %s546 = sphi 0, %s545
      %s560 = sphi 0, %s546
      %s564 = sphi 0, %s564
      %s566 = sphi 0, %s564
      %s567 = sphi 0, %s566
      %s581 = sphi 0, %s567
      %s585 = sphi 0, %s585
      %s587 = sphi 0, %s585
      %s588 = sphi 0, %s587
      %s602 = sphi 0, %s588
      %s606 = sphi 0, %s606
      %s608 = sphi 0, %s606
      %s609 = sphi 0, %s608
      %s623 = sphi 0, %s609
      %s627 = sphi 0, %s627
      %s629 = sphi 0, %s627
      %s630 = sphi 0, %s629
      %s644 = sphi 0, %s630
      %s648 = sphi 0, %s648
      %s650 = sphi 0, %s648
      %s651 = sphi 0, %s650
      %s665 = sphi 0, %s651
      %s669 = sphi 0, %s669
      %s671 = sphi 0, %s669
      %s672 = sphi 0, %s671
      %s686 = sphi 0, %s672
      %s690 = sphi 0, %s690
      %s692 = sphi 0, %s690
      %s693 = sphi 0, %s692
      %s707 = sphi 0, %s693
      %s711 = sphi 0, %s711
      %s713 = sphi 0, %s711
      %s714 = sphi 0, %s713
      %s728 = sphi 0, %s714
      %s734 = sphi 0, %s736
      %s737 = sphi 0, %s734
      %s738 = sphi 0, %s737
      %s754 = sphi 0, %s738
    $region4: #{miss_decoder_forward.1} parent=1 // loop_header_branch
      %87 = sbr.rel (%p85) target = $region8
    $region5: #{miss_decoder_forward.1} parent=1 // loop_body
      %s89 = ssub.s32 %s84, 1
      %s90 = ssub.s32 %s84, 2
      %s91 = sadd.s32 %s84, 1
      %s92 = ssub.s32 %s84, %s91
      %p93 = scmp.eq.s32.totalorder %s92, 0
      %s95 = sadd.s32 %s94, 1
      %s96 = scalar_select %p93, %s94, %s95
      %p99 = pneg %p93
      %p100 = scmp.eq.s32.totalorder %s84, 1
      %p101 = por %p99, %p100
      %p102 = scmp.ne.s32.totalorder %s94, %s97
      %p103 = scmp.eq.s32.totalorder %s84, 0
      %p104 = por %p102, %p103
      %p105 = scmp.ne.s32.totalorder %s94, %s97
      %p106 = scmp.eq.s32.totalorder %s89, 1
      %p107 = por %p105, %p106
      %p108 = scmp.ne.s32.totalorder %s97, %s98
      %p109 = scmp.eq.s32.totalorder %s89, 0
      %p110 = por %p108, %p109
      %p111 = scmp.ne.s32.totalorder %s97, %s98
      %p112 = scmp.eq.s32.totalorder %s90, 1
      %p113 = por %p111, %p112
      %p115 = scmp.ne.s32.totalorder %s98, %s114
      %p116 = scmp.eq.s32.totalorder %s90, 0
      %p117 = por %p115, %p116
      %s118 = ssub.s32 %s84, %s91
      %p119 = scmp.eq.s32.totalorder %s118, 0
      %s121 = sadd.s32 %s120, 1
      %s122 = scalar_select %p119, %s120, %s121
      %p125 = pneg %p119
      %p126 = scmp.eq.s32.totalorder %s84, 1
      %p127 = por %p125, %p126
      %p128 = scmp.ne.s32.totalorder %s120, %s123
      %p129 = scmp.eq.s32.totalorder %s84, 0
      %p130 = por %p128, %p129
      %p131 = scmp.ne.s32.totalorder %s120, %s123
      %p132 = scmp.eq.s32.totalorder %s89, 1
      %p133 = por %p131, %p132
      %p134 = scmp.ne.s32.totalorder %s123, %s124
      %p135 = scmp.eq.s32.totalorder %s89, 0
      %p136 = por %p134, %p135
      %p137 = scmp.ne.s32.totalorder %s123, %s124
      %p138 = scmp.eq.s32.totalorder %s90, 1
      %p139 = por %p137, %p138
      %p141 = scmp.ne.s32.totalorder %s124, %s140
      %p142 = scmp.eq.s32.totalorder %s90, 0
      %p143 = por %p141, %p142
      %s145 = sadd.s32 %s144, 1
      %p148 = scmp.eq.s32.totalorder %s84, 1
      %p149 = scmp.ne.s32.totalorder %s144, %s146
      %p150 = scmp.eq.s32.totalorder %s84, 0
      %p151 = por %p149, %p150
      %p152 = scmp.ne.s32.totalorder %s144, %s146
      %p153 = scmp.eq.s32.totalorder %s89, 1
      %p154 = por %p152, %p153
      %p155 = scmp.ne.s32.totalorder %s146, %s147
      %p156 = scmp.eq.s32.totalorder %s89, 0
      %p157 = por %p155, %p156
      %p158 = scmp.ne.s32.totalorder %s146, %s147
      %p159 = scmp.eq.s32.totalorder %s90, 1
      %p160 = por %p158, %p159
      %p162 = scmp.ne.s32.totalorder %s147, %s161
      %p163 = scmp.eq.s32.totalorder %s90, 0
      %p164 = por %p162, %p163
      %s166 = sadd.s32 %s165, 1
      %p169 = scmp.eq.s32.totalorder %s84, 1
      %p170 = scmp.ne.s32.totalorder %s165, %s167
      %p171 = scmp.eq.s32.totalorder %s84, 0
      %p172 = por %p170, %p171
      %p173 = scmp.ne.s32.totalorder %s165, %s167
      %p174 = scmp.eq.s32.totalorder %s89, 1
      %p175 = por %p173, %p174
      %p176 = scmp.ne.s32.totalorder %s167, %s168
      %p177 = scmp.eq.s32.totalorder %s89, 0
      %p178 = por %p176, %p177
      %p179 = scmp.ne.s32.totalorder %s167, %s168
      %p180 = scmp.eq.s32.totalorder %s90, 1
      %p181 = por %p179, %p180
      %p183 = scmp.ne.s32.totalorder %s168, %s182
      %p184 = scmp.eq.s32.totalorder %s90, 0
      %p185 = por %p183, %p184
      %s187 = sadd.s32 %s186, 1
      %p190 = scmp.eq.s32.totalorder %s84, 1
      %p191 = scmp.ne.s32.totalorder %s186, %s188
      %p192 = scmp.eq.s32.totalorder %s84, 0
      %p193 = por %p191, %p192
      %p194 = scmp.ne.s32.totalorder %s186, %s188
      %p195 = scmp.eq.s32.totalorder %s89, 1
      %p196 = por %p194, %p195
      %p197 = scmp.ne.s32.totalorder %s188, %s189
      %p198 = scmp.eq.s32.totalorder %s89, 0
      %p199 = por %p197, %p198
      %p200 = scmp.ne.s32.totalorder %s188, %s189
      %p201 = scmp.eq.s32.totalorder %s90, 1
      %p202 = por %p200, %p201
      %p204 = scmp.ne.s32.totalorder %s189, %s203
      %p205 = scmp.eq.s32.totalorder %s90, 0
      %p206 = por %p204, %p205
      %s208 = sadd.s32 %s207, 1
      %p211 = scmp.eq.s32.totalorder %s84, 1
      %p212 = scmp.ne.s32.totalorder %s207, %s209
      %p213 = scmp.eq.s32.totalorder %s84, 0
      %p214 = por %p212, %p213
      %p215 = scmp.ne.s32.totalorder %s207, %s209
      %p216 = scmp.eq.s32.totalorder %s89, 1
      %p217 = por %p215, %p216
      %p218 = scmp.ne.s32.totalorder %s209, %s210
      %p219 = scmp.eq.s32.totalorder %s89, 0
      %p220 = por %p218, %p219
      %p221 = scmp.ne.s32.totalorder %s209, %s210
      %p222 = scmp.eq.s32.totalorder %s90, 1
      %p223 = por %p221, %p222
      %p225 = scmp.ne.s32.totalorder %s210, %s224
      %p226 = scmp.eq.s32.totalorder %s90, 0
      %p227 = por %p225, %p226
      %s229 = sadd.s32 %s228, 1
      %p232 = scmp.eq.s32.totalorder %s84, 1
      %p233 = scmp.ne.s32.totalorder %s228, %s230
      %p234 = scmp.eq.s32.totalorder %s84, 0
      %p235 = por %p233, %p234
      %p236 = scmp.ne.s32.totalorder %s228, %s230
      %p237 = scmp.eq.s32.totalorder %s89, 1
      %p238 = por %p236, %p237
      %p239 = scmp.ne.s32.totalorder %s230, %s231
      %p240 = scmp.eq.s32.totalorder %s89, 0
      %p241 = por %p239, %p240
      %p242 = scmp.ne.s32.totalorder %s230, %s231
      %p243 = scmp.eq.s32.totalorder %s90, 1
      %p244 = por %p242, %p243
      %p246 = scmp.ne.s32.totalorder %s231, %s245
      %p247 = scmp.eq.s32.totalorder %s90, 0
      %p248 = por %p246, %p247
      %s250 = sadd.s32 %s249, 1
      %p253 = scmp.eq.s32.totalorder %s84, 1
      %p254 = scmp.ne.s32.totalorder %s249, %s251
      %p255 = scmp.eq.s32.totalorder %s84, 0
      %p256 = por %p254, %p255
      %p257 = scmp.ne.s32.totalorder %s249, %s251
      %p258 = scmp.eq.s32.totalorder %s89, 1
      %p259 = por %p257, %p258
      %p260 = scmp.ne.s32.totalorder %s251, %s252
      %p261 = scmp.eq.s32.totalorder %s89, 0
      %p262 = por %p260, %p261
      %p263 = scmp.ne.s32.totalorder %s251, %s252
      %p264 = scmp.eq.s32.totalorder %s90, 1
      %p265 = por %p263, %p264
      %p267 = scmp.ne.s32.totalorder %s252, %s266
      %p268 = scmp.eq.s32.totalorder %s90, 0
      %p269 = por %p267, %p268
      %s271 = sadd.s32 %s270, 1
      %p274 = scmp.eq.s32.totalorder %s84, 1
      %p275 = scmp.ne.s32.totalorder %s270, %s272
      %p276 = scmp.eq.s32.totalorder %s84, 0
      %p277 = por %p275, %p276
      %p278 = scmp.ne.s32.totalorder %s270, %s272
      %p279 = scmp.eq.s32.totalorder %s89, 1
      %p280 = por %p278, %p279
      %p281 = scmp.ne.s32.totalorder %s272, %s273
      %p282 = scmp.eq.s32.totalorder %s89, 0
      %p283 = por %p281, %p282
      %p284 = scmp.ne.s32.totalorder %s272, %s273
      %p285 = scmp.eq.s32.totalorder %s90, 1
      %p286 = por %p284, %p285
      %p288 = scmp.ne.s32.totalorder %s273, %s287
      %p289 = scmp.eq.s32.totalorder %s90, 0
      %p290 = por %p288, %p289
      %s292 = sadd.s32 %s291, 1
      %p295 = scmp.eq.s32.totalorder %s84, 1
      %p296 = scmp.ne.s32.totalorder %s291, %s293
      %p297 = scmp.eq.s32.totalorder %s84, 0
      %p298 = por %p296, %p297
      %p299 = scmp.ne.s32.totalorder %s291, %s293
      %p300 = scmp.eq.s32.totalorder %s89, 1
      %p301 = por %p299, %p300
      %p302 = scmp.ne.s32.totalorder %s293, %s294
      %p303 = scmp.eq.s32.totalorder %s89, 0
      %p304 = por %p302, %p303
      %p305 = scmp.ne.s32.totalorder %s293, %s294
      %p306 = scmp.eq.s32.totalorder %s90, 1
      %p307 = por %p305, %p306
      %p309 = scmp.ne.s32.totalorder %s294, %s308
      %p310 = scmp.eq.s32.totalorder %s90, 0
      %p311 = por %p309, %p310
      %s313 = sadd.s32 %s312, 1
      %p316 = scmp.eq.s32.totalorder %s84, 1
      %p317 = scmp.ne.s32.totalorder %s312, %s314
      %p318 = scmp.eq.s32.totalorder %s84, 0
      %p319 = por %p317, %p318
      %p320 = scmp.ne.s32.totalorder %s312, %s314
      %p321 = scmp.eq.s32.totalorder %s89, 1
      %p322 = por %p320, %p321
      %p323 = scmp.ne.s32.totalorder %s314, %s315
      %p324 = scmp.eq.s32.totalorder %s89, 0
      %p325 = por %p323, %p324
      %p326 = scmp.ne.s32.totalorder %s314, %s315
      %p327 = scmp.eq.s32.totalorder %s90, 1
      %p328 = por %p326, %p327
      %p330 = scmp.ne.s32.totalorder %s315, %s329
      %p331 = scmp.eq.s32.totalorder %s90, 0
      %p332 = por %p330, %p331
      %s334 = sadd.s32 %s333, 1
      %p337 = scmp.eq.s32.totalorder %s84, 1
      %p338 = scmp.ne.s32.totalorder %s333, %s335
      %p339 = scmp.eq.s32.totalorder %s84, 0
      %p340 = por %p338, %p339
      %p341 = scmp.ne.s32.totalorder %s333, %s335
      %p342 = scmp.eq.s32.totalorder %s89, 1
      %p343 = por %p341, %p342
      %p344 = scmp.ne.s32.totalorder %s335, %s336
      %p345 = scmp.eq.s32.totalorder %s89, 0
      %p346 = por %p344, %p345
      %p347 = scmp.ne.s32.totalorder %s335, %s336
      %p348 = scmp.eq.s32.totalorder %s90, 1
      %p349 = por %p347, %p348
      %p351 = scmp.ne.s32.totalorder %s336, %s350
      %p352 = scmp.eq.s32.totalorder %s90, 0
      %p353 = por %p351, %p352
      %s355 = sadd.s32 %s354, 1
      %p358 = scmp.eq.s32.totalorder %s84, 1
      %p359 = scmp.ne.s32.totalorder %s354, %s356
      %p360 = scmp.eq.s32.totalorder %s84, 0
      %p361 = por %p359, %p360
      %p362 = scmp.ne.s32.totalorder %s354, %s356
      %p363 = scmp.eq.s32.totalorder %s89, 1
      %p364 = por %p362, %p363
      %p365 = scmp.ne.s32.totalorder %s356, %s357
      %p366 = scmp.eq.s32.totalorder %s89, 0
      %p367 = por %p365, %p366
      %p368 = scmp.ne.s32.totalorder %s356, %s357
      %p369 = scmp.eq.s32.totalorder %s90, 1
      %p370 = por %p368, %p369
      %p372 = scmp.ne.s32.totalorder %s357, %s371
      %p373 = scmp.eq.s32.totalorder %s90, 0
      %p374 = por %p372, %p373
      %s376 = sadd.s32 %s375, 1
      %p379 = scmp.eq.s32.totalorder %s84, 1
      %p380 = scmp.ne.s32.totalorder %s375, %s377
      %p381 = scmp.eq.s32.totalorder %s84, 0
      %p382 = por %p380, %p381
      %p383 = scmp.ne.s32.totalorder %s375, %s377
      %p384 = scmp.eq.s32.totalorder %s89, 1
      %p385 = por %p383, %p384
      %p386 = scmp.ne.s32.totalorder %s377, %s378
      %p387 = scmp.eq.s32.totalorder %s89, 0
      %p388 = por %p386, %p387
      %p389 = scmp.ne.s32.totalorder %s377, %s378
      %p390 = scmp.eq.s32.totalorder %s90, 1
      %p391 = por %p389, %p390
      %p393 = scmp.ne.s32.totalorder %s378, %s392
      %p394 = scmp.eq.s32.totalorder %s90, 0
      %p395 = por %p393, %p394
      %s397 = sadd.s32 %s396, 1
      %p400 = scmp.eq.s32.totalorder %s84, 1
      %p401 = scmp.ne.s32.totalorder %s396, %s398
      %p402 = scmp.eq.s32.totalorder %s84, 0
      %p403 = por %p401, %p402
      %p404 = scmp.ne.s32.totalorder %s396, %s398
      %p405 = scmp.eq.s32.totalorder %s89, 1
      %p406 = por %p404, %p405
      %p407 = scmp.ne.s32.totalorder %s398, %s399
      %p408 = scmp.eq.s32.totalorder %s89, 0
      %p409 = por %p407, %p408
      %p410 = scmp.ne.s32.totalorder %s398, %s399
      %p411 = scmp.eq.s32.totalorder %s90, 1
      %p412 = por %p410, %p411
      %p414 = scmp.ne.s32.totalorder %s399, %s413
      %p415 = scmp.eq.s32.totalorder %s90, 0
      %p416 = por %p414, %p415
      %s418 = sadd.s32 %s417, 1
      %p421 = scmp.eq.s32.totalorder %s84, 1
      %p422 = scmp.ne.s32.totalorder %s417, %s419
      %p423 = scmp.eq.s32.totalorder %s84, 0
      %p424 = por %p422, %p423
      %p425 = scmp.ne.s32.totalorder %s417, %s419
      %p426 = scmp.eq.s32.totalorder %s89, 1
      %p427 = por %p425, %p426
      %p428 = scmp.ne.s32.totalorder %s419, %s420
      %p429 = scmp.eq.s32.totalorder %s89, 0
      %p430 = por %p428, %p429
      %p431 = scmp.ne.s32.totalorder %s419, %s420
      %p432 = scmp.eq.s32.totalorder %s90, 1
      %p433 = por %p431, %p432
      %p435 = scmp.ne.s32.totalorder %s420, %s434
      %p436 = scmp.eq.s32.totalorder %s90, 0
      %p437 = por %p435, %p436
      %s439 = sadd.s32 %s438, 1
      %p442 = scmp.eq.s32.totalorder %s84, 1
      %p443 = scmp.ne.s32.totalorder %s438, %s440
      %p444 = scmp.eq.s32.totalorder %s84, 0
      %p445 = por %p443, %p444
      %p446 = scmp.ne.s32.totalorder %s438, %s440
      %p447 = scmp.eq.s32.totalorder %s89, 1
      %p448 = por %p446, %p447
      %p449 = scmp.ne.s32.totalorder %s440, %s441
      %p450 = scmp.eq.s32.totalorder %s89, 0
      %p451 = por %p449, %p450
      %p452 = scmp.ne.s32.totalorder %s440, %s441
      %p453 = scmp.eq.s32.totalorder %s90, 1
      %p454 = por %p452, %p453
      %p456 = scmp.ne.s32.totalorder %s441, %s455
      %p457 = scmp.eq.s32.totalorder %s90, 0
      %p458 = por %p456, %p457
      %s460 = sadd.s32 %s459, 1
      %p463 = scmp.eq.s32.totalorder %s84, 1
      %p464 = scmp.ne.s32.totalorder %s459, %s461
      %p465 = scmp.eq.s32.totalorder %s84, 0
      %p466 = por %p464, %p465
      %p467 = scmp.ne.s32.totalorder %s459, %s461
      %p468 = scmp.eq.s32.totalorder %s89, 1
      %p469 = por %p467, %p468
      %p470 = scmp.ne.s32.totalorder %s461, %s462
      %p471 = scmp.eq.s32.totalorder %s89, 0
      %p472 = por %p470, %p471
      %p473 = scmp.ne.s32.totalorder %s461, %s462
      %p474 = scmp.eq.s32.totalorder %s90, 1
      %p475 = por %p473, %p474
      %p477 = scmp.ne.s32.totalorder %s462, %s476
      %p478 = scmp.eq.s32.totalorder %s90, 0
      %p479 = por %p477, %p478
      %s481 = sadd.s32 %s480, 1
      %p484 = scmp.eq.s32.totalorder %s84, 1
      %p485 = scmp.ne.s32.totalorder %s480, %s482
      %p486 = scmp.eq.s32.totalorder %s84, 0
      %p487 = por %p485, %p486
      %p488 = scmp.ne.s32.totalorder %s480, %s482
      %p489 = scmp.eq.s32.totalorder %s89, 1
      %p490 = por %p488, %p489
      %p491 = scmp.ne.s32.totalorder %s482, %s483
      %p492 = scmp.eq.s32.totalorder %s89, 0
      %p493 = por %p491, %p492
      %p494 = scmp.ne.s32.totalorder %s482, %s483
      %p495 = scmp.eq.s32.totalorder %s90, 1
      %p496 = por %p494, %p495
      %p498 = scmp.ne.s32.totalorder %s483, %s497
      %p499 = scmp.eq.s32.totalorder %s90, 0
      %p500 = por %p498, %p499
      %s502 = sadd.s32 %s501, 1
      %p505 = scmp.eq.s32.totalorder %s84, 1
      %p506 = scmp.ne.s32.totalorder %s501, %s503
      %p507 = scmp.eq.s32.totalorder %s84, 0
      %p508 = por %p506, %p507
      %p509 = scmp.ne.s32.totalorder %s501, %s503
      %p510 = scmp.eq.s32.totalorder %s89, 1
      %p511 = por %p509, %p510
      %p512 = scmp.ne.s32.totalorder %s503, %s504
      %p513 = scmp.eq.s32.totalorder %s89, 0
      %p514 = por %p512, %p513
      %p515 = scmp.ne.s32.totalorder %s503, %s504
      %p516 = scmp.eq.s32.totalorder %s90, 1
      %p517 = por %p515, %p516
      %p519 = scmp.ne.s32.totalorder %s504, %s518
      %p520 = scmp.eq.s32.totalorder %s90, 0
      %p521 = por %p519, %p520
      %s523 = sadd.s32 %s522, 1
      %p526 = scmp.eq.s32.totalorder %s84, 1
      %p527 = scmp.ne.s32.totalorder %s522, %s524
      %p528 = scmp.eq.s32.totalorder %s84, 0
      %p529 = por %p527, %p528
      %p530 = scmp.ne.s32.totalorder %s522, %s524
      %p531 = scmp.eq.s32.totalorder %s89, 1
      %p532 = por %p530, %p531
      %p533 = scmp.ne.s32.totalorder %s524, %s525
      %p534 = scmp.eq.s32.totalorder %s89, 0
      %p535 = por %p533, %p534
      %p536 = scmp.ne.s32.totalorder %s524, %s525
      %p537 = scmp.eq.s32.totalorder %s90, 1
      %p538 = por %p536, %p537
      %p540 = scmp.ne.s32.totalorder %s525, %s539
      %p541 = scmp.eq.s32.totalorder %s90, 0
      %p542 = por %p540, %p541
      %s544 = sadd.s32 %s543, 1
      %p547 = scmp.eq.s32.totalorder %s84, 1
      %p548 = scmp.ne.s32.totalorder %s543, %s545
      %p549 = scmp.eq.s32.totalorder %s84, 0
      %p550 = por %p548, %p549
      %p551 = scmp.ne.s32.totalorder %s543, %s545
      %p552 = scmp.eq.s32.totalorder %s89, 1
      %p553 = por %p551, %p552
      %p554 = scmp.ne.s32.totalorder %s545, %s546
      %p555 = scmp.eq.s32.totalorder %s89, 0
      %p556 = por %p554, %p555
      %p557 = scmp.ne.s32.totalorder %s545, %s546
      %p558 = scmp.eq.s32.totalorder %s90, 1
      %p559 = por %p557, %p558
      %p561 = scmp.ne.s32.totalorder %s546, %s560
      %p562 = scmp.eq.s32.totalorder %s90, 0
      %p563 = por %p561, %p562
      %s565 = sadd.s32 %s564, 1
      %p568 = scmp.eq.s32.totalorder %s84, 1
      %p569 = scmp.ne.s32.totalorder %s564, %s566
      %p570 = scmp.eq.s32.totalorder %s84, 0
      %p571 = por %p569, %p570
      %p572 = scmp.ne.s32.totalorder %s564, %s566
      %p573 = scmp.eq.s32.totalorder %s89, 1
      %p574 = por %p572, %p573
      %p575 = scmp.ne.s32.totalorder %s566, %s567
      %p576 = scmp.eq.s32.totalorder %s89, 0
      %p577 = por %p575, %p576
      %p578 = scmp.ne.s32.totalorder %s566, %s567
      %p579 = scmp.eq.s32.totalorder %s90, 1
      %p580 = por %p578, %p579
      %p582 = scmp.ne.s32.totalorder %s567, %s581
      %p583 = scmp.eq.s32.totalorder %s90, 0
      %p584 = por %p582, %p583
      %s586 = sadd.s32 %s585, 1
      %p589 = scmp.eq.s32.totalorder %s84, 1
      %p590 = scmp.ne.s32.totalorder %s585, %s587
      %p591 = scmp.eq.s32.totalorder %s84, 0
      %p592 = por %p590, %p591
      %p593 = scmp.ne.s32.totalorder %s585, %s587
      %p594 = scmp.eq.s32.totalorder %s89, 1
      %p595 = por %p593, %p594
      %p596 = scmp.ne.s32.totalorder %s587, %s588
      %p597 = scmp.eq.s32.totalorder %s89, 0
      %p598 = por %p596, %p597
      %p599 = scmp.ne.s32.totalorder %s587, %s588
      %p600 = scmp.eq.s32.totalorder %s90, 1
      %p601 = por %p599, %p600
      %p603 = scmp.ne.s32.totalorder %s588, %s602
      %p604 = scmp.eq.s32.totalorder %s90, 0
      %p605 = por %p603, %p604
      %s607 = sadd.s32 %s606, 1
      %p610 = scmp.eq.s32.totalorder %s84, 1
      %p611 = scmp.ne.s32.totalorder %s606, %s608
      %p612 = scmp.eq.s32.totalorder %s84, 0
      %p613 = por %p611, %p612
      %p614 = scmp.ne.s32.totalorder %s606, %s608
      %p615 = scmp.eq.s32.totalorder %s89, 1
      %p616 = por %p614, %p615
      %p617 = scmp.ne.s32.totalorder %s608, %s609
      %p618 = scmp.eq.s32.totalorder %s89, 0
      %p619 = por %p617, %p618
      %p620 = scmp.ne.s32.totalorder %s608, %s609
      %p621 = scmp.eq.s32.totalorder %s90, 1
      %p622 = por %p620, %p621
      %p624 = scmp.ne.s32.totalorder %s609, %s623
      %p625 = scmp.eq.s32.totalorder %s90, 0
      %p626 = por %p624, %p625
      %s628 = sadd.s32 %s627, 1
      %p631 = scmp.eq.s32.totalorder %s84, 1
      %p632 = scmp.ne.s32.totalorder %s627, %s629
      %p633 = scmp.eq.s32.totalorder %s84, 0
      %p634 = por %p632, %p633
      %p635 = scmp.ne.s32.totalorder %s627, %s629
      %p636 = scmp.eq.s32.totalorder %s89, 1
      %p637 = por %p635, %p636
      %p638 = scmp.ne.s32.totalorder %s629, %s630
      %p639 = scmp.eq.s32.totalorder %s89, 0
      %p640 = por %p638, %p639
      %p641 = scmp.ne.s32.totalorder %s629, %s630
      %p642 = scmp.eq.s32.totalorder %s90, 1
      %p643 = por %p641, %p642
      %p645 = scmp.ne.s32.totalorder %s630, %s644
      %p646 = scmp.eq.s32.totalorder %s90, 0
      %p647 = por %p645, %p646
      %s649 = sadd.s32 %s648, 1
      %p652 = scmp.eq.s32.totalorder %s84, 1
      %p653 = scmp.ne.s32.totalorder %s648, %s650
      %p654 = scmp.eq.s32.totalorder %s84, 0
      %p655 = por %p653, %p654
      %p656 = scmp.ne.s32.totalorder %s648, %s650
      %p657 = scmp.eq.s32.totalorder %s89, 1
      %p658 = por %p656, %p657
      %p659 = scmp.ne.s32.totalorder %s650, %s651
      %p660 = scmp.eq.s32.totalorder %s89, 0
      %p661 = por %p659, %p660
      %p662 = scmp.ne.s32.totalorder %s650, %s651
      %p663 = scmp.eq.s32.totalorder %s90, 1
      %p664 = por %p662, %p663
      %p666 = scmp.ne.s32.totalorder %s651, %s665
      %p667 = scmp.eq.s32.totalorder %s90, 0
      %p668 = por %p666, %p667
      %s670 = sadd.s32 %s669, 1
      %p673 = scmp.eq.s32.totalorder %s84, 1
      %p674 = scmp.ne.s32.totalorder %s669, %s671
      %p675 = scmp.eq.s32.totalorder %s84, 0
      %p676 = por %p674, %p675
      %p677 = scmp.ne.s32.totalorder %s669, %s671
      %p678 = scmp.eq.s32.totalorder %s89, 1
      %p679 = por %p677, %p678
      %p680 = scmp.ne.s32.totalorder %s671, %s672
      %p681 = scmp.eq.s32.totalorder %s89, 0
      %p682 = por %p680, %p681
      %p683 = scmp.ne.s32.totalorder %s671, %s672
      %p684 = scmp.eq.s32.totalorder %s90, 1
      %p685 = por %p683, %p684
      %p687 = scmp.ne.s32.totalorder %s672, %s686
      %p688 = scmp.eq.s32.totalorder %s90, 0
      %p689 = por %p687, %p688
      %s691 = sadd.s32 %s690, 1
      %p694 = scmp.eq.s32.totalorder %s84, 1
      %p695 = scmp.ne.s32.totalorder %s690, %s692
      %p696 = scmp.eq.s32.totalorder %s84, 0
      %p697 = por %p695, %p696
      %p698 = scmp.ne.s32.totalorder %s690, %s692
      %p699 = scmp.eq.s32.totalorder %s89, 1
      %p700 = por %p698, %p699
      %p701 = scmp.ne.s32.totalorder %s692, %s693
      %p702 = scmp.eq.s32.totalorder %s89, 0
      %p703 = por %p701, %p702
      %p704 = scmp.ne.s32.totalorder %s692, %s693
      %p705 = scmp.eq.s32.totalorder %s90, 1
      %p706 = por %p704, %p705
      %p708 = scmp.ne.s32.totalorder %s693, %s707
      %p709 = scmp.eq.s32.totalorder %s90, 0
      %p710 = por %p708, %p709
      %s712 = sadd.s32 %s711, 1
      %p715 = scmp.eq.s32.totalorder %s84, 1
      %p716 = scmp.ne.s32.totalorder %s711, %s713
      %p717 = scmp.eq.s32.totalorder %s84, 0
      %p718 = por %p716, %p717
      %p719 = scmp.ne.s32.totalorder %s711, %s713
      %p720 = scmp.eq.s32.totalorder %s89, 1
      %p721 = por %p719, %p720
      %p722 = scmp.ne.s32.totalorder %s713, %s714
      %p723 = scmp.eq.s32.totalorder %s89, 0
      %p724 = por %p722, %p723
      %p725 = scmp.ne.s32.totalorder %s713, %s714
      %p726 = scmp.eq.s32.totalorder %s90, 1
      %p727 = por %p725, %p726
      %p729 = scmp.ne.s32.totalorder %s714, %s728
      %p730 = scmp.eq.s32.totalorder %s90, 0
      %p731 = por %p729, %p730
      %s732 = ssub.s32 %s84, %s91
      %p733 = scmp.eq.s32.totalorder %s732, 0
      %s735 = sadd.s32 %s734, 1
      %s736 = scalar_select %p733, %s734, %s735
      %p739 = pneg %p733
      %p740 = scmp.eq.s32.totalorder %s84, 1
      %p741 = por %p739, %p740
      %p742 = scmp.ne.s32.totalorder %s734, %s737
      %p743 = scmp.eq.s32.totalorder %s84, 0
      %p744 = por %p742, %p743
      %p745 = scmp.ne.s32.totalorder %s734, %s737
      %p746 = scmp.eq.s32.totalorder %s89, 1
      %p747 = por %p745, %p746
      %p748 = scmp.ne.s32.totalorder %s737, %s738
      %p749 = scmp.eq.s32.totalorder %s89, 0
      %p750 = por %p748, %p749
      %p751 = scmp.ne.s32.totalorder %s737, %s738
      %p752 = scmp.eq.s32.totalorder %s90, 1
      %p753 = por %p751, %p752
      %p755 = scmp.ne.s32.totalorder %s738, %s754
      %p756 = scmp.eq.s32.totalorder %s90, 0
      %p757 = por %p755, %p756
      %p758 = scmp.le.s32.totalorder 1, %s84
      %p759 = scmp.lt.s32.totalorder %s84, 3
      %p760 = pnand %p758, %p759
      %p761 = pneg %p760
      // Predicated region
      $region9: #{miss_decoder_forward.1} parent=5 // pred_check
        _
      $region10: #{miss_decoder_forward.1} parent=5 // pred_check_branch
        %763 = sbr.rel (%p760) target = $region12
      $region11: #{miss_decoder_forward.1} parent=5 // pred_region
        %s764 = ssub.s32 %s84, 1
        // Predicated region
        $region13: #{miss_decoder_forward.1} parent=11 // pred_check
          %p765 = pneg %p157
        $region14: #{miss_decoder_forward.1} parent=11 // pred_check_branch
          %767 = sbr.rel (%p765) target = $region16
        $region15: #{miss_decoder_forward.1} parent=11 // pred_region
          _
        $region16: #{miss_decoder_forward.1} parent=11 // pred_fallthru
          _
        // Predicated region
        $region17: #{miss_decoder_forward.1} parent=11 // pred_check
          %p768 = pneg %p178
        $region18: #{miss_decoder_forward.1} parent=11 // pred_check_branch
          %770 = sbr.rel (%p768) target = $region20
        $region19: #{miss_decoder_forward.1} parent=11 // pred_region
          _
        $region20: #{miss_decoder_forward.1} parent=11 // pred_fallthru
          _
        // Predicated region
        $region21: #{miss_decoder_forward.1} parent=11 // pred_check
          %p771 = pneg %p199
        $region22: #{miss_decoder_forward.1} parent=11 // pred_check_branch
          %773 = sbr.rel (%p771) target = $region24
        $region23: #{miss_decoder_forward.1} parent=11 // pred_region
          _
        $region24: #{miss_decoder_forward.1} parent=11 // pred_fallthru
          _
        // Predicated region
        $region25: #{miss_decoder_forward.1} parent=11 // pred_check
          %p774 = pneg %p220
        $region26: #{miss_decoder_forward.1} parent=11 // pred_check_branch
          %776 = sbr.rel (%p774) target = $region28
        $region27: #{miss_decoder_forward.1} parent=11 // pred_region
          _
        $region28: #{miss_decoder_forward.1} parent=11 // pred_fallthru
          _
        // Predicated region
        $region29: #{miss_decoder_forward.1} parent=11 // pred_check
          %p777 = pneg %p241
        $region30: #{miss_decoder_forward.1} parent=11 // pred_check_branch
          %779 = sbr.rel (%p777) target = $region32
        $region31: #{miss_decoder_forward.1} parent=11 // pred_region
          _
        $region32: #{miss_decoder_forward.1} parent=11 // pred_fallthru
          _
        // Predicated region
        $region33: #{miss_decoder_forward.1} parent=11 // pred_check
          %p780 = pneg %p262
        $region34: #{miss_decoder_forward.1} parent=11 // pred_check_branch
          %782 = sbr.rel (%p780) target = $region36
        $region35: #{miss_decoder_forward.1} parent=11 // pred_region
          _
        $region36: #{miss_decoder_forward.1} parent=11 // pred_fallthru
          _
        // Predicated region
        $region37: #{miss_decoder_forward.1} parent=11 // pred_check
          %p783 = pneg %p283
        $region38: #{miss_decoder_forward.1} parent=11 // pred_check_branch
          %785 = sbr.rel (%p783) target = $region40
        $region39: #{miss_decoder_forward.1} parent=11 // pred_region
          %s787 = ssub.s32 1024, 1024
          %788 = vsyncadd [#allocation6], %s787
          %s789 = sshll.u32 [#allocation7], 4
          %s790 = int_to_ptr.vmem [resolvable:$true] %s789
          %795 = dma.hbm_to_vmem [thread:$0]  %s17, 1024, %s790, [#allocation6], 128, 128, 8
        $region40: #{miss_decoder_forward.1} parent=11 // pred_fallthru
          _
        // Predicated region
        $region41: #{miss_decoder_forward.1} parent=11 // pred_check
          %p796 = pneg %p304
        $region42: #{miss_decoder_forward.1} parent=11 // pred_check_branch
          %798 = sbr.rel (%p796) target = $region44
        $region43: #{miss_decoder_forward.1} parent=11 // pred_region
          _
        $region44: #{miss_decoder_forward.1} parent=11 // pred_fallthru
          _
        // Predicated region
        $region45: #{miss_decoder_forward.1} parent=11 // pred_check
          %p799 = pneg %p325
        $region46: #{miss_decoder_forward.1} parent=11 // pred_check_branch
          %801 = sbr.rel (%p799) target = $region48
        $region47: #{miss_decoder_forward.1} parent=11 // pred_region
          _
        $region48: #{miss_decoder_forward.1} parent=11 // pred_fallthru
          _
        // Predicated region
        $region49: #{miss_decoder_forward.1} parent=11 // pred_check
          %p802 = pneg %p346
        $region50: #{miss_decoder_forward.1} parent=11 // pred_check_branch
          %804 = sbr.rel (%p802) target = $region52
        $region51: #{miss_decoder_forward.1} parent=11 // pred_region
          _
        $region52: #{miss_decoder_forward.1} parent=11 // pred_fallthru
          _
        // Predicated region
        $region53: #{miss_decoder_forward.1} parent=11 // pred_check
          %p805 = pneg %p367
        $region54: #{miss_decoder_forward.1} parent=11 // pred_check_branch
          %807 = sbr.rel (%p805) target = $region56
        $region55: #{miss_decoder_forward.1} parent=11 // pred_region
          %s809 = ssub.s32 1024, 1024
          %810 = vsyncadd [#allocation9], %s809
          %s811 = sshll.u32 [#allocation8], 4
          %s812 = int_to_ptr.vmem [resolvable:$true] %s811
          %817 = dma.hbm_to_vmem [thread:$0]  %s25, 1024, %s812, [#allocation9], 128, 128, 8
        $region56: #{miss_decoder_forward.1} parent=11 // pred_fallthru
          _
        // Predicated region
        $region57: #{miss_decoder_forward.1} parent=11 // pred_check
          %p818 = pneg %p388
        $region58: #{miss_decoder_forward.1} parent=11 // pred_check_branch
          %820 = sbr.rel (%p818) target = $region60
        $region59: #{miss_decoder_forward.1} parent=11 // pred_region
          _
        $region60: #{miss_decoder_forward.1} parent=11 // pred_fallthru
          _
        // Predicated region
        $region61: #{miss_decoder_forward.1} parent=11 // pred_check
          %p821 = pneg %p409
        $region62: #{miss_decoder_forward.1} parent=11 // pred_check_branch
          %823 = sbr.rel (%p821) target = $region64
        $region63: #{miss_decoder_forward.1} parent=11 // pred_region
          %s825 = ssub.s32 1024, 1024
          %826 = vsyncadd [#allocation9], %s825
          %s827 = sshll.u32 [#allocation10], 4
          %s828 = int_to_ptr.vmem [resolvable:$true] %s827
          %833 = dma.hbm_to_vmem [thread:$0]  %s29, 1024, %s828, [#allocation9], 128, 128, 8
        $region64: #{miss_decoder_forward.1} parent=11 // pred_fallthru
          _
        // Predicated region
        $region65: #{miss_decoder_forward.1} parent=11 // pred_check
          %p834 = pneg %p430
        $region66: #{miss_decoder_forward.1} parent=11 // pred_check_branch
          %836 = sbr.rel (%p834) target = $region68
        $region67: #{miss_decoder_forward.1} parent=11 // pred_region
          %s838 = ssub.s32 32, 32
          %839 = vsyncadd [#allocation12], %s838
          %s840 = sshll.u32 [#allocation11], 4
          %s841 = int_to_ptr.vmem [resolvable:$true] %s840
          %846 = dma.hbm_to_vmem [thread:$0]  %s31, 32, %s841, [#allocation12], 16, 16, 1
        $region68: #{miss_decoder_forward.1} parent=11 // pred_fallthru
          _
        // Predicated region
        $region69: #{miss_decoder_forward.1} parent=11 // pred_check
          %p847 = pneg %p451
        $region70: #{miss_decoder_forward.1} parent=11 // pred_check_branch
          %849 = sbr.rel (%p847) target = $region72
        $region71: #{miss_decoder_forward.1} parent=11 // pred_region
          %s851 = ssub.s32 1024, 1024
          %852 = vsyncadd [#allocation12], %s851
          %s853 = sshll.u32 [#allocation13], 4
          %s854 = int_to_ptr.vmem [resolvable:$true] %s853
          %859 = dma.hbm_to_vmem [thread:$0]  %s33, 1024, %s854, [#allocation12], 128, 128, 8
        $region72: #{miss_decoder_forward.1} parent=11 // pred_fallthru
          _
        // Predicated region
        $region73: #{miss_decoder_forward.1} parent=11 // pred_check
          %p860 = pneg %p472
        $region74: #{miss_decoder_forward.1} parent=11 // pred_check_branch
          %862 = sbr.rel (%p860) target = $region76
        $region75: #{miss_decoder_forward.1} parent=11 // pred_region
          %s864 = ssub.s32 32, 32
          %865 = vsyncadd [#allocation15], %s864
          %s866 = sshll.u32 [#allocation14], 4
          %s867 = int_to_ptr.vmem [resolvable:$true] %s866
          %872 = dma.hbm_to_vmem [thread:$0]  %s35, 32, %s867, [#allocation15], 16, 16, 1
        $region76: #{miss_decoder_forward.1} parent=11 // pred_fallthru
          _
        // Predicated region
        $region77: #{miss_decoder_forward.1} parent=11 // pred_check
          %p873 = pneg %p493
        $region78: #{miss_decoder_forward.1} parent=11 // pred_check_branch
          %875 = sbr.rel (%p873) target = $region80
        $region79: #{miss_decoder_forward.1} parent=11 // pred_region
          %s877 = ssub.s32 1024, 1024
          %878 = vsyncadd [#allocation15], %s877
          %s879 = sshll.u32 [#allocation16], 4
          %s880 = int_to_ptr.vmem [resolvable:$true] %s879
          %885 = dma.hbm_to_vmem [thread:$0]  %s37, 1024, %s880, [#allocation15], 128, 128, 8
        $region80: #{miss_decoder_forward.1} parent=11 // pred_fallthru
          _
        // Predicated region
        $region81: #{miss_decoder_forward.1} parent=11 // pred_check
          %p886 = pneg %p514
        $region82: #{miss_decoder_forward.1} parent=11 // pred_check_branch
          %888 = sbr.rel (%p886) target = $region84
        $region83: #{miss_decoder_forward.1} parent=11 // pred_region
          %s890 = ssub.s32 32, 32
          %891 = vsyncadd [#allocation18], %s890
          %s892 = sshll.u32 [#allocation17], 4
          %s893 = int_to_ptr.vmem [resolvable:$true] %s892
          %898 = dma.hbm_to_vmem [thread:$0]  %s39, 32, %s893, [#allocation18], 16, 16, 1
        $region84: #{miss_decoder_forward.1} parent=11 // pred_fallthru
          _
        // Predicated region
        $region85: #{miss_decoder_forward.1} parent=11 // pred_check
          %p899 = pneg %p535
        $region86: #{miss_decoder_forward.1} parent=11 // pred_check_branch
          %901 = sbr.rel (%p899) target = $region88
        $region87: #{miss_decoder_forward.1} parent=11 // pred_region
          %s903 = ssub.s32 32, 32
          %904 = vsyncadd [#allocation18], %s903
          %s905 = sshll.u32 [#allocation19], 4
          %s906 = int_to_ptr.vmem [resolvable:$true] %s905
          %911 = dma.hbm_to_vmem [thread:$0]  %s41, 32, %s906, [#allocation18], 16, 16, 1
        $region88: #{miss_decoder_forward.1} parent=11 // pred_fallthru
          _
        // Predicated region
        $region89: #{miss_decoder_forward.1} parent=11 // pred_check
          %p912 = pneg %p556
        $region90: #{miss_decoder_forward.1} parent=11 // pred_check_branch
          %914 = sbr.rel (%p912) target = $region92
        $region91: #{miss_decoder_forward.1} parent=11 // pred_region
          %s916 = ssub.s32 32, 32
          %917 = vsyncadd [#allocation21], %s916
          %s918 = sshll.u32 [#allocation20], 4
          %s919 = int_to_ptr.vmem [resolvable:$true] %s918
          %924 = dma.hbm_to_vmem [thread:$0]  %s43, 32, %s919, [#allocation21], 16, 16, 1
        $region92: #{miss_decoder_forward.1} parent=11 // pred_fallthru
          _
        // Predicated region
        $region93: #{miss_decoder_forward.1} parent=11 // pred_check
          %p925 = pneg %p577
        $region94: #{miss_decoder_forward.1} parent=11 // pred_check_branch
          %927 = sbr.rel (%p925) target = $region96
        $region95: #{miss_decoder_forward.1} parent=11 // pred_region
          %s929 = ssub.s32 1024, 1024
          %930 = vsyncadd [#allocation21], %s929
          %s931 = sshll.u32 [#allocation22], 4
          %s932 = int_to_ptr.vmem [resolvable:$true] %s931
          %937 = dma.hbm_to_vmem [thread:$0]  %s45, 1024, %s932, [#allocation21], 128, 128, 8
        $region96: #{miss_decoder_forward.1} parent=11 // pred_fallthru
          _
        // Predicated region
        $region97: #{miss_decoder_forward.1} parent=11 // pred_check
          %p938 = pneg %p598
        $region98: #{miss_decoder_forward.1} parent=11 // pred_check_branch
          %940 = sbr.rel (%p938) target = $region100
        $region99: #{miss_decoder_forward.1} parent=11 // pred_region
          %s942 = ssub.s32 32, 32
          %943 = vsyncadd [#allocation24], %s942
          %s944 = sshll.u32 [#allocation23], 4
          %s945 = int_to_ptr.vmem [resolvable:$true] %s944
          %950 = dma.hbm_to_vmem [thread:$0]  %s47, 32, %s945, [#allocation24], 16, 16, 1
        $region100: #{miss_decoder_forward.1} parent=11 // pred_fallthru
          _
        // Predicated region
        $region101: #{miss_decoder_forward.1} parent=11 // pred_check
          %p951 = pneg %p619
        $region102: #{miss_decoder_forward.1} parent=11 // pred_check_branch
          %953 = sbr.rel (%p951) target = $region104
        $region103: #{miss_decoder_forward.1} parent=11 // pred_region
          _
        $region104: #{miss_decoder_forward.1} parent=11 // pred_fallthru
          _
        // Predicated region
        $region105: #{miss_decoder_forward.1} parent=11 // pred_check
          %p954 = pneg %p640
        $region106: #{miss_decoder_forward.1} parent=11 // pred_check_branch
          %956 = sbr.rel (%p954) target = $region108
        $region107: #{miss_decoder_forward.1} parent=11 // pred_region
          %s958 = ssub.s32 32, 32
          %959 = vsyncadd [#allocation24], %s958
          %s960 = sshll.u32 [#allocation25], 4
          %s961 = int_to_ptr.vmem [resolvable:$true] %s960
          %966 = dma.hbm_to_vmem [thread:$0]  %s51, 32, %s961, [#allocation24], 16, 16, 1
        $region108: #{miss_decoder_forward.1} parent=11 // pred_fallthru
          _
        // Predicated region
        $region109: #{miss_decoder_forward.1} parent=11 // pred_check
          %p967 = pneg %p661
        $region110: #{miss_decoder_forward.1} parent=11 // pred_check_branch
          %969 = sbr.rel (%p967) target = $region112
        $region111: #{miss_decoder_forward.1} parent=11 // pred_region
          %s971 = ssub.s32 32, 32
          %972 = vsyncadd [#allocation27], %s971
          %s973 = sshll.u32 [#allocation26], 4
          %s974 = int_to_ptr.vmem [resolvable:$true] %s973
          %979 = dma.hbm_to_vmem [thread:$0]  %s53, 32, %s974, [#allocation27], 16, 16, 1
        $region112: #{miss_decoder_forward.1} parent=11 // pred_fallthru
          _
        // Predicated region
        $region113: #{miss_decoder_forward.1} parent=11 // pred_check
          %p980 = pneg %p682
        $region114: #{miss_decoder_forward.1} parent=11 // pred_check_branch
          %982 = sbr.rel (%p980) target = $region116
        $region115: #{miss_decoder_forward.1} parent=11 // pred_region
          %s984 = ssub.s32 32, 32
          %985 = vsyncadd [#allocation27], %s984
          %s986 = sshll.u32 [#allocation28], 4
          %s987 = int_to_ptr.vmem [resolvable:$true] %s986
          %992 = dma.hbm_to_vmem [thread:$0]  %s55, 32, %s987, [#allocation27], 16, 16, 1
        $region116: #{miss_decoder_forward.1} parent=11 // pred_fallthru
          _
        // Predicated region
        $region117: #{miss_decoder_forward.1} parent=11 // pred_check
          %p993 = pneg %p703
        $region118: #{miss_decoder_forward.1} parent=11 // pred_check_branch
          %995 = sbr.rel (%p993) target = $region120
        $region119: #{miss_decoder_forward.1} parent=11 // pred_region
          _
        $region120: #{miss_decoder_forward.1} parent=11 // pred_fallthru
          _
        // Predicated region
        $region121: #{miss_decoder_forward.1} parent=11 // pred_check
          %p996 = pneg %p724
        $region122: #{miss_decoder_forward.1} parent=11 // pred_check_branch
          %998 = sbr.rel (%p996) target = $region124
        $region123: #{miss_decoder_forward.1} parent=11 // pred_region
          %s1000 = ssub.s32 16, 16
          %1001 = vsyncadd [#allocation30], %s1000
          %s1003 = sshll.u32 [#allocation29], 4
          %s1004 = int_to_ptr.vmem [resolvable:$true] %s1003
          %1006 = dma.hbm_to_vmem [thread:$0]  %s59, 16, %s1004, [#allocation30]
        $region124: #{miss_decoder_forward.1} parent=11 // pred_fallthru
          _
      $region12: #{miss_decoder_forward.1} parent=5 // pred_fallthru
        _
      %p1007 = scmp.lt.s32.totalorder %s84, 2
      // Predicated region
      $region125: #{miss_decoder_forward.1} parent=5 // pred_check
        %p1008 = pneg %p1007
      $region126: #{miss_decoder_forward.1} parent=5 // pred_check_branch
        %1010 = sbr.rel (%p1008) target = $region128
      $region127: #{miss_decoder_forward.1} parent=5 // pred_region
        // Predicated region
        $region129: #{miss_decoder_forward.1} parent=127 // pred_check
          %p1011 = pneg %p104
        $region130: #{miss_decoder_forward.1} parent=127 // pred_check_branch
          %1013 = sbr.rel (%p1011) target = $region132
        $region131: #{miss_decoder_forward.1} parent=127 // pred_region
          %s1014 = sand.u32 %s94, 1
          %s1015 = scalar_lea.sflag [#allocation3], %s1014
          %s1016 = sand.u32 %s94, 1
          %s1017 = smul.addr %s1016, 8
          %s1018 = scalar_lea.vmem [#allocation2], %s1017
          %s1020 = ssub.s32 128, 128
          %1021 = vsyncadd %s1015, %s1020
          %s1022 = smul.addr %s84, 128
          %s1023 = scalar_lea.hbm %s1, %s1022
          %s1025 = sshll.u32 %s1018, 4
          %s1026 = int_to_ptr.vmem [resolvable:$true] %s1025
          %1028 = dma.hbm_to_vmem [thread:$0]  %s1023, 128, %s1026, %s1015
        $region132: #{miss_decoder_forward.1} parent=127 // pred_fallthru
          _
        // Predicated region
        $region133: #{miss_decoder_forward.1} parent=127 // pred_check
          %p1029 = pneg %p130
        $region134: #{miss_decoder_forward.1} parent=127 // pred_check_branch
          %1031 = sbr.rel (%p1029) target = $region136
        $region135: #{miss_decoder_forward.1} parent=127 // pred_region
          %s1032 = sand.u32 %s84, 1
          %s1033 = scalar_lea.sflag [#allocation6], %s1032
          %s1034 = sand.u32 %s120, 1
          %s1035 = smul.addr %s1034, 8
          %s1036 = scalar_lea.vmem [#allocation5], %s1035
          %s1038 = ssub.s32 128, 128
          %1039 = vsyncadd %s1033, %s1038
          %s1040 = smul.addr %s84, 128
          %s1041 = scalar_lea.hbm %s3, %s1040
          %s1043 = sshll.u32 %s1036, 4
          %s1044 = int_to_ptr.vmem [resolvable:$true] %s1043
          %1046 = dma.hbm_to_vmem [thread:$0]  %s1041, 128, %s1044, %s1033
        $region136: #{miss_decoder_forward.1} parent=127 // pred_fallthru
          _
      $region128: #{miss_decoder_forward.1} parent=5 // pred_fallthru
        _
      %p1047 = scmp.le.s32.totalorder 1, %s84
      %p1048 = scmp.lt.s32.totalorder %s84, 3
      %p1049 = pnand %p1047, %p1048
      %p1050 = pneg %p1049
      // Predicated region
      $region137: #{miss_decoder_forward.1} parent=5 // pred_check
        _
      $region138: #{miss_decoder_forward.1} parent=5 // pred_check_branch
        %1052 = sbr.rel (%p1049) target = $region140
      $region139: #{miss_decoder_forward.1} parent=5 // pred_region
        %s1053 = ssub.s32 %s84, 1
        %s1054 = sand.u32 %s97, 1
        %s1055 = scalar_lea.sflag [#allocation3], %s1054
        %s1056 = sand.u32 %s97, 1
        %s1057 = smul.addr %s1056, 8
        %s1058 = scalar_lea.vmem [#allocation2], %s1057
        // Predicated region
        $region141: #{miss_decoder_forward.1} parent=139 // pred_check
          %p1059 = pneg %p110
        $region142: #{miss_decoder_forward.1} parent=139 // pred_check_branch
          %1061 = sbr.rel (%p1059) target = $region144
        $region143: #{miss_decoder_forward.1} parent=139 // pred_region
          %1062 = dma.done %s1055, 128
        $region144: #{miss_decoder_forward.1} parent=139 // pred_fallthru
          _
        %s1063 = sand.u32 %s89, 1
        %s1064 = scalar_lea.sflag [#allocation6], %s1063
        %s1065 = sand.u32 %s123, 1
        %s1066 = smul.addr %s1065, 8
        %s1067 = scalar_lea.vmem [#allocation5], %s1066
        // Predicated region
        $region145: #{miss_decoder_forward.1} parent=139 // pred_check
          %p1068 = pneg %p136
        $region146: #{miss_decoder_forward.1} parent=139 // pred_check_branch
          %1070 = sbr.rel (%p1068) target = $region148
        $region147: #{miss_decoder_forward.1} parent=139 // pred_region
          %1071 = dma.done %s1064, 128
        $region148: #{miss_decoder_forward.1} parent=139 // pred_fallthru
          _
        // Predicated region
        $region149: #{miss_decoder_forward.1} parent=139 // pred_check
          %p1072 = pneg %p283
        $region150: #{miss_decoder_forward.1} parent=139 // pred_check_branch
          %1074 = sbr.rel (%p1072) target = $region152
        $region151: #{miss_decoder_forward.1} parent=139 // pred_region
          %1075 = dma.done [#allocation6], 1024
        $region152: #{miss_decoder_forward.1} parent=139 // pred_fallthru
          _
        // Predicated region
        $region153: #{miss_decoder_forward.1} parent=139 // pred_check
          %p1076 = pneg %p367
        $region154: #{miss_decoder_forward.1} parent=139 // pred_check_branch
          %1078 = sbr.rel (%p1076) target = $region156
        $region155: #{miss_decoder_forward.1} parent=139 // pred_region
          %1079 = dma.done [#allocation9], 1024
        $region156: #{miss_decoder_forward.1} parent=139 // pred_fallthru
          _
        // Predicated region
        $region157: #{miss_decoder_forward.1} parent=139 // pred_check
          %p1080 = pneg %p409
        $region158: #{miss_decoder_forward.1} parent=139 // pred_check_branch
          %1082 = sbr.rel (%p1080) target = $region160
        $region159: #{miss_decoder_forward.1} parent=139 // pred_region
          %1083 = dma.done [#allocation9], 1024
        $region160: #{miss_decoder_forward.1} parent=139 // pred_fallthru
          _
        // Predicated region
        $region161: #{miss_decoder_forward.1} parent=139 // pred_check
          %p1084 = pneg %p430
        $region162: #{miss_decoder_forward.1} parent=139 // pred_check_branch
          %1086 = sbr.rel (%p1084) target = $region164
        $region163: #{miss_decoder_forward.1} parent=139 // pred_region
          %1087 = dma.done [#allocation12], 32
        $region164: #{miss_decoder_forward.1} parent=139 // pred_fallthru
          _
        // Predicated region
        $region165: #{miss_decoder_forward.1} parent=139 // pred_check
          %p1088 = pneg %p451
        $region166: #{miss_decoder_forward.1} parent=139 // pred_check_branch
          %1090 = sbr.rel (%p1088) target = $region168
        $region167: #{miss_decoder_forward.1} parent=139 // pred_region
          %1091 = dma.done [#allocation12], 1024
        $region168: #{miss_decoder_forward.1} parent=139 // pred_fallthru
          _
        // Predicated region
        $region169: #{miss_decoder_forward.1} parent=139 // pred_check
          %p1092 = pneg %p472
        $region170: #{miss_decoder_forward.1} parent=139 // pred_check_branch
          %1094 = sbr.rel (%p1092) target = $region172
        $region171: #{miss_decoder_forward.1} parent=139 // pred_region
          %1095 = dma.done [#allocation15], 32
        $region172: #{miss_decoder_forward.1} parent=139 // pred_fallthru
          _
        // Predicated region
        $region173: #{miss_decoder_forward.1} parent=139 // pred_check
          %p1096 = pneg %p493
        $region174: #{miss_decoder_forward.1} parent=139 // pred_check_branch
          %1098 = sbr.rel (%p1096) target = $region176
        $region175: #{miss_decoder_forward.1} parent=139 // pred_region
          %1099 = dma.done [#allocation15], 1024
        $region176: #{miss_decoder_forward.1} parent=139 // pred_fallthru
          _
        // Predicated region
        $region177: #{miss_decoder_forward.1} parent=139 // pred_check
          %p1100 = pneg %p514
        $region178: #{miss_decoder_forward.1} parent=139 // pred_check_branch
          %1102 = sbr.rel (%p1100) target = $region180
        $region179: #{miss_decoder_forward.1} parent=139 // pred_region
          %1103 = dma.done [#allocation18], 32
        $region180: #{miss_decoder_forward.1} parent=139 // pred_fallthru
          _
        // Predicated region
        $region181: #{miss_decoder_forward.1} parent=139 // pred_check
          %p1104 = pneg %p535
        $region182: #{miss_decoder_forward.1} parent=139 // pred_check_branch
          %1106 = sbr.rel (%p1104) target = $region184
        $region183: #{miss_decoder_forward.1} parent=139 // pred_region
          %1107 = dma.done [#allocation18], 32
        $region184: #{miss_decoder_forward.1} parent=139 // pred_fallthru
          _
        // Predicated region
        $region185: #{miss_decoder_forward.1} parent=139 // pred_check
          %p1108 = pneg %p556
        $region186: #{miss_decoder_forward.1} parent=139 // pred_check_branch
          %1110 = sbr.rel (%p1108) target = $region188
        $region187: #{miss_decoder_forward.1} parent=139 // pred_region
          %1111 = dma.done [#allocation21], 32
        $region188: #{miss_decoder_forward.1} parent=139 // pred_fallthru
          _
        // Predicated region
        $region189: #{miss_decoder_forward.1} parent=139 // pred_check
          %p1112 = pneg %p577
        $region190: #{miss_decoder_forward.1} parent=139 // pred_check_branch
          %1114 = sbr.rel (%p1112) target = $region192
        $region191: #{miss_decoder_forward.1} parent=139 // pred_region
          %1115 = dma.done [#allocation21], 1024
        $region192: #{miss_decoder_forward.1} parent=139 // pred_fallthru
          _
        // Predicated region
        $region193: #{miss_decoder_forward.1} parent=139 // pred_check
          %p1116 = pneg %p598
        $region194: #{miss_decoder_forward.1} parent=139 // pred_check_branch
          %1118 = sbr.rel (%p1116) target = $region196
        $region195: #{miss_decoder_forward.1} parent=139 // pred_region
          %1119 = dma.done [#allocation24], 32
        $region196: #{miss_decoder_forward.1} parent=139 // pred_fallthru
          _
        // Predicated region
        $region197: #{miss_decoder_forward.1} parent=139 // pred_check
          %p1120 = pneg %p640
        $region198: #{miss_decoder_forward.1} parent=139 // pred_check_branch
          %1122 = sbr.rel (%p1120) target = $region200
        $region199: #{miss_decoder_forward.1} parent=139 // pred_region
          %1123 = dma.done [#allocation24], 32
        $region200: #{miss_decoder_forward.1} parent=139 // pred_fallthru
          _
        // Predicated region
        $region201: #{miss_decoder_forward.1} parent=139 // pred_check
          %p1124 = pneg %p661
        $region202: #{miss_decoder_forward.1} parent=139 // pred_check_branch
          %1126 = sbr.rel (%p1124) target = $region204
        $region203: #{miss_decoder_forward.1} parent=139 // pred_region
          %1127 = dma.done [#allocation27], 32
        $region204: #{miss_decoder_forward.1} parent=139 // pred_fallthru
          _
        // Predicated region
        $region205: #{miss_decoder_forward.1} parent=139 // pred_check
          %p1128 = pneg %p682
        $region206: #{miss_decoder_forward.1} parent=139 // pred_check_branch
          %1130 = sbr.rel (%p1128) target = $region208
        $region207: #{miss_decoder_forward.1} parent=139 // pred_region
          %1131 = dma.done [#allocation27], 32
        $region208: #{miss_decoder_forward.1} parent=139 // pred_fallthru
          _
        // Predicated region
        $region209: #{miss_decoder_forward.1} parent=139 // pred_check
          %p1132 = pneg %p724
        $region210: #{miss_decoder_forward.1} parent=139 // pred_check_branch
          %1134 = sbr.rel (%p1132) target = $region212
        $region211: #{miss_decoder_forward.1} parent=139 // pred_region
          %1135 = dma.done [#allocation30], 16
        $region212: #{miss_decoder_forward.1} parent=139 // pred_fallthru
          _
        %s1136 = sand.u32 %s97, 1
        %s1137 = scalar_lea.sflag [#allocation3], %s1136
        %s1138 = sand.u32 %s97, 1
        %s1139 = smul.addr %s1138, 8
        %s1140 = scalar_lea.vmem [#allocation2], %s1139
        %p1141 = pneg %p110
        %p1142 = pneg %p107
        %s1143 = sand.u32 %s89, 1
        %s1144 = scalar_lea.sflag [#allocation6], %s1143
        %s1145 = sand.u32 %s123, 1
        %s1146 = smul.addr %s1145, 8
        %s1147 = scalar_lea.vmem [#allocation5], %s1146
        %p1148 = pneg %p136
        %p1149 = pneg %p133
        %p1150 = pneg %p157
        %p1151 = pneg %p154
        %p1152 = pneg %p178
        %p1153 = pneg %p175
        %p1154 = pneg %p199
        %p1155 = pneg %p196
        %p1156 = pneg %p220
        %p1157 = pneg %p217
        %p1158 = pneg %p241
        %p1159 = pneg %p238
        %p1160 = pneg %p262
        %p1161 = pneg %p259
        %p1162 = pneg %p283
        %p1163 = pneg %p280
        %p1164 = pneg %p304
        %p1165 = pneg %p301
        %p1166 = pneg %p325
        %p1167 = pneg %p322
        %p1168 = pneg %p346
        %p1169 = pneg %p343
        %p1170 = pneg %p367
        %p1171 = pneg %p364
        %p1172 = pneg %p388
        %p1173 = pneg %p385
        %p1174 = pneg %p409
        %p1175 = pneg %p406
        %p1176 = pneg %p430
        %p1177 = pneg %p427
        %p1178 = pneg %p451
        %p1179 = pneg %p448
        %p1180 = pneg %p472
        %p1181 = pneg %p469
        %p1182 = pneg %p493
        %p1183 = pneg %p490
        %p1184 = pneg %p514
        %p1185 = pneg %p511
        %p1186 = pneg %p535
        %p1187 = pneg %p532
        %p1188 = pneg %p556
        %p1189 = pneg %p553
        %p1190 = pneg %p577
        %p1191 = pneg %p574
        %p1192 = pneg %p598
        %p1193 = pneg %p595
        %p1194 = pneg %p619
        %p1195 = pneg %p616
        %p1196 = pneg %p640
        %p1197 = pneg %p637
        %p1198 = pneg %p661
        %p1199 = pneg %p658
        %p1200 = pneg %p682
        %p1201 = pneg %p679
        %p1202 = pneg %p703
        %p1203 = pneg %p700
        %p1204 = pneg %p724
        %p1205 = pneg %p721
        %p1206 = pneg %p750
        %p1207 = pneg %p747
        %s1208 = sand.u32 %s737, 1
        %s1209 = scalar_lea.sflag [#allocation4], %s1208
        %s1210 = sand.u32 %s737, 1
        %s1211 = smul.addr %s1210, 8
        %s1212 = scalar_lea.vmem [#allocation31], %s1211
        %v1213 = vld [vmem:[%s1058] sm:$0xff]
        %v1214 = vld [vmem:[%s1067] sm:$0xff]
        %v1215 = vld [vmem:[%s5] sm:$0xff]
        %v1216 = vld [vmem:[%s5 + $0x8] sm:$0xff]
        %v1217 = vld [vmem:[%s5 + $0x10] sm:$0xff]
        %v1218 = vld [vmem:[%s5 + $0x18] sm:$0xff]
        %v1219 = vld [vmem:[%s7] sm:$0x1]
        %v1220 = vld [vmem:[%s9] sm:$0xff]
        %v1221 = vld [vmem:[%s9 + $0x8] sm:$0xff]
        %v1222 = vld [vmem:[%s9 + $0x10] sm:$0xff]
        %v1223 = vld [vmem:[%s9 + $0x18] sm:$0xff]
        %v1224 = vld [vmem:[%s11] sm:$0x1]
        %v1225 = vld [vmem:[%s13] sm:$0xff]
        %v1226 = vld [vmem:[%s13 + $0x8] sm:$0xff]
        %v1227 = vld [vmem:[%s13 + $0x10] sm:$0xff]
        %v1228 = vld [vmem:[%s13 + $0x18] sm:$0xff]
        %v1229 = vld [vmem:[%s15] sm:$0x1]
        %v1230 = vld [vmem:[#allocation7] sm:$0xff]
        %v1231 = vld [vmem:[#allocation7 + $0x8] sm:$0xff]
        %v1232 = vld [vmem:[#allocation7 + $0x10] sm:$0xff]
        %v1233 = vld [vmem:[#allocation7 + $0x18] sm:$0xff]
        %v1234 = vld [vmem:[%s19] sm:$0x1]
        %v1236 = vlaneseq
        %v1237 = vshrl.u32 %v1236, 7
        %v1238 = vsub.s32 0, %v1237
        %v1239 = vrot.slane %v1219, %v1238
        %vm1241 = vcmask 261120
        %v1243 = vsel %vm1241, %v1213, 0
        %1245 = vmatprep.subr.mxu0 0.0
        %1246 = vmatpush1.msra.mxu0 %v1215
        %1247 = vmatprep.subr.mxu0 0.0
        %1248 = vmatpush1.msra.mxu0 %v1216
        %1249 = vmatprep.subr.mxu0 0.0
        %1250 = vmatpush1.msra.mxu0 %v1217
        %1251 = vmatprep.subr.mxu0 0.0
        %1252 = vmatpush1.msra.mxu0 %v1218
        %1253 = vmatprep.subr.mxu0 0.0
        %1254 = vmatpush1.msra.mxu0 0.0
        %1255 = vmatprep.subr.mxu0 0.0
        %1256 = vmatpush1.msra.mxu0 0.0
        %1257 = vmatprep.subr.mxu0 0.0
        %1258 = vmatpush1.msra.mxu0 0.0
        %1259 = vmatprep.subr.mxu0 0.0
        %1260 = vmatpush1.msra.mxu0 0.0
        %1261 = vmatprep.subr.mxu0 0.0
        %1262 = vmatpush1.msra.mxu0 0.0
        %1263 = vmatprep.subr.mxu0 0.0
        %1264 = vmatpush1.msra.mxu0 0.0
        %1265 = vmatprep.subr.mxu0 0.0
        %1266 = vmatpush1.msra.mxu0 0.0
        %1267 = vmatprep.subr.mxu0 0.0
        %1268 = vmatpush1.msra.mxu0 0.0
        %1269 = vmatprep.subr.mxu0 0.0
        %1270 = vmatpush1.msra.mxu0 0.0
        %1271 = vmatprep.subr.mxu0 0.0
        %1272 = vmatpush1.msra.mxu0 0.0
        %1273 = vmatprep.subr.mxu0 0.0
        %1274 = vmatpush1.msra.mxu0 0.0
        %1275 = vmatprep.subr.mxu0 0.0
        %1276 = vmatpush1.msra.mxu0 0.0
        %1277 = vmatprep.subr.mxu0 0.0
        %1278 = vmatpush1.msra.mxu0 0.0
        %1279 = vmatprep.subr.mxu0 0.0
        %1280 = vmatpush1.msra.mxu0 0.0
        %1281 = vmatprep.subr.mxu0 0.0
        %1282 = vmatpush1.msra.mxu0 0.0
        %1283 = vmatprep.subr.mxu0 0.0
        %1284 = vmatpush1.msra.mxu0 0.0
        %1285 = vmatprep.subr.mxu0 0.0
        %1286 = vmatpush1.msra.mxu0 0.0
        %1287 = vmatprep.subr.mxu0 0.0
        %1288 = vmatpush1.msra.mxu0 0.0
        %1289 = vmatprep.subr.mxu0 0.0
        %1290 = vmatpush1.msra.mxu0 0.0
        %1291 = vmatprep.subr.mxu0 0.0
        %1292 = vmatpush1.msra.mxu0 0.0
        %1293 = vmatprep.subr.mxu0 0.0
        %1294 = vmatpush1.msra.mxu0 0.0
        %1295 = vmatprep.subr.mxu0 0.0
        %1296 = vmatpush1.msra.mxu0 0.0
        %1297 = vmatprep.subr.mxu0 0.0
        %1298 = vmatpush1.msra.mxu0 0.0
        %1299 = vmatprep.subr.mxu0 0.0
        %1300 = vmatpush1.msra.mxu0 0.0
        %1301 = vmatprep.subr.mxu0 0.0
        %1302 = vmatpush1.msra.mxu0 0.0
        %1303 = vmatprep.subr.mxu0 0.0
        %1304 = vmatpush1.msra.mxu0 0.0
        %1305 = vmatprep.subr.mxu0 0.0
        %1306 = vmatpush1.msra.mxu0 0.0
        %1307 = vmatprep.subr.mxu0 0.0
        %1308 = vmatpush1.msra.mxu0 0.0
        %1309 = vmatprep.mubr.f32.mxu0 0.0
        %1310 = vmatmul.mubr.f32.gmra.mrb[0].mxu0 %v1243
        %v1311 = vpop.f32.mrb[0].mxu0
        %v1312 = vadd.f32 %v1239, %v1311
        %v1313 = vpop.f32.mrb[0].mxu0
        %1314 = vdwg.mxu0
        %v1316 = vlaneseq
        %v1317 = vshrl.u32 %v1316, 7
        %v1318 = vsub.s32 0, %v1317
        %v1319 = vrot.slane %v1224, %v1318
        %1321 = vmatprep.subr.mxu0 0.0
        %1322 = vmatpush1.msra.mxu0 %v1220
        %1323 = vmatprep.subr.mxu0 0.0
        %1324 = vmatpush1.msra.mxu0 %v1221
        %1325 = vmatprep.subr.mxu0 0.0
        %1326 = vmatpush1.msra.mxu0 %v1222
        %1327 = vmatprep.subr.mxu0 0.0
        %1328 = vmatpush1.msra.mxu0 %v1223
        %1329 = vmatprep.subr.mxu0 0.0
        %1330 = vmatpush1.msra.mxu0 0.0
        %1331 = vmatprep.subr.mxu0 0.0
        %1332 = vmatpush1.msra.mxu0 0.0
        %1333 = vmatprep.subr.mxu0 0.0
        %1334 = vmatpush1.msra.mxu0 0.0
        %1335 = vmatprep.subr.mxu0 0.0
        %1336 = vmatpush1.msra.mxu0 0.0
        %1337 = vmatprep.subr.mxu0 0.0
        %1338 = vmatpush1.msra.mxu0 0.0
        %1339 = vmatprep.subr.mxu0 0.0
        %1340 = vmatpush1.msra.mxu0 0.0
        %1341 = vmatprep.subr.mxu0 0.0
        %1342 = vmatpush1.msra.mxu0 0.0
        %1343 = vmatprep.subr.mxu0 0.0
        %1344 = vmatpush1.msra.mxu0 0.0
        %1345 = vmatprep.subr.mxu0 0.0
        %1346 = vmatpush1.msra.mxu0 0.0
        %1347 = vmatprep.subr.mxu0 0.0
        %1348 = vmatpush1.msra.mxu0 0.0
        %1349 = vmatprep.subr.mxu0 0.0
        %1350 = vmatpush1.msra.mxu0 0.0
        %1351 = vmatprep.subr.mxu0 0.0
        %1352 = vmatpush1.msra.mxu0 0.0
        %1353 = vmatprep.subr.mxu0 0.0
        %1354 = vmatpush1.msra.mxu0 0.0
        %1355 = vmatprep.subr.mxu0 0.0
        %1356 = vmatpush1.msra.mxu0 0.0
        %1357 = vmatprep.subr.mxu0 0.0
        %1358 = vmatpush1.msra.mxu0 0.0
        %1359 = vmatprep.subr.mxu0 0.0
        %1360 = vmatpush1.msra.mxu0 0.0
        %1361 = vmatprep.subr.mxu0 0.0
        %1362 = vmatpush1.msra.mxu0 0.0
        %1363 = vmatprep.subr.mxu0 0.0
        %1364 = vmatpush1.msra.mxu0 0.0
        %1365 = vmatprep.subr.mxu0 0.0
        %1366 = vmatpush1.msra.mxu0 0.0
        %1367 = vmatprep.subr.mxu0 0.0
        %1368 = vmatpush1.msra.mxu0 0.0
        %1369 = vmatprep.subr.mxu0 0.0
        %1370 = vmatpush1.msra.mxu0 0.0
        %1371 = vmatprep.subr.mxu0 0.0
        %1372 = vmatpush1.msra.mxu0 0.0
        %1373 = vmatprep.subr.mxu0 0.0
        %1374 = vmatpush1.msra.mxu0 0.0
        %1375 = vmatprep.subr.mxu0 0.0
        %1376 = vmatpush1.msra.mxu0 0.0
        %1377 = vmatprep.subr.mxu0 0.0
        %1378 = vmatpush1.msra.mxu0 0.0
        %1379 = vmatprep.subr.mxu0 0.0
        %1380 = vmatpush1.msra.mxu0 0.0
        %1381 = vmatprep.subr.mxu0 0.0
        %1382 = vmatpush1.msra.mxu0 0.0
        %1383 = vmatprep.subr.mxu0 0.0
        %1384 = vmatpush1.msra.mxu0 0.0
        %1385 = vmatprep.mubr.f32.mxu0 0.0
        %1386 = vmatmul.mubr.f32.gmra.mrb[0].mxu0 %v1243
        %v1387 = vpop.f32.mrb[0].mxu0
        %v1388 = vadd.f32 %v1319, %v1387
        %v1389 = vpop.f32.mrb[0].mxu0
        %1390 = vdwg.mxu0
        %v1392 = vlaneseq
        %v1393 = vshrl.u32 %v1392, 7
        %v1394 = vsub.s32 0, %v1393
        %v1395 = vrot.slane %v1229, %v1394
        %1397 = vmatprep.subr.mxu0 0.0
        %1398 = vmatpush1.msra.mxu0 %v1225
        %1399 = vmatprep.subr.mxu0 0.0
        %1400 = vmatpush1.msra.mxu0 %v1226
        %1401 = vmatprep.subr.mxu0 0.0
        %1402 = vmatpush1.msra.mxu0 %v1227
        %1403 = vmatprep.subr.mxu0 0.0
        %1404 = vmatpush1.msra.mxu0 %v1228
        %1405 = vmatprep.subr.mxu0 0.0
        %1406 = vmatpush1.msra.mxu0 0.0
        %1407 = vmatprep.subr.mxu0 0.0
        %1408 = vmatpush1.msra.mxu0 0.0
        %1409 = vmatprep.subr.mxu0 0.0
        %1410 = vmatpush1.msra.mxu0 0.0
        %1411 = vmatprep.subr.mxu0 0.0
        %1412 = vmatpush1.msra.mxu0 0.0
        %1413 = vmatprep.subr.mxu0 0.0
        %1414 = vmatpush1.msra.mxu0 0.0
        %1415 = vmatprep.subr.mxu0 0.0
        %1416 = vmatpush1.msra.mxu0 0.0
        %1417 = vmatprep.subr.mxu0 0.0
        %1418 = vmatpush1.msra.mxu0 0.0
        %1419 = vmatprep.subr.mxu0 0.0
        %1420 = vmatpush1.msra.mxu0 0.0
        %1421 = vmatprep.subr.mxu0 0.0
        %1422 = vmatpush1.msra.mxu0 0.0
        %1423 = vmatprep.subr.mxu0 0.0
        %1424 = vmatpush1.msra.mxu0 0.0
        %1425 = vmatprep.subr.mxu0 0.0
        %1426 = vmatpush1.msra.mxu0 0.0
        %1427 = vmatprep.subr.mxu0 0.0
        %1428 = vmatpush1.msra.mxu0 0.0
        %1429 = vmatprep.subr.mxu0 0.0
        %1430 = vmatpush1.msra.mxu0 0.0
        %1431 = vmatprep.subr.mxu0 0.0
        %1432 = vmatpush1.msra.mxu0 0.0
        %1433 = vmatprep.subr.mxu0 0.0
        %1434 = vmatpush1.msra.mxu0 0.0
        %1435 = vmatprep.subr.mxu0 0.0
        %1436 = vmatpush1.msra.mxu0 0.0
        %1437 = vmatprep.subr.mxu0 0.0
        %1438 = vmatpush1.msra.mxu0 0.0
        %1439 = vmatprep.subr.mxu0 0.0
        %1440 = vmatpush1.msra.mxu0 0.0
        %1441 = vmatprep.subr.mxu0 0.0
        %1442 = vmatpush1.msra.mxu0 0.0
        %1443 = vmatprep.subr.mxu0 0.0
        %1444 = vmatpush1.msra.mxu0 0.0
        %1445 = vmatprep.subr.mxu0 0.0
        %1446 = vmatpush1.msra.mxu0 0.0
        %1447 = vmatprep.subr.mxu0 0.0
        %1448 = vmatpush1.msra.mxu0 0.0
        %1449 = vmatprep.subr.mxu0 0.0
        %1450 = vmatpush1.msra.mxu0 0.0
        %1451 = vmatprep.subr.mxu0 0.0
        %1452 = vmatpush1.msra.mxu0 0.0
        %1453 = vmatprep.subr.mxu0 0.0
        %1454 = vmatpush1.msra.mxu0 0.0
        %1455 = vmatprep.subr.mxu0 0.0
        %1456 = vmatpush1.msra.mxu0 0.0
        %1457 = vmatprep.subr.mxu0 0.0
        %1458 = vmatpush1.msra.mxu0 0.0
        %1459 = vmatprep.subr.mxu0 0.0
        %1460 = vmatpush1.msra.mxu0 0.0
        %1461 = vmatprep.mubr.f32.mxu0 0.0
        %1462 = vmatmul.mubr.f32.gmra.mrb[0].mxu0 %v1243
        %v1463 = vpop.f32.mrb[0].mxu0
        %v1464 = vadd.f32 %v1395, %v1463
        %v1465 = vpop.f32.mrb[0].mxu0
        %1466 = vdwg.mxu0
        %vm1467 = vcmask 64512
        %v1469 = vsel %vm1467, %v1312, 0
        %v1472 = vsel %vm1467, %v1388, 0
        %1474 = vmatprep.subr.mxu0 0.0
        %1475 = vmatpush1.xpose.msra.mxu0 %v1472
        %1476 = vmatprep.subr.mxu0 0.0
        %1477 = vmatpush1.xpose.msra.mxu0 0.0
        %1478 = vmatprep.subr.mxu0 0.0
        %1479 = vmatpush1.xpose.msra.mxu0 0.0
        %1480 = vmatprep.subr.mxu0 0.0
        %1481 = vmatpush1.xpose.msra.mxu0 0.0
        %1482 = vmatprep.subr.mxu0 0.0
        %1483 = vmatpush1.xpose.msra.mxu0 0.0
        %1484 = vmatprep.subr.mxu0 0.0
        %1485 = vmatpush1.xpose.msra.mxu0 0.0
        %1486 = vmatprep.subr.mxu0 0.0
        %1487 = vmatpush1.xpose.msra.mxu0 0.0
        %1488 = vmatprep.subr.mxu0 0.0
        %1489 = vmatpush1.xpose.msra.mxu0 0.0
        %1490 = vmatprep.subr.mxu0 0.0
        %1491 = vmatpush1.xpose.msra.mxu0 0.0
        %1492 = vmatprep.subr.mxu0 0.0
        %1493 = vmatpush1.xpose.msra.mxu0 0.0
        %1494 = vmatprep.subr.mxu0 0.0
        %1495 = vmatpush1.xpose.msra.mxu0 0.0
        %1496 = vmatprep.subr.mxu0 0.0
        %1497 = vmatpush1.xpose.msra.mxu0 0.0
        %1498 = vmatprep.subr.mxu0 0.0
        %1499 = vmatpush1.xpose.msra.mxu0 0.0
        %1500 = vmatprep.subr.mxu0 0.0
        %1501 = vmatpush1.xpose.msra.mxu0 0.0
        %1502 = vmatprep.subr.mxu0 0.0
        %1503 = vmatpush1.xpose.msra.mxu0 0.0
        %1504 = vmatprep.subr.mxu0 0.0
        %1505 = vmatpush1.xpose.msra.mxu0 0.0
        %1506 = vmatprep.subr.mxu0 0.0
        %1507 = vmatpush1.xpose.msra.mxu0 0.0
        %1508 = vmatprep.subr.mxu0 0.0
        %1509 = vmatpush1.xpose.msra.mxu0 0.0
        %1510 = vmatprep.subr.mxu0 0.0
        %1511 = vmatpush1.xpose.msra.mxu0 0.0
        %1512 = vmatprep.subr.mxu0 0.0
        %1513 = vmatpush1.xpose.msra.mxu0 0.0
        %1514 = vmatprep.subr.mxu0 0.0
        %1515 = vmatpush1.xpose.msra.mxu0 0.0
        %1516 = vmatprep.subr.mxu0 0.0
        %1517 = vmatpush1.xpose.msra.mxu0 0.0
        %1518 = vmatprep.subr.mxu0 0.0
        %1519 = vmatpush1.xpose.msra.mxu0 0.0
        %1520 = vmatprep.subr.mxu0 0.0
        %1521 = vmatpush1.xpose.msra.mxu0 0.0
        %1522 = vmatprep.subr.mxu0 0.0
        %1523 = vmatpush1.xpose.msra.mxu0 0.0
        %1524 = vmatprep.subr.mxu0 0.0
        %1525 = vmatpush1.xpose.msra.mxu0 0.0
        %1526 = vmatprep.subr.mxu0 0.0
        %1527 = vmatpush1.xpose.msra.mxu0 0.0
        %1528 = vmatprep.subr.mxu0 0.0
        %1529 = vmatpush1.xpose.msra.mxu0 0.0
        %1530 = vmatprep.subr.mxu0 0.0
        %1531 = vmatpush1.xpose.msra.mxu0 0.0
        %1532 = vmatprep.subr.mxu0 0.0
        %1533 = vmatpush1.xpose.msra.mxu0 0.0
        %1534 = vmatprep.subr.mxu0 0.0
        %1535 = vmatpush1.xpose.msra.mxu0 0.0
        %1536 = vmatprep.subr.mxu0 0.0
        %1537 = vmatpush1.xpose.msra.mxu0 0.0
        %1538 = vmatprep.mubr.f32.mxu0 0.0
        %1539 = vmatmul.mubr.f32.gmra.mrb[0].mxu0 %v1469
        %v1540 = vpop.f32.mrb[0].mxu0
        %v1541 = vadd.f32 0.0, %v1540
        %v1542 = vpop.f32.mrb[0].mxu0
        %1543 = vdwg.mxu0
        %v1544 = vsel %vm1467, %v1541, -inf
        %1545 = vmax.xlane.f32.xlu0 %v1544
        %v1546 = vpop.xlane.xlu0 %1545
        %v1547 = vsub.f32 %v1541, %v1546
        %v1548 = vmul.f32 %v1547, 1.442695
        %v1549 = vpow.pop %v1548
        %v1550 = vsel %vm1467, %v1549, 0.0
        %1551 = vadd.xlane.f32.xlu0 %v1550
        %v1552 = vpop.xlane.xlu0 %1551
        %v1553 = vrcp.pop %v1552
        %v1554 = vmul.f32 %v1549, %v1553
        %v1556 = vsel %vm1467, %v1554, 0
        %1558 = vmatprep.subr.mxu0 0.0
        %1559 = vmatpush1.msra.mxu0 %v1464
        %1560 = vmatprep.subr.mxu0 0.0
        %1561 = vmatpush1.msra.mxu0 0.0
        %1562 = vmatprep.subr.mxu0 0.0
        %1563 = vmatpush1.msra.mxu0 0.0
        %1564 = vmatprep.subr.mxu0 0.0
        %1565 = vmatpush1.msra.mxu0 0.0
        %1566 = vmatprep.subr.mxu0 0.0
        %1567 = vmatpush1.msra.mxu0 0.0
        %1568 = vmatprep.subr.mxu0 0.0
        %1569 = vmatpush1.msra.mxu0 0.0
        %1570 = vmatprep.subr.mxu0 0.0
        %1571 = vmatpush1.msra.mxu0 0.0
        %1572 = vmatprep.subr.mxu0 0.0
        %1573 = vmatpush1.msra.mxu0 0.0
        %1574 = vmatprep.subr.mxu0 0.0
        %1575 = vmatpush1.msra.mxu0 0.0
        %1576 = vmatprep.subr.mxu0 0.0
        %1577 = vmatpush1.msra.mxu0 0.0
        %1578 = vmatprep.subr.mxu0 0.0
        %1579 = vmatpush1.msra.mxu0 0.0
        %1580 = vmatprep.subr.mxu0 0.0
        %1581 = vmatpush1.msra.mxu0 0.0
        %1582 = vmatprep.subr.mxu0 0.0
        %1583 = vmatpush1.msra.mxu0 0.0
        %1584 = vmatprep.subr.mxu0 0.0
        %1585 = vmatpush1.msra.mxu0 0.0
        %1586 = vmatprep.subr.mxu0 0.0
        %1587 = vmatpush1.msra.mxu0 0.0
        %1588 = vmatprep.subr.mxu0 0.0
        %1589 = vmatpush1.msra.mxu0 0.0
        %1590 = vmatprep.subr.mxu0 0.0
        %1591 = vmatpush1.msra.mxu0 0.0
        %1592 = vmatprep.subr.mxu0 0.0
        %1593 = vmatpush1.msra.mxu0 0.0
        %1594 = vmatprep.subr.mxu0 0.0
        %1595 = vmatpush1.msra.mxu0 0.0
        %1596 = vmatprep.subr.mxu0 0.0
        %1597 = vmatpush1.msra.mxu0 0.0
        %1598 = vmatprep.subr.mxu0 0.0
        %1599 = vmatpush1.msra.mxu0 0.0
        %1600 = vmatprep.subr.mxu0 0.0
        %1601 = vmatpush1.msra.mxu0 0.0
        %1602 = vmatprep.subr.mxu0 0.0
        %1603 = vmatpush1.msra.mxu0 0.0
        %1604 = vmatprep.subr.mxu0 0.0
        %1605 = vmatpush1.msra.mxu0 0.0
        %1606 = vmatprep.subr.mxu0 0.0
        %1607 = vmatpush1.msra.mxu0 0.0
        %1608 = vmatprep.subr.mxu0 0.0
        %1609 = vmatpush1.msra.mxu0 0.0
        %1610 = vmatprep.subr.mxu0 0.0
        %1611 = vmatpush1.msra.mxu0 0.0
        %1612 = vmatprep.subr.mxu0 0.0
        %1613 = vmatpush1.msra.mxu0 0.0
        %1614 = vmatprep.subr.mxu0 0.0
        %1615 = vmatpush1.msra.mxu0 0.0
        %1616 = vmatprep.subr.mxu0 0.0
        %1617 = vmatpush1.msra.mxu0 0.0
        %1618 = vmatprep.subr.mxu0 0.0
        %1619 = vmatpush1.msra.mxu0 0.0
        %1620 = vmatprep.subr.mxu0 0.0
        %1621 = vmatpush1.msra.mxu0 0.0
        %1622 = vmatprep.mubr.f32.mxu0 0.0
        %1623 = vmatmul.mubr.f32.gmra.mrb[0].mxu0 %v1556
        %v1624 = vpop.f32.mrb[0].mxu0
        %v1625 = vadd.f32 0.0, %v1624
        %v1626 = vpop.f32.mrb[0].mxu0
        %1627 = vdwg.mxu0
        %1628 = vrot.lane.b32.xlu0 %v1312, 120
        %v1629 = vpop.permute.xlu0 %1628
        %1630 = vrot.lane.b32.xlu0 %v1388, 120
        %v1631 = vpop.permute.xlu0 %1630
        %v1632 = vsel %vm1467, %v1629, 0
        %v1634 = vsel %vm1467, %v1631, 0
        %1636 = vmatprep.subr.mxu0 0.0
        %1637 = vmatpush1.xpose.msra.mxu0 %v1634
        %1638 = vmatprep.subr.mxu0 0.0
        %1639 = vmatpush1.xpose.msra.mxu0 0.0
        %1640 = vmatprep.subr.mxu0 0.0
        %1641 = vmatpush1.xpose.msra.mxu0 0.0
        %1642 = vmatprep.subr.mxu0 0.0
        %1643 = vmatpush1.xpose.msra.mxu0 0.0
        %1644 = vmatprep.subr.mxu0 0.0
        %1645 = vmatpush1.xpose.msra.mxu0 0.0
        %1646 = vmatprep.subr.mxu0 0.0
        %1647 = vmatpush1.xpose.msra.mxu0 0.0
        %1648 = vmatprep.subr.mxu0 0.0
        %1649 = vmatpush1.xpose.msra.mxu0 0.0
        %1650 = vmatprep.subr.mxu0 0.0
        %1651 = vmatpush1.xpose.msra.mxu0 0.0
        %1652 = vmatprep.subr.mxu0 0.0
        %1653 = vmatpush1.xpose.msra.mxu0 0.0
        %1654 = vmatprep.subr.mxu0 0.0
        %1655 = vmatpush1.xpose.msra.mxu0 0.0
        %1656 = vmatprep.subr.mxu0 0.0
        %1657 = vmatpush1.xpose.msra.mxu0 0.0
        %1658 = vmatprep.subr.mxu0 0.0
        %1659 = vmatpush1.xpose.msra.mxu0 0.0
        %1660 = vmatprep.subr.mxu0 0.0
        %1661 = vmatpush1.xpose.msra.mxu0 0.0
        %1662 = vmatprep.subr.mxu0 0.0
        %1663 = vmatpush1.xpose.msra.mxu0 0.0
        %1664 = vmatprep.subr.mxu0 0.0
        %1665 = vmatpush1.xpose.msra.mxu0 0.0
        %1666 = vmatprep.subr.mxu0 0.0
        %1667 = vmatpush1.xpose.msra.mxu0 0.0
        %1668 = vmatprep.subr.mxu0 0.0
        %1669 = vmatpush1.xpose.msra.mxu0 0.0
        %1670 = vmatprep.subr.mxu0 0.0
        %1671 = vmatpush1.xpose.msra.mxu0 0.0
        %1672 = vmatprep.subr.mxu0 0.0
        %1673 = vmatpush1.xpose.msra.mxu0 0.0
        %1674 = vmatprep.subr.mxu0 0.0
        %1675 = vmatpush1.xpose.msra.mxu0 0.0
        %1676 = vmatprep.subr.mxu0 0.0
        %1677 = vmatpush1.xpose.msra.mxu0 0.0
        %1678 = vmatprep.subr.mxu0 0.0
        %1679 = vmatpush1.xpose.msra.mxu0 0.0
        %1680 = vmatprep.subr.mxu0 0.0
        %1681 = vmatpush1.xpose.msra.mxu0 0.0
        %1682 = vmatprep.subr.mxu0 0.0
        %1683 = vmatpush1.xpose.msra.mxu0 0.0
        %1684 = vmatprep.subr.mxu0 0.0
        %1685 = vmatpush1.xpose.msra.mxu0 0.0
        %1686 = vmatprep.subr.mxu0 0.0
        %1687 = vmatpush1.xpose.msra.mxu0 0.0
        %1688 = vmatprep.subr.mxu0 0.0
        %1689 = vmatpush1.xpose.msra.mxu0 0.0
        %1690 = vmatprep.subr.mxu0 0.0
        %1691 = vmatpush1.xpose.msra.mxu0 0.0
        %1692 = vmatprep.subr.mxu0 0.0
        %1693 = vmatpush1.xpose.msra.mxu0 0.0
        %1694 = vmatprep.subr.mxu0 0.0
        %1695 = vmatpush1.xpose.msra.mxu0 0.0
        %1696 = vmatprep.subr.mxu0 0.0
        %1697 = vmatpush1.xpose.msra.mxu0 0.0
        %1698 = vmatprep.subr.mxu0 0.0
        %1699 = vmatpush1.xpose.msra.mxu0 0.0
        %1700 = vmatprep.mubr.f32.mxu0 0.0
        %1701 = vmatmul.mubr.f32.gmra.mrb[0].mxu0 %v1632
        %v1702 = vpop.f32.mrb[0].mxu0
        %v1703 = vadd.f32 0.0, %v1702
        %v1704 = vpop.f32.mrb[0].mxu0
        %1705 = vdwg.mxu0
        %v1706 = vsel %vm1467, %v1703, -inf
        %1707 = vmax.xlane.f32.xlu0 %v1706
        %v1708 = vpop.xlane.xlu0 %1707
        %v1709 = vsub.f32 %v1703, %v1708
        %v1710 = vmul.f32 %v1709, 1.442695
        %v1711 = vpow.pop %v1710
        %v1712 = vsel %vm1467, %v1711, 0.0
        %1713 = vadd.xlane.f32.xlu0 %v1712
        %v1714 = vpop.xlane.xlu0 %1713
        %v1715 = vrcp.pop %v1714
        %v1716 = vmul.f32 %v1711, %v1715
        %1718 = vrot.lane.b32.xlu0 %v1464, 120
        %v1719 = vpop.permute.xlu0 %1718
        %v1722 = vsel %vm1467, %v1716, 0
        %1724 = vmatprep.subr.mxu0 0.0
        %1725 = vmatpush1.msra.mxu0 %v1719
        %1726 = vmatprep.subr.mxu0 0.0
        %1727 = vmatpush1.msra.mxu0 0.0
        %1728 = vmatprep.subr.mxu0 0.0
        %1729 = vmatpush1.msra.mxu0 0.0
        %1730 = vmatprep.subr.mxu0 0.0
        %1731 = vmatpush1.msra.mxu0 0.0
        %1732 = vmatprep.subr.mxu0 0.0
        %1733 = vmatpush1.msra.mxu0 0.0
        %1734 = vmatprep.subr.mxu0 0.0
        %1735 = vmatpush1.msra.mxu0 0.0
        %1736 = vmatprep.subr.mxu0 0.0
        %1737 = vmatpush1.msra.mxu0 0.0
        %1738 = vmatprep.subr.mxu0 0.0
        %1739 = vmatpush1.msra.mxu0 0.0
        %1740 = vmatprep.subr.mxu0 0.0
        %1741 = vmatpush1.msra.mxu0 0.0
        %1742 = vmatprep.subr.mxu0 0.0
        %1743 = vmatpush1.msra.mxu0 0.0
        %1744 = vmatprep.subr.mxu0 0.0
        %1745 = vmatpush1.msra.mxu0 0.0
        %1746 = vmatprep.subr.mxu0 0.0
        %1747 = vmatpush1.msra.mxu0 0.0
        %1748 = vmatprep.subr.mxu0 0.0
        %1749 = vmatpush1.msra.mxu0 0.0
        %1750 = vmatprep.subr.mxu0 0.0
        %1751 = vmatpush1.msra.mxu0 0.0
        %1752 = vmatprep.subr.mxu0 0.0
        %1753 = vmatpush1.msra.mxu0 0.0
        %1754 = vmatprep.subr.mxu0 0.0
        %1755 = vmatpush1.msra.mxu0 0.0
        %1756 = vmatprep.subr.mxu0 0.0
        %1757 = vmatpush1.msra.mxu0 0.0
        %1758 = vmatprep.subr.mxu0 0.0
        %1759 = vmatpush1.msra.mxu0 0.0
        %1760 = vmatprep.subr.mxu0 0.0
        %1761 = vmatpush1.msra.mxu0 0.0
        %1762 = vmatprep.subr.mxu0 0.0
        %1763 = vmatpush1.msra.mxu0 0.0
        %1764 = vmatprep.subr.mxu0 0.0
        %1765 = vmatpush1.msra.mxu0 0.0
        %1766 = vmatprep.subr.mxu0 0.0
        %1767 = vmatpush1.msra.mxu0 0.0
        %1768 = vmatprep.subr.mxu0 0.0
        %1769 = vmatpush1.msra.mxu0 0.0
        %1770 = vmatprep.subr.mxu0 0.0
        %1771 = vmatpush1.msra.mxu0 0.0
        %1772 = vmatprep.subr.mxu0 0.0
        %1773 = vmatpush1.msra.mxu0 0.0
        %1774 = vmatprep.subr.mxu0 0.0
        %1775 = vmatpush1.msra.mxu0 0.0
        %1776 = vmatprep.subr.mxu0 0.0
        %1777 = vmatpush1.msra.mxu0 0.0
        %1778 = vmatprep.subr.mxu0 0.0
        %1779 = vmatpush1.msra.mxu0 0.0
        %1780 = vmatprep.subr.mxu0 0.0
        %1781 = vmatpush1.msra.mxu0 0.0
        %1782 = vmatprep.subr.mxu0 0.0
        %1783 = vmatpush1.msra.mxu0 0.0
        %1784 = vmatprep.subr.mxu0 0.0
        %1785 = vmatpush1.msra.mxu0 0.0
        %1786 = vmatprep.subr.mxu0 0.0
        %1787 = vmatpush1.msra.mxu0 0.0
        %1788 = vmatprep.mubr.f32.mxu0 0.0
        %1789 = vmatmul.mubr.f32.gmra.mrb[0].mxu0 %v1722
        %v1790 = vpop.f32.mrb[0].mxu0
        %v1791 = vadd.f32 0.0, %v1790
        %v1792 = vpop.f32.mrb[0].mxu0
        %1793 = vdwg.mxu0
        %v1795 = vsel %vm1467, %v1791, 0
        %1797 = vmatprep.subr.mxu0 0.0
        %1798 = vmatpush1.msra.mxu0 %v1231
        %1799 = vmatprep.subr.mxu0 0.0
        %1800 = vmatpush1.msra.mxu0 0.0
        %1801 = vmatprep.subr.mxu0 0.0
        %1802 = vmatpush1.msra.mxu0 0.0
        %1803 = vmatprep.subr.mxu0 0.0
        %1804 = vmatpush1.msra.mxu0 0.0
        %1805 = vmatprep.subr.mxu0 0.0
        %1806 = vmatpush1.msra.mxu0 0.0
        %1807 = vmatprep.subr.mxu0 0.0
        %1808 = vmatpush1.msra.mxu0 0.0
        %1809 = vmatprep.subr.mxu0 0.0
        %1810 = vmatpush1.msra.mxu0 0.0
        %1811 = vmatprep.subr.mxu0 0.0
        %1812 = vmatpush1.msra.mxu0 0.0
        %1813 = vmatprep.subr.mxu0 0.0
        %1814 = vmatpush1.msra.mxu0 0.0
        %1815 = vmatprep.subr.mxu0 0.0
        %1816 = vmatpush1.msra.mxu0 0.0
        %1817 = vmatprep.subr.mxu0 0.0
        %1818 = vmatpush1.msra.mxu0 0.0
        %1819 = vmatprep.subr.mxu0 0.0
        %1820 = vmatpush1.msra.mxu0 0.0
        %1821 = vmatprep.subr.mxu0 0.0
        %1822 = vmatpush1.msra.mxu0 0.0
        %1823 = vmatprep.subr.mxu0 0.0
        %1824 = vmatpush1.msra.mxu0 0.0
        %1825 = vmatprep.subr.mxu0 0.0
        %1826 = vmatpush1.msra.mxu0 0.0
        %1827 = vmatprep.subr.mxu0 0.0
        %1828 = vmatpush1.msra.mxu0 0.0
        %1829 = vmatprep.subr.mxu0 0.0
        %1830 = vmatpush1.msra.mxu0 0.0
        %1831 = vmatprep.subr.mxu0 0.0
        %1832 = vmatpush1.msra.mxu0 0.0
        %1833 = vmatprep.subr.mxu0 0.0
        %1834 = vmatpush1.msra.mxu0 0.0
        %1835 = vmatprep.subr.mxu0 0.0
        %1836 = vmatpush1.msra.mxu0 0.0
        %1837 = vmatprep.subr.mxu0 0.0
        %1838 = vmatpush1.msra.mxu0 0.0
        %1839 = vmatprep.subr.mxu0 0.0
        %1840 = vmatpush1.msra.mxu0 0.0
        %1841 = vmatprep.subr.mxu0 0.0
        %1842 = vmatpush1.msra.mxu0 0.0
        %1843 = vmatprep.subr.mxu0 0.0
        %1844 = vmatpush1.msra.mxu0 0.0
        %1845 = vmatprep.subr.mxu0 0.0
        %1846 = vmatpush1.msra.mxu0 0.0
        %1847 = vmatprep.subr.mxu0 0.0
        %1848 = vmatpush1.msra.mxu0 0.0
        %1849 = vmatprep.subr.mxu0 0.0
        %1850 = vmatpush1.msra.mxu0 0.0
        %1851 = vmatprep.subr.mxu0 0.0
        %1852 = vmatpush1.msra.mxu0 0.0
        %1853 = vmatprep.subr.mxu0 0.0
        %1854 = vmatpush1.msra.mxu0 0.0
        %1855 = vmatprep.subr.mxu0 0.0
        %1856 = vmatpush1.msra.mxu0 0.0
        %1857 = vmatprep.subr.mxu0 0.0
        %1858 = vmatpush1.msra.mxu0 0.0
        %1859 = vmatprep.subr.mxu0 0.0
        %1860 = vmatpush1.msra.mxu0 0.0
        %1861 = vmatprep.mubr.f32.mxu0 0.0
        %1862 = vmatmul.mubr.f32.gmra.mrb[0].mxu0 %v1795
        %v1863 = vpop.f32.mrb[0].mxu0
        %v1864 = vadd.f32 0.0, %v1863
        %v1865 = vpop.f32.mrb[0].mxu0
        %1866 = vdwg.mxu0
        %v1868 = vsel %vm1467, %v1625, 0
        %1870 = vmatprep.subr.mxu0 0.0
        %1871 = vmatpush1.msra.mxu0 %v1230
        %1872 = vmatprep.subr.mxu0 0.0
        %1873 = vmatpush1.msra.mxu0 0.0
        %1874 = vmatprep.subr.mxu0 0.0
        %1875 = vmatpush1.msra.mxu0 0.0
        %1876 = vmatprep.subr.mxu0 0.0
        %1877 = vmatpush1.msra.mxu0 0.0
        %1878 = vmatprep.subr.mxu0 0.0
        %1879 = vmatpush1.msra.mxu0 0.0
        %1880 = vmatprep.subr.mxu0 0.0
        %1881 = vmatpush1.msra.mxu0 0.0
        %1882 = vmatprep.subr.mxu0 0.0
        %1883 = vmatpush1.msra.mxu0 0.0
        %1884 = vmatprep.subr.mxu0 0.0
        %1885 = vmatpush1.msra.mxu0 0.0
        %1886 = vmatprep.subr.mxu0 0.0
        %1887 = vmatpush1.msra.mxu0 0.0
        %1888 = vmatprep.subr.mxu0 0.0
        %1889 = vmatpush1.msra.mxu0 0.0
        %1890 = vmatprep.subr.mxu0 0.0
        %1891 = vmatpush1.msra.mxu0 0.0
        %1892 = vmatprep.subr.mxu0 0.0
        %1893 = vmatpush1.msra.mxu0 0.0
        %1894 = vmatprep.subr.mxu0 0.0
        %1895 = vmatpush1.msra.mxu0 0.0
        %1896 = vmatprep.subr.mxu0 0.0
        %1897 = vmatpush1.msra.mxu0 0.0
        %1898 = vmatprep.subr.mxu0 0.0
        %1899 = vmatpush1.msra.mxu0 0.0
        %1900 = vmatprep.subr.mxu0 0.0
        %1901 = vmatpush1.msra.mxu0 0.0
        %1902 = vmatprep.subr.mxu0 0.0
        %1903 = vmatpush1.msra.mxu0 0.0
        %1904 = vmatprep.subr.mxu0 0.0
        %1905 = vmatpush1.msra.mxu0 0.0
        %1906 = vmatprep.subr.mxu0 0.0
        %1907 = vmatpush1.msra.mxu0 0.0
        %1908 = vmatprep.subr.mxu0 0.0
        %1909 = vmatpush1.msra.mxu0 0.0
        %1910 = vmatprep.subr.mxu0 0.0
        %1911 = vmatpush1.msra.mxu0 0.0
        %1912 = vmatprep.subr.mxu0 0.0
        %1913 = vmatpush1.msra.mxu0 0.0
        %1914 = vmatprep.subr.mxu0 0.0
        %1915 = vmatpush1.msra.mxu0 0.0
        %1916 = vmatprep.subr.mxu0 0.0
        %1917 = vmatpush1.msra.mxu0 0.0
        %1918 = vmatprep.subr.mxu0 0.0
        %1919 = vmatpush1.msra.mxu0 0.0
        %1920 = vmatprep.subr.mxu0 0.0
        %1921 = vmatpush1.msra.mxu0 0.0
        %1922 = vmatprep.subr.mxu0 0.0
        %1923 = vmatpush1.msra.mxu0 0.0
        %1924 = vmatprep.subr.mxu0 0.0
        %1925 = vmatpush1.msra.mxu0 0.0
        %1926 = vmatprep.subr.mxu0 0.0
        %1927 = vmatpush1.msra.mxu0 0.0
        %1928 = vmatprep.subr.mxu0 0.0
        %1929 = vmatpush1.msra.mxu0 0.0
        %1930 = vmatprep.subr.mxu0 0.0
        %1931 = vmatpush1.msra.mxu0 0.0
        %1932 = vmatprep.subr.mxu0 0.0
        %1933 = vmatpush1.msra.mxu0 0.0
        %1934 = vmatprep.mubr.f32.mxu0 0.0
        %1935 = vmatmul.mubr.f32.gmra.mrb[0].mxu0 %v1868
        %v1936 = vpop.f32.mrb[0].mxu0
        %v1937 = vadd.f32 %v1864, %v1936
        %v1938 = vpop.f32.mrb[0].mxu0
        %1939 = vdwg.mxu0
        %1940 = vrot.lane.b32.xlu0 %v1312, 112
        %v1941 = vpop.permute.xlu0 %1940
        %1942 = vrot.lane.b32.xlu0 %v1388, 112
        %v1943 = vpop.permute.xlu0 %1942
        %v1944 = vsel %vm1467, %v1941, 0
        %v1946 = vsel %vm1467, %v1943, 0
        %1948 = vmatprep.subr.mxu0 0.0
        %1949 = vmatpush1.xpose.msra.mxu0 %v1946
        %1950 = vmatprep.subr.mxu0 0.0
        %1951 = vmatpush1.xpose.msra.mxu0 0.0
        %1952 = vmatprep.subr.mxu0 0.0
        %1953 = vmatpush1.xpose.msra.mxu0 0.0
        %1954 = vmatprep.subr.mxu0 0.0
        %1955 = vmatpush1.xpose.msra.mxu0 0.0
        %1956 = vmatprep.subr.mxu0 0.0
        %1957 = vmatpush1.xpose.msra.mxu0 0.0
        %1958 = vmatprep.subr.mxu0 0.0
        %1959 = vmatpush1.xpose.msra.mxu0 0.0
        %1960 = vmatprep.subr.mxu0 0.0
        %1961 = vmatpush1.xpose.msra.mxu0 0.0
        %1962 = vmatprep.subr.mxu0 0.0
        %1963 = vmatpush1.xpose.msra.mxu0 0.0
        %1964 = vmatprep.subr.mxu0 0.0
        %1965 = vmatpush1.xpose.msra.mxu0 0.0
        %1966 = vmatprep.subr.mxu0 0.0
        %1967 = vmatpush1.xpose.msra.mxu0 0.0
        %1968 = vmatprep.subr.mxu0 0.0
        %1969 = vmatpush1.xpose.msra.mxu0 0.0
        %1970 = vmatprep.subr.mxu0 0.0
        %1971 = vmatpush1.xpose.msra.mxu0 0.0
        %1972 = vmatprep.subr.mxu0 0.0
        %1973 = vmatpush1.xpose.msra.mxu0 0.0
        %1974 = vmatprep.subr.mxu0 0.0
        %1975 = vmatpush1.xpose.msra.mxu0 0.0
        %1976 = vmatprep.subr.mxu0 0.0
        %1977 = vmatpush1.xpose.msra.mxu0 0.0
        %1978 = vmatprep.subr.mxu0 0.0
        %1979 = vmatpush1.xpose.msra.mxu0 0.0
        %1980 = vmatprep.subr.mxu0 0.0
        %1981 = vmatpush1.xpose.msra.mxu0 0.0
        %1982 = vmatprep.subr.mxu0 0.0
        %1983 = vmatpush1.xpose.msra.mxu0 0.0
        %1984 = vmatprep.subr.mxu0 0.0
        %1985 = vmatpush1.xpose.msra.mxu0 0.0
        %1986 = vmatprep.subr.mxu0 0.0
        %1987 = vmatpush1.xpose.msra.mxu0 0.0
        %1988 = vmatprep.subr.mxu0 0.0
        %1989 = vmatpush1.xpose.msra.mxu0 0.0
        %1990 = vmatprep.subr.mxu0 0.0
        %1991 = vmatpush1.xpose.msra.mxu0 0.0
        %1992 = vmatprep.subr.mxu0 0.0
        %1993 = vmatpush1.xpose.msra.mxu0 0.0
        %1994 = vmatprep.subr.mxu0 0.0
        %1995 = vmatpush1.xpose.msra.mxu0 0.0
        %1996 = vmatprep.subr.mxu0 0.0
        %1997 = vmatpush1.xpose.msra.mxu0 0.0
        %1998 = vmatprep.subr.mxu0 0.0
        %1999 = vmatpush1.xpose.msra.mxu0 0.0
        %2000 = vmatprep.subr.mxu0 0.0
        %2001 = vmatpush1.xpose.msra.mxu0 0.0
        %2002 = vmatprep.subr.mxu0 0.0
        %2003 = vmatpush1.xpose.msra.mxu0 0.0
        %2004 = vmatprep.subr.mxu0 0.0
        %2005 = vmatpush1.xpose.msra.mxu0 0.0
        %2006 = vmatprep.subr.mxu0 0.0
        %2007 = vmatpush1.xpose.msra.mxu0 0.0
        %2008 = vmatprep.subr.mxu0 0.0
        %2009 = vmatpush1.xpose.msra.mxu0 0.0
        %2010 = vmatprep.subr.mxu0 0.0
        %2011 = vmatpush1.xpose.msra.mxu0 0.0
        %2012 = vmatprep.mubr.f32.mxu0 0.0
        %2013 = vmatmul.mubr.f32.gmra.mrb[0].mxu0 %v1944
        %v2014 = vpop.f32.mrb[0].mxu0
        %v2015 = vadd.f32 0.0, %v2014
        %v2016 = vpop.f32.mrb[0].mxu0
        %2017 = vdwg.mxu0
        %v2018 = vsel %vm1467, %v2015, -inf
        %2019 = vmax.xlane.f32.xlu0 %v2018
        %v2020 = vpop.xlane.xlu0 %2019
        %v2021 = vsub.f32 %v2015, %v2020
        %v2022 = vmul.f32 %v2021, 1.442695
        %v2023 = vpow.pop %v2022
        %v2024 = vsel %vm1467, %v2023, 0.0
        %2025 = vadd.xlane.f32.xlu0 %v2024
        %v2026 = vpop.xlane.xlu0 %2025
        %v2027 = vrcp.pop %v2026
        %v2028 = vmul.f32 %v2023, %v2027
        %2029 = vrot.lane.b32.xlu0 %v1464, 112
        %v2030 = vpop.permute.xlu0 %2029
        %v2033 = vsel %vm1467, %v2028, 0
        %2035 = vmatprep.subr.mxu0 0.0
        %2036 = vmatpush1.msra.mxu0 %v2030
        %2037 = vmatprep.subr.mxu0 0.0
        %2038 = vmatpush1.msra.mxu0 0.0
        %2039 = vmatprep.subr.mxu0 0.0
        %2040 = vmatpush1.msra.mxu0 0.0
        %2041 = vmatprep.subr.mxu0 0.0
        %2042 = vmatpush1.msra.mxu0 0.0
        %2043 = vmatprep.subr.mxu0 0.0
        %2044 = vmatpush1.msra.mxu0 0.0
        %2045 = vmatprep.subr.mxu0 0.0
        %2046 = vmatpush1.msra.mxu0 0.0
        %2047 = vmatprep.subr.mxu0 0.0
        %2048 = vmatpush1.msra.mxu0 0.0
        %2049 = vmatprep.subr.mxu0 0.0
        %2050 = vmatpush1.msra.mxu0 0.0
        %2051 = vmatprep.subr.mxu0 0.0
        %2052 = vmatpush1.msra.mxu0 0.0
        %2053 = vmatprep.subr.mxu0 0.0
        %2054 = vmatpush1.msra.mxu0 0.0
        %2055 = vmatprep.subr.mxu0 0.0
        %2056 = vmatpush1.msra.mxu0 0.0
        %2057 = vmatprep.subr.mxu0 0.0
        %2058 = vmatpush1.msra.mxu0 0.0
        %2059 = vmatprep.subr.mxu0 0.0
        %2060 = vmatpush1.msra.mxu0 0.0
        %2061 = vmatprep.subr.mxu0 0.0
        %2062 = vmatpush1.msra.mxu0 0.0
        %2063 = vmatprep.subr.mxu0 0.0
        %2064 = vmatpush1.msra.mxu0 0.0
        %2065 = vmatprep.subr.mxu0 0.0
        %2066 = vmatpush1.msra.mxu0 0.0
        %2067 = vmatprep.subr.mxu0 0.0
        %2068 = vmatpush1.msra.mxu0 0.0
        %2069 = vmatprep.subr.mxu0 0.0
        %2070 = vmatpush1.msra.mxu0 0.0
        %2071 = vmatprep.subr.mxu0 0.0
        %2072 = vmatpush1.msra.mxu0 0.0
        %2073 = vmatprep.subr.mxu0 0.0
        %2074 = vmatpush1.msra.mxu0 0.0
        %2075 = vmatprep.subr.mxu0 0.0
        %2076 = vmatpush1.msra.mxu0 0.0
        %2077 = vmatprep.subr.mxu0 0.0
        %2078 = vmatpush1.msra.mxu0 0.0
        %2079 = vmatprep.subr.mxu0 0.0
        %2080 = vmatpush1.msra.mxu0 0.0
        %2081 = vmatprep.subr.mxu0 0.0
        %2082 = vmatpush1.msra.mxu0 0.0
        %2083 = vmatprep.subr.mxu0 0.0
        %2084 = vmatpush1.msra.mxu0 0.0
        %2085 = vmatprep.subr.mxu0 0.0
        %2086 = vmatpush1.msra.mxu0 0.0
        %2087 = vmatprep.subr.mxu0 0.0
        %2088 = vmatpush1.msra.mxu0 0.0
        %2089 = vmatprep.subr.mxu0 0.0
        %2090 = vmatpush1.msra.mxu0 0.0
        %2091 = vmatprep.subr.mxu0 0.0
        %2092 = vmatpush1.msra.mxu0 0.0
        %2093 = vmatprep.subr.mxu0 0.0
        %2094 = vmatpush1.msra.mxu0 0.0
        %2095 = vmatprep.subr.mxu0 0.0
        %2096 = vmatpush1.msra.mxu0 0.0
        %2097 = vmatprep.subr.mxu0 0.0
        %2098 = vmatpush1.msra.mxu0 0.0
        %2099 = vmatprep.mubr.f32.mxu0 0.0
        %2100 = vmatmul.mubr.f32.gmra.mrb[0].mxu0 %v2033
        %v2101 = vpop.f32.mrb[0].mxu0
        %v2102 = vadd.f32 0.0, %v2101
        %v2103 = vpop.f32.mrb[0].mxu0
        %2104 = vdwg.mxu0
        %v2106 = vsel %vm1467, %v2102, 0
        %2108 = vmatprep.subr.mxu0 0.0
        %2109 = vmatpush1.msra.mxu0 %v1232
        %2110 = vmatprep.subr.mxu0 0.0
        %2111 = vmatpush1.msra.mxu0 0.0
        %2112 = vmatprep.subr.mxu0 0.0
        %2113 = vmatpush1.msra.mxu0 0.0
        %2114 = vmatprep.subr.mxu0 0.0
        %2115 = vmatpush1.msra.mxu0 0.0
        %2116 = vmatprep.subr.mxu0 0.0
        %2117 = vmatpush1.msra.mxu0 0.0
        %2118 = vmatprep.subr.mxu0 0.0
        %2119 = vmatpush1.msra.mxu0 0.0
        %2120 = vmatprep.subr.mxu0 0.0
        %2121 = vmatpush1.msra.mxu0 0.0
        %2122 = vmatprep.subr.mxu0 0.0
        %2123 = vmatpush1.msra.mxu0 0.0
        %2124 = vmatprep.subr.mxu0 0.0
        %2125 = vmatpush1.msra.mxu0 0.0
        %2126 = vmatprep.subr.mxu0 0.0
        %2127 = vmatpush1.msra.mxu0 0.0
        %2128 = vmatprep.subr.mxu0 0.0
        %2129 = vmatpush1.msra.mxu0 0.0
        %2130 = vmatprep.subr.mxu0 0.0
        %2131 = vmatpush1.msra.mxu0 0.0
        %2132 = vmatprep.subr.mxu0 0.0
        %2133 = vmatpush1.msra.mxu0 0.0
        %2134 = vmatprep.subr.mxu0 0.0
        %2135 = vmatpush1.msra.mxu0 0.0
        %2136 = vmatprep.subr.mxu0 0.0
        %2137 = vmatpush1.msra.mxu0 0.0
        %2138 = vmatprep.subr.mxu0 0.0
        %2139 = vmatpush1.msra.mxu0 0.0
        %2140 = vmatprep.subr.mxu0 0.0
        %2141 = vmatpush1.msra.mxu0 0.0
        %2142 = vmatprep.subr.mxu0 0.0
        %2143 = vmatpush1.msra.mxu0 0.0
        %2144 = vmatprep.subr.mxu0 0.0
        %2145 = vmatpush1.msra.mxu0 0.0
        %2146 = vmatprep.subr.mxu0 0.0
        %2147 = vmatpush1.msra.mxu0 0.0
        %2148 = vmatprep.subr.mxu0 0.0
        %2149 = vmatpush1.msra.mxu0 0.0
        %2150 = vmatprep.subr.mxu0 0.0
        %2151 = vmatpush1.msra.mxu0 0.0
        %2152 = vmatprep.subr.mxu0 0.0
        %2153 = vmatpush1.msra.mxu0 0.0
        %2154 = vmatprep.subr.mxu0 0.0
        %2155 = vmatpush1.msra.mxu0 0.0
        %2156 = vmatprep.subr.mxu0 0.0
        %2157 = vmatpush1.msra.mxu0 0.0
        %2158 = vmatprep.subr.mxu0 0.0
        %2159 = vmatpush1.msra.mxu0 0.0
        %2160 = vmatprep.subr.mxu0 0.0
        %2161 = vmatpush1.msra.mxu0 0.0
        %2162 = vmatprep.subr.mxu0 0.0
        %2163 = vmatpush1.msra.mxu0 0.0
        %2164 = vmatprep.subr.mxu0 0.0
        %2165 = vmatpush1.msra.mxu0 0.0
        %2166 = vmatprep.subr.mxu0 0.0
        %2167 = vmatpush1.msra.mxu0 0.0
        %2168 = vmatprep.subr.mxu0 0.0
        %2169 = vmatpush1.msra.mxu0 0.0
        %2170 = vmatprep.subr.mxu0 0.0
        %2171 = vmatpush1.msra.mxu0 0.0
        %2172 = vmatprep.mubr.f32.mxu0 0.0
        %2173 = vmatmul.mubr.f32.gmra.mrb[0].mxu0 %v2106
        %v2174 = vpop.f32.mrb[0].mxu0
        %v2175 = vadd.f32 0.0, %v2174
        %v2176 = vpop.f32.mrb[0].mxu0
        %2177 = vdwg.mxu0
        %v2178 = vadd.f32 %v1937, %v2175
        %2179 = vrot.lane.b32.xlu0 %v1312, 104
        %v2180 = vpop.permute.xlu0 %2179
        %2181 = vrot.lane.b32.xlu0 %v1388, 104
        %v2182 = vpop.permute.xlu0 %2181
        %v2183 = vsel %vm1467, %v2180, 0
        %v2185 = vsel %vm1467, %v2182, 0
        %2187 = vmatprep.subr.mxu0 0.0
        %2188 = vmatpush1.xpose.msra.mxu0 %v2185
        %2189 = vmatprep.subr.mxu0 0.0
        %2190 = vmatpush1.xpose.msra.mxu0 0.0
        %2191 = vmatprep.subr.mxu0 0.0
        %2192 = vmatpush1.xpose.msra.mxu0 0.0
        %2193 = vmatprep.subr.mxu0 0.0
        %2194 = vmatpush1.xpose.msra.mxu0 0.0
        %2195 = vmatprep.subr.mxu0 0.0
        %2196 = vmatpush1.xpose.msra.mxu0 0.0
        %2197 = vmatprep.subr.mxu0 0.0
        %2198 = vmatpush1.xpose.msra.mxu0 0.0
        %2199 = vmatprep.subr.mxu0 0.0
        %2200 = vmatpush1.xpose.msra.mxu0 0.0
        %2201 = vmatprep.subr.mxu0 0.0
        %2202 = vmatpush1.xpose.msra.mxu0 0.0
        %2203 = vmatprep.subr.mxu0 0.0
        %2204 = vmatpush1.xpose.msra.mxu0 0.0
        %2205 = vmatprep.subr.mxu0 0.0
        %2206 = vmatpush1.xpose.msra.mxu0 0.0
        %2207 = vmatprep.subr.mxu0 0.0
        %2208 = vmatpush1.xpose.msra.mxu0 0.0
        %2209 = vmatprep.subr.mxu0 0.0
        %2210 = vmatpush1.xpose.msra.mxu0 0.0
        %2211 = vmatprep.subr.mxu0 0.0
        %2212 = vmatpush1.xpose.msra.mxu0 0.0
        %2213 = vmatprep.subr.mxu0 0.0
        %2214 = vmatpush1.xpose.msra.mxu0 0.0
        %2215 = vmatprep.subr.mxu0 0.0
        %2216 = vmatpush1.xpose.msra.mxu0 0.0
        %2217 = vmatprep.subr.mxu0 0.0
        %2218 = vmatpush1.xpose.msra.mxu0 0.0
        %2219 = vmatprep.subr.mxu0 0.0
        %2220 = vmatpush1.xpose.msra.mxu0 0.0
        %2221 = vmatprep.subr.mxu0 0.0
        %2222 = vmatpush1.xpose.msra.mxu0 0.0
        %2223 = vmatprep.subr.mxu0 0.0
        %2224 = vmatpush1.xpose.msra.mxu0 0.0
        %2225 = vmatprep.subr.mxu0 0.0
        %2226 = vmatpush1.xpose.msra.mxu0 0.0
        %2227 = vmatprep.subr.mxu0 0.0
        %2228 = vmatpush1.xpose.msra.mxu0 0.0
        %2229 = vmatprep.subr.mxu0 0.0
        %2230 = vmatpush1.xpose.msra.mxu0 0.0
        %2231 = vmatprep.subr.mxu0 0.0
        %2232 = vmatpush1.xpose.msra.mxu0 0.0
        %2233 = vmatprep.subr.mxu0 0.0
        %2234 = vmatpush1.xpose.msra.mxu0 0.0
        %2235 = vmatprep.subr.mxu0 0.0
        %2236 = vmatpush1.xpose.msra.mxu0 0.0
        %2237 = vmatprep.subr.mxu0 0.0
        %2238 = vmatpush1.xpose.msra.mxu0 0.0
        %2239 = vmatprep.subr.mxu0 0.0
        %2240 = vmatpush1.xpose.msra.mxu0 0.0
        %2241 = vmatprep.subr.mxu0 0.0
        %2242 = vmatpush1.xpose.msra.mxu0 0.0
        %2243 = vmatprep.subr.mxu0 0.0
        %2244 = vmatpush1.xpose.msra.mxu0 0.0
        %2245 = vmatprep.subr.mxu0 0.0
        %2246 = vmatpush1.xpose.msra.mxu0 0.0
        %2247 = vmatprep.subr.mxu0 0.0
        %2248 = vmatpush1.xpose.msra.mxu0 0.0
        %2249 = vmatprep.subr.mxu0 0.0
        %2250 = vmatpush1.xpose.msra.mxu0 0.0
        %2251 = vmatprep.mubr.f32.mxu0 0.0
        %2252 = vmatmul.mubr.f32.gmra.mrb[0].mxu0 %v2183
        %v2253 = vpop.f32.mrb[0].mxu0
        %v2254 = vadd.f32 0.0, %v2253
        %v2255 = vpop.f32.mrb[0].mxu0
        %2256 = vdwg.mxu0
        %v2257 = vsel %vm1467, %v2254, -inf
        %2258 = vmax.xlane.f32.xlu0 %v2257
        %v2259 = vpop.xlane.xlu0 %2258
        %v2260 = vsub.f32 %v2254, %v2259
        %v2261 = vmul.f32 %v2260, 1.442695
        %v2262 = vpow.pop %v2261
        %v2263 = vsel %vm1467, %v2262, 0.0
        %2264 = vadd.xlane.f32.xlu0 %v2263
        %v2265 = vpop.xlane.xlu0 %2264
        %v2266 = vrcp.pop %v2265
        %v2267 = vmul.f32 %v2262, %v2266
        %2268 = vrot.lane.b32.xlu0 %v1464, 104
        %v2269 = vpop.permute.xlu0 %2268
        %v2272 = vsel %vm1467, %v2267, 0
        %2274 = vmatprep.subr.mxu0 0.0
        %2275 = vmatpush1.msra.mxu0 %v2269
        %2276 = vmatprep.subr.mxu0 0.0
        %2277 = vmatpush1.msra.mxu0 0.0
        %2278 = vmatprep.subr.mxu0 0.0
        %2279 = vmatpush1.msra.mxu0 0.0
        %2280 = vmatprep.subr.mxu0 0.0
        %2281 = vmatpush1.msra.mxu0 0.0
        %2282 = vmatprep.subr.mxu0 0.0
        %2283 = vmatpush1.msra.mxu0 0.0
        %2284 = vmatprep.subr.mxu0 0.0
        %2285 = vmatpush1.msra.mxu0 0.0
        %2286 = vmatprep.subr.mxu0 0.0
        %2287 = vmatpush1.msra.mxu0 0.0
        %2288 = vmatprep.subr.mxu0 0.0
        %2289 = vmatpush1.msra.mxu0 0.0
        %2290 = vmatprep.subr.mxu0 0.0
        %2291 = vmatpush1.msra.mxu0 0.0
        %2292 = vmatprep.subr.mxu0 0.0
        %2293 = vmatpush1.msra.mxu0 0.0
        %2294 = vmatprep.subr.mxu0 0.0
        %2295 = vmatpush1.msra.mxu0 0.0
        %2296 = vmatprep.subr.mxu0 0.0
        %2297 = vmatpush1.msra.mxu0 0.0
        %2298 = vmatprep.subr.mxu0 0.0
        %2299 = vmatpush1.msra.mxu0 0.0
        %2300 = vmatprep.subr.mxu0 0.0
        %2301 = vmatpush1.msra.mxu0 0.0
        %2302 = vmatprep.subr.mxu0 0.0
        %2303 = vmatpush1.msra.mxu0 0.0
        %2304 = vmatprep.subr.mxu0 0.0
        %2305 = vmatpush1.msra.mxu0 0.0
        %2306 = vmatprep.subr.mxu0 0.0
        %2307 = vmatpush1.msra.mxu0 0.0
        %2308 = vmatprep.subr.mxu0 0.0
        %2309 = vmatpush1.msra.mxu0 0.0
        %2310 = vmatprep.subr.mxu0 0.0
        %2311 = vmatpush1.msra.mxu0 0.0
        %2312 = vmatprep.subr.mxu0 0.0
        %2313 = vmatpush1.msra.mxu0 0.0
        %2314 = vmatprep.subr.mxu0 0.0
        %2315 = vmatpush1.msra.mxu0 0.0
        %2316 = vmatprep.subr.mxu0 0.0
        %2317 = vmatpush1.msra.mxu0 0.0
        %2318 = vmatprep.subr.mxu0 0.0
        %2319 = vmatpush1.msra.mxu0 0.0
        %2320 = vmatprep.subr.mxu0 0.0
        %2321 = vmatpush1.msra.mxu0 0.0
        %2322 = vmatprep.subr.mxu0 0.0
        %2323 = vmatpush1.msra.mxu0 0.0
        %2324 = vmatprep.subr.mxu0 0.0
        %2325 = vmatpush1.msra.mxu0 0.0
        %2326 = vmatprep.subr.mxu0 0.0
        %2327 = vmatpush1.msra.mxu0 0.0
        %2328 = vmatprep.subr.mxu0 0.0
        %2329 = vmatpush1.msra.mxu0 0.0
        %2330 = vmatprep.subr.mxu0 0.0
        %2331 = vmatpush1.msra.mxu0 0.0
        %2332 = vmatprep.subr.mxu0 0.0
        %2333 = vmatpush1.msra.mxu0 0.0
        %2334 = vmatprep.subr.mxu0 0.0
        %2335 = vmatpush1.msra.mxu0 0.0
        %2336 = vmatprep.subr.mxu0 0.0
        %2337 = vmatpush1.msra.mxu0 0.0
        %2338 = vmatprep.mubr.f32.mxu0 0.0
        %2339 = vmatmul.mubr.f32.gmra.mrb[0].mxu0 %v2272
        %v2340 = vpop.f32.mrb[0].mxu0
        %v2341 = vadd.f32 0.0, %v2340
        %v2342 = vpop.f32.mrb[0].mxu0
        %2343 = vdwg.mxu0
        %v2345 = vsel %vm1467, %v2341, 0
        %2347 = vmatprep.subr.mxu0 0.0
        %2348 = vmatpush1.msra.mxu0 %v1233
        %2349 = vmatprep.subr.mxu0 0.0
        %2350 = vmatpush1.msra.mxu0 0.0
        %2351 = vmatprep.subr.mxu0 0.0
        %2352 = vmatpush1.msra.mxu0 0.0
        %2353 = vmatprep.subr.mxu0 0.0
        %2354 = vmatpush1.msra.mxu0 0.0
        %2355 = vmatprep.subr.mxu0 0.0
        %2356 = vmatpush1.msra.mxu0 0.0
        %2357 = vmatprep.subr.mxu0 0.0
        %2358 = vmatpush1.msra.mxu0 0.0
        %2359 = vmatprep.subr.mxu0 0.0
        %2360 = vmatpush1.msra.mxu0 0.0
        %2361 = vmatprep.subr.mxu0 0.0
        %2362 = vmatpush1.msra.mxu0 0.0
        %2363 = vmatprep.subr.mxu0 0.0
        %2364 = vmatpush1.msra.mxu0 0.0
        %2365 = vmatprep.subr.mxu0 0.0
        %2366 = vmatpush1.msra.mxu0 0.0
        %2367 = vmatprep.subr.mxu0 0.0
        %2368 = vmatpush1.msra.mxu0 0.0
        %2369 = vmatprep.subr.mxu0 0.0
        %2370 = vmatpush1.msra.mxu0 0.0
        %2371 = vmatprep.subr.mxu0 0.0
        %2372 = vmatpush1.msra.mxu0 0.0
        %2373 = vmatprep.subr.mxu0 0.0
        %2374 = vmatpush1.msra.mxu0 0.0
        %2375 = vmatprep.subr.mxu0 0.0
        %2376 = vmatpush1.msra.mxu0 0.0
        %2377 = vmatprep.subr.mxu0 0.0
        %2378 = vmatpush1.msra.mxu0 0.0
        %2379 = vmatprep.subr.mxu0 0.0
        %2380 = vmatpush1.msra.mxu0 0.0
        %2381 = vmatprep.subr.mxu0 0.0
        %2382 = vmatpush1.msra.mxu0 0.0
        %2383 = vmatprep.subr.mxu0 0.0
        %2384 = vmatpush1.msra.mxu0 0.0
        %2385 = vmatprep.subr.mxu0 0.0
        %2386 = vmatpush1.msra.mxu0 0.0
        %2387 = vmatprep.subr.mxu0 0.0
        %2388 = vmatpush1.msra.mxu0 0.0
        %2389 = vmatprep.subr.mxu0 0.0
        %2390 = vmatpush1.msra.mxu0 0.0
        %2391 = vmatprep.subr.mxu0 0.0
        %2392 = vmatpush1.msra.mxu0 0.0
        %2393 = vmatprep.subr.mxu0 0.0
        %2394 = vmatpush1.msra.mxu0 0.0
        %2395 = vmatprep.subr.mxu0 0.0
        %2396 = vmatpush1.msra.mxu0 0.0
        %2397 = vmatprep.subr.mxu0 0.0
        %2398 = vmatpush1.msra.mxu0 0.0
        %2399 = vmatprep.subr.mxu0 0.0
        %2400 = vmatpush1.msra.mxu0 0.0
        %2401 = vmatprep.subr.mxu0 0.0
        %2402 = vmatpush1.msra.mxu0 0.0
        %2403 = vmatprep.subr.mxu0 0.0
        %2404 = vmatpush1.msra.mxu0 0.0
        %2405 = vmatprep.subr.mxu0 0.0
        %2406 = vmatpush1.msra.mxu0 0.0
        %2407 = vmatprep.subr.mxu0 0.0
        %2408 = vmatpush1.msra.mxu0 0.0
        %2409 = vmatprep.subr.mxu0 0.0
        %2410 = vmatpush1.msra.mxu0 0.0
        %2411 = vmatprep.mubr.f32.mxu0 0.0
        %2412 = vmatmul.mubr.f32.gmra.mrb[0].mxu0 %v2345
        %v2413 = vpop.f32.mrb[0].mxu0
        %v2414 = vadd.f32 0.0, %v2413
        %v2415 = vpop.f32.mrb[0].mxu0
        %2416 = vdwg.mxu0
        %v2417 = vadd.f32 %v2178, %v2414
        %v2418 = vadd.f32 %v1213, %v2417
        %v2420 = vlaneseq
        %v2421 = vshrl.u32 %v2420, 7
        %v2422 = vsub.s32 0, %v2421
        %v2423 = vrot.slane %v1234, %v2422
        %v2425 = vadd.f32 %v2418, %v2423
        %v2426 = vld [vmem:[%s21] sm:$0x1]
        %v2427 = vld [vmem:[%s23] sm:$0x1]
        %v2428 = vsel %vm1241, %v2425, 0.0
        %2429 = vadd.xlane.f32.xlu0 %v2428
        %v2430 = vpop.xlane.xlu0 %2429
        %v2431 = vrcp.pop 32.0
        %v2432 = vmul.f32 %v2430, %v2431
        %v2433 = vsub.f32 %v2425, %v2432
        %v2434 = vmul.f32 %v2433, %v2433
        %v2435 = vsel %vm1241, %v2434, 0.0
        %2436 = vadd.xlane.f32.xlu0 %v2435
        %v2437 = vpop.xlane.xlu0 %2436
        %v2438 = vmul.f32 %v2437, %v2431
        %v2439 = vadd.f32 %v2438, 1e-05
        %v2440 = vrsqrt.pop %v2439
        %v2441 = vmul.f32 %v2433, %v2440
        %v2443 = vlaneseq
        %v2444 = vshrl.u32 %v2443, 7
        %v2445 = vsub.s32 0, %v2444
        %v2446 = vrot.slane %v2426, %v2445
        %v2448 = vmul.f32 %v2441, %v2446
        %v2450 = vlaneseq
        %v2451 = vshrl.u32 %v2450, 7
        %v2452 = vsub.s32 0, %v2451
        %v2453 = vrot.slane %v2427, %v2452
        %v2455 = vadd.f32 %v2448, %v2453
        %v2456 = vld [vmem:[#allocation8] sm:$0xff]
        %v2457 = vld [vmem:[#allocation8 + $0x8] sm:$0xff]
        %v2458 = vld [vmem:[#allocation8 + $0x10] sm:$0xff]
        %v2459 = vld [vmem:[#allocation8 + $0x18] sm:$0xff]
        %v2460 = vld [vmem:[%s27] sm:$0x1]
        %v2461 = vld [vmem:[#allocation10] sm:$0xff]
        %v2462 = vld [vmem:[#allocation10 + $0x8] sm:$0xff]
        %v2463 = vld [vmem:[#allocation10 + $0x10] sm:$0xff]
        %v2464 = vld [vmem:[#allocation10 + $0x18] sm:$0xff]
        %v2465 = vld [vmem:[#allocation11] sm:$0x1]
        %v2466 = vld [vmem:[#allocation13] sm:$0xff]
        %v2467 = vld [vmem:[#allocation13 + $0x8] sm:$0xff]
        %v2468 = vld [vmem:[#allocation13 + $0x10] sm:$0xff]
        %v2469 = vld [vmem:[#allocation13 + $0x18] sm:$0xff]
        %v2470 = vld [vmem:[#allocation14] sm:$0x1]
        %v2471 = vld [vmem:[#allocation16] sm:$0xff]
        %v2472 = vld [vmem:[#allocation16 + $0x8] sm:$0xff]
        %v2473 = vld [vmem:[#allocation16 + $0x10] sm:$0xff]
        %v2474 = vld [vmem:[#allocation16 + $0x18] sm:$0xff]
        %v2475 = vld [vmem:[#allocation17] sm:$0x1]
        %v2477 = vlaneseq
        %v2478 = vshrl.u32 %v2477, 7
        %v2479 = vsub.s32 0, %v2478
        %v2480 = vrot.slane %v2460, %v2479
        %v2483 = vsel %vm1241, %v2455, 0
        %2485 = vmatprep.subr.mxu0 0.0
        %2486 = vmatpush1.msra.mxu0 %v2456
        %2487 = vmatprep.subr.mxu0 0.0
        %2488 = vmatpush1.msra.mxu0 %v2457
        %2489 = vmatprep.subr.mxu0 0.0
        %2490 = vmatpush1.msra.mxu0 %v2458
        %2491 = vmatprep.subr.mxu0 0.0
        %2492 = vmatpush1.msra.mxu0 %v2459
        %2493 = vmatprep.subr.mxu0 0.0
        %2494 = vmatpush1.msra.mxu0 0.0
        %2495 = vmatprep.subr.mxu0 0.0
        %2496 = vmatpush1.msra.mxu0 0.0
        %2497 = vmatprep.subr.mxu0 0.0
        %2498 = vmatpush1.msra.mxu0 0.0
        %2499 = vmatprep.subr.mxu0 0.0
        %2500 = vmatpush1.msra.mxu0 0.0
        %2501 = vmatprep.subr.mxu0 0.0
        %2502 = vmatpush1.msra.mxu0 0.0
        %2503 = vmatprep.subr.mxu0 0.0
        %2504 = vmatpush1.msra.mxu0 0.0
        %2505 = vmatprep.subr.mxu0 0.0
        %2506 = vmatpush1.msra.mxu0 0.0
        %2507 = vmatprep.subr.mxu0 0.0
        %2508 = vmatpush1.msra.mxu0 0.0
        %2509 = vmatprep.subr.mxu0 0.0
        %2510 = vmatpush1.msra.mxu0 0.0
        %2511 = vmatprep.subr.mxu0 0.0
        %2512 = vmatpush1.msra.mxu0 0.0
        %2513 = vmatprep.subr.mxu0 0.0
        %2514 = vmatpush1.msra.mxu0 0.0
        %2515 = vmatprep.subr.mxu0 0.0
        %2516 = vmatpush1.msra.mxu0 0.0
        %2517 = vmatprep.subr.mxu0 0.0
        %2518 = vmatpush1.msra.mxu0 0.0
        %2519 = vmatprep.subr.mxu0 0.0
        %2520 = vmatpush1.msra.mxu0 0.0
        %2521 = vmatprep.subr.mxu0 0.0
        %2522 = vmatpush1.msra.mxu0 0.0
        %2523 = vmatprep.subr.mxu0 0.0
        %2524 = vmatpush1.msra.mxu0 0.0
        %2525 = vmatprep.subr.mxu0 0.0
        %2526 = vmatpush1.msra.mxu0 0.0
        %2527 = vmatprep.subr.mxu0 0.0
        %2528 = vmatpush1.msra.mxu0 0.0
        %2529 = vmatprep.subr.mxu0 0.0
        %2530 = vmatpush1.msra.mxu0 0.0
        %2531 = vmatprep.subr.mxu0 0.0
        %2532 = vmatpush1.msra.mxu0 0.0
        %2533 = vmatprep.subr.mxu0 0.0
        %2534 = vmatpush1.msra.mxu0 0.0
        %2535 = vmatprep.subr.mxu0 0.0
        %2536 = vmatpush1.msra.mxu0 0.0
        %2537 = vmatprep.subr.mxu0 0.0
        %2538 = vmatpush1.msra.mxu0 0.0
        %2539 = vmatprep.subr.mxu0 0.0
        %2540 = vmatpush1.msra.mxu0 0.0
        %2541 = vmatprep.subr.mxu0 0.0
        %2542 = vmatpush1.msra.mxu0 0.0
        %2543 = vmatprep.subr.mxu0 0.0
        %2544 = vmatpush1.msra.mxu0 0.0
        %2545 = vmatprep.subr.mxu0 0.0
        %2546 = vmatpush1.msra.mxu0 0.0
        %2547 = vmatprep.subr.mxu0 0.0
        %2548 = vmatpush1.msra.mxu0 0.0
        %2549 = vmatprep.mubr.f32.mxu0 0.0
        %2550 = vmatmul.mubr.f32.gmra.mrb[0].mxu0 %v2483
        %v2551 = vpop.f32.mrb[0].mxu0
        %v2552 = vadd.f32 %v2480, %v2551
        %v2553 = vpop.f32.mrb[0].mxu0
        %2554 = vdwg.mxu0
        %v2556 = vlaneseq
        %v2557 = vshrl.u32 %v2556, 7
        %v2558 = vsub.s32 0, %v2557
        %v2559 = vrot.slane %v2465, %v2558
        %v2562 = vsel %vm1241, %v1214, 0
        %2564 = vmatprep.subr.mxu0 0.0
        %2565 = vmatpush1.msra.mxu0 %v2461
        %2566 = vmatprep.subr.mxu0 0.0
        %2567 = vmatpush1.msra.mxu0 %v2462
        %2568 = vmatprep.subr.mxu0 0.0
        %2569 = vmatpush1.msra.mxu0 %v2463
        %2570 = vmatprep.subr.mxu0 0.0
        %2571 = vmatpush1.msra.mxu0 %v2464
        %2572 = vmatprep.subr.mxu0 0.0
        %2573 = vmatpush1.msra.mxu0 0.0
        %2574 = vmatprep.subr.mxu0 0.0
        %2575 = vmatpush1.msra.mxu0 0.0
        %2576 = vmatprep.subr.mxu0 0.0
        %2577 = vmatpush1.msra.mxu0 0.0
        %2578 = vmatprep.subr.mxu0 0.0
        %2579 = vmatpush1.msra.mxu0 0.0
        %2580 = vmatprep.subr.mxu0 0.0
        %2581 = vmatpush1.msra.mxu0 0.0
        %2582 = vmatprep.subr.mxu0 0.0
        %2583 = vmatpush1.msra.mxu0 0.0
        %2584 = vmatprep.subr.mxu0 0.0
        %2585 = vmatpush1.msra.mxu0 0.0
        %2586 = vmatprep.subr.mxu0 0.0
        %2587 = vmatpush1.msra.mxu0 0.0
        %2588 = vmatprep.subr.mxu0 0.0
        %2589 = vmatpush1.msra.mxu0 0.0
        %2590 = vmatprep.subr.mxu0 0.0
        %2591 = vmatpush1.msra.mxu0 0.0
        %2592 = vmatprep.subr.mxu0 0.0
        %2593 = vmatpush1.msra.mxu0 0.0
        %2594 = vmatprep.subr.mxu0 0.0
        %2595 = vmatpush1.msra.mxu0 0.0
        %2596 = vmatprep.subr.mxu0 0.0
        %2597 = vmatpush1.msra.mxu0 0.0
        %2598 = vmatprep.subr.mxu0 0.0
        %2599 = vmatpush1.msra.mxu0 0.0
        %2600 = vmatprep.subr.mxu0 0.0
        %2601 = vmatpush1.msra.mxu0 0.0
        %2602 = vmatprep.subr.mxu0 0.0
        %2603 = vmatpush1.msra.mxu0 0.0
        %2604 = vmatprep.subr.mxu0 0.0
        %2605 = vmatpush1.msra.mxu0 0.0
        %2606 = vmatprep.subr.mxu0 0.0
        %2607 = vmatpush1.msra.mxu0 0.0
        %2608 = vmatprep.subr.mxu0 0.0
        %2609 = vmatpush1.msra.mxu0 0.0
        %2610 = vmatprep.subr.mxu0 0.0
        %2611 = vmatpush1.msra.mxu0 0.0
        %2612 = vmatprep.subr.mxu0 0.0
        %2613 = vmatpush1.msra.mxu0 0.0
        %2614 = vmatprep.subr.mxu0 0.0
        %2615 = vmatpush1.msra.mxu0 0.0
        %2616 = vmatprep.subr.mxu0 0.0
        %2617 = vmatpush1.msra.mxu0 0.0
        %2618 = vmatprep.subr.mxu0 0.0
        %2619 = vmatpush1.msra.mxu0 0.0
        %2620 = vmatprep.subr.mxu0 0.0
        %2621 = vmatpush1.msra.mxu0 0.0
        %2622 = vmatprep.subr.mxu0 0.0
        %2623 = vmatpush1.msra.mxu0 0.0
        %2624 = vmatprep.subr.mxu0 0.0
        %2625 = vmatpush1.msra.mxu0 0.0
        %2626 = vmatprep.subr.mxu0 0.0
        %2627 = vmatpush1.msra.mxu0 0.0
        %2628 = vmatprep.mubr.f32.mxu0 0.0
        %2629 = vmatmul.mubr.f32.gmra.mrb[0].mxu0 %v2562
        %v2630 = vpop.f32.mrb[0].mxu0
        %v2631 = vadd.f32 %v2559, %v2630
        %v2632 = vpop.f32.mrb[0].mxu0
        %2633 = vdwg.mxu0
        %v2635 = vlaneseq
        %v2636 = vshrl.u32 %v2635, 7
        %v2637 = vsub.s32 0, %v2636
        %v2638 = vrot.slane %v2470, %v2637
        %2640 = vmatprep.subr.mxu0 0.0
        %2641 = vmatpush1.msra.mxu0 %v2466
        %2642 = vmatprep.subr.mxu0 0.0
        %2643 = vmatpush1.msra.mxu0 %v2467
        %2644 = vmatprep.subr.mxu0 0.0
        %2645 = vmatpush1.msra.mxu0 %v2468
        %2646 = vmatprep.subr.mxu0 0.0
        %2647 = vmatpush1.msra.mxu0 %v2469
        %2648 = vmatprep.subr.mxu0 0.0
        %2649 = vmatpush1.msra.mxu0 0.0
        %2650 = vmatprep.subr.mxu0 0.0
        %2651 = vmatpush1.msra.mxu0 0.0
        %2652 = vmatprep.subr.mxu0 0.0
        %2653 = vmatpush1.msra.mxu0 0.0
        %2654 = vmatprep.subr.mxu0 0.0
        %2655 = vmatpush1.msra.mxu0 0.0
        %2656 = vmatprep.subr.mxu0 0.0
        %2657 = vmatpush1.msra.mxu0 0.0
        %2658 = vmatprep.subr.mxu0 0.0
        %2659 = vmatpush1.msra.mxu0 0.0
        %2660 = vmatprep.subr.mxu0 0.0
        %2661 = vmatpush1.msra.mxu0 0.0
        %2662 = vmatprep.subr.mxu0 0.0
        %2663 = vmatpush1.msra.mxu0 0.0
        %2664 = vmatprep.subr.mxu0 0.0
        %2665 = vmatpush1.msra.mxu0 0.0
        %2666 = vmatprep.subr.mxu0 0.0
        %2667 = vmatpush1.msra.mxu0 0.0
        %2668 = vmatprep.subr.mxu0 0.0
        %2669 = vmatpush1.msra.mxu0 0.0
        %2670 = vmatprep.subr.mxu0 0.0
        %2671 = vmatpush1.msra.mxu0 0.0
        %2672 = vmatprep.subr.mxu0 0.0
        %2673 = vmatpush1.msra.mxu0 0.0
        %2674 = vmatprep.subr.mxu0 0.0
        %2675 = vmatpush1.msra.mxu0 0.0
        %2676 = vmatprep.subr.mxu0 0.0
        %2677 = vmatpush1.msra.mxu0 0.0
        %2678 = vmatprep.subr.mxu0 0.0
        %2679 = vmatpush1.msra.mxu0 0.0
        %2680 = vmatprep.subr.mxu0 0.0
        %2681 = vmatpush1.msra.mxu0 0.0
        %2682 = vmatprep.subr.mxu0 0.0
        %2683 = vmatpush1.msra.mxu0 0.0
        %2684 = vmatprep.subr.mxu0 0.0
        %2685 = vmatpush1.msra.mxu0 0.0
        %2686 = vmatprep.subr.mxu0 0.0
        %2687 = vmatpush1.msra.mxu0 0.0
        %2688 = vmatprep.subr.mxu0 0.0
        %2689 = vmatpush1.msra.mxu0 0.0
        %2690 = vmatprep.subr.mxu0 0.0
        %2691 = vmatpush1.msra.mxu0 0.0
        %2692 = vmatprep.subr.mxu0 0.0
        %2693 = vmatpush1.msra.mxu0 0.0
        %2694 = vmatprep.subr.mxu0 0.0
        %2695 = vmatpush1.msra.mxu0 0.0
        %2696 = vmatprep.subr.mxu0 0.0
        %2697 = vmatpush1.msra.mxu0 0.0
        %2698 = vmatprep.subr.mxu0 0.0
        %2699 = vmatpush1.msra.mxu0 0.0
        %2700 = vmatprep.subr.mxu0 0.0
        %2701 = vmatpush1.msra.mxu0 0.0
        %2702 = vmatprep.subr.mxu0 0.0
        %2703 = vmatpush1.msra.mxu0 0.0
        %2704 = vmatprep.mubr.f32.mxu0 0.0
        %2705 = vmatmul.mubr.f32.gmra.mrb[0].mxu0 %v2562
        %v2706 = vpop.f32.mrb[0].mxu0
        %v2707 = vadd.f32 %v2638, %v2706
        %v2708 = vpop.f32.mrb[0].mxu0
        %2709 = vdwg.mxu0
        %v2711 = vsel %vm1467, %v2552, 0
        %v2714 = vsel %vm1467, %v2631, 0
        %2716 = vmatprep.subr.mxu0 0.0
        %2717 = vmatpush1.xpose.msra.mxu0 %v2714
        %2718 = vmatprep.subr.mxu0 0.0
        %2719 = vmatpush1.xpose.msra.mxu0 0.0
        %2720 = vmatprep.subr.mxu0 0.0
        %2721 = vmatpush1.xpose.msra.mxu0 0.0
        %2722 = vmatprep.subr.mxu0 0.0
        %2723 = vmatpush1.xpose.msra.mxu0 0.0
        %2724 = vmatprep.subr.mxu0 0.0
        %2725 = vmatpush1.xpose.msra.mxu0 0.0
        %2726 = vmatprep.subr.mxu0 0.0
        %2727 = vmatpush1.xpose.msra.mxu0 0.0
        %2728 = vmatprep.subr.mxu0 0.0
        %2729 = vmatpush1.xpose.msra.mxu0 0.0
        %2730 = vmatprep.subr.mxu0 0.0
        %2731 = vmatpush1.xpose.msra.mxu0 0.0
        %2732 = vmatprep.subr.mxu0 0.0
        %2733 = vmatpush1.xpose.msra.mxu0 0.0
        %2734 = vmatprep.subr.mxu0 0.0
        %2735 = vmatpush1.xpose.msra.mxu0 0.0
        %2736 = vmatprep.subr.mxu0 0.0
        %2737 = vmatpush1.xpose.msra.mxu0 0.0
        %2738 = vmatprep.subr.mxu0 0.0
        %2739 = vmatpush1.xpose.msra.mxu0 0.0
        %2740 = vmatprep.subr.mxu0 0.0
        %2741 = vmatpush1.xpose.msra.mxu0 0.0
        %2742 = vmatprep.subr.mxu0 0.0
        %2743 = vmatpush1.xpose.msra.mxu0 0.0
        %2744 = vmatprep.subr.mxu0 0.0
        %2745 = vmatpush1.xpose.msra.mxu0 0.0
        %2746 = vmatprep.subr.mxu0 0.0
        %2747 = vmatpush1.xpose.msra.mxu0 0.0
        %2748 = vmatprep.subr.mxu0 0.0
        %2749 = vmatpush1.xpose.msra.mxu0 0.0
        %2750 = vmatprep.subr.mxu0 0.0
        %2751 = vmatpush1.xpose.msra.mxu0 0.0
        %2752 = vmatprep.subr.mxu0 0.0
        %2753 = vmatpush1.xpose.msra.mxu0 0.0
        %2754 = vmatprep.subr.mxu0 0.0
        %2755 = vmatpush1.xpose.msra.mxu0 0.0
        %2756 = vmatprep.subr.mxu0 0.0
        %2757 = vmatpush1.xpose.msra.mxu0 0.0
        %2758 = vmatprep.subr.mxu0 0.0
        %2759 = vmatpush1.xpose.msra.mxu0 0.0
        %2760 = vmatprep.subr.mxu0 0.0
        %2761 = vmatpush1.xpose.msra.mxu0 0.0
        %2762 = vmatprep.subr.mxu0 0.0
        %2763 = vmatpush1.xpose.msra.mxu0 0.0
        %2764 = vmatprep.subr.mxu0 0.0
        %2765 = vmatpush1.xpose.msra.mxu0 0.0
        %2766 = vmatprep.subr.mxu0 0.0
        %2767 = vmatpush1.xpose.msra.mxu0 0.0
        %2768 = vmatprep.subr.mxu0 0.0
        %2769 = vmatpush1.xpose.msra.mxu0 0.0
        %2770 = vmatprep.subr.mxu0 0.0
        %2771 = vmatpush1.xpose.msra.mxu0 0.0
        %2772 = vmatprep.subr.mxu0 0.0
        %2773 = vmatpush1.xpose.msra.mxu0 0.0
        %2774 = vmatprep.subr.mxu0 0.0
        %2775 = vmatpush1.xpose.msra.mxu0 0.0
        %2776 = vmatprep.subr.mxu0 0.0
        %2777 = vmatpush1.xpose.msra.mxu0 0.0
        %2778 = vmatprep.subr.mxu0 0.0
        %2779 = vmatpush1.xpose.msra.mxu0 0.0
        %2780 = vmatprep.mubr.f32.mxu0 0.0
        %2781 = vmatmul.mubr.f32.gmra.mrb[0].mxu0 %v2711
        %v2782 = vpop.f32.mrb[0].mxu0
        %v2783 = vadd.f32 0.0, %v2782
        %v2784 = vpop.f32.mrb[0].mxu0
        %2785 = vdwg.mxu0
        %v2786 = vsel %vm1467, %v2783, -inf
        %2787 = vmax.xlane.f32.xlu0 %v2786
        %v2788 = vpop.xlane.xlu0 %2787
        %v2789 = vsub.f32 %v2783, %v2788
        %v2790 = vmul.f32 %v2789, 1.442695
        %v2791 = vpow.pop %v2790
        %v2792 = vsel %vm1467, %v2791, 0.0
        %2793 = vadd.xlane.f32.xlu0 %v2792
        %v2794 = vpop.xlane.xlu0 %2793
        %v2795 = vrcp.pop %v2794
        %v2796 = vmul.f32 %v2791, %v2795
        %v2798 = vsel %vm1467, %v2796, 0
        %2800 = vmatprep.subr.mxu0 0.0
        %2801 = vmatpush1.msra.mxu0 %v2707
        %2802 = vmatprep.subr.mxu0 0.0
        %2803 = vmatpush1.msra.mxu0 0.0
        %2804 = vmatprep.subr.mxu0 0.0
        %2805 = vmatpush1.msra.mxu0 0.0
        %2806 = vmatprep.subr.mxu0 0.0
        %2807 = vmatpush1.msra.mxu0 0.0
        %2808 = vmatprep.subr.mxu0 0.0
        %2809 = vmatpush1.msra.mxu0 0.0
        %2810 = vmatprep.subr.mxu0 0.0
        %2811 = vmatpush1.msra.mxu0 0.0
        %2812 = vmatprep.subr.mxu0 0.0
        %2813 = vmatpush1.msra.mxu0 0.0
        %2814 = vmatprep.subr.mxu0 0.0
        %2815 = vmatpush1.msra.mxu0 0.0
        %2816 = vmatprep.subr.mxu0 0.0
        %2817 = vmatpush1.msra.mxu0 0.0
        %2818 = vmatprep.subr.mxu0 0.0
        %2819 = vmatpush1.msra.mxu0 0.0
        %2820 = vmatprep.subr.mxu0 0.0
        %2821 = vmatpush1.msra.mxu0 0.0
        %2822 = vmatprep.subr.mxu0 0.0
        %2823 = vmatpush1.msra.mxu0 0.0
        %2824 = vmatprep.subr.mxu0 0.0
        %2825 = vmatpush1.msra.mxu0 0.0
        %2826 = vmatprep.subr.mxu0 0.0
        %2827 = vmatpush1.msra.mxu0 0.0
        %2828 = vmatprep.subr.mxu0 0.0
        %2829 = vmatpush1.msra.mxu0 0.0
        %2830 = vmatprep.subr.mxu0 0.0
        %2831 = vmatpush1.msra.mxu0 0.0
        %2832 = vmatprep.subr.mxu0 0.0
        %2833 = vmatpush1.msra.mxu0 0.0
        %2834 = vmatprep.subr.mxu0 0.0
        %2835 = vmatpush1.msra.mxu0 0.0
        %2836 = vmatprep.subr.mxu0 0.0
        %2837 = vmatpush1.msra.mxu0 0.0
        %2838 = vmatprep.subr.mxu0 0.0
        %2839 = vmatpush1.msra.mxu0 0.0
        %2840 = vmatprep.subr.mxu0 0.0
        %2841 = vmatpush1.msra.mxu0 0.0
        %2842 = vmatprep.subr.mxu0 0.0
        %2843 = vmatpush1.msra.mxu0 0.0
        %2844 = vmatprep.subr.mxu0 0.0
        %2845 = vmatpush1.msra.mxu0 0.0
        %2846 = vmatprep.subr.mxu0 0.0
        %2847 = vmatpush1.msra.mxu0 0.0
        %2848 = vmatprep.subr.mxu0 0.0
        %2849 = vmatpush1.msra.mxu0 0.0
        %2850 = vmatprep.subr.mxu0 0.0
        %2851 = vmatpush1.msra.mxu0 0.0
        %2852 = vmatprep.subr.mxu0 0.0
        %2853 = vmatpush1.msra.mxu0 0.0
        %2854 = vmatprep.subr.mxu0 0.0
        %2855 = vmatpush1.msra.mxu0 0.0
        %2856 = vmatprep.subr.mxu0 0.0
        %2857 = vmatpush1.msra.mxu0 0.0
        %2858 = vmatprep.subr.mxu0 0.0
        %2859 = vmatpush1.msra.mxu0 0.0
        %2860 = vmatprep.subr.mxu0 0.0
        %2861 = vmatpush1.msra.mxu0 0.0
        %2862 = vmatprep.subr.mxu0 0.0
        %2863 = vmatpush1.msra.mxu0 0.0
        %2864 = vmatprep.mubr.f32.mxu0 0.0
        %2865 = vmatmul.mubr.f32.gmra.mrb[0].mxu0 %v2798
        %v2866 = vpop.f32.mrb[0].mxu0
        %v2867 = vadd.f32 0.0, %v2866
        %v2868 = vpop.f32.mrb[0].mxu0
        %2869 = vdwg.mxu0
        %2870 = vrot.lane.b32.xlu0 %v2552, 120
        %v2871 = vpop.permute.xlu0 %2870
        %2872 = vrot.lane.b32.xlu0 %v2631, 120
        %v2873 = vpop.permute.xlu0 %2872
        %v2874 = vsel %vm1467, %v2871, 0
        %v2876 = vsel %vm1467, %v2873, 0
        %2878 = vmatprep.subr.mxu0 0.0
        %2879 = vmatpush1.xpose.msra.mxu0 %v2876
        %2880 = vmatprep.subr.mxu0 0.0
        %2881 = vmatpush1.xpose.msra.mxu0 0.0
        %2882 = vmatprep.subr.mxu0 0.0
        %2883 = vmatpush1.xpose.msra.mxu0 0.0
        %2884 = vmatprep.subr.mxu0 0.0
        %2885 = vmatpush1.xpose.msra.mxu0 0.0
        %2886 = vmatprep.subr.mxu0 0.0
        %2887 = vmatpush1.xpose.msra.mxu0 0.0
        %2888 = vmatprep.subr.mxu0 0.0
        %2889 = vmatpush1.xpose.msra.mxu0 0.0
        %2890 = vmatprep.subr.mxu0 0.0
        %2891 = vmatpush1.xpose.msra.mxu0 0.0
        %2892 = vmatprep.subr.mxu0 0.0
        %2893 = vmatpush1.xpose.msra.mxu0 0.0
        %2894 = vmatprep.subr.mxu0 0.0
        %2895 = vmatpush1.xpose.msra.mxu0 0.0
        %2896 = vmatprep.subr.mxu0 0.0
        %2897 = vmatpush1.xpose.msra.mxu0 0.0
        %2898 = vmatprep.subr.mxu0 0.0
        %2899 = vmatpush1.xpose.msra.mxu0 0.0
        %2900 = vmatprep.subr.mxu0 0.0
        %2901 = vmatpush1.xpose.msra.mxu0 0.0
        %2902 = vmatprep.subr.mxu0 0.0
        %2903 = vmatpush1.xpose.msra.mxu0 0.0
        %2904 = vmatprep.subr.mxu0 0.0
        %2905 = vmatpush1.xpose.msra.mxu0 0.0
        %2906 = vmatprep.subr.mxu0 0.0
        %2907 = vmatpush1.xpose.msra.mxu0 0.0
        %2908 = vmatprep.subr.mxu0 0.0
        %2909 = vmatpush1.xpose.msra.mxu0 0.0
        %2910 = vmatprep.subr.mxu0 0.0
        %2911 = vmatpush1.xpose.msra.mxu0 0.0
        %2912 = vmatprep.subr.mxu0 0.0
        %2913 = vmatpush1.xpose.msra.mxu0 0.0
        %2914 = vmatprep.subr.mxu0 0.0
        %2915 = vmatpush1.xpose.msra.mxu0 0.0
        %2916 = vmatprep.subr.mxu0 0.0
        %2917 = vmatpush1.xpose.msra.mxu0 0.0
        %2918 = vmatprep.subr.mxu0 0.0
        %2919 = vmatpush1.xpose.msra.mxu0 0.0
        %2920 = vmatprep.subr.mxu0 0.0
        %2921 = vmatpush1.xpose.msra.mxu0 0.0
        %2922 = vmatprep.subr.mxu0 0.0
        %2923 = vmatpush1.xpose.msra.mxu0 0.0
        %2924 = vmatprep.subr.mxu0 0.0
        %2925 = vmatpush1.xpose.msra.mxu0 0.0
        %2926 = vmatprep.subr.mxu0 0.0
        %2927 = vmatpush1.xpose.msra.mxu0 0.0
        %2928 = vmatprep.subr.mxu0 0.0
        %2929 = vmatpush1.xpose.msra.mxu0 0.0
        %2930 = vmatprep.subr.mxu0 0.0
        %2931 = vmatpush1.xpose.msra.mxu0 0.0
        %2932 = vmatprep.subr.mxu0 0.0
        %2933 = vmatpush1.xpose.msra.mxu0 0.0
        %2934 = vmatprep.subr.mxu0 0.0
        %2935 = vmatpush1.xpose.msra.mxu0 0.0
        %2936 = vmatprep.subr.mxu0 0.0
        %2937 = vmatpush1.xpose.msra.mxu0 0.0
        %2938 = vmatprep.subr.mxu0 0.0
        %2939 = vmatpush1.xpose.msra.mxu0 0.0
        %2940 = vmatprep.subr.mxu0 0.0
        %2941 = vmatpush1.xpose.msra.mxu0 0.0
        %2942 = vmatprep.mubr.f32.mxu0 0.0
        %2943 = vmatmul.mubr.f32.gmra.mrb[0].mxu0 %v2874
        %v2944 = vpop.f32.mrb[0].mxu0
        %v2945 = vadd.f32 0.0, %v2944
        %v2946 = vpop.f32.mrb[0].mxu0
        %2947 = vdwg.mxu0
        %v2948 = vsel %vm1467, %v2945, -inf
        %2949 = vmax.xlane.f32.xlu0 %v2948
        %v2950 = vpop.xlane.xlu0 %2949
        %v2951 = vsub.f32 %v2945, %v2950
        %v2952 = vmul.f32 %v2951, 1.442695
        %v2953 = vpow.pop %v2952
        %v2954 = vsel %vm1467, %v2953, 0.0
        %2955 = vadd.xlane.f32.xlu0 %v2954
        %v2956 = vpop.xlane.xlu0 %2955
        %v2957 = vrcp.pop %v2956
        %v2958 = vmul.f32 %v2953, %v2957
        %2960 = vrot.lane.b32.xlu0 %v2707, 120
        %v2961 = vpop.permute.xlu0 %2960
        %v2964 = vsel %vm1467, %v2958, 0
        %2966 = vmatprep.subr.mxu0 0.0
        %2967 = vmatpush1.msra.mxu0 %v2961
        %2968 = vmatprep.subr.mxu0 0.0
        %2969 = vmatpush1.msra.mxu0 0.0
        %2970 = vmatprep.subr.mxu0 0.0
        %2971 = vmatpush1.msra.mxu0 0.0
        %2972 = vmatprep.subr.mxu0 0.0
        %2973 = vmatpush1.msra.mxu0 0.0
        %2974 = vmatprep.subr.mxu0 0.0
        %2975 = vmatpush1.msra.mxu0 0.0
        %2976 = vmatprep.subr.mxu0 0.0
        %2977 = vmatpush1.msra.mxu0 0.0
        %2978 = vmatprep.subr.mxu0 0.0
        %2979 = vmatpush1.msra.mxu0 0.0
        %2980 = vmatprep.subr.mxu0 0.0
        %2981 = vmatpush1.msra.mxu0 0.0
        %2982 = vmatprep.subr.mxu0 0.0
        %2983 = vmatpush1.msra.mxu0 0.0
        %2984 = vmatprep.subr.mxu0 0.0
        %2985 = vmatpush1.msra.mxu0 0.0
        %2986 = vmatprep.subr.mxu0 0.0
        %2987 = vmatpush1.msra.mxu0 0.0
        %2988 = vmatprep.subr.mxu0 0.0
        %2989 = vmatpush1.msra.mxu0 0.0
        %2990 = vmatprep.subr.mxu0 0.0
        %2991 = vmatpush1.msra.mxu0 0.0
        %2992 = vmatprep.subr.mxu0 0.0
        %2993 = vmatpush1.msra.mxu0 0.0
        %2994 = vmatprep.subr.mxu0 0.0
        %2995 = vmatpush1.msra.mxu0 0.0
        %2996 = vmatprep.subr.mxu0 0.0
        %2997 = vmatpush1.msra.mxu0 0.0
        %2998 = vmatprep.subr.mxu0 0.0
        %2999 = vmatpush1.msra.mxu0 0.0
        %3000 = vmatprep.subr.mxu0 0.0
        %3001 = vmatpush1.msra.mxu0 0.0
        %3002 = vmatprep.subr.mxu0 0.0
        %3003 = vmatpush1.msra.mxu0 0.0
        %3004 = vmatprep.subr.mxu0 0.0
        %3005 = vmatpush1.msra.mxu0 0.0
        %3006 = vmatprep.subr.mxu0 0.0
        %3007 = vmatpush1.msra.mxu0 0.0
        %3008 = vmatprep.subr.mxu0 0.0
        %3009 = vmatpush1.msra.mxu0 0.0
        %3010 = vmatprep.subr.mxu0 0.0
        %3011 = vmatpush1.msra.mxu0 0.0
        %3012 = vmatprep.subr.mxu0 0.0
        %3013 = vmatpush1.msra.mxu0 0.0
        %3014 = vmatprep.subr.mxu0 0.0
        %3015 = vmatpush1.msra.mxu0 0.0
        %3016 = vmatprep.subr.mxu0 0.0
        %3017 = vmatpush1.msra.mxu0 0.0
        %3018 = vmatprep.subr.mxu0 0.0
        %3019 = vmatpush1.msra.mxu0 0.0
        %3020 = vmatprep.subr.mxu0 0.0
        %3021 = vmatpush1.msra.mxu0 0.0
        %3022 = vmatprep.subr.mxu0 0.0
        %3023 = vmatpush1.msra.mxu0 0.0
        %3024 = vmatprep.subr.mxu0 0.0
        %3025 = vmatpush1.msra.mxu0 0.0
        %3026 = vmatprep.subr.mxu0 0.0
        %3027 = vmatpush1.msra.mxu0 0.0
        %3028 = vmatprep.subr.mxu0 0.0
        %3029 = vmatpush1.msra.mxu0 0.0
        %3030 = vmatprep.mubr.f32.mxu0 0.0
        %3031 = vmatmul.mubr.f32.gmra.mrb[0].mxu0 %v2964
        %v3032 = vpop.f32.mrb[0].mxu0
        %v3033 = vadd.f32 0.0, %v3032
        %v3034 = vpop.f32.mrb[0].mxu0
        %3035 = vdwg.mxu0
        %v3037 = vsel %vm1467, %v3033, 0
        %3039 = vmatprep.subr.mxu0 0.0
        %3040 = vmatpush1.msra.mxu0 %v2472
        %3041 = vmatprep.subr.mxu0 0.0
        %3042 = vmatpush1.msra.mxu0 0.0
        %3043 = vmatprep.subr.mxu0 0.0
        %3044 = vmatpush1.msra.mxu0 0.0
        %3045 = vmatprep.subr.mxu0 0.0
        %3046 = vmatpush1.msra.mxu0 0.0
        %3047 = vmatprep.subr.mxu0 0.0
        %3048 = vmatpush1.msra.mxu0 0.0
        %3049 = vmatprep.subr.mxu0 0.0
        %3050 = vmatpush1.msra.mxu0 0.0
        %3051 = vmatprep.subr.mxu0 0.0
        %3052 = vmatpush1.msra.mxu0 0.0
        %3053 = vmatprep.subr.mxu0 0.0
        %3054 = vmatpush1.msra.mxu0 0.0
        %3055 = vmatprep.subr.mxu0 0.0
        %3056 = vmatpush1.msra.mxu0 0.0
        %3057 = vmatprep.subr.mxu0 0.0
        %3058 = vmatpush1.msra.mxu0 0.0
        %3059 = vmatprep.subr.mxu0 0.0
        %3060 = vmatpush1.msra.mxu0 0.0
        %3061 = vmatprep.subr.mxu0 0.0
        %3062 = vmatpush1.msra.mxu0 0.0
        %3063 = vmatprep.subr.mxu0 0.0
        %3064 = vmatpush1.msra.mxu0 0.0
        %3065 = vmatprep.subr.mxu0 0.0
        %3066 = vmatpush1.msra.mxu0 0.0
        %3067 = vmatprep.subr.mxu0 0.0
        %3068 = vmatpush1.msra.mxu0 0.0
        %3069 = vmatprep.subr.mxu0 0.0
        %3070 = vmatpush1.msra.mxu0 0.0
        %3071 = vmatprep.subr.mxu0 0.0
        %3072 = vmatpush1.msra.mxu0 0.0
        %3073 = vmatprep.subr.mxu0 0.0
        %3074 = vmatpush1.msra.mxu0 0.0
        %3075 = vmatprep.subr.mxu0 0.0
        %3076 = vmatpush1.msra.mxu0 0.0
        %3077 = vmatprep.subr.mxu0 0.0
        %3078 = vmatpush1.msra.mxu0 0.0
        %3079 = vmatprep.subr.mxu0 0.0
        %3080 = vmatpush1.msra.mxu0 0.0
        %3081 = vmatprep.subr.mxu0 0.0
        %3082 = vmatpush1.msra.mxu0 0.0
        %3083 = vmatprep.subr.mxu0 0.0
        %3084 = vmatpush1.msra.mxu0 0.0
        %3085 = vmatprep.subr.mxu0 0.0
        %3086 = vmatpush1.msra.mxu0 0.0
        %3087 = vmatprep.subr.mxu0 0.0
        %3088 = vmatpush1.msra.mxu0 0.0
        %3089 = vmatprep.subr.mxu0 0.0
        %3090 = vmatpush1.msra.mxu0 0.0
        %3091 = vmatprep.subr.mxu0 0.0
        %3092 = vmatpush1.msra.mxu0 0.0
        %3093 = vmatprep.subr.mxu0 0.0
        %3094 = vmatpush1.msra.mxu0 0.0
        %3095 = vmatprep.subr.mxu0 0.0
        %3096 = vmatpush1.msra.mxu0 0.0
        %3097 = vmatprep.subr.mxu0 0.0
        %3098 = vmatpush1.msra.mxu0 0.0
        %3099 = vmatprep.subr.mxu0 0.0
        %3100 = vmatpush1.msra.mxu0 0.0
        %3101 = vmatprep.subr.mxu0 0.0
        %3102 = vmatpush1.msra.mxu0 0.0
        %3103 = vmatprep.mubr.f32.mxu0 0.0
        %3104 = vmatmul.mubr.f32.gmra.mrb[0].mxu0 %v3037
        %v3105 = vpop.f32.mrb[0].mxu0
        %v3106 = vadd.f32 0.0, %v3105
        %v3107 = vpop.f32.mrb[0].mxu0
        %3108 = vdwg.mxu0
        %v3110 = vsel %vm1467, %v2867, 0
        %3112 = vmatprep.subr.mxu0 0.0
        %3113 = vmatpush1.msra.mxu0 %v2471
        %3114 = vmatprep.subr.mxu0 0.0
        %3115 = vmatpush1.msra.mxu0 0.0
        %3116 = vmatprep.subr.mxu0 0.0
        %3117 = vmatpush1.msra.mxu0 0.0
        %3118 = vmatprep.subr.mxu0 0.0
        %3119 = vmatpush1.msra.mxu0 0.0
        %3120 = vmatprep.subr.mxu0 0.0
        %3121 = vmatpush1.msra.mxu0 0.0
        %3122 = vmatprep.subr.mxu0 0.0
        %3123 = vmatpush1.msra.mxu0 0.0
        %3124 = vmatprep.subr.mxu0 0.0
        %3125 = vmatpush1.msra.mxu0 0.0
        %3126 = vmatprep.subr.mxu0 0.0
        %3127 = vmatpush1.msra.mxu0 0.0
        %3128 = vmatprep.subr.mxu0 0.0
        %3129 = vmatpush1.msra.mxu0 0.0
        %3130 = vmatprep.subr.mxu0 0.0
        %3131 = vmatpush1.msra.mxu0 0.0
        %3132 = vmatprep.subr.mxu0 0.0
        %3133 = vmatpush1.msra.mxu0 0.0
        %3134 = vmatprep.subr.mxu0 0.0
        %3135 = vmatpush1.msra.mxu0 0.0
        %3136 = vmatprep.subr.mxu0 0.0
        %3137 = vmatpush1.msra.mxu0 0.0
        %3138 = vmatprep.subr.mxu0 0.0
        %3139 = vmatpush1.msra.mxu0 0.0
        %3140 = vmatprep.subr.mxu0 0.0
        %3141 = vmatpush1.msra.mxu0 0.0
        %3142 = vmatprep.subr.mxu0 0.0
        %3143 = vmatpush1.msra.mxu0 0.0
        %3144 = vmatprep.subr.mxu0 0.0
        %3145 = vmatpush1.msra.mxu0 0.0
        %3146 = vmatprep.subr.mxu0 0.0
        %3147 = vmatpush1.msra.mxu0 0.0
        %3148 = vmatprep.subr.mxu0 0.0
        %3149 = vmatpush1.msra.mxu0 0.0
        %3150 = vmatprep.subr.mxu0 0.0
        %3151 = vmatpush1.msra.mxu0 0.0
        %3152 = vmatprep.subr.mxu0 0.0
        %3153 = vmatpush1.msra.mxu0 0.0
        %3154 = vmatprep.subr.mxu0 0.0
        %3155 = vmatpush1.msra.mxu0 0.0
        %3156 = vmatprep.subr.mxu0 0.0
        %3157 = vmatpush1.msra.mxu0 0.0
        %3158 = vmatprep.subr.mxu0 0.0
        %3159 = vmatpush1.msra.mxu0 0.0
        %3160 = vmatprep.subr.mxu0 0.0
        %3161 = vmatpush1.msra.mxu0 0.0
        %3162 = vmatprep.subr.mxu0 0.0
        %3163 = vmatpush1.msra.mxu0 0.0
        %3164 = vmatprep.subr.mxu0 0.0
        %3165 = vmatpush1.msra.mxu0 0.0
        %3166 = vmatprep.subr.mxu0 0.0
        %3167 = vmatpush1.msra.mxu0 0.0
        %3168 = vmatprep.subr.mxu0 0.0
        %3169 = vmatpush1.msra.mxu0 0.0
        %3170 = vmatprep.subr.mxu0 0.0
        %3171 = vmatpush1.msra.mxu0 0.0
        %3172 = vmatprep.subr.mxu0 0.0
        %3173 = vmatpush1.msra.mxu0 0.0
        %3174 = vmatprep.subr.mxu0 0.0
        %3175 = vmatpush1.msra.mxu0 0.0
        %3176 = vmatprep.mubr.f32.mxu0 0.0
        %3177 = vmatmul.mubr.f32.gmra.mrb[0].mxu0 %v3110
        %v3178 = vpop.f32.mrb[0].mxu0
        %v3179 = vadd.f32 %v3106, %v3178
        %v3180 = vpop.f32.mrb[0].mxu0
        %3181 = vdwg.mxu0
        %3182 = vrot.lane.b32.xlu0 %v2552, 112
        %v3183 = vpop.permute.xlu0 %3182
        %3184 = vrot.lane.b32.xlu0 %v2631, 112
        %v3185 = vpop.permute.xlu0 %3184
        %v3186 = vsel %vm1467, %v3183, 0
        %v3188 = vsel %vm1467, %v3185, 0
        %3190 = vmatprep.subr.mxu0 0.0
        %3191 = vmatpush1.xpose.msra.mxu0 %v3188
        %3192 = vmatprep.subr.mxu0 0.0
        %3193 = vmatpush1.xpose.msra.mxu0 0.0
        %3194 = vmatprep.subr.mxu0 0.0
        %3195 = vmatpush1.xpose.msra.mxu0 0.0
        %3196 = vmatprep.subr.mxu0 0.0
        %3197 = vmatpush1.xpose.msra.mxu0 0.0
        %3198 = vmatprep.subr.mxu0 0.0
        %3199 = vmatpush1.xpose.msra.mxu0 0.0
        %3200 = vmatprep.subr.mxu0 0.0
        %3201 = vmatpush1.xpose.msra.mxu0 0.0
        %3202 = vmatprep.subr.mxu0 0.0
        %3203 = vmatpush1.xpose.msra.mxu0 0.0
        %3204 = vmatprep.subr.mxu0 0.0
        %3205 = vmatpush1.xpose.msra.mxu0 0.0
        %3206 = vmatprep.subr.mxu0 0.0
        %3207 = vmatpush1.xpose.msra.mxu0 0.0
        %3208 = vmatprep.subr.mxu0 0.0
        %3209 = vmatpush1.xpose.msra.mxu0 0.0
        %3210 = vmatprep.subr.mxu0 0.0
        %3211 = vmatpush1.xpose.msra.mxu0 0.0
        %3212 = vmatprep.subr.mxu0 0.0
        %3213 = vmatpush1.xpose.msra.mxu0 0.0
        %3214 = vmatprep.subr.mxu0 0.0
        %3215 = vmatpush1.xpose.msra.mxu0 0.0
        %3216 = vmatprep.subr.mxu0 0.0
        %3217 = vmatpush1.xpose.msra.mxu0 0.0
        %3218 = vmatprep.subr.mxu0 0.0
        %3219 = vmatpush1.xpose.msra.mxu0 0.0
        %3220 = vmatprep.subr.mxu0 0.0
        %3221 = vmatpush1.xpose.msra.mxu0 0.0
        %3222 = vmatprep.subr.mxu0 0.0
        %3223 = vmatpush1.xpose.msra.mxu0 0.0
        %3224 = vmatprep.subr.mxu0 0.0
        %3225 = vmatpush1.xpose.msra.mxu0 0.0
        %3226 = vmatprep.subr.mxu0 0.0
        %3227 = vmatpush1.xpose.msra.mxu0 0.0
        %3228 = vmatprep.subr.mxu0 0.0
        %3229 = vmatpush1.xpose.msra.mxu0 0.0
        %3230 = vmatprep.subr.mxu0 0.0
        %3231 = vmatpush1.xpose.msra.mxu0 0.0
        %3232 = vmatprep.subr.mxu0 0.0
        %3233 = vmatpush1.xpose.msra.mxu0 0.0
        %3234 = vmatprep.subr.mxu0 0.0
        %3235 = vmatpush1.xpose.msra.mxu0 0.0
        %3236 = vmatprep.subr.mxu0 0.0
        %3237 = vmatpush1.xpose.msra.mxu0 0.0
        %3238 = vmatprep.subr.mxu0 0.0
        %3239 = vmatpush1.xpose.msra.mxu0 0.0
        %3240 = vmatprep.subr.mxu0 0.0
        %3241 = vmatpush1.xpose.msra.mxu0 0.0
        %3242 = vmatprep.subr.mxu0 0.0
        %3243 = vmatpush1.xpose.msra.mxu0 0.0
        %3244 = vmatprep.subr.mxu0 0.0
        %3245 = vmatpush1.xpose.msra.mxu0 0.0
        %3246 = vmatprep.subr.mxu0 0.0
        %3247 = vmatpush1.xpose.msra.mxu0 0.0
        %3248 = vmatprep.subr.mxu0 0.0
        %3249 = vmatpush1.xpose.msra.mxu0 0.0
        %3250 = vmatprep.subr.mxu0 0.0
        %3251 = vmatpush1.xpose.msra.mxu0 0.0
        %3252 = vmatprep.subr.mxu0 0.0
        %3253 = vmatpush1.xpose.msra.mxu0 0.0
        %3254 = vmatprep.mubr.f32.mxu0 0.0
        %3255 = vmatmul.mubr.f32.gmra.mrb[0].mxu0 %v3186
        %v3256 = vpop.f32.mrb[0].mxu0
        %v3257 = vadd.f32 0.0, %v3256
        %v3258 = vpop.f32.mrb[0].mxu0
        %3259 = vdwg.mxu0
        %v3260 = vsel %vm1467, %v3257, -inf
        %3261 = vmax.xlane.f32.xlu0 %v3260
        %v3262 = vpop.xlane.xlu0 %3261
        %v3263 = vsub.f32 %v3257, %v3262
        %v3264 = vmul.f32 %v3263, 1.442695
        %v3265 = vpow.pop %v3264
        %v3266 = vsel %vm1467, %v3265, 0.0
        %3267 = vadd.xlane.f32.xlu0 %v3266
        %v3268 = vpop.xlane.xlu0 %3267
        %v3269 = vrcp.pop %v3268
        %v3270 = vmul.f32 %v3265, %v3269
        %3271 = vrot.lane.b32.xlu0 %v2707, 112
        %v3272 = vpop.permute.xlu0 %3271
        %v3275 = vsel %vm1467, %v3270, 0
        %3277 = vmatprep.subr.mxu0 0.0
        %3278 = vmatpush1.msra.mxu0 %v3272
        %3279 = vmatprep.subr.mxu0 0.0
        %3280 = vmatpush1.msra.mxu0 0.0
        %3281 = vmatprep.subr.mxu0 0.0
        %3282 = vmatpush1.msra.mxu0 0.0
        %3283 = vmatprep.subr.mxu0 0.0
        %3284 = vmatpush1.msra.mxu0 0.0
        %3285 = vmatprep.subr.mxu0 0.0
        %3286 = vmatpush1.msra.mxu0 0.0
        %3287 = vmatprep.subr.mxu0 0.0
        %3288 = vmatpush1.msra.mxu0 0.0
        %3289 = vmatprep.subr.mxu0 0.0
        %3290 = vmatpush1.msra.mxu0 0.0
        %3291 = vmatprep.subr.mxu0 0.0
        %3292 = vmatpush1.msra.mxu0 0.0
        %3293 = vmatprep.subr.mxu0 0.0
        %3294 = vmatpush1.msra.mxu0 0.0
        %3295 = vmatprep.subr.mxu0 0.0
        %3296 = vmatpush1.msra.mxu0 0.0
        %3297 = vmatprep.subr.mxu0 0.0
        %3298 = vmatpush1.msra.mxu0 0.0
        %3299 = vmatprep.subr.mxu0 0.0
        %3300 = vmatpush1.msra.mxu0 0.0
        %3301 = vmatprep.subr.mxu0 0.0
        %3302 = vmatpush1.msra.mxu0 0.0
        %3303 = vmatprep.subr.mxu0 0.0
        %3304 = vmatpush1.msra.mxu0 0.0
        %3305 = vmatprep.subr.mxu0 0.0
        %3306 = vmatpush1.msra.mxu0 0.0
        %3307 = vmatprep.subr.mxu0 0.0
        %3308 = vmatpush1.msra.mxu0 0.0
        %3309 = vmatprep.subr.mxu0 0.0
        %3310 = vmatpush1.msra.mxu0 0.0
        %3311 = vmatprep.subr.mxu0 0.0
        %3312 = vmatpush1.msra.mxu0 0.0
        %3313 = vmatprep.subr.mxu0 0.0
        %3314 = vmatpush1.msra.mxu0 0.0
        %3315 = vmatprep.subr.mxu0 0.0
        %3316 = vmatpush1.msra.mxu0 0.0
        %3317 = vmatprep.subr.mxu0 0.0
        %3318 = vmatpush1.msra.mxu0 0.0
        %3319 = vmatprep.subr.mxu0 0.0
        %3320 = vmatpush1.msra.mxu0 0.0
        %3321 = vmatprep.subr.mxu0 0.0
        %3322 = vmatpush1.msra.mxu0 0.0
        %3323 = vmatprep.subr.mxu0 0.0
        %3324 = vmatpush1.msra.mxu0 0.0
        %3325 = vmatprep.subr.mxu0 0.0
        %3326 = vmatpush1.msra.mxu0 0.0
        %3327 = vmatprep.subr.mxu0 0.0
        %3328 = vmatpush1.msra.mxu0 0.0
        %3329 = vmatprep.subr.mxu0 0.0
        %3330 = vmatpush1.msra.mxu0 0.0
        %3331 = vmatprep.subr.mxu0 0.0
        %3332 = vmatpush1.msra.mxu0 0.0
        %3333 = vmatprep.subr.mxu0 0.0
        %3334 = vmatpush1.msra.mxu0 0.0
        %3335 = vmatprep.subr.mxu0 0.0
        %3336 = vmatpush1.msra.mxu0 0.0
        %3337 = vmatprep.subr.mxu0 0.0
        %3338 = vmatpush1.msra.mxu0 0.0
        %3339 = vmatprep.subr.mxu0 0.0
        %3340 = vmatpush1.msra.mxu0 0.0
        %3341 = vmatprep.mubr.f32.mxu0 0.0
        %3342 = vmatmul.mubr.f32.gmra.mrb[0].mxu0 %v3275
        %v3343 = vpop.f32.mrb[0].mxu0
        %v3344 = vadd.f32 0.0, %v3343
        %v3345 = vpop.f32.mrb[0].mxu0
        %3346 = vdwg.mxu0
        %v3348 = vsel %vm1467, %v3344, 0
        %3350 = vmatprep.subr.mxu0 0.0
        %3351 = vmatpush1.msra.mxu0 %v2473
        %3352 = vmatprep.subr.mxu0 0.0
        %3353 = vmatpush1.msra.mxu0 0.0
        %3354 = vmatprep.subr.mxu0 0.0
        %3355 = vmatpush1.msra.mxu0 0.0
        %3356 = vmatprep.subr.mxu0 0.0
        %3357 = vmatpush1.msra.mxu0 0.0
        %3358 = vmatprep.subr.mxu0 0.0
        %3359 = vmatpush1.msra.mxu0 0.0
        %3360 = vmatprep.subr.mxu0 0.0
        %3361 = vmatpush1.msra.mxu0 0.0
        %3362 = vmatprep.subr.mxu0 0.0
        %3363 = vmatpush1.msra.mxu0 0.0
        %3364 = vmatprep.subr.mxu0 0.0
        %3365 = vmatpush1.msra.mxu0 0.0
        %3366 = vmatprep.subr.mxu0 0.0
        %3367 = vmatpush1.msra.mxu0 0.0
        %3368 = vmatprep.subr.mxu0 0.0
        %3369 = vmatpush1.msra.mxu0 0.0
        %3370 = vmatprep.subr.mxu0 0.0
        %3371 = vmatpush1.msra.mxu0 0.0
        %3372 = vmatprep.subr.mxu0 0.0
        %3373 = vmatpush1.msra.mxu0 0.0
        %3374 = vmatprep.subr.mxu0 0.0
        %3375 = vmatpush1.msra.mxu0 0.0
        %3376 = vmatprep.subr.mxu0 0.0
        %3377 = vmatpush1.msra.mxu0 0.0
        %3378 = vmatprep.subr.mxu0 0.0
        %3379 = vmatpush1.msra.mxu0 0.0
        %3380 = vmatprep.subr.mxu0 0.0
        %3381 = vmatpush1.msra.mxu0 0.0
        %3382 = vmatprep.subr.mxu0 0.0
        %3383 = vmatpush1.msra.mxu0 0.0
        %3384 = vmatprep.subr.mxu0 0.0
        %3385 = vmatpush1.msra.mxu0 0.0
        %3386 = vmatprep.subr.mxu0 0.0
        %3387 = vmatpush1.msra.mxu0 0.0
        %3388 = vmatprep.subr.mxu0 0.0
        %3389 = vmatpush1.msra.mxu0 0.0
        %3390 = vmatprep.subr.mxu0 0.0
        %3391 = vmatpush1.msra.mxu0 0.0
        %3392 = vmatprep.subr.mxu0 0.0
        %3393 = vmatpush1.msra.mxu0 0.0
        %3394 = vmatprep.subr.mxu0 0.0
        %3395 = vmatpush1.msra.mxu0 0.0
        %3396 = vmatprep.subr.mxu0 0.0
        %3397 = vmatpush1.msra.mxu0 0.0
        %3398 = vmatprep.subr.mxu0 0.0
        %3399 = vmatpush1.msra.mxu0 0.0
        %3400 = vmatprep.subr.mxu0 0.0
        %3401 = vmatpush1.msra.mxu0 0.0
        %3402 = vmatprep.subr.mxu0 0.0
        %3403 = vmatpush1.msra.mxu0 0.0
        %3404 = vmatprep.subr.mxu0 0.0
        %3405 = vmatpush1.msra.mxu0 0.0
        %3406 = vmatprep.subr.mxu0 0.0
        %3407 = vmatpush1.msra.mxu0 0.0
        %3408 = vmatprep.subr.mxu0 0.0
        %3409 = vmatpush1.msra.mxu0 0.0
        %3410 = vmatprep.subr.mxu0 0.0
        %3411 = vmatpush1.msra.mxu0 0.0
        %3412 = vmatprep.subr.mxu0 0.0
        %3413 = vmatpush1.msra.mxu0 0.0
        %3414 = vmatprep.mubr.f32.mxu0 0.0
        %3415 = vmatmul.mubr.f32.gmra.mrb[0].mxu0 %v3348
        %v3416 = vpop.f32.mrb[0].mxu0
        %v3417 = vadd.f32 0.0, %v3416
        %v3418 = vpop.f32.mrb[0].mxu0
        %3419 = vdwg.mxu0
        %v3420 = vadd.f32 %v3179, %v3417
        %3421 = vrot.lane.b32.xlu0 %v2552, 104
        %v3422 = vpop.permute.xlu0 %3421
        %3423 = vrot.lane.b32.xlu0 %v2631, 104
        %v3424 = vpop.permute.xlu0 %3423
        %v3425 = vsel %vm1467, %v3422, 0
        %v3427 = vsel %vm1467, %v3424, 0
        %3429 = vmatprep.subr.mxu0 0.0
        %3430 = vmatpush1.xpose.msra.mxu0 %v3427
        %3431 = vmatprep.subr.mxu0 0.0
        %3432 = vmatpush1.xpose.msra.mxu0 0.0
        %3433 = vmatprep.subr.mxu0 0.0
        %3434 = vmatpush1.xpose.msra.mxu0 0.0
        %3435 = vmatprep.subr.mxu0 0.0
        %3436 = vmatpush1.xpose.msra.mxu0 0.0
        %3437 = vmatprep.subr.mxu0 0.0
        %3438 = vmatpush1.xpose.msra.mxu0 0.0
        %3439 = vmatprep.subr.mxu0 0.0
        %3440 = vmatpush1.xpose.msra.mxu0 0.0
        %3441 = vmatprep.subr.mxu0 0.0
        %3442 = vmatpush1.xpose.msra.mxu0 0.0
        %3443 = vmatprep.subr.mxu0 0.0
        %3444 = vmatpush1.xpose.msra.mxu0 0.0
        %3445 = vmatprep.subr.mxu0 0.0
        %3446 = vmatpush1.xpose.msra.mxu0 0.0
        %3447 = vmatprep.subr.mxu0 0.0
        %3448 = vmatpush1.xpose.msra.mxu0 0.0
        %3449 = vmatprep.subr.mxu0 0.0
        %3450 = vmatpush1.xpose.msra.mxu0 0.0
        %3451 = vmatprep.subr.mxu0 0.0
        %3452 = vmatpush1.xpose.msra.mxu0 0.0
        %3453 = vmatprep.subr.mxu0 0.0
        %3454 = vmatpush1.xpose.msra.mxu0 0.0
        %3455 = vmatprep.subr.mxu0 0.0
        %3456 = vmatpush1.xpose.msra.mxu0 0.0
        %3457 = vmatprep.subr.mxu0 0.0
        %3458 = vmatpush1.xpose.msra.mxu0 0.0
        %3459 = vmatprep.subr.mxu0 0.0
        %3460 = vmatpush1.xpose.msra.mxu0 0.0
        %3461 = vmatprep.subr.mxu0 0.0
        %3462 = vmatpush1.xpose.msra.mxu0 0.0
        %3463 = vmatprep.subr.mxu0 0.0
        %3464 = vmatpush1.xpose.msra.mxu0 0.0
        %3465 = vmatprep.subr.mxu0 0.0
        %3466 = vmatpush1.xpose.msra.mxu0 0.0
        %3467 = vmatprep.subr.mxu0 0.0
        %3468 = vmatpush1.xpose.msra.mxu0 0.0
        %3469 = vmatprep.subr.mxu0 0.0
        %3470 = vmatpush1.xpose.msra.mxu0 0.0
        %3471 = vmatprep.subr.mxu0 0.0
        %3472 = vmatpush1.xpose.msra.mxu0 0.0
        %3473 = vmatprep.subr.mxu0 0.0
        %3474 = vmatpush1.xpose.msra.mxu0 0.0
        %3475 = vmatprep.subr.mxu0 0.0
        %3476 = vmatpush1.xpose.msra.mxu0 0.0
        %3477 = vmatprep.subr.mxu0 0.0
        %3478 = vmatpush1.xpose.msra.mxu0 0.0
        %3479 = vmatprep.subr.mxu0 0.0
        %3480 = vmatpush1.xpose.msra.mxu0 0.0
        %3481 = vmatprep.subr.mxu0 0.0
        %3482 = vmatpush1.xpose.msra.mxu0 0.0
        %3483 = vmatprep.subr.mxu0 0.0
        %3484 = vmatpush1.xpose.msra.mxu0 0.0
        %3485 = vmatprep.subr.mxu0 0.0
        %3486 = vmatpush1.xpose.msra.mxu0 0.0
        %3487 = vmatprep.subr.mxu0 0.0
        %3488 = vmatpush1.xpose.msra.mxu0 0.0
        %3489 = vmatprep.subr.mxu0 0.0
        %3490 = vmatpush1.xpose.msra.mxu0 0.0
        %3491 = vmatprep.subr.mxu0 0.0
        %3492 = vmatpush1.xpose.msra.mxu0 0.0
        %3493 = vmatprep.mubr.f32.mxu0 0.0
        %3494 = vmatmul.mubr.f32.gmra.mrb[0].mxu0 %v3425
        %v3495 = vpop.f32.mrb[0].mxu0
        %v3496 = vadd.f32 0.0, %v3495
        %v3497 = vpop.f32.mrb[0].mxu0
        %3498 = vdwg.mxu0
        %v3499 = vsel %vm1467, %v3496, -inf
        %3500 = vmax.xlane.f32.xlu0 %v3499
        %v3501 = vpop.xlane.xlu0 %3500
        %v3502 = vsub.f32 %v3496, %v3501
        %v3503 = vmul.f32 %v3502, 1.442695
        %v3504 = vpow.pop %v3503
        %v3505 = vsel %vm1467, %v3504, 0.0
        %3506 = vadd.xlane.f32.xlu0 %v3505
        %v3507 = vpop.xlane.xlu0 %3506
        %v3508 = vrcp.pop %v3507
        %v3509 = vmul.f32 %v3504, %v3508
        %3510 = vrot.lane.b32.xlu0 %v2707, 104
        %v3511 = vpop.permute.xlu0 %3510
        %v3514 = vsel %vm1467, %v3509, 0
        %3516 = vmatprep.subr.mxu0 0.0
        %3517 = vmatpush1.msra.mxu0 %v3511
        %3518 = vmatprep.subr.mxu0 0.0
        %3519 = vmatpush1.msra.mxu0 0.0
        %3520 = vmatprep.subr.mxu0 0.0
        %3521 = vmatpush1.msra.mxu0 0.0
        %3522 = vmatprep.subr.mxu0 0.0
        %3523 = vmatpush1.msra.mxu0 0.0
        %3524 = vmatprep.subr.mxu0 0.0
        %3525 = vmatpush1.msra.mxu0 0.0
        %3526 = vmatprep.subr.mxu0 0.0
        %3527 = vmatpush1.msra.mxu0 0.0
        %3528 = vmatprep.subr.mxu0 0.0
        %3529 = vmatpush1.msra.mxu0 0.0
        %3530 = vmatprep.subr.mxu0 0.0
        %3531 = vmatpush1.msra.mxu0 0.0
        %3532 = vmatprep.subr.mxu0 0.0
        %3533 = vmatpush1.msra.mxu0 0.0
        %3534 = vmatprep.subr.mxu0 0.0
        %3535 = vmatpush1.msra.mxu0 0.0
        %3536 = vmatprep.subr.mxu0 0.0
        %3537 = vmatpush1.msra.mxu0 0.0
        %3538 = vmatprep.subr.mxu0 0.0
        %3539 = vmatpush1.msra.mxu0 0.0
        %3540 = vmatprep.subr.mxu0 0.0
        %3541 = vmatpush1.msra.mxu0 0.0
        %3542 = vmatprep.subr.mxu0 0.0
        %3543 = vmatpush1.msra.mxu0 0.0
        %3544 = vmatprep.subr.mxu0 0.0
        %3545 = vmatpush1.msra.mxu0 0.0
        %3546 = vmatprep.subr.mxu0 0.0
        %3547 = vmatpush1.msra.mxu0 0.0
        %3548 = vmatprep.subr.mxu0 0.0
        %3549 = vmatpush1.msra.mxu0 0.0
        %3550 = vmatprep.subr.mxu0 0.0
        %3551 = vmatpush1.msra.mxu0 0.0
        %3552 = vmatprep.subr.mxu0 0.0
        %3553 = vmatpush1.msra.mxu0 0.0
        %3554 = vmatprep.subr.mxu0 0.0
        %3555 = vmatpush1.msra.mxu0 0.0
        %3556 = vmatprep.subr.mxu0 0.0
        %3557 = vmatpush1.msra.mxu0 0.0
        %3558 = vmatprep.subr.mxu0 0.0
        %3559 = vmatpush1.msra.mxu0 0.0
        %3560 = vmatprep.subr.mxu0 0.0
        %3561 = vmatpush1.msra.mxu0 0.0
        %3562 = vmatprep.subr.mxu0 0.0
        %3563 = vmatpush1.msra.mxu0 0.0
        %3564 = vmatprep.subr.mxu0 0.0
        %3565 = vmatpush1.msra.mxu0 0.0
        %3566 = vmatprep.subr.mxu0 0.0
        %3567 = vmatpush1.msra.mxu0 0.0
        %3568 = vmatprep.subr.mxu0 0.0
        %3569 = vmatpush1.msra.mxu0 0.0
        %3570 = vmatprep.subr.mxu0 0.0
        %3571 = vmatpush1.msra.mxu0 0.0
        %3572 = vmatprep.subr.mxu0 0.0
        %3573 = vmatpush1.msra.mxu0 0.0
        %3574 = vmatprep.subr.mxu0 0.0
        %3575 = vmatpush1.msra.mxu0 0.0
        %3576 = vmatprep.subr.mxu0 0.0
        %3577 = vmatpush1.msra.mxu0 0.0
        %3578 = vmatprep.subr.mxu0 0.0
        %3579 = vmatpush1.msra.mxu0 0.0
        %3580 = vmatprep.mubr.f32.mxu0 0.0
        %3581 = vmatmul.mubr.f32.gmra.mrb[0].mxu0 %v3514
        %v3582 = vpop.f32.mrb[0].mxu0
        %v3583 = vadd.f32 0.0, %v3582
        %v3584 = vpop.f32.mrb[0].mxu0
        %3585 = vdwg.mxu0
        %v3587 = vsel %vm1467, %v3583, 0
        %3589 = vmatprep.subr.mxu0 0.0
        %3590 = vmatpush1.msra.mxu0 %v2474
        %3591 = vmatprep.subr.mxu0 0.0
        %3592 = vmatpush1.msra.mxu0 0.0
        %3593 = vmatprep.subr.mxu0 0.0
        %3594 = vmatpush1.msra.mxu0 0.0
        %3595 = vmatprep.subr.mxu0 0.0
        %3596 = vmatpush1.msra.mxu0 0.0
        %3597 = vmatprep.subr.mxu0 0.0
        %3598 = vmatpush1.msra.mxu0 0.0
        %3599 = vmatprep.subr.mxu0 0.0
        %3600 = vmatpush1.msra.mxu0 0.0
        %3601 = vmatprep.subr.mxu0 0.0
        %3602 = vmatpush1.msra.mxu0 0.0
        %3603 = vmatprep.subr.mxu0 0.0
        %3604 = vmatpush1.msra.mxu0 0.0
        %3605 = vmatprep.subr.mxu0 0.0
        %3606 = vmatpush1.msra.mxu0 0.0
        %3607 = vmatprep.subr.mxu0 0.0
        %3608 = vmatpush1.msra.mxu0 0.0
        %3609 = vmatprep.subr.mxu0 0.0
        %3610 = vmatpush1.msra.mxu0 0.0
        %3611 = vmatprep.subr.mxu0 0.0
        %3612 = vmatpush1.msra.mxu0 0.0
        %3613 = vmatprep.subr.mxu0 0.0
        %3614 = vmatpush1.msra.mxu0 0.0
        %3615 = vmatprep.subr.mxu0 0.0
        %3616 = vmatpush1.msra.mxu0 0.0
        %3617 = vmatprep.subr.mxu0 0.0
        %3618 = vmatpush1.msra.mxu0 0.0
        %3619 = vmatprep.subr.mxu0 0.0
        %3620 = vmatpush1.msra.mxu0 0.0
        %3621 = vmatprep.subr.mxu0 0.0
        %3622 = vmatpush1.msra.mxu0 0.0
        %3623 = vmatprep.subr.mxu0 0.0
        %3624 = vmatpush1.msra.mxu0 0.0
        %3625 = vmatprep.subr.mxu0 0.0
        %3626 = vmatpush1.msra.mxu0 0.0
        %3627 = vmatprep.subr.mxu0 0.0
        %3628 = vmatpush1.msra.mxu0 0.0
        %3629 = vmatprep.subr.mxu0 0.0
        %3630 = vmatpush1.msra.mxu0 0.0
        %3631 = vmatprep.subr.mxu0 0.0
        %3632 = vmatpush1.msra.mxu0 0.0
        %3633 = vmatprep.subr.mxu0 0.0
        %3634 = vmatpush1.msra.mxu0 0.0
        %3635 = vmatprep.subr.mxu0 0.0
        %3636 = vmatpush1.msra.mxu0 0.0
        %3637 = vmatprep.subr.mxu0 0.0
        %3638 = vmatpush1.msra.mxu0 0.0
        %3639 = vmatprep.subr.mxu0 0.0
        %3640 = vmatpush1.msra.mxu0 0.0
        %3641 = vmatprep.subr.mxu0 0.0
        %3642 = vmatpush1.msra.mxu0 0.0
        %3643 = vmatprep.subr.mxu0 0.0
        %3644 = vmatpush1.msra.mxu0 0.0
        %3645 = vmatprep.subr.mxu0 0.0
        %3646 = vmatpush1.msra.mxu0 0.0
        %3647 = vmatprep.subr.mxu0 0.0
        %3648 = vmatpush1.msra.mxu0 0.0
        %3649 = vmatprep.subr.mxu0 0.0
        %3650 = vmatpush1.msra.mxu0 0.0
        %3651 = vmatprep.subr.mxu0 0.0
        %3652 = vmatpush1.msra.mxu0 0.0
        %3653 = vmatprep.mubr.f32.mxu0 0.0
        %3654 = vmatmul.mubr.f32.gmra.mrb[0].mxu0 %v3587
        %v3655 = vpop.f32.mrb[0].mxu0
        %v3656 = vadd.f32 0.0, %v3655
        %v3657 = vpop.f32.mrb[0].mxu0
        %3658 = vdwg.mxu0
        %v3659 = vadd.f32 %v3420, %v3656
        %v3660 = vadd.f32 %v2455, %v3659
        %v3662 = vlaneseq
        %v3663 = vshrl.u32 %v3662, 7
        %v3664 = vsub.s32 0, %v3663
        %v3665 = vrot.slane %v2475, %v3664
        %v3667 = vadd.f32 %v3660, %v3665
        %v3668 = vld [vmem:[#allocation19] sm:$0x1]
        %v3669 = vld [vmem:[#allocation20] sm:$0x1]
        %v3670 = vsel %vm1241, %v3667, 0.0
        %3671 = vadd.xlane.f32.xlu0 %v3670
        %v3672 = vpop.xlane.xlu0 %3671
        %v3673 = vmul.f32 %v3672, %v2431
        %v3674 = vsub.f32 %v3667, %v3673
        %v3675 = vmul.f32 %v3674, %v3674
        %v3676 = vsel %vm1241, %v3675, 0.0
        %3677 = vadd.xlane.f32.xlu0 %v3676
        %v3678 = vpop.xlane.xlu0 %3677
        %v3679 = vmul.f32 %v3678, %v2431
        %v3680 = vadd.f32 %v3679, 1e-05
        %v3681 = vrsqrt.pop %v3680
        %v3682 = vmul.f32 %v3674, %v3681
        %v3684 = vlaneseq
        %v3685 = vshrl.u32 %v3684, 7
        %v3686 = vsub.s32 0, %v3685
        %v3687 = vrot.slane %v3668, %v3686
        %v3689 = vmul.f32 %v3682, %v3687
        %v3691 = vlaneseq
        %v3692 = vshrl.u32 %v3691, 7
        %v3693 = vsub.s32 0, %v3692
        %v3694 = vrot.slane %v3669, %v3693
        %v3696 = vadd.f32 %v3689, %v3694
        %v3697 = vld [vmem:[#allocation22] sm:$0xff]
        %v3698 = vld [vmem:[#allocation22 + $0x8] sm:$0xff]
        %v3699 = vld [vmem:[#allocation22 + $0x10] sm:$0xff]
        %v3700 = vld [vmem:[#allocation22 + $0x18] sm:$0xff]
        %v3701 = vld [vmem:[%s49] sm:$0xff]
        %v3702 = vld [vmem:[%s49 + $0x8] sm:$0xff]
        %v3703 = vld [vmem:[%s49 + $0x10] sm:$0xff]
        %v3704 = vld [vmem:[%s49 + $0x18] sm:$0xff]
        %v3705 = vld [vmem:[%s49 + $0x20] sm:$0xff]
        %v3706 = vld [vmem:[%s49 + $0x28] sm:$0xff]
        %v3707 = vld [vmem:[%s49 + $0x30] sm:$0xff]
        %v3708 = vld [vmem:[%s49 + $0x38] sm:$0xff]
        %v3709 = vld [vmem:[#allocation23] sm:$0x1]
        %v3711 = vlaneseq
        %v3712 = vshrl.u32 %v3711, 7
        %v3713 = vsub.s32 0, %v3712
        %v3714 = vrot.slane %v3709, %v3713
        %v3717 = vsel %vm1241, %v3696, 0
        %3719 = vmatprep.subr.mxu0 0.0
        %3720 = vmatpush1.msra.mxu0 %v3697
        %3721 = vmatprep.subr.mxu0 0.0
        %3722 = vmatpush1.msra.mxu0 %v3698
        %3723 = vmatprep.subr.mxu0 0.0
        %3724 = vmatpush1.msra.mxu0 %v3699
        %3725 = vmatprep.subr.mxu0 0.0
        %3726 = vmatpush1.msra.mxu0 %v3700
        %3727 = vmatprep.subr.mxu0 0.0
        %3728 = vmatpush1.msra.mxu0 0.0
        %3729 = vmatprep.subr.mxu0 0.0
        %3730 = vmatpush1.msra.mxu0 0.0
        %3731 = vmatprep.subr.mxu0 0.0
        %3732 = vmatpush1.msra.mxu0 0.0
        %3733 = vmatprep.subr.mxu0 0.0
        %3734 = vmatpush1.msra.mxu0 0.0
        %3735 = vmatprep.subr.mxu0 0.0
        %3736 = vmatpush1.msra.mxu0 0.0
        %3737 = vmatprep.subr.mxu0 0.0
        %3738 = vmatpush1.msra.mxu0 0.0
        %3739 = vmatprep.subr.mxu0 0.0
        %3740 = vmatpush1.msra.mxu0 0.0
        %3741 = vmatprep.subr.mxu0 0.0
        %3742 = vmatpush1.msra.mxu0 0.0
        %3743 = vmatprep.subr.mxu0 0.0
        %3744 = vmatpush1.msra.mxu0 0.0
        %3745 = vmatprep.subr.mxu0 0.0
        %3746 = vmatpush1.msra.mxu0 0.0
        %3747 = vmatprep.subr.mxu0 0.0
        %3748 = vmatpush1.msra.mxu0 0.0
        %3749 = vmatprep.subr.mxu0 0.0
        %3750 = vmatpush1.msra.mxu0 0.0
        %3751 = vmatprep.subr.mxu0 0.0
        %3752 = vmatpush1.msra.mxu0 0.0
        %3753 = vmatprep.subr.mxu0 0.0
        %3754 = vmatpush1.msra.mxu0 0.0
        %3755 = vmatprep.subr.mxu0 0.0
        %3756 = vmatpush1.msra.mxu0 0.0
        %3757 = vmatprep.subr.mxu0 0.0
        %3758 = vmatpush1.msra.mxu0 0.0
        %3759 = vmatprep.subr.mxu0 0.0
        %3760 = vmatpush1.msra.mxu0 0.0
        %3761 = vmatprep.subr.mxu0 0.0
        %3762 = vmatpush1.msra.mxu0 0.0
        %3763 = vmatprep.subr.mxu0 0.0
        %3764 = vmatpush1.msra.mxu0 0.0
        %3765 = vmatprep.subr.mxu0 0.0
        %3766 = vmatpush1.msra.mxu0 0.0
        %3767 = vmatprep.subr.mxu0 0.0
        %3768 = vmatpush1.msra.mxu0 0.0
        %3769 = vmatprep.subr.mxu0 0.0
        %3770 = vmatpush1.msra.mxu0 0.0
        %3771 = vmatprep.subr.mxu0 0.0
        %3772 = vmatpush1.msra.mxu0 0.0
        %3773 = vmatprep.subr.mxu0 0.0
        %3774 = vmatpush1.msra.mxu0 0.0
        %3775 = vmatprep.subr.mxu0 0.0
        %3776 = vmatpush1.msra.mxu0 0.0
        %3777 = vmatprep.subr.mxu0 0.0
        %3778 = vmatpush1.msra.mxu0 0.0
        %3779 = vmatprep.subr.mxu0 0.0
        %3780 = vmatpush1.msra.mxu0 0.0
        %3781 = vmatprep.subr.mxu0 0.0
        %3782 = vmatpush1.msra.mxu0 0.0
        %3783 = vmatprep.mubr.f32.mxu0 0.0
        %3784 = vmatmul.mubr.f32.gmra.mrb[0].mxu0 %v3717
        %v3785 = vpop.f32.mrb[0].mxu0
        %v3786 = vadd.f32 %v3714, %v3785
        %v3787 = vpop.f32.mrb[0].mxu0
        %3788 = vdwg.mxu0
        %v3789 = vmax.f32 %v3786, 0.0
        %vm3790 = vcmask 523264
        %v3792 = vsel %vm3790, %v3789, 0
        %3794 = vmatprep.subr.mxu0 0.0
        %3795 = vmatpush1.msra.mxu0 %v3701
        %3796 = vmatprep.subr.mxu0 0.0
        %3797 = vmatpush1.msra.mxu0 %v3702
        %3798 = vmatprep.subr.mxu0 0.0
        %3799 = vmatpush1.msra.mxu0 %v3703
        %3800 = vmatprep.subr.mxu0 0.0
        %3801 = vmatpush1.msra.mxu0 %v3704
        %3802 = vmatprep.subr.mxu0 0.0
        %3803 = vmatpush1.msra.mxu0 %v3705
        %3804 = vmatprep.subr.mxu0 0.0
        %3805 = vmatpush1.msra.mxu0 %v3706
        %3806 = vmatprep.subr.mxu0 0.0
        %3807 = vmatpush1.msra.mxu0 %v3707
        %3808 = vmatprep.subr.mxu0 0.0
        %3809 = vmatpush1.msra.mxu0 %v3708
        %3810 = vmatprep.subr.mxu0 0.0
        %3811 = vmatpush1.msra.mxu0 0.0
        %3812 = vmatprep.subr.mxu0 0.0
        %3813 = vmatpush1.msra.mxu0 0.0
        %3814 = vmatprep.subr.mxu0 0.0
        %3815 = vmatpush1.msra.mxu0 0.0
        %3816 = vmatprep.subr.mxu0 0.0
        %3817 = vmatpush1.msra.mxu0 0.0
        %3818 = vmatprep.subr.mxu0 0.0
        %3819 = vmatpush1.msra.mxu0 0.0
        %3820 = vmatprep.subr.mxu0 0.0
        %3821 = vmatpush1.msra.mxu0 0.0
        %3822 = vmatprep.subr.mxu0 0.0
        %3823 = vmatpush1.msra.mxu0 0.0
        %3824 = vmatprep.subr.mxu0 0.0
        %3825 = vmatpush1.msra.mxu0 0.0
        %3826 = vmatprep.subr.mxu0 0.0
        %3827 = vmatpush1.msra.mxu0 0.0
        %3828 = vmatprep.subr.mxu0 0.0
        %3829 = vmatpush1.msra.mxu0 0.0
        %3830 = vmatprep.subr.mxu0 0.0
        %3831 = vmatpush1.msra.mxu0 0.0
        %3832 = vmatprep.subr.mxu0 0.0
        %3833 = vmatpush1.msra.mxu0 0.0
        %3834 = vmatprep.subr.mxu0 0.0
        %3835 = vmatpush1.msra.mxu0 0.0
        %3836 = vmatprep.subr.mxu0 0.0
        %3837 = vmatpush1.msra.mxu0 0.0
        %3838 = vmatprep.subr.mxu0 0.0
        %3839 = vmatpush1.msra.mxu0 0.0
        %3840 = vmatprep.subr.mxu0 0.0
        %3841 = vmatpush1.msra.mxu0 0.0
        %3842 = vmatprep.subr.mxu0 0.0
        %3843 = vmatpush1.msra.mxu0 0.0
        %3844 = vmatprep.subr.mxu0 0.0
        %3845 = vmatpush1.msra.mxu0 0.0
        %3846 = vmatprep.subr.mxu0 0.0
        %3847 = vmatpush1.msra.mxu0 0.0
        %3848 = vmatprep.subr.mxu0 0.0
        %3849 = vmatpush1.msra.mxu0 0.0
        %3850 = vmatprep.subr.mxu0 0.0
        %3851 = vmatpush1.msra.mxu0 0.0
        %3852 = vmatprep.subr.mxu0 0.0
        %3853 = vmatpush1.msra.mxu0 0.0
        %3854 = vmatprep.subr.mxu0 0.0
        %3855 = vmatpush1.msra.mxu0 0.0
        %3856 = vmatprep.subr.mxu0 0.0
        %3857 = vmatpush1.msra.mxu0 0.0
        %3858 = vmatprep.mubr.f32.mxu0 0.0
        %3859 = vmatmul.mubr.f32.gmra.mrb[0].mxu0 %v3792
        %v3860 = vpop.f32.mrb[0].mxu0
        %v3861 = vadd.f32 0.0, %v3860
        %v3862 = vpop.f32.mrb[0].mxu0
        %3863 = vdwg.mxu0
        %v3864 = vadd.f32 %v3696, %v3861
        %v3865 = vld [vmem:[#allocation25] sm:$0x1]
        %v3867 = vlaneseq
        %v3868 = vshrl.u32 %v3867, 7
        %v3869 = vsub.s32 0, %v3868
        %v3870 = vrot.slane %v3865, %v3869
        %v3872 = vadd.f32 %v3864, %v3870
        %v3873 = vld [vmem:[#allocation26] sm:$0x1]
        %v3874 = vld [vmem:[#allocation28] sm:$0x1]
        %v3875 = vsel %vm1241, %v3872, 0.0
        %3876 = vadd.xlane.f32.xlu0 %v3875
        %v3877 = vpop.xlane.xlu0 %3876
        %v3878 = vmul.f32 %v3877, %v2431
        %v3879 = vsub.f32 %v3872, %v3878
        %v3880 = vmul.f32 %v3879, %v3879
        %v3881 = vsel %vm1241, %v3880, 0.0
        %3882 = vadd.xlane.f32.xlu0 %v3881
        %v3883 = vpop.xlane.xlu0 %3882
        %v3884 = vmul.f32 %v3883, %v2431
        %v3885 = vadd.f32 %v3884, 1e-05
        %v3886 = vrsqrt.pop %v3885
        %v3887 = vmul.f32 %v3879, %v3886
        %v3889 = vlaneseq
        %v3890 = vshrl.u32 %v3889, 7
        %v3891 = vsub.s32 0, %v3890
        %v3892 = vrot.slane %v3873, %v3891
        %v3894 = vmul.f32 %v3887, %v3892
        %v3896 = vlaneseq
        %v3897 = vshrl.u32 %v3896, 7
        %v3898 = vsub.s32 0, %v3897
        %v3899 = vrot.slane %v3874, %v3898
        %v3901 = vadd.f32 %v3894, %v3899
        %s3902 = scalar_lea.vmem %s5, 32
        %v3903 = vld [vmem:[%s3902] sm:$0xff]
        %v3904 = vld [vmem:[%s3902 + $0x8] sm:$0xff]
        %v3905 = vld [vmem:[%s3902 + $0x10] sm:$0xff]
        %v3906 = vld [vmem:[%s3902 + $0x18] sm:$0xff]
        %s3907 = scalar_lea.vmem %s7, 1
        %v3908 = vld [vmem:[%s3907] sm:$0x1]
        %s3909 = scalar_lea.vmem %s9, 32
        %v3910 = vld [vmem:[%s3909] sm:$0xff]
        %v3911 = vld [vmem:[%s3909 + $0x8] sm:$0xff]
        %v3912 = vld [vmem:[%s3909 + $0x10] sm:$0xff]
        %v3913 = vld [vmem:[%s3909 + $0x18] sm:$0xff]
        %s3914 = scalar_lea.vmem %s11, 1
        %v3915 = vld [vmem:[%s3914] sm:$0x1]
        %s3916 = scalar_lea.vmem %s13, 32
        %v3917 = vld [vmem:[%s3916] sm:$0xff]
        %v3918 = vld [vmem:[%s3916 + $0x8] sm:$0xff]
        %v3919 = vld [vmem:[%s3916 + $0x10] sm:$0xff]
        %v3920 = vld [vmem:[%s3916 + $0x18] sm:$0xff]
        %s3921 = scalar_lea.vmem %s15, 1
        %v3922 = vld [vmem:[%s3921] sm:$0x1]
        %s3923 = scalar_lea.vmem [#allocation7], 32
        %v3924 = vld [vmem:[%s3923] sm:$0xff]
        %v3925 = vld [vmem:[%s3923 + $0x8] sm:$0xff]
        %v3926 = vld [vmem:[%s3923 + $0x10] sm:$0xff]
        %v3927 = vld [vmem:[%s3923 + $0x18] sm:$0xff]
        %s3928 = scalar_lea.vmem %s19, 1
        %v3929 = vld [vmem:[%s3928] sm:$0x1]
        %v3931 = vlaneseq
        %v3932 = vshrl.u32 %v3931, 7
        %v3933 = vsub.s32 0, %v3932
        %v3934 = vrot.slane %v3908, %v3933
        %v3937 = vsel %vm1241, %v3901, 0
        %3939 = vmatprep.subr.mxu0 0.0
        %3940 = vmatpush1.msra.mxu0 %v3903
        %3941 = vmatprep.subr.mxu0 0.0
        %3942 = vmatpush1.msra.mxu0 %v3904
        %3943 = vmatprep.subr.mxu0 0.0
        %3944 = vmatpush1.msra.mxu0 %v3905
        %3945 = vmatprep.subr.mxu0 0.0
        %3946 = vmatpush1.msra.mxu0 %v3906
        %3947 = vmatprep.subr.mxu0 0.0
        %3948 = vmatpush1.msra.mxu0 0.0
        %3949 = vmatprep.subr.mxu0 0.0
        %3950 = vmatpush1.msra.mxu0 0.0
        %3951 = vmatprep.subr.mxu0 0.0
        %3952 = vmatpush1.msra.mxu0 0.0
        %3953 = vmatprep.subr.mxu0 0.0
        %3954 = vmatpush1.msra.mxu0 0.0
        %3955 = vmatprep.subr.mxu0 0.0
        %3956 = vmatpush1.msra.mxu0 0.0
        %3957 = vmatprep.subr.mxu0 0.0
        %3958 = vmatpush1.msra.mxu0 0.0
        %3959 = vmatprep.subr.mxu0 0.0
        %3960 = vmatpush1.msra.mxu0 0.0
        %3961 = vmatprep.subr.mxu0 0.0
        %3962 = vmatpush1.msra.mxu0 0.0
        %3963 = vmatprep.subr.mxu0 0.0
        %3964 = vmatpush1.msra.mxu0 0.0
        %3965 = vmatprep.subr.mxu0 0.0
        %3966 = vmatpush1.msra.mxu0 0.0
        %3967 = vmatprep.subr.mxu0 0.0
        %3968 = vmatpush1.msra.mxu0 0.0
        %3969 = vmatprep.subr.mxu0 0.0
        %3970 = vmatpush1.msra.mxu0 0.0
        %3971 = vmatprep.subr.mxu0 0.0
        %3972 = vmatpush1.msra.mxu0 0.0
        %3973 = vmatprep.subr.mxu0 0.0
        %3974 = vmatpush1.msra.mxu0 0.0
        %3975 = vmatprep.subr.mxu0 0.0
        %3976 = vmatpush1.msra.mxu0 0.0
        %3977 = vmatprep.subr.mxu0 0.0
        %3978 = vmatpush1.msra.mxu0 0.0
        %3979 = vmatprep.subr.mxu0 0.0
        %3980 = vmatpush1.msra.mxu0 0.0
        %3981 = vmatprep.subr.mxu0 0.0
        %3982 = vmatpush1.msra.mxu0 0.0
        %3983 = vmatprep.subr.mxu0 0.0
        %3984 = vmatpush1.msra.mxu0 0.0
        %3985 = vmatprep.subr.mxu0 0.0
        %3986 = vmatpush1.msra.mxu0 0.0
        %3987 = vmatprep.subr.mxu0 0.0
        %3988 = vmatpush1.msra.mxu0 0.0
        %3989 = vmatprep.subr.mxu0 0.0
        %3990 = vmatpush1.msra.mxu0 0.0
        %3991 = vmatprep.subr.mxu0 0.0
        %3992 = vmatpush1.msra.mxu0 0.0
        %3993 = vmatprep.subr.mxu0 0.0
        %3994 = vmatpush1.msra.mxu0 0.0
        %3995 = vmatprep.subr.mxu0 0.0
        %3996 = vmatpush1.msra.mxu0 0.0
        %3997 = vmatprep.subr.mxu0 0.0
        %3998 = vmatpush1.msra.mxu0 0.0
        %3999 = vmatprep.subr.mxu0 0.0
        %4000 = vmatpush1.msra.mxu0 0.0
        %4001 = vmatprep.subr.mxu0 0.0
        %4002 = vmatpush1.msra.mxu0 0.0
        %4003 = vmatprep.mubr.f32.mxu0 0.0
        %4004 = vmatmul.mubr.f32.gmra.mrb[0].mxu0 %v3937
        %v4005 = vpop.f32.mrb[0].mxu0
        %v4006 = vadd.f32 %v3934, %v4005
        %v4007 = vpop.f32.mrb[0].mxu0
        %4008 = vdwg.mxu0
        %v4010 = vlaneseq
        %v4011 = vshrl.u32 %v4010, 7
        %v4012 = vsub.s32 0, %v4011
        %v4013 = vrot.slane %v3915, %v4012
        %4015 = vmatprep.subr.mxu0 0.0
        %4016 = vmatpush1.msra.mxu0 %v3910
        %4017 = vmatprep.subr.mxu0 0.0
        %4018 = vmatpush1.msra.mxu0 %v3911
        %4019 = vmatprep.subr.mxu0 0.0
        %4020 = vmatpush1.msra.mxu0 %v3912
        %4021 = vmatprep.subr.mxu0 0.0
        %4022 = vmatpush1.msra.mxu0 %v3913
        %4023 = vmatprep.subr.mxu0 0.0
        %4024 = vmatpush1.msra.mxu0 0.0
        %4025 = vmatprep.subr.mxu0 0.0
        %4026 = vmatpush1.msra.mxu0 0.0
        %4027 = vmatprep.subr.mxu0 0.0
        %4028 = vmatpush1.msra.mxu0 0.0
        %4029 = vmatprep.subr.mxu0 0.0
        %4030 = vmatpush1.msra.mxu0 0.0
        %4031 = vmatprep.subr.mxu0 0.0
        %4032 = vmatpush1.msra.mxu0 0.0
        %4033 = vmatprep.subr.mxu0 0.0
        %4034 = vmatpush1.msra.mxu0 0.0
        %4035 = vmatprep.subr.mxu0 0.0
        %4036 = vmatpush1.msra.mxu0 0.0
        %4037 = vmatprep.subr.mxu0 0.0
        %4038 = vmatpush1.msra.mxu0 0.0
        %4039 = vmatprep.subr.mxu0 0.0
        %4040 = vmatpush1.msra.mxu0 0.0
        %4041 = vmatprep.subr.mxu0 0.0
        %4042 = vmatpush1.msra.mxu0 0.0
        %4043 = vmatprep.subr.mxu0 0.0
        %4044 = vmatpush1.msra.mxu0 0.0
        %4045 = vmatprep.subr.mxu0 0.0
        %4046 = vmatpush1.msra.mxu0 0.0
        %4047 = vmatprep.subr.mxu0 0.0
        %4048 = vmatpush1.msra.mxu0 0.0
        %4049 = vmatprep.subr.mxu0 0.0
        %4050 = vmatpush1.msra.mxu0 0.0
        %4051 = vmatprep.subr.mxu0 0.0
        %4052 = vmatpush1.msra.mxu0 0.0
        %4053 = vmatprep.subr.mxu0 0.0
        %4054 = vmatpush1.msra.mxu0 0.0
        %4055 = vmatprep.subr.mxu0 0.0
        %4056 = vmatpush1.msra.mxu0 0.0
        %4057 = vmatprep.subr.mxu0 0.0
        %4058 = vmatpush1.msra.mxu0 0.0
        %4059 = vmatprep.subr.mxu0 0.0
        %4060 = vmatpush1.msra.mxu0 0.0
        %4061 = vmatprep.subr.mxu0 0.0
        %4062 = vmatpush1.msra.mxu0 0.0
        %4063 = vmatprep.subr.mxu0 0.0
        %4064 = vmatpush1.msra.mxu0 0.0
        %4065 = vmatprep.subr.mxu0 0.0
        %4066 = vmatpush1.msra.mxu0 0.0
        %4067 = vmatprep.subr.mxu0 0.0
        %4068 = vmatpush1.msra.mxu0 0.0
        %4069 = vmatprep.subr.mxu0 0.0
        %4070 = vmatpush1.msra.mxu0 0.0
        %4071 = vmatprep.subr.mxu0 0.0
        %4072 = vmatpush1.msra.mxu0 0.0
        %4073 = vmatprep.subr.mxu0 0.0
        %4074 = vmatpush1.msra.mxu0 0.0
        %4075 = vmatprep.subr.mxu0 0.0
        %4076 = vmatpush1.msra.mxu0 0.0
        %4077 = vmatprep.subr.mxu0 0.0
        %4078 = vmatpush1.msra.mxu0 0.0
        %4079 = vmatprep.mubr.f32.mxu0 0.0
        %4080 = vmatmul.mubr.f32.gmra.mrb[0].mxu0 %v3937
        %v4081 = vpop.f32.mrb[0].mxu0
        %v4082 = vadd.f32 %v4013, %v4081
        %v4083 = vpop.f32.mrb[0].mxu0
        %4084 = vdwg.mxu0
        %v4086 = vlaneseq
        %v4087 = vshrl.u32 %v4086, 7
        %v4088 = vsub.s32 0, %v4087
        %v4089 = vrot.slane %v3922, %v4088
        %4091 = vmatprep.subr.mxu0 0.0
        %4092 = vmatpush1.msra.mxu0 %v3917
        %4093 = vmatprep.subr.mxu0 0.0
        %4094 = vmatpush1.msra.mxu0 %v3918
        %4095 = vmatprep.subr.mxu0 0.0
        %4096 = vmatpush1.msra.mxu0 %v3919
        %4097 = vmatprep.subr.mxu0 0.0
        %4098 = vmatpush1.msra.mxu0 %v3920
        %4099 = vmatprep.subr.mxu0 0.0
        %4100 = vmatpush1.msra.mxu0 0.0
        %4101 = vmatprep.subr.mxu0 0.0
        %4102 = vmatpush1.msra.mxu0 0.0
        %4103 = vmatprep.subr.mxu0 0.0
        %4104 = vmatpush1.msra.mxu0 0.0
        %4105 = vmatprep.subr.mxu0 0.0
        %4106 = vmatpush1.msra.mxu0 0.0
        %4107 = vmatprep.subr.mxu0 0.0
        %4108 = vmatpush1.msra.mxu0 0.0
        %4109 = vmatprep.subr.mxu0 0.0
        %4110 = vmatpush1.msra.mxu0 0.0
        %4111 = vmatprep.subr.mxu0 0.0
        %4112 = vmatpush1.msra.mxu0 0.0
        %4113 = vmatprep.subr.mxu0 0.0
        %4114 = vmatpush1.msra.mxu0 0.0
        %4115 = vmatprep.subr.mxu0 0.0
        %4116 = vmatpush1.msra.mxu0 0.0
        %4117 = vmatprep.subr.mxu0 0.0
        %4118 = vmatpush1.msra.mxu0 0.0
        %4119 = vmatprep.subr.mxu0 0.0
        %4120 = vmatpush1.msra.mxu0 0.0
        %4121 = vmatprep.subr.mxu0 0.0
        %4122 = vmatpush1.msra.mxu0 0.0
        %4123 = vmatprep.subr.mxu0 0.0
        %4124 = vmatpush1.msra.mxu0 0.0
        %4125 = vmatprep.subr.mxu0 0.0
        %4126 = vmatpush1.msra.mxu0 0.0
        %4127 = vmatprep.subr.mxu0 0.0
        %4128 = vmatpush1.msra.mxu0 0.0
        %4129 = vmatprep.subr.mxu0 0.0
        %4130 = vmatpush1.msra.mxu0 0.0
        %4131 = vmatprep.subr.mxu0 0.0
        %4132 = vmatpush1.msra.mxu0 0.0
        %4133 = vmatprep.subr.mxu0 0.0
        %4134 = vmatpush1.msra.mxu0 0.0
        %4135 = vmatprep.subr.mxu0 0.0
        %4136 = vmatpush1.msra.mxu0 0.0
        %4137 = vmatprep.subr.mxu0 0.0
        %4138 = vmatpush1.msra.mxu0 0.0
        %4139 = vmatprep.subr.mxu0 0.0
        %4140 = vmatpush1.msra.mxu0 0.0
        %4141 = vmatprep.subr.mxu0 0.0
        %4142 = vmatpush1.msra.mxu0 0.0
        %4143 = vmatprep.subr.mxu0 0.0
        %4144 = vmatpush1.msra.mxu0 0.0
        %4145 = vmatprep.subr.mxu0 0.0
        %4146 = vmatpush1.msra.mxu0 0.0
        %4147 = vmatprep.subr.mxu0 0.0
        %4148 = vmatpush1.msra.mxu0 0.0
        %4149 = vmatprep.subr.mxu0 0.0
        %4150 = vmatpush1.msra.mxu0 0.0
        %4151 = vmatprep.subr.mxu0 0.0
        %4152 = vmatpush1.msra.mxu0 0.0
        %4153 = vmatprep.subr.mxu0 0.0
        %4154 = vmatpush1.msra.mxu0 0.0
        %4155 = vmatprep.mubr.f32.mxu0 0.0
        %4156 = vmatmul.mubr.f32.gmra.mrb[0].mxu0 %v3937
        %v4157 = vpop.f32.mrb[0].mxu0
        %v4158 = vadd.f32 %v4089, %v4157
        %v4159 = vpop.f32.mrb[0].mxu0
        %4160 = vdwg.mxu0
        %v4162 = vsel %vm1467, %v4006, 0
        %v4165 = vsel %vm1467, %v4082, 0
        %4167 = vmatprep.subr.mxu0 0.0
        %4168 = vmatpush1.xpose.msra.mxu0 %v4165
        %4169 = vmatprep.subr.mxu0 0.0
        %4170 = vmatpush1.xpose.msra.mxu0 0.0
        %4171 = vmatprep.subr.mxu0 0.0
        %4172 = vmatpush1.xpose.msra.mxu0 0.0
        %4173 = vmatprep.subr.mxu0 0.0
        %4174 = vmatpush1.xpose.msra.mxu0 0.0
        %4175 = vmatprep.subr.mxu0 0.0
        %4176 = vmatpush1.xpose.msra.mxu0 0.0
        %4177 = vmatprep.subr.mxu0 0.0
        %4178 = vmatpush1.xpose.msra.mxu0 0.0
        %4179 = vmatprep.subr.mxu0 0.0
        %4180 = vmatpush1.xpose.msra.mxu0 0.0
        %4181 = vmatprep.subr.mxu0 0.0
        %4182 = vmatpush1.xpose.msra.mxu0 0.0
        %4183 = vmatprep.subr.mxu0 0.0
        %4184 = vmatpush1.xpose.msra.mxu0 0.0
        %4185 = vmatprep.subr.mxu0 0.0
        %4186 = vmatpush1.xpose.msra.mxu0 0.0
        %4187 = vmatprep.subr.mxu0 0.0
        %4188 = vmatpush1.xpose.msra.mxu0 0.0
        %4189 = vmatprep.subr.mxu0 0.0
        %4190 = vmatpush1.xpose.msra.mxu0 0.0
        %4191 = vmatprep.subr.mxu0 0.0
        %4192 = vmatpush1.xpose.msra.mxu0 0.0
        %4193 = vmatprep.subr.mxu0 0.0
        %4194 = vmatpush1.xpose.msra.mxu0 0.0
        %4195 = vmatprep.subr.mxu0 0.0
        %4196 = vmatpush1.xpose.msra.mxu0 0.0
        %4197 = vmatprep.subr.mxu0 0.0
        %4198 = vmatpush1.xpose.msra.mxu0 0.0
        %4199 = vmatprep.subr.mxu0 0.0
        %4200 = vmatpush1.xpose.msra.mxu0 0.0
        %4201 = vmatprep.subr.mxu0 0.0
        %4202 = vmatpush1.xpose.msra.mxu0 0.0
        %4203 = vmatprep.subr.mxu0 0.0
        %4204 = vmatpush1.xpose.msra.mxu0 0.0
        %4205 = vmatprep.subr.mxu0 0.0
        %4206 = vmatpush1.xpose.msra.mxu0 0.0
        %4207 = vmatprep.subr.mxu0 0.0
        %4208 = vmatpush1.xpose.msra.mxu0 0.0
        %4209 = vmatprep.subr.mxu0 0.0
        %4210 = vmatpush1.xpose.msra.mxu0 0.0
        %4211 = vmatprep.subr.mxu0 0.0
        %4212 = vmatpush1.xpose.msra.mxu0 0.0
        %4213 = vmatprep.subr.mxu0 0.0
        %4214 = vmatpush1.xpose.msra.mxu0 0.0
        %4215 = vmatprep.subr.mxu0 0.0
        %4216 = vmatpush1.xpose.msra.mxu0 0.0
        %4217 = vmatprep.subr.mxu0 0.0
        %4218 = vmatpush1.xpose.msra.mxu0 0.0
        %4219 = vmatprep.subr.mxu0 0.0
        %4220 = vmatpush1.xpose.msra.mxu0 0.0
        %4221 = vmatprep.subr.mxu0 0.0
        %4222 = vmatpush1.xpose.msra.mxu0 0.0
        %4223 = vmatprep.subr.mxu0 0.0
        %4224 = vmatpush1.xpose.msra.mxu0 0.0
        %4225 = vmatprep.subr.mxu0 0.0
        %4226 = vmatpush1.xpose.msra.mxu0 0.0
        %4227 = vmatprep.subr.mxu0 0.0
        %4228 = vmatpush1.xpose.msra.mxu0 0.0
        %4229 = vmatprep.subr.mxu0 0.0
        %4230 = vmatpush1.xpose.msra.mxu0 0.0
        %4231 = vmatprep.mubr.f32.mxu0 0.0
        %4232 = vmatmul.mubr.f32.gmra.mrb[0].mxu0 %v4162
        %v4233 = vpop.f32.mrb[0].mxu0
        %v4234 = vadd.f32 0.0, %v4233
        %v4235 = vpop.f32.mrb[0].mxu0
        %4236 = vdwg.mxu0
        %v4237 = vsel %vm1467, %v4234, -inf
        %4238 = vmax.xlane.f32.xlu0 %v4237
        %v4239 = vpop.xlane.xlu0 %4238
        %v4240 = vsub.f32 %v4234, %v4239
        %v4241 = vmul.f32 %v4240, 1.442695
        %v4242 = vpow.pop %v4241
        %v4243 = vsel %vm1467, %v4242, 0.0
        %4244 = vadd.xlane.f32.xlu0 %v4243
        %v4245 = vpop.xlane.xlu0 %4244
        %v4246 = vrcp.pop %v4245
        %v4247 = vmul.f32 %v4242, %v4246
        %v4249 = vsel %vm1467, %v4247, 0
        %4251 = vmatprep.subr.mxu0 0.0
        %4252 = vmatpush1.msra.mxu0 %v4158
        %4253 = vmatprep.subr.mxu0 0.0
        %4254 = vmatpush1.msra.mxu0 0.0
        %4255 = vmatprep.subr.mxu0 0.0
        %4256 = vmatpush1.msra.mxu0 0.0
        %4257 = vmatprep.subr.mxu0 0.0
        %4258 = vmatpush1.msra.mxu0 0.0
        %4259 = vmatprep.subr.mxu0 0.0
        %4260 = vmatpush1.msra.mxu0 0.0
        %4261 = vmatprep.subr.mxu0 0.0
        %4262 = vmatpush1.msra.mxu0 0.0
        %4263 = vmatprep.subr.mxu0 0.0
        %4264 = vmatpush1.msra.mxu0 0.0
        %4265 = vmatprep.subr.mxu0 0.0
        %4266 = vmatpush1.msra.mxu0 0.0
        %4267 = vmatprep.subr.mxu0 0.0
        %4268 = vmatpush1.msra.mxu0 0.0
        %4269 = vmatprep.subr.mxu0 0.0
        %4270 = vmatpush1.msra.mxu0 0.0
        %4271 = vmatprep.subr.mxu0 0.0
        %4272 = vmatpush1.msra.mxu0 0.0
        %4273 = vmatprep.subr.mxu0 0.0
        %4274 = vmatpush1.msra.mxu0 0.0
        %4275 = vmatprep.subr.mxu0 0.0
        %4276 = vmatpush1.msra.mxu0 0.0
        %4277 = vmatprep.subr.mxu0 0.0
        %4278 = vmatpush1.msra.mxu0 0.0
        %4279 = vmatprep.subr.mxu0 0.0
        %4280 = vmatpush1.msra.mxu0 0.0
        %4281 = vmatprep.subr.mxu0 0.0
        %4282 = vmatpush1.msra.mxu0 0.0
        %4283 = vmatprep.subr.mxu0 0.0
        %4284 = vmatpush1.msra.mxu0 0.0
        %4285 = vmatprep.subr.mxu0 0.0
        %4286 = vmatpush1.msra.mxu0 0.0
        %4287 = vmatprep.subr.mxu0 0.0
        %4288 = vmatpush1.msra.mxu0 0.0
        %4289 = vmatprep.subr.mxu0 0.0
        %4290 = vmatpush1.msra.mxu0 0.0
        %4291 = vmatprep.subr.mxu0 0.0
        %4292 = vmatpush1.msra.mxu0 0.0
        %4293 = vmatprep.subr.mxu0 0.0
        %4294 = vmatpush1.msra.mxu0 0.0
        %4295 = vmatprep.subr.mxu0 0.0
        %4296 = vmatpush1.msra.mxu0 0.0
        %4297 = vmatprep.subr.mxu0 0.0
        %4298 = vmatpush1.msra.mxu0 0.0
        %4299 = vmatprep.subr.mxu0 0.0
        %4300 = vmatpush1.msra.mxu0 0.0
        %4301 = vmatprep.subr.mxu0 0.0
        %4302 = vmatpush1.msra.mxu0 0.0
        %4303 = vmatprep.subr.mxu0 0.0
        %4304 = vmatpush1.msra.mxu0 0.0
        %4305 = vmatprep.subr.mxu0 0.0
        %4306 = vmatpush1.msra.mxu0 0.0
        %4307 = vmatprep.subr.mxu0 0.0
        %4308 = vmatpush1.msra.mxu0 0.0
        %4309 = vmatprep.subr.mxu0 0.0
        %4310 = vmatpush1.msra.mxu0 0.0
        %4311 = vmatprep.subr.mxu0 0.0
        %4312 = vmatpush1.msra.mxu0 0.0
        %4313 = vmatprep.subr.mxu0 0.0
        %4314 = vmatpush1.msra.mxu0 0.0
        %4315 = vmatprep.mubr.f32.mxu0 0.0
        %4316 = vmatmul.mubr.f32.gmra.mrb[0].mxu0 %v4249
        %v4317 = vpop.f32.mrb[0].mxu0
        %v4318 = vadd.f32 0.0, %v4317
        %v4319 = vpop.f32.mrb[0].mxu0
        %4320 = vdwg.mxu0
        %4321 = vrot.lane.b32.xlu0 %v4006, 120
        %v4322 = vpop.permute.xlu0 %4321
        %4323 = vrot.lane.b32.xlu0 %v4082, 120
        %v4324 = vpop.permute.xlu0 %4323
        %v4325 = vsel %vm1467, %v4322, 0
        %v4327 = vsel %vm1467, %v4324, 0
        %4329 = vmatprep.subr.mxu0 0.0
        %4330 = vmatpush1.xpose.msra.mxu0 %v4327
        %4331 = vmatprep.subr.mxu0 0.0
        %4332 = vmatpush1.xpose.msra.mxu0 0.0
        %4333 = vmatprep.subr.mxu0 0.0
        %4334 = vmatpush1.xpose.msra.mxu0 0.0
        %4335 = vmatprep.subr.mxu0 0.0
        %4336 = vmatpush1.xpose.msra.mxu0 0.0
        %4337 = vmatprep.subr.mxu0 0.0
        %4338 = vmatpush1.xpose.msra.mxu0 0.0
        %4339 = vmatprep.subr.mxu0 0.0
        %4340 = vmatpush1.xpose.msra.mxu0 0.0
        %4341 = vmatprep.subr.mxu0 0.0
        %4342 = vmatpush1.xpose.msra.mxu0 0.0
        %4343 = vmatprep.subr.mxu0 0.0
        %4344 = vmatpush1.xpose.msra.mxu0 0.0
        %4345 = vmatprep.subr.mxu0 0.0
        %4346 = vmatpush1.xpose.msra.mxu0 0.0
        %4347 = vmatprep.subr.mxu0 0.0
        %4348 = vmatpush1.xpose.msra.mxu0 0.0
        %4349 = vmatprep.subr.mxu0 0.0
        %4350 = vmatpush1.xpose.msra.mxu0 0.0
        %4351 = vmatprep.subr.mxu0 0.0
        %4352 = vmatpush1.xpose.msra.mxu0 0.0
        %4353 = vmatprep.subr.mxu0 0.0
        %4354 = vmatpush1.xpose.msra.mxu0 0.0
        %4355 = vmatprep.subr.mxu0 0.0
        %4356 = vmatpush1.xpose.msra.mxu0 0.0
        %4357 = vmatprep.subr.mxu0 0.0
        %4358 = vmatpush1.xpose.msra.mxu0 0.0
        %4359 = vmatprep.subr.mxu0 0.0
        %4360 = vmatpush1.xpose.msra.mxu0 0.0
        %4361 = vmatprep.subr.mxu0 0.0
        %4362 = vmatpush1.xpose.msra.mxu0 0.0
        %4363 = vmatprep.subr.mxu0 0.0
        %4364 = vmatpush1.xpose.msra.mxu0 0.0
        %4365 = vmatprep.subr.mxu0 0.0
        %4366 = vmatpush1.xpose.msra.mxu0 0.0
        %4367 = vmatprep.subr.mxu0 0.0
        %4368 = vmatpush1.xpose.msra.mxu0 0.0
        %4369 = vmatprep.subr.mxu0 0.0
        %4370 = vmatpush1.xpose.msra.mxu0 0.0
        %4371 = vmatprep.subr.mxu0 0.0
        %4372 = vmatpush1.xpose.msra.mxu0 0.0
        %4373 = vmatprep.subr.mxu0 0.0
        %4374 = vmatpush1.xpose.msra.mxu0 0.0
        %4375 = vmatprep.subr.mxu0 0.0
        %4376 = vmatpush1.xpose.msra.mxu0 0.0
        %4377 = vmatprep.subr.mxu0 0.0
        %4378 = vmatpush1.xpose.msra.mxu0 0.0
        %4379 = vmatprep.subr.mxu0 0.0
        %4380 = vmatpush1.xpose.msra.mxu0 0.0
        %4381 = vmatprep.subr.mxu0 0.0
        %4382 = vmatpush1.xpose.msra.mxu0 0.0
        %4383 = vmatprep.subr.mxu0 0.0
        %4384 = vmatpush1.xpose.msra.mxu0 0.0
        %4385 = vmatprep.subr.mxu0 0.0
        %4386 = vmatpush1.xpose.msra.mxu0 0.0
        %4387 = vmatprep.subr.mxu0 0.0
        %4388 = vmatpush1.xpose.msra.mxu0 0.0
        %4389 = vmatprep.subr.mxu0 0.0
        %4390 = vmatpush1.xpose.msra.mxu0 0.0
        %4391 = vmatprep.subr.mxu0 0.0
        %4392 = vmatpush1.xpose.msra.mxu0 0.0
        %4393 = vmatprep.mubr.f32.mxu0 0.0
        %4394 = vmatmul.mubr.f32.gmra.mrb[0].mxu0 %v4325
        %v4395 = vpop.f32.mrb[0].mxu0
        %v4396 = vadd.f32 0.0, %v4395
        %v4397 = vpop.f32.mrb[0].mxu0
        %4398 = vdwg.mxu0
        %v4399 = vsel %vm1467, %v4396, -inf
        %4400 = vmax.xlane.f32.xlu0 %v4399
        %v4401 = vpop.xlane.xlu0 %4400
        %v4402 = vsub.f32 %v4396, %v4401
        %v4403 = vmul.f32 %v4402, 1.442695
        %v4404 = vpow.pop %v4403
        %v4405 = vsel %vm1467, %v4404, 0.0
        %4406 = vadd.xlane.f32.xlu0 %v4405
        %v4407 = vpop.xlane.xlu0 %4406
        %v4408 = vrcp.pop %v4407
        %v4409 = vmul.f32 %v4404, %v4408
        %4411 = vrot.lane.b32.xlu0 %v4158, 120
        %v4412 = vpop.permute.xlu0 %4411
        %v4415 = vsel %vm1467, %v4409, 0
        %4417 = vmatprep.subr.mxu0 0.0
        %4418 = vmatpush1.msra.mxu0 %v4412
        %4419 = vmatprep.subr.mxu0 0.0
        %4420 = vmatpush1.msra.mxu0 0.0
        %4421 = vmatprep.subr.mxu0 0.0
        %4422 = vmatpush1.msra.mxu0 0.0
        %4423 = vmatprep.subr.mxu0 0.0
        %4424 = vmatpush1.msra.mxu0 0.0
        %4425 = vmatprep.subr.mxu0 0.0
        %4426 = vmatpush1.msra.mxu0 0.0
        %4427 = vmatprep.subr.mxu0 0.0
        %4428 = vmatpush1.msra.mxu0 0.0
        %4429 = vmatprep.subr.mxu0 0.0
        %4430 = vmatpush1.msra.mxu0 0.0
        %4431 = vmatprep.subr.mxu0 0.0
        %4432 = vmatpush1.msra.mxu0 0.0
        %4433 = vmatprep.subr.mxu0 0.0
        %4434 = vmatpush1.msra.mxu0 0.0
        %4435 = vmatprep.subr.mxu0 0.0
        %4436 = vmatpush1.msra.mxu0 0.0
        %4437 = vmatprep.subr.mxu0 0.0
        %4438 = vmatpush1.msra.mxu0 0.0
        %4439 = vmatprep.subr.mxu0 0.0
        %4440 = vmatpush1.msra.mxu0 0.0
        %4441 = vmatprep.subr.mxu0 0.0
        %4442 = vmatpush1.msra.mxu0 0.0
        %4443 = vmatprep.subr.mxu0 0.0
        %4444 = vmatpush1.msra.mxu0 0.0
        %4445 = vmatprep.subr.mxu0 0.0
        %4446 = vmatpush1.msra.mxu0 0.0
        %4447 = vmatprep.subr.mxu0 0.0
        %4448 = vmatpush1.msra.mxu0 0.0
        %4449 = vmatprep.subr.mxu0 0.0
        %4450 = vmatpush1.msra.mxu0 0.0
        %4451 = vmatprep.subr.mxu0 0.0
        %4452 = vmatpush1.msra.mxu0 0.0
        %4453 = vmatprep.subr.mxu0 0.0
        %4454 = vmatpush1.msra.mxu0 0.0
        %4455 = vmatprep.subr.mxu0 0.0
        %4456 = vmatpush1.msra.mxu0 0.0
        %4457 = vmatprep.subr.mxu0 0.0
        %4458 = vmatpush1.msra.mxu0 0.0
        %4459 = vmatprep.subr.mxu0 0.0
        %4460 = vmatpush1.msra.mxu0 0.0
        %4461 = vmatprep.subr.mxu0 0.0
        %4462 = vmatpush1.msra.mxu0 0.0
        %4463 = vmatprep.subr.mxu0 0.0
        %4464 = vmatpush1.msra.mxu0 0.0
        %4465 = vmatprep.subr.mxu0 0.0
        %4466 = vmatpush1.msra.mxu0 0.0
        %4467 = vmatprep.subr.mxu0 0.0
        %4468 = vmatpush1.msra.mxu0 0.0
        %4469 = vmatprep.subr.mxu0 0.0
        %4470 = vmatpush1.msra.mxu0 0.0
        %4471 = vmatprep.subr.mxu0 0.0
        %4472 = vmatpush1.msra.mxu0 0.0
        %4473 = vmatprep.subr.mxu0 0.0
        %4474 = vmatpush1.msra.mxu0 0.0
        %4475 = vmatprep.subr.mxu0 0.0
        %4476 = vmatpush1.msra.mxu0 0.0
        %4477 = vmatprep.subr.mxu0 0.0
        %4478 = vmatpush1.msra.mxu0 0.0
        %4479 = vmatprep.subr.mxu0 0.0
        %4480 = vmatpush1.msra.mxu0 0.0
        %4481 = vmatprep.mubr.f32.mxu0 0.0
        %4482 = vmatmul.mubr.f32.gmra.mrb[0].mxu0 %v4415
        %v4483 = vpop.f32.mrb[0].mxu0
        %v4484 = vadd.f32 0.0, %v4483
        %v4485 = vpop.f32.mrb[0].mxu0
        %4486 = vdwg.mxu0
        %v4488 = vsel %vm1467, %v4484, 0
        %4490 = vmatprep.subr.mxu0 0.0
        %4491 = vmatpush1.msra.mxu0 %v3925
        %4492 = vmatprep.subr.mxu0 0.0
        %4493 = vmatpush1.msra.mxu0 0.0
        %4494 = vmatprep.subr.mxu0 0.0
        %4495 = vmatpush1.msra.mxu0 0.0
        %4496 = vmatprep.subr.mxu0 0.0
        %4497 = vmatpush1.msra.mxu0 0.0
        %4498 = vmatprep.subr.mxu0 0.0
        %4499 = vmatpush1.msra.mxu0 0.0
        %4500 = vmatprep.subr.mxu0 0.0
        %4501 = vmatpush1.msra.mxu0 0.0
        %4502 = vmatprep.subr.mxu0 0.0
        %4503 = vmatpush1.msra.mxu0 0.0
        %4504 = vmatprep.subr.mxu0 0.0
        %4505 = vmatpush1.msra.mxu0 0.0
        %4506 = vmatprep.subr.mxu0 0.0
        %4507 = vmatpush1.msra.mxu0 0.0
        %4508 = vmatprep.subr.mxu0 0.0
        %4509 = vmatpush1.msra.mxu0 0.0
        %4510 = vmatprep.subr.mxu0 0.0
        %4511 = vmatpush1.msra.mxu0 0.0
        %4512 = vmatprep.subr.mxu0 0.0
        %4513 = vmatpush1.msra.mxu0 0.0
        %4514 = vmatprep.subr.mxu0 0.0
        %4515 = vmatpush1.msra.mxu0 0.0
        %4516 = vmatprep.subr.mxu0 0.0
        %4517 = vmatpush1.msra.mxu0 0.0
        %4518 = vmatprep.subr.mxu0 0.0
        %4519 = vmatpush1.msra.mxu0 0.0
        %4520 = vmatprep.subr.mxu0 0.0
        %4521 = vmatpush1.msra.mxu0 0.0
        %4522 = vmatprep.subr.mxu0 0.0
        %4523 = vmatpush1.msra.mxu0 0.0
        %4524 = vmatprep.subr.mxu0 0.0
        %4525 = vmatpush1.msra.mxu0 0.0
        %4526 = vmatprep.subr.mxu0 0.0
        %4527 = vmatpush1.msra.mxu0 0.0
        %4528 = vmatprep.subr.mxu0 0.0
        %4529 = vmatpush1.msra.mxu0 0.0
        %4530 = vmatprep.subr.mxu0 0.0
        %4531 = vmatpush1.msra.mxu0 0.0
        %4532 = vmatprep.subr.mxu0 0.0
        %4533 = vmatpush1.msra.mxu0 0.0
        %4534 = vmatprep.subr.mxu0 0.0
        %4535 = vmatpush1.msra.mxu0 0.0
        %4536 = vmatprep.subr.mxu0 0.0
        %4537 = vmatpush1.msra.mxu0 0.0
        %4538 = vmatprep.subr.mxu0 0.0
        %4539 = vmatpush1.msra.mxu0 0.0
        %4540 = vmatprep.subr.mxu0 0.0
        %4541 = vmatpush1.msra.mxu0 0.0
        %4542 = vmatprep.subr.mxu0 0.0
        %4543 = vmatpush1.msra.mxu0 0.0
        %4544 = vmatprep.subr.mxu0 0.0
        %4545 = vmatpush1.msra.mxu0 0.0
        %4546 = vmatprep.subr.mxu0 0.0
        %4547 = vmatpush1.msra.mxu0 0.0
        %4548 = vmatprep.subr.mxu0 0.0
        %4549 = vmatpush1.msra.mxu0 0.0
        %4550 = vmatprep.subr.mxu0 0.0
        %4551 = vmatpush1.msra.mxu0 0.0
        %4552 = vmatprep.subr.mxu0 0.0
        %4553 = vmatpush1.msra.mxu0 0.0
        %4554 = vmatprep.mubr.f32.mxu0 0.0
        %4555 = vmatmul.mubr.f32.gmra.mrb[0].mxu0 %v4488
        %v4556 = vpop.f32.mrb[0].mxu0
        %v4557 = vadd.f32 0.0, %v4556
        %v4558 = vpop.f32.mrb[0].mxu0
        %4559 = vdwg.mxu0
        %v4561 = vsel %vm1467, %v4318, 0
        %4563 = vmatprep.subr.mxu0 0.0
        %4564 = vmatpush1.msra.mxu0 %v3924
        %4565 = vmatprep.subr.mxu0 0.0
        %4566 = vmatpush1.msra.mxu0 0.0
        %4567 = vmatprep.subr.mxu0 0.0
        %4568 = vmatpush1.msra.mxu0 0.0
        %4569 = vmatprep.subr.mxu0 0.0
        %4570 = vmatpush1.msra.mxu0 0.0
        %4571 = vmatprep.subr.mxu0 0.0
        %4572 = vmatpush1.msra.mxu0 0.0
        %4573 = vmatprep.subr.mxu0 0.0
        %4574 = vmatpush1.msra.mxu0 0.0
        %4575 = vmatprep.subr.mxu0 0.0
        %4576 = vmatpush1.msra.mxu0 0.0
        %4577 = vmatprep.subr.mxu0 0.0
        %4578 = vmatpush1.msra.mxu0 0.0
        %4579 = vmatprep.subr.mxu0 0.0
        %4580 = vmatpush1.msra.mxu0 0.0
        %4581 = vmatprep.subr.mxu0 0.0
        %4582 = vmatpush1.msra.mxu0 0.0
        %4583 = vmatprep.subr.mxu0 0.0
        %4584 = vmatpush1.msra.mxu0 0.0
        %4585 = vmatprep.subr.mxu0 0.0
        %4586 = vmatpush1.msra.mxu0 0.0
        %4587 = vmatprep.subr.mxu0 0.0
        %4588 = vmatpush1.msra.mxu0 0.0
        %4589 = vmatprep.subr.mxu0 0.0
        %4590 = vmatpush1.msra.mxu0 0.0
        %4591 = vmatprep.subr.mxu0 0.0
        %4592 = vmatpush1.msra.mxu0 0.0
        %4593 = vmatprep.subr.mxu0 0.0
        %4594 = vmatpush1.msra.mxu0 0.0
        %4595 = vmatprep.subr.mxu0 0.0
        %4596 = vmatpush1.msra.mxu0 0.0
        %4597 = vmatprep.subr.mxu0 0.0
        %4598 = vmatpush1.msra.mxu0 0.0
        %4599 = vmatprep.subr.mxu0 0.0
        %4600 = vmatpush1.msra.mxu0 0.0
        %4601 = vmatprep.subr.mxu0 0.0
        %4602 = vmatpush1.msra.mxu0 0.0
        %4603 = vmatprep.subr.mxu0 0.0
        %4604 = vmatpush1.msra.mxu0 0.0
        %4605 = vmatprep.subr.mxu0 0.0
        %4606 = vmatpush1.msra.mxu0 0.0
        %4607 = vmatprep.subr.mxu0 0.0
        %4608 = vmatpush1.msra.mxu0 0.0
        %4609 = vmatprep.subr.mxu0 0.0
        %4610 = vmatpush1.msra.mxu0 0.0
        %4611 = vmatprep.subr.mxu0 0.0
        %4612 = vmatpush1.msra.mxu0 0.0
        %4613 = vmatprep.subr.mxu0 0.0
        %4614 = vmatpush1.msra.mxu0 0.0
        %4615 = vmatprep.subr.mxu0 0.0
        %4616 = vmatpush1.msra.mxu0 0.0
        %4617 = vmatprep.subr.mxu0 0.0
        %4618 = vmatpush1.msra.mxu0 0.0
        %4619 = vmatprep.subr.mxu0 0.0
        %4620 = vmatpush1.msra.mxu0 0.0
        %4621 = vmatprep.subr.mxu0 0.0
        %4622 = vmatpush1.msra.mxu0 0.0
        %4623 = vmatprep.subr.mxu0 0.0
        %4624 = vmatpush1.msra.mxu0 0.0
        %4625 = vmatprep.subr.mxu0 0.0
        %4626 = vmatpush1.msra.mxu0 0.0
        %4627 = vmatprep.mubr.f32.mxu0 0.0
        %4628 = vmatmul.mubr.f32.gmra.mrb[0].mxu0 %v4561
        %v4629 = vpop.f32.mrb[0].mxu0
        %v4630 = vadd.f32 %v4557, %v4629
        %v4631 = vpop.f32.mrb[0].mxu0
        %4632 = vdwg.mxu0
        %4633 = vrot.lane.b32.xlu0 %v4006, 112
        %v4634 = vpop.permute.xlu0 %4633
        %4635 = vrot.lane.b32.xlu0 %v4082, 112
        %v4636 = vpop.permute.xlu0 %4635
        %v4637 = vsel %vm1467, %v4634, 0
        %v4639 = vsel %vm1467, %v4636, 0
        %4641 = vmatprep.subr.mxu0 0.0
        %4642 = vmatpush1.xpose.msra.mxu0 %v4639
        %4643 = vmatprep.subr.mxu0 0.0
        %4644 = vmatpush1.xpose.msra.mxu0 0.0
        %4645 = vmatprep.subr.mxu0 0.0
        %4646 = vmatpush1.xpose.msra.mxu0 0.0
        %4647 = vmatprep.subr.mxu0 0.0
        %4648 = vmatpush1.xpose.msra.mxu0 0.0
        %4649 = vmatprep.subr.mxu0 0.0
        %4650 = vmatpush1.xpose.msra.mxu0 0.0
        %4651 = vmatprep.subr.mxu0 0.0
        %4652 = vmatpush1.xpose.msra.mxu0 0.0
        %4653 = vmatprep.subr.mxu0 0.0
        %4654 = vmatpush1.xpose.msra.mxu0 0.0
        %4655 = vmatprep.subr.mxu0 0.0
        %4656 = vmatpush1.xpose.msra.mxu0 0.0
        %4657 = vmatprep.subr.mxu0 0.0
        %4658 = vmatpush1.xpose.msra.mxu0 0.0
        %4659 = vmatprep.subr.mxu0 0.0
        %4660 = vmatpush1.xpose.msra.mxu0 0.0
        %4661 = vmatprep.subr.mxu0 0.0
        %4662 = vmatpush1.xpose.msra.mxu0 0.0
        %4663 = vmatprep.subr.mxu0 0.0
        %4664 = vmatpush1.xpose.msra.mxu0 0.0
        %4665 = vmatprep.subr.mxu0 0.0
        %4666 = vmatpush1.xpose.msra.mxu0 0.0
        %4667 = vmatprep.subr.mxu0 0.0
        %4668 = vmatpush1.xpose.msra.mxu0 0.0
        %4669 = vmatprep.subr.mxu0 0.0
        %4670 = vmatpush1.xpose.msra.mxu0 0.0
        %4671 = vmatprep.subr.mxu0 0.0
        %4672 = vmatpush1.xpose.msra.mxu0 0.0
        %4673 = vmatprep.subr.mxu0 0.0
        %4674 = vmatpush1.xpose.msra.mxu0 0.0
        %4675 = vmatprep.subr.mxu0 0.0
        %4676 = vmatpush1.xpose.msra.mxu0 0.0
        %4677 = vmatprep.subr.mxu0 0.0
        %4678 = vmatpush1.xpose.msra.mxu0 0.0
        %4679 = vmatprep.subr.mxu0 0.0
        %4680 = vmatpush1.xpose.msra.mxu0 0.0
        %4681 = vmatprep.subr.mxu0 0.0
        %4682 = vmatpush1.xpose.msra.mxu0 0.0
        %4683 = vmatprep.subr.mxu0 0.0
        %4684 = vmatpush1.xpose.msra.mxu0 0.0
        %4685 = vmatprep.subr.mxu0 0.0
        %4686 = vmatpush1.xpose.msra.mxu0 0.0
        %4687 = vmatprep.subr.mxu0 0.0
        %4688 = vmatpush1.xpose.msra.mxu0 0.0
        %4689 = vmatprep.subr.mxu0 0.0
        %4690 = vmatpush1.xpose.msra.mxu0 0.0
        %4691 = vmatprep.subr.mxu0 0.0
        %4692 = vmatpush1.xpose.msra.mxu0 0.0
        %4693 = vmatprep.subr.mxu0 0.0
        %4694 = vmatpush1.xpose.msra.mxu0 0.0
        %4695 = vmatprep.subr.mxu0 0.0
        %4696 = vmatpush1.xpose.msra.mxu0 0.0
        %4697 = vmatprep.subr.mxu0 0.0
        %4698 = vmatpush1.xpose.msra.mxu0 0.0
        %4699 = vmatprep.subr.mxu0 0.0
        %4700 = vmatpush1.xpose.msra.mxu0 0.0
        %4701 = vmatprep.subr.mxu0 0.0
        %4702 = vmatpush1.xpose.msra.mxu0 0.0
        %4703 = vmatprep.subr.mxu0 0.0
        %4704 = vmatpush1.xpose.msra.mxu0 0.0
        %4705 = vmatprep.mubr.f32.mxu0 0.0
        %4706 = vmatmul.mubr.f32.gmra.mrb[0].mxu0 %v4637
        %v4707 = vpop.f32.mrb[0].mxu0
        %v4708 = vadd.f32 0.0, %v4707
        %v4709 = vpop.f32.mrb[0].mxu0
        %4710 = vdwg.mxu0
        %v4711 = vsel %vm1467, %v4708, -inf
        %4712 = vmax.xlane.f32.xlu0 %v4711
        %v4713 = vpop.xlane.xlu0 %4712
        %v4714 = vsub.f32 %v4708, %v4713
        %v4715 = vmul.f32 %v4714, 1.442695
        %v4716 = vpow.pop %v4715
        %v4717 = vsel %vm1467, %v4716, 0.0
        %4718 = vadd.xlane.f32.xlu0 %v4717
        %v4719 = vpop.xlane.xlu0 %4718
        %v4720 = vrcp.pop %v4719
        %v4721 = vmul.f32 %v4716, %v4720
        %4722 = vrot.lane.b32.xlu0 %v4158, 112
        %v4723 = vpop.permute.xlu0 %4722
        %v4726 = vsel %vm1467, %v4721, 0
        %4728 = vmatprep.subr.mxu0 0.0
        %4729 = vmatpush1.msra.mxu0 %v4723
        %4730 = vmatprep.subr.mxu0 0.0
        %4731 = vmatpush1.msra.mxu0 0.0
        %4732 = vmatprep.subr.mxu0 0.0
        %4733 = vmatpush1.msra.mxu0 0.0
        %4734 = vmatprep.subr.mxu0 0.0
        %4735 = vmatpush1.msra.mxu0 0.0
        %4736 = vmatprep.subr.mxu0 0.0
        %4737 = vmatpush1.msra.mxu0 0.0
        %4738 = vmatprep.subr.mxu0 0.0
        %4739 = vmatpush1.msra.mxu0 0.0
        %4740 = vmatprep.subr.mxu0 0.0
        %4741 = vmatpush1.msra.mxu0 0.0
        %4742 = vmatprep.subr.mxu0 0.0
        %4743 = vmatpush1.msra.mxu0 0.0
        %4744 = vmatprep.subr.mxu0 0.0
        %4745 = vmatpush1.msra.mxu0 0.0
        %4746 = vmatprep.subr.mxu0 0.0
        %4747 = vmatpush1.msra.mxu0 0.0
        %4748 = vmatprep.subr.mxu0 0.0
        %4749 = vmatpush1.msra.mxu0 0.0
        %4750 = vmatprep.subr.mxu0 0.0
        %4751 = vmatpush1.msra.mxu0 0.0
        %4752 = vmatprep.subr.mxu0 0.0
        %4753 = vmatpush1.msra.mxu0 0.0
        %4754 = vmatprep.subr.mxu0 0.0
        %4755 = vmatpush1.msra.mxu0 0.0
        %4756 = vmatprep.subr.mxu0 0.0
        %4757 = vmatpush1.msra.mxu0 0.0
        %4758 = vmatprep.subr.mxu0 0.0
        %4759 = vmatpush1.msra.mxu0 0.0
        %4760 = vmatprep.subr.mxu0 0.0
        %4761 = vmatpush1.msra.mxu0 0.0
        %4762 = vmatprep.subr.mxu0 0.0
        %4763 = vmatpush1.msra.mxu0 0.0
        %4764 = vmatprep.subr.mxu0 0.0
        %4765 = vmatpush1.msra.mxu0 0.0
        %4766 = vmatprep.subr.mxu0 0.0
        %4767 = vmatpush1.msra.mxu0 0.0
        %4768 = vmatprep.subr.mxu0 0.0
        %4769 = vmatpush1.msra.mxu0 0.0
        %4770 = vmatprep.subr.mxu0 0.0
        %4771 = vmatpush1.msra.mxu0 0.0
        %4772 = vmatprep.subr.mxu0 0.0
        %4773 = vmatpush1.msra.mxu0 0.0
        %4774 = vmatprep.subr.mxu0 0.0
        %4775 = vmatpush1.msra.mxu0 0.0
        %4776 = vmatprep.subr.mxu0 0.0
        %4777 = vmatpush1.msra.mxu0 0.0
        %4778 = vmatprep.subr.mxu0 0.0
        %4779 = vmatpush1.msra.mxu0 0.0
        %4780 = vmatprep.subr.mxu0 0.0
        %4781 = vmatpush1.msra.mxu0 0.0
        %4782 = vmatprep.subr.mxu0 0.0
        %4783 = vmatpush1.msra.mxu0 0.0
        %4784 = vmatprep.subr.mxu0 0.0
        %4785 = vmatpush1.msra.mxu0 0.0
        %4786 = vmatprep.subr.mxu0 0.0
        %4787 = vmatpush1.msra.mxu0 0.0
        %4788 = vmatprep.subr.mxu0 0.0
        %4789 = vmatpush1.msra.mxu0 0.0
        %4790 = vmatprep.subr.mxu0 0.0
        %4791 = vmatpush1.msra.mxu0 0.0
        %4792 = vmatprep.mubr.f32.mxu0 0.0
        %4793 = vmatmul.mubr.f32.gmra.mrb[0].mxu0 %v4726
        %v4794 = vpop.f32.mrb[0].mxu0
        %v4795 = vadd.f32 0.0, %v4794
        %v4796 = vpop.f32.mrb[0].mxu0
        %4797 = vdwg.mxu0
        %v4799 = vsel %vm1467, %v4795, 0
        %4801 = vmatprep.subr.mxu0 0.0
        %4802 = vmatpush1.msra.mxu0 %v3926
        %4803 = vmatprep.subr.mxu0 0.0
        %4804 = vmatpush1.msra.mxu0 0.0
        %4805 = vmatprep.subr.mxu0 0.0
        %4806 = vmatpush1.msra.mxu0 0.0
        %4807 = vmatprep.subr.mxu0 0.0
        %4808 = vmatpush1.msra.mxu0 0.0
        %4809 = vmatprep.subr.mxu0 0.0
        %4810 = vmatpush1.msra.mxu0 0.0
        %4811 = vmatprep.subr.mxu0 0.0
        %4812 = vmatpush1.msra.mxu0 0.0
        %4813 = vmatprep.subr.mxu0 0.0
        %4814 = vmatpush1.msra.mxu0 0.0
        %4815 = vmatprep.subr.mxu0 0.0
        %4816 = vmatpush1.msra.mxu0 0.0
        %4817 = vmatprep.subr.mxu0 0.0
        %4818 = vmatpush1.msra.mxu0 0.0
        %4819 = vmatprep.subr.mxu0 0.0
        %4820 = vmatpush1.msra.mxu0 0.0
        %4821 = vmatprep.subr.mxu0 0.0
        %4822 = vmatpush1.msra.mxu0 0.0
        %4823 = vmatprep.subr.mxu0 0.0
        %4824 = vmatpush1.msra.mxu0 0.0
        %4825 = vmatprep.subr.mxu0 0.0
        %4826 = vmatpush1.msra.mxu0 0.0
        %4827 = vmatprep.subr.mxu0 0.0
        %4828 = vmatpush1.msra.mxu0 0.0
        %4829 = vmatprep.subr.mxu0 0.0
        %4830 = vmatpush1.msra.mxu0 0.0
        %4831 = vmatprep.subr.mxu0 0.0
        %4832 = vmatpush1.msra.mxu0 0.0
        %4833 = vmatprep.subr.mxu0 0.0
        %4834 = vmatpush1.msra.mxu0 0.0
        %4835 = vmatprep.subr.mxu0 0.0
        %4836 = vmatpush1.msra.mxu0 0.0
        %4837 = vmatprep.subr.mxu0 0.0
        %4838 = vmatpush1.msra.mxu0 0.0
        %4839 = vmatprep.subr.mxu0 0.0
        %4840 = vmatpush1.msra.mxu0 0.0
        %4841 = vmatprep.subr.mxu0 0.0
        %4842 = vmatpush1.msra.mxu0 0.0
        %4843 = vmatprep.subr.mxu0 0.0
        %4844 = vmatpush1.msra.mxu0 0.0
        %4845 = vmatprep.subr.mxu0 0.0
        %4846 = vmatpush1.msra.mxu0 0.0
        %4847 = vmatprep.subr.mxu0 0.0
        %4848 = vmatpush1.msra.mxu0 0.0
        %4849 = vmatprep.subr.mxu0 0.0
        %4850 = vmatpush1.msra.mxu0 0.0
        %4851 = vmatprep.subr.mxu0 0.0
        %4852 = vmatpush1.msra.mxu0 0.0
        %4853 = vmatprep.subr.mxu0 0.0
        %4854 = vmatpush1.msra.mxu0 0.0
        %4855 = vmatprep.subr.mxu0 0.0
        %4856 = vmatpush1.msra.mxu0 0.0
        %4857 = vmatprep.subr.mxu0 0.0
        %4858 = vmatpush1.msra.mxu0 0.0
        %4859 = vmatprep.subr.mxu0 0.0
        %4860 = vmatpush1.msra.mxu0 0.0
        %4861 = vmatprep.subr.mxu0 0.0
        %4862 = vmatpush1.msra.mxu0 0.0
        %4863 = vmatprep.subr.mxu0 0.0
        %4864 = vmatpush1.msra.mxu0 0.0
        %4865 = vmatprep.mubr.f32.mxu0 0.0
        %4866 = vmatmul.mubr.f32.gmra.mrb[0].mxu0 %v4799
        %v4867 = vpop.f32.mrb[0].mxu0
        %v4868 = vadd.f32 0.0, %v4867
        %v4869 = vpop.f32.mrb[0].mxu0
        %4870 = vdwg.mxu0
        %v4871 = vadd.f32 %v4630, %v4868
        %4872 = vrot.lane.b32.xlu0 %v4006, 104
        %v4873 = vpop.permute.xlu0 %4872
        %4874 = vrot.lane.b32.xlu0 %v4082, 104
        %v4875 = vpop.permute.xlu0 %4874
        %v4876 = vsel %vm1467, %v4873, 0
        %v4878 = vsel %vm1467, %v4875, 0
        %4880 = vmatprep.subr.mxu0 0.0
        %4881 = vmatpush1.xpose.msra.mxu0 %v4878
        %4882 = vmatprep.subr.mxu0 0.0
        %4883 = vmatpush1.xpose.msra.mxu0 0.0
        %4884 = vmatprep.subr.mxu0 0.0
        %4885 = vmatpush1.xpose.msra.mxu0 0.0
        %4886 = vmatprep.subr.mxu0 0.0
        %4887 = vmatpush1.xpose.msra.mxu0 0.0
        %4888 = vmatprep.subr.mxu0 0.0
        %4889 = vmatpush1.xpose.msra.mxu0 0.0
        %4890 = vmatprep.subr.mxu0 0.0
        %4891 = vmatpush1.xpose.msra.mxu0 0.0
        %4892 = vmatprep.subr.mxu0 0.0
        %4893 = vmatpush1.xpose.msra.mxu0 0.0
        %4894 = vmatprep.subr.mxu0 0.0
        %4895 = vmatpush1.xpose.msra.mxu0 0.0
        %4896 = vmatprep.subr.mxu0 0.0
        %4897 = vmatpush1.xpose.msra.mxu0 0.0
        %4898 = vmatprep.subr.mxu0 0.0
        %4899 = vmatpush1.xpose.msra.mxu0 0.0
        %4900 = vmatprep.subr.mxu0 0.0
        %4901 = vmatpush1.xpose.msra.mxu0 0.0
        %4902 = vmatprep.subr.mxu0 0.0
        %4903 = vmatpush1.xpose.msra.mxu0 0.0
        %4904 = vmatprep.subr.mxu0 0.0
        %4905 = vmatpush1.xpose.msra.mxu0 0.0
        %4906 = vmatprep.subr.mxu0 0.0
        %4907 = vmatpush1.xpose.msra.mxu0 0.0
        %4908 = vmatprep.subr.mxu0 0.0
        %4909 = vmatpush1.xpose.msra.mxu0 0.0
        %4910 = vmatprep.subr.mxu0 0.0
        %4911 = vmatpush1.xpose.msra.mxu0 0.0
        %4912 = vmatprep.subr.mxu0 0.0
        %4913 = vmatpush1.xpose.msra.mxu0 0.0
        %4914 = vmatprep.subr.mxu0 0.0
        %4915 = vmatpush1.xpose.msra.mxu0 0.0
        %4916 = vmatprep.subr.mxu0 0.0
        %4917 = vmatpush1.xpose.msra.mxu0 0.0
        %4918 = vmatprep.subr.mxu0 0.0
        %4919 = vmatpush1.xpose.msra.mxu0 0.0
        %4920 = vmatprep.subr.mxu0 0.0
        %4921 = vmatpush1.xpose.msra.mxu0 0.0
        %4922 = vmatprep.subr.mxu0 0.0
        %4923 = vmatpush1.xpose.msra.mxu0 0.0
        %4924 = vmatprep.subr.mxu0 0.0
        %4925 = vmatpush1.xpose.msra.mxu0 0.0
        %4926 = vmatprep.subr.mxu0 0.0
        %4927 = vmatpush1.xpose.msra.mxu0 0.0
        %4928 = vmatprep.subr.mxu0 0.0
        %4929 = vmatpush1.xpose.msra.mxu0 0.0
        %4930 = vmatprep.subr.mxu0 0.0
        %4931 = vmatpush1.xpose.msra.mxu0 0.0
        %4932 = vmatprep.subr.mxu0 0.0
        %4933 = vmatpush1.xpose.msra.mxu0 0.0
        %4934 = vmatprep.subr.mxu0 0.0
        %4935 = vmatpush1.xpose.msra.mxu0 0.0
        %4936 = vmatprep.subr.mxu0 0.0
        %4937 = vmatpush1.xpose.msra.mxu0 0.0
        %4938 = vmatprep.subr.mxu0 0.0
        %4939 = vmatpush1.xpose.msra.mxu0 0.0
        %4940 = vmatprep.subr.mxu0 0.0
        %4941 = vmatpush1.xpose.msra.mxu0 0.0
        %4942 = vmatprep.subr.mxu0 0.0
        %4943 = vmatpush1.xpose.msra.mxu0 0.0
        %4944 = vmatprep.mubr.f32.mxu0 0.0
        %4945 = vmatmul.mubr.f32.gmra.mrb[0].mxu0 %v4876
        %v4946 = vpop.f32.mrb[0].mxu0
        %v4947 = vadd.f32 0.0, %v4946
        %v4948 = vpop.f32.mrb[0].mxu0
        %4949 = vdwg.mxu0
        %v4950 = vsel %vm1467, %v4947, -inf
        %4951 = vmax.xlane.f32.xlu0 %v4950
        %v4952 = vpop.xlane.xlu0 %4951
        %v4953 = vsub.f32 %v4947, %v4952
        %v4954 = vmul.f32 %v4953, 1.442695
        %v4955 = vpow.pop %v4954
        %v4956 = vsel %vm1467, %v4955, 0.0
        %4957 = vadd.xlane.f32.xlu0 %v4956
        %v4958 = vpop.xlane.xlu0 %4957
        %v4959 = vrcp.pop %v4958
        %v4960 = vmul.f32 %v4955, %v4959
        %4961 = vrot.lane.b32.xlu0 %v4158, 104
        %v4962 = vpop.permute.xlu0 %4961
        %v4965 = vsel %vm1467, %v4960, 0
        %4967 = vmatprep.subr.mxu0 0.0
        %4968 = vmatpush1.msra.mxu0 %v4962
        %4969 = vmatprep.subr.mxu0 0.0
        %4970 = vmatpush1.msra.mxu0 0.0
        %4971 = vmatprep.subr.mxu0 0.0
        %4972 = vmatpush1.msra.mxu0 0.0
        %4973 = vmatprep.subr.mxu0 0.0
        %4974 = vmatpush1.msra.mxu0 0.0
        %4975 = vmatprep.subr.mxu0 0.0
        %4976 = vmatpush1.msra.mxu0 0.0
        %4977 = vmatprep.subr.mxu0 0.0
        %4978 = vmatpush1.msra.mxu0 0.0
        %4979 = vmatprep.subr.mxu0 0.0
        %4980 = vmatpush1.msra.mxu0 0.0
        %4981 = vmatprep.subr.mxu0 0.0
        %4982 = vmatpush1.msra.mxu0 0.0
        %4983 = vmatprep.subr.mxu0 0.0
        %4984 = vmatpush1.msra.mxu0 0.0
        %4985 = vmatprep.subr.mxu0 0.0
        %4986 = vmatpush1.msra.mxu0 0.0
        %4987 = vmatprep.subr.mxu0 0.0
        %4988 = vmatpush1.msra.mxu0 0.0
        %4989 = vmatprep.subr.mxu0 0.0
        %4990 = vmatpush1.msra.mxu0 0.0
        %4991 = vmatprep.subr.mxu0 0.0
        %4992 = vmatpush1.msra.mxu0 0.0
        %4993 = vmatprep.subr.mxu0 0.0
        %4994 = vmatpush1.msra.mxu0 0.0
        %4995 = vmatprep.subr.mxu0 0.0
        %4996 = vmatpush1.msra.mxu0 0.0
        %4997 = vmatprep.subr.mxu0 0.0
        %4998 = vmatpush1.msra.mxu0 0.0
        %4999 = vmatprep.subr.mxu0 0.0
        %5000 = vmatpush1.msra.mxu0 0.0
        %5001 = vmatprep.subr.mxu0 0.0
        %5002 = vmatpush1.msra.mxu0 0.0
        %5003 = vmatprep.subr.mxu0 0.0
        %5004 = vmatpush1.msra.mxu0 0.0
        %5005 = vmatprep.subr.mxu0 0.0
        %5006 = vmatpush1.msra.mxu0 0.0
        %5007 = vmatprep.subr.mxu0 0.0
        %5008 = vmatpush1.msra.mxu0 0.0
        %5009 = vmatprep.subr.mxu0 0.0
        %5010 = vmatpush1.msra.mxu0 0.0
        %5011 = vmatprep.subr.mxu0 0.0
        %5012 = vmatpush1.msra.mxu0 0.0
        %5013 = vmatprep.subr.mxu0 0.0
        %5014 = vmatpush1.msra.mxu0 0.0
        %5015 = vmatprep.subr.mxu0 0.0
        %5016 = vmatpush1.msra.mxu0 0.0
        %5017 = vmatprep.subr.mxu0 0.0
        %5018 = vmatpush1.msra.mxu0 0.0
        %5019 = vmatprep.subr.mxu0 0.0
        %5020 = vmatpush1.msra.mxu0 0.0
        %5021 = vmatprep.subr.mxu0 0.0
        %5022 = vmatpush1.msra.mxu0 0.0
        %5023 = vmatprep.subr.mxu0 0.0
        %5024 = vmatpush1.msra.mxu0 0.0
        %5025 = vmatprep.subr.mxu0 0.0
        %5026 = vmatpush1.msra.mxu0 0.0
        %5027 = vmatprep.subr.mxu0 0.0
        %5028 = vmatpush1.msra.mxu0 0.0
        %5029 = vmatprep.subr.mxu0 0.0
        %5030 = vmatpush1.msra.mxu0 0.0
        %5031 = vmatprep.mubr.f32.mxu0 0.0
        %5032 = vmatmul.mubr.f32.gmra.mrb[0].mxu0 %v4965
        %v5033 = vpop.f32.mrb[0].mxu0
        %v5034 = vadd.f32 0.0, %v5033
        %v5035 = vpop.f32.mrb[0].mxu0
        %5036 = vdwg.mxu0
        %v5038 = vsel %vm1467, %v5034, 0
        %5040 = vmatprep.subr.mxu0 0.0
        %5041 = vmatpush1.msra.mxu0 %v3927
        %5042 = vmatprep.subr.mxu0 0.0
        %5043 = vmatpush1.msra.mxu0 0.0
        %5044 = vmatprep.subr.mxu0 0.0
        %5045 = vmatpush1.msra.mxu0 0.0
        %5046 = vmatprep.subr.mxu0 0.0
        %5047 = vmatpush1.msra.mxu0 0.0
        %5048 = vmatprep.subr.mxu0 0.0
        %5049 = vmatpush1.msra.mxu0 0.0
        %5050 = vmatprep.subr.mxu0 0.0
        %5051 = vmatpush1.msra.mxu0 0.0
        %5052 = vmatprep.subr.mxu0 0.0
        %5053 = vmatpush1.msra.mxu0 0.0
        %5054 = vmatprep.subr.mxu0 0.0
        %5055 = vmatpush1.msra.mxu0 0.0
        %5056 = vmatprep.subr.mxu0 0.0
        %5057 = vmatpush1.msra.mxu0 0.0
        %5058 = vmatprep.subr.mxu0 0.0
        %5059 = vmatpush1.msra.mxu0 0.0
        %5060 = vmatprep.subr.mxu0 0.0
        %5061 = vmatpush1.msra.mxu0 0.0
        %5062 = vmatprep.subr.mxu0 0.0
        %5063 = vmatpush1.msra.mxu0 0.0
        %5064 = vmatprep.subr.mxu0 0.0
        %5065 = vmatpush1.msra.mxu0 0.0
        %5066 = vmatprep.subr.mxu0 0.0
        %5067 = vmatpush1.msra.mxu0 0.0
        %5068 = vmatprep.subr.mxu0 0.0
        %5069 = vmatpush1.msra.mxu0 0.0
        %5070 = vmatprep.subr.mxu0 0.0
        %5071 = vmatpush1.msra.mxu0 0.0
        %5072 = vmatprep.subr.mxu0 0.0
        %5073 = vmatpush1.msra.mxu0 0.0
        %5074 = vmatprep.subr.mxu0 0.0
        %5075 = vmatpush1.msra.mxu0 0.0
        %5076 = vmatprep.subr.mxu0 0.0
        %5077 = vmatpush1.msra.mxu0 0.0
        %5078 = vmatprep.subr.mxu0 0.0
        %5079 = vmatpush1.msra.mxu0 0.0
        %5080 = vmatprep.subr.mxu0 0.0
        %5081 = vmatpush1.msra.mxu0 0.0
        %5082 = vmatprep.subr.mxu0 0.0
        %5083 = vmatpush1.msra.mxu0 0.0
        %5084 = vmatprep.subr.mxu0 0.0
        %5085 = vmatpush1.msra.mxu0 0.0
        %5086 = vmatprep.subr.mxu0 0.0
        %5087 = vmatpush1.msra.mxu0 0.0
        %5088 = vmatprep.subr.mxu0 0.0
        %5089 = vmatpush1.msra.mxu0 0.0
        %5090 = vmatprep.subr.mxu0 0.0
        %5091 = vmatpush1.msra.mxu0 0.0
        %5092 = vmatprep.subr.mxu0 0.0
        %5093 = vmatpush1.msra.mxu0 0.0
        %5094 = vmatprep.subr.mxu0 0.0
        %5095 = vmatpush1.msra.mxu0 0.0
        %5096 = vmatprep.subr.mxu0 0.0
        %5097 = vmatpush1.msra.mxu0 0.0
        %5098 = vmatprep.subr.mxu0 0.0
        %5099 = vmatpush1.msra.mxu0 0.0
        %5100 = vmatprep.subr.mxu0 0.0
        %5101 = vmatpush1.msra.mxu0 0.0
        %5102 = vmatprep.subr.mxu0 0.0
        %5103 = vmatpush1.msra.mxu0 0.0
        %5104 = vmatprep.mubr.f32.mxu0 0.0
        %5105 = vmatmul.mubr.f32.gmra.mrb[0].mxu0 %v5038
        %v5106 = vpop.f32.mrb[0].mxu0
        %v5107 = vadd.f32 0.0, %v5106
        %v5108 = vpop.f32.mrb[0].mxu0
        %5109 = vdwg.mxu0
        %v5110 = vadd.f32 %v4871, %v5107
        %v5111 = vadd.f32 %v3901, %v5110
        %v5113 = vlaneseq
        %v5114 = vshrl.u32 %v5113, 7
        %v5115 = vsub.s32 0, %v5114
        %v5116 = vrot.slane %v3929, %v5115
        %v5118 = vadd.f32 %v5111, %v5116
        %s5119 = scalar_lea.vmem %s21, 1
        %v5120 = vld [vmem:[%s5119] sm:$0x1]
        %s5121 = scalar_lea.vmem %s23, 1
        %v5122 = vld [vmem:[%s5121] sm:$0x1]
        %v5123 = vsel %vm1241, %v5118, 0.0
        %5124 = vadd.xlane.f32.xlu0 %v5123
        %v5125 = vpop.xlane.xlu0 %5124
        %v5126 = vmul.f32 %v5125, %v2431
        %v5127 = vsub.f32 %v5118, %v5126
        %v5128 = vmul.f32 %v5127, %v5127
        %v5129 = vsel %vm1241, %v5128, 0.0
        %5130 = vadd.xlane.f32.xlu0 %v5129
        %v5131 = vpop.xlane.xlu0 %5130
        %v5132 = vmul.f32 %v5131, %v2431
        %v5133 = vadd.f32 %v5132, 1e-05
        %v5134 = vrsqrt.pop %v5133
        %v5135 = vmul.f32 %v5127, %v5134
        %v5137 = vlaneseq
        %v5138 = vshrl.u32 %v5137, 7
        %v5139 = vsub.s32 0, %v5138
        %v5140 = vrot.slane %v5120, %v5139
        %v5142 = vmul.f32 %v5135, %v5140
        %v5144 = vlaneseq
        %v5145 = vshrl.u32 %v5144, 7
        %v5146 = vsub.s32 0, %v5145
        %v5147 = vrot.slane %v5122, %v5146
        %v5149 = vadd.f32 %v5142, %v5147
        %s5150 = scalar_lea.vmem [#allocation8], 32
        %v5151 = vld [vmem:[%s5150] sm:$0xff]
        %v5152 = vld [vmem:[%s5150 + $0x8] sm:$0xff]
        %v5153 = vld [vmem:[%s5150 + $0x10] sm:$0xff]
        %v5154 = vld [vmem:[%s5150 + $0x18] sm:$0xff]
        %s5155 = scalar_lea.vmem %s27, 1
        %v5156 = vld [vmem:[%s5155] sm:$0x1]
        %s5157 = scalar_lea.vmem [#allocation10], 32
        %v5158 = vld [vmem:[%s5157] sm:$0xff]
        %v5159 = vld [vmem:[%s5157 + $0x8] sm:$0xff]
        %v5160 = vld [vmem:[%s5157 + $0x10] sm:$0xff]
        %v5161 = vld [vmem:[%s5157 + $0x18] sm:$0xff]
        %s5162 = scalar_lea.vmem [#allocation11], 1
        %v5163 = vld [vmem:[%s5162] sm:$0x1]
        %s5164 = scalar_lea.vmem [#allocation13], 32
        %v5165 = vld [vmem:[%s5164] sm:$0xff]
        %v5166 = vld [vmem:[%s5164 + $0x8] sm:$0xff]
        %v5167 = vld [vmem:[%s5164 + $0x10] sm:$0xff]
        %v5168 = vld [vmem:[%s5164 + $0x18] sm:$0xff]
        %s5169 = scalar_lea.vmem [#allocation14], 1
        %v5170 = vld [vmem:[%s5169] sm:$0x1]
        %s5171 = scalar_lea.vmem [#allocation16], 32
        %v5172 = vld [vmem:[%s5171] sm:$0xff]
        %v5173 = vld [vmem:[%s5171 + $0x8] sm:$0xff]
        %v5174 = vld [vmem:[%s5171 + $0x10] sm:$0xff]
        %v5175 = vld [vmem:[%s5171 + $0x18] sm:$0xff]
        %s5176 = scalar_lea.vmem [#allocation17], 1
        %v5177 = vld [vmem:[%s5176] sm:$0x1]
        %v5179 = vlaneseq
        %v5180 = vshrl.u32 %v5179, 7
        %v5181 = vsub.s32 0, %v5180
        %v5182 = vrot.slane %v5156, %v5181
        %v5185 = vsel %vm1241, %v5149, 0
        %5187 = vmatprep.subr.mxu0 0.0
        %5188 = vmatpush1.msra.mxu0 %v5151
        %5189 = vmatprep.subr.mxu0 0.0
        %5190 = vmatpush1.msra.mxu0 %v5152
        %5191 = vmatprep.subr.mxu0 0.0
        %5192 = vmatpush1.msra.mxu0 %v5153
        %5193 = vmatprep.subr.mxu0 0.0
        %5194 = vmatpush1.msra.mxu0 %v5154
        %5195 = vmatprep.subr.mxu0 0.0
        %5196 = vmatpush1.msra.mxu0 0.0
        %5197 = vmatprep.subr.mxu0 0.0
        %5198 = vmatpush1.msra.mxu0 0.0
        %5199 = vmatprep.subr.mxu0 0.0
        %5200 = vmatpush1.msra.mxu0 0.0
        %5201 = vmatprep.subr.mxu0 0.0
        %5202 = vmatpush1.msra.mxu0 0.0
        %5203 = vmatprep.subr.mxu0 0.0
        %5204 = vmatpush1.msra.mxu0 0.0
        %5205 = vmatprep.subr.mxu0 0.0
        %5206 = vmatpush1.msra.mxu0 0.0
        %5207 = vmatprep.subr.mxu0 0.0
        %5208 = vmatpush1.msra.mxu0 0.0
        %5209 = vmatprep.subr.mxu0 0.0
        %5210 = vmatpush1.msra.mxu0 0.0
        %5211 = vmatprep.subr.mxu0 0.0
        %5212 = vmatpush1.msra.mxu0 0.0
        %5213 = vmatprep.subr.mxu0 0.0
        %5214 = vmatpush1.msra.mxu0 0.0
        %5215 = vmatprep.subr.mxu0 0.0
        %5216 = vmatpush1.msra.mxu0 0.0
        %5217 = vmatprep.subr.mxu0 0.0
        %5218 = vmatpush1.msra.mxu0 0.0
        %5219 = vmatprep.subr.mxu0 0.0
        %5220 = vmatpush1.msra.mxu0 0.0
        %5221 = vmatprep.subr.mxu0 0.0
        %5222 = vmatpush1.msra.mxu0 0.0
        %5223 = vmatprep.subr.mxu0 0.0
        %5224 = vmatpush1.msra.mxu0 0.0
        %5225 = vmatprep.subr.mxu0 0.0
        %5226 = vmatpush1.msra.mxu0 0.0
        %5227 = vmatprep.subr.mxu0 0.0
        %5228 = vmatpush1.msra.mxu0 0.0
        %5229 = vmatprep.subr.mxu0 0.0
        %5230 = vmatpush1.msra.mxu0 0.0
        %5231 = vmatprep.subr.mxu0 0.0
        %5232 = vmatpush1.msra.mxu0 0.0
        %5233 = vmatprep.subr.mxu0 0.0
        %5234 = vmatpush1.msra.mxu0 0.0
        %5235 = vmatprep.subr.mxu0 0.0
        %5236 = vmatpush1.msra.mxu0 0.0
        %5237 = vmatprep.subr.mxu0 0.0
        %5238 = vmatpush1.msra.mxu0 0.0
        %5239 = vmatprep.subr.mxu0 0.0
        %5240 = vmatpush1.msra.mxu0 0.0
        %5241 = vmatprep.subr.mxu0 0.0
        %5242 = vmatpush1.msra.mxu0 0.0
        %5243 = vmatprep.subr.mxu0 0.0
        %5244 = vmatpush1.msra.mxu0 0.0
        %5245 = vmatprep.subr.mxu0 0.0
        %5246 = vmatpush1.msra.mxu0 0.0
        %5247 = vmatprep.subr.mxu0 0.0
        %5248 = vmatpush1.msra.mxu0 0.0
        %5249 = vmatprep.subr.mxu0 0.0
        %5250 = vmatpush1.msra.mxu0 0.0
        %5251 = vmatprep.mubr.f32.mxu0 0.0
        %5252 = vmatmul.mubr.f32.gmra.mrb[0].mxu0 %v5185
        %v5253 = vpop.f32.mrb[0].mxu0
        %v5254 = vadd.f32 %v5182, %v5253
        %v5255 = vpop.f32.mrb[0].mxu0
        %5256 = vdwg.mxu0
        %v5258 = vlaneseq
        %v5259 = vshrl.u32 %v5258, 7
        %v5260 = vsub.s32 0, %v5259
        %v5261 = vrot.slane %v5163, %v5260
        %5263 = vmatprep.subr.mxu0 0.0
        %5264 = vmatpush1.msra.mxu0 %v5158
        %5265 = vmatprep.subr.mxu0 0.0
        %5266 = vmatpush1.msra.mxu0 %v5159
        %5267 = vmatprep.subr.mxu0 0.0
        %5268 = vmatpush1.msra.mxu0 %v5160
        %5269 = vmatprep.subr.mxu0 0.0
        %5270 = vmatpush1.msra.mxu0 %v5161
        %5271 = vmatprep.subr.mxu0 0.0
        %5272 = vmatpush1.msra.mxu0 0.0
        %5273 = vmatprep.subr.mxu0 0.0
        %5274 = vmatpush1.msra.mxu0 0.0
        %5275 = vmatprep.subr.mxu0 0.0
        %5276 = vmatpush1.msra.mxu0 0.0
        %5277 = vmatprep.subr.mxu0 0.0
        %5278 = vmatpush1.msra.mxu0 0.0
        %5279 = vmatprep.subr.mxu0 0.0
        %5280 = vmatpush1.msra.mxu0 0.0
        %5281 = vmatprep.subr.mxu0 0.0
        %5282 = vmatpush1.msra.mxu0 0.0
        %5283 = vmatprep.subr.mxu0 0.0
        %5284 = vmatpush1.msra.mxu0 0.0
        %5285 = vmatprep.subr.mxu0 0.0
        %5286 = vmatpush1.msra.mxu0 0.0
        %5287 = vmatprep.subr.mxu0 0.0
        %5288 = vmatpush1.msra.mxu0 0.0
        %5289 = vmatprep.subr.mxu0 0.0
        %5290 = vmatpush1.msra.mxu0 0.0
        %5291 = vmatprep.subr.mxu0 0.0
        %5292 = vmatpush1.msra.mxu0 0.0
        %5293 = vmatprep.subr.mxu0 0.0
        %5294 = vmatpush1.msra.mxu0 0.0
        %5295 = vmatprep.subr.mxu0 0.0
        %5296 = vmatpush1.msra.mxu0 0.0
        %5297 = vmatprep.subr.mxu0 0.0
        %5298 = vmatpush1.msra.mxu0 0.0
        %5299 = vmatprep.subr.mxu0 0.0
        %5300 = vmatpush1.msra.mxu0 0.0
        %5301 = vmatprep.subr.mxu0 0.0
        %5302 = vmatpush1.msra.mxu0 0.0
        %5303 = vmatprep.subr.mxu0 0.0
        %5304 = vmatpush1.msra.mxu0 0.0
        %5305 = vmatprep.subr.mxu0 0.0
        %5306 = vmatpush1.msra.mxu0 0.0
        %5307 = vmatprep.subr.mxu0 0.0
        %5308 = vmatpush1.msra.mxu0 0.0
        %5309 = vmatprep.subr.mxu0 0.0
        %5310 = vmatpush1.msra.mxu0 0.0
        %5311 = vmatprep.subr.mxu0 0.0
        %5312 = vmatpush1.msra.mxu0 0.0
        %5313 = vmatprep.subr.mxu0 0.0
        %5314 = vmatpush1.msra.mxu0 0.0
        %5315 = vmatprep.subr.mxu0 0.0
        %5316 = vmatpush1.msra.mxu0 0.0
        %5317 = vmatprep.subr.mxu0 0.0
        %5318 = vmatpush1.msra.mxu0 0.0
        %5319 = vmatprep.subr.mxu0 0.0
        %5320 = vmatpush1.msra.mxu0 0.0
        %5321 = vmatprep.subr.mxu0 0.0
        %5322 = vmatpush1.msra.mxu0 0.0
        %5323 = vmatprep.subr.mxu0 0.0
        %5324 = vmatpush1.msra.mxu0 0.0
        %5325 = vmatprep.subr.mxu0 0.0
        %5326 = vmatpush1.msra.mxu0 0.0
        %5327 = vmatprep.mubr.f32.mxu0 0.0
        %5328 = vmatmul.mubr.f32.gmra.mrb[0].mxu0 %v2562
        %v5329 = vpop.f32.mrb[0].mxu0
        %v5330 = vadd.f32 %v5261, %v5329
        %v5331 = vpop.f32.mrb[0].mxu0
        %5332 = vdwg.mxu0
        %v5334 = vlaneseq
        %v5335 = vshrl.u32 %v5334, 7
        %v5336 = vsub.s32 0, %v5335
        %v5337 = vrot.slane %v5170, %v5336
        %5339 = vmatprep.subr.mxu0 0.0
        %5340 = vmatpush1.msra.mxu0 %v5165
        %5341 = vmatprep.subr.mxu0 0.0
        %5342 = vmatpush1.msra.mxu0 %v5166
        %5343 = vmatprep.subr.mxu0 0.0
        %5344 = vmatpush1.msra.mxu0 %v5167
        %5345 = vmatprep.subr.mxu0 0.0
        %5346 = vmatpush1.msra.mxu0 %v5168
        %5347 = vmatprep.subr.mxu0 0.0
        %5348 = vmatpush1.msra.mxu0 0.0
        %5349 = vmatprep.subr.mxu0 0.0
        %5350 = vmatpush1.msra.mxu0 0.0
        %5351 = vmatprep.subr.mxu0 0.0
        %5352 = vmatpush1.msra.mxu0 0.0
        %5353 = vmatprep.subr.mxu0 0.0
        %5354 = vmatpush1.msra.mxu0 0.0
        %5355 = vmatprep.subr.mxu0 0.0
        %5356 = vmatpush1.msra.mxu0 0.0
        %5357 = vmatprep.subr.mxu0 0.0
        %5358 = vmatpush1.msra.mxu0 0.0
        %5359 = vmatprep.subr.mxu0 0.0
        %5360 = vmatpush1.msra.mxu0 0.0
        %5361 = vmatprep.subr.mxu0 0.0
        %5362 = vmatpush1.msra.mxu0 0.0
        %5363 = vmatprep.subr.mxu0 0.0
        %5364 = vmatpush1.msra.mxu0 0.0
        %5365 = vmatprep.subr.mxu0 0.0
        %5366 = vmatpush1.msra.mxu0 0.0
        %5367 = vmatprep.subr.mxu0 0.0
        %5368 = vmatpush1.msra.mxu0 0.0
        %5369 = vmatprep.subr.mxu0 0.0
        %5370 = vmatpush1.msra.mxu0 0.0
        %5371 = vmatprep.subr.mxu0 0.0
        %5372 = vmatpush1.msra.mxu0 0.0
        %5373 = vmatprep.subr.mxu0 0.0
        %5374 = vmatpush1.msra.mxu0 0.0
        %5375 = vmatprep.subr.mxu0 0.0
        %5376 = vmatpush1.msra.mxu0 0.0
        %5377 = vmatprep.subr.mxu0 0.0
        %5378 = vmatpush1.msra.mxu0 0.0
        %5379 = vmatprep.subr.mxu0 0.0
        %5380 = vmatpush1.msra.mxu0 0.0
        %5381 = vmatprep.subr.mxu0 0.0
        %5382 = vmatpush1.msra.mxu0 0.0
        %5383 = vmatprep.subr.mxu0 0.0
        %5384 = vmatpush1.msra.mxu0 0.0
        %5385 = vmatprep.subr.mxu0 0.0
        %5386 = vmatpush1.msra.mxu0 0.0
        %5387 = vmatprep.subr.mxu0 0.0
        %5388 = vmatpush1.msra.mxu0 0.0
        %5389 = vmatprep.subr.mxu0 0.0
        %5390 = vmatpush1.msra.mxu0 0.0
        %5391 = vmatprep.subr.mxu0 0.0
        %5392 = vmatpush1.msra.mxu0 0.0
        %5393 = vmatprep.subr.mxu0 0.0
        %5394 = vmatpush1.msra.mxu0 0.0
        %5395 = vmatprep.subr.mxu0 0.0
        %5396 = vmatpush1.msra.mxu0 0.0
        %5397 = vmatprep.subr.mxu0 0.0
        %5398 = vmatpush1.msra.mxu0 0.0
        %5399 = vmatprep.subr.mxu0 0.0
        %5400 = vmatpush1.msra.mxu0 0.0
        %5401 = vmatprep.subr.mxu0 0.0
        %5402 = vmatpush1.msra.mxu0 0.0
        %5403 = vmatprep.mubr.f32.mxu0 0.0
        %5404 = vmatmul.mubr.f32.gmra.mrb[0].mxu0 %v2562
        %v5405 = vpop.f32.mrb[0].mxu0
        %v5406 = vadd.f32 %v5337, %v5405
        %v5407 = vpop.f32.mrb[0].mxu0
        %5408 = vdwg.mxu0
        %v5410 = vsel %vm1467, %v5254, 0
        %v5413 = vsel %vm1467, %v5330, 0
        %5415 = vmatprep.subr.mxu0 0.0
        %5416 = vmatpush1.xpose.msra.mxu0 %v5413
        %5417 = vmatprep.subr.mxu0 0.0
        %5418 = vmatpush1.xpose.msra.mxu0 0.0
        %5419 = vmatprep.subr.mxu0 0.0
        %5420 = vmatpush1.xpose.msra.mxu0 0.0
        %5421 = vmatprep.subr.mxu0 0.0
        %5422 = vmatpush1.xpose.msra.mxu0 0.0
        %5423 = vmatprep.subr.mxu0 0.0
        %5424 = vmatpush1.xpose.msra.mxu0 0.0
        %5425 = vmatprep.subr.mxu0 0.0
        %5426 = vmatpush1.xpose.msra.mxu0 0.0
        %5427 = vmatprep.subr.mxu0 0.0
        %5428 = vmatpush1.xpose.msra.mxu0 0.0
        %5429 = vmatprep.subr.mxu0 0.0
        %5430 = vmatpush1.xpose.msra.mxu0 0.0
        %5431 = vmatprep.subr.mxu0 0.0
        %5432 = vmatpush1.xpose.msra.mxu0 0.0
        %5433 = vmatprep.subr.mxu0 0.0
        %5434 = vmatpush1.xpose.msra.mxu0 0.0
        %5435 = vmatprep.subr.mxu0 0.0
        %5436 = vmatpush1.xpose.msra.mxu0 0.0
        %5437 = vmatprep.subr.mxu0 0.0
        %5438 = vmatpush1.xpose.msra.mxu0 0.0
        %5439 = vmatprep.subr.mxu0 0.0
        %5440 = vmatpush1.xpose.msra.mxu0 0.0
        %5441 = vmatprep.subr.mxu0 0.0
        %5442 = vmatpush1.xpose.msra.mxu0 0.0
        %5443 = vmatprep.subr.mxu0 0.0
        %5444 = vmatpush1.xpose.msra.mxu0 0.0
        %5445 = vmatprep.subr.mxu0 0.0
        %5446 = vmatpush1.xpose.msra.mxu0 0.0
        %5447 = vmatprep.subr.mxu0 0.0
        %5448 = vmatpush1.xpose.msra.mxu0 0.0
        %5449 = vmatprep.subr.mxu0 0.0
        %5450 = vmatpush1.xpose.msra.mxu0 0.0
        %5451 = vmatprep.subr.mxu0 0.0
        %5452 = vmatpush1.xpose.msra.mxu0 0.0
        %5453 = vmatprep.subr.mxu0 0.0
        %5454 = vmatpush1.xpose.msra.mxu0 0.0
        %5455 = vmatprep.subr.mxu0 0.0
        %5456 = vmatpush1.xpose.msra.mxu0 0.0
        %5457 = vmatprep.subr.mxu0 0.0
        %5458 = vmatpush1.xpose.msra.mxu0 0.0
        %5459 = vmatprep.subr.mxu0 0.0
        %5460 = vmatpush1.xpose.msra.mxu0 0.0
        %5461 = vmatprep.subr.mxu0 0.0
        %5462 = vmatpush1.xpose.msra.mxu0 0.0
        %5463 = vmatprep.subr.mxu0 0.0
        %5464 = vmatpush1.xpose.msra.mxu0 0.0
        %5465 = vmatprep.subr.mxu0 0.0
        %5466 = vmatpush1.xpose.msra.mxu0 0.0
        %5467 = vmatprep.subr.mxu0 0.0
        %5468 = vmatpush1.xpose.msra.mxu0 0.0
        %5469 = vmatprep.subr.mxu0 0.0
        %5470 = vmatpush1.xpose.msra.mxu0 0.0
        %5471 = vmatprep.subr.mxu0 0.0
        %5472 = vmatpush1.xpose.msra.mxu0 0.0
        %5473 = vmatprep.subr.mxu0 0.0
        %5474 = vmatpush1.xpose.msra.mxu0 0.0
        %5475 = vmatprep.subr.mxu0 0.0
        %5476 = vmatpush1.xpose.msra.mxu0 0.0
        %5477 = vmatprep.subr.mxu0 0.0
        %5478 = vmatpush1.xpose.msra.mxu0 0.0
        %5479 = vmatprep.mubr.f32.mxu0 0.0
        %5480 = vmatmul.mubr.f32.gmra.mrb[0].mxu0 %v5410
        %v5481 = vpop.f32.mrb[0].mxu0
        %v5482 = vadd.f32 0.0, %v5481
        %v5483 = vpop.f32.mrb[0].mxu0
        %5484 = vdwg.mxu0
        %v5485 = vsel %vm1467, %v5482, -inf
        %5486 = vmax.xlane.f32.xlu0 %v5485
        %v5487 = vpop.xlane.xlu0 %5486
        %v5488 = vsub.f32 %v5482, %v5487
        %v5489 = vmul.f32 %v5488, 1.442695
        %v5490 = vpow.pop %v5489
        %v5491 = vsel %vm1467, %v5490, 0.0
        %5492 = vadd.xlane.f32.xlu0 %v5491
        %v5493 = vpop.xlane.xlu0 %5492
        %v5494 = vrcp.pop %v5493
        %v5495 = vmul.f32 %v5490, %v5494
        %v5497 = vsel %vm1467, %v5495, 0
        %5499 = vmatprep.subr.mxu0 0.0
        %5500 = vmatpush1.msra.mxu0 %v5406
        %5501 = vmatprep.subr.mxu0 0.0
        %5502 = vmatpush1.msra.mxu0 0.0
        %5503 = vmatprep.subr.mxu0 0.0
        %5504 = vmatpush1.msra.mxu0 0.0
        %5505 = vmatprep.subr.mxu0 0.0
        %5506 = vmatpush1.msra.mxu0 0.0
        %5507 = vmatprep.subr.mxu0 0.0
        %5508 = vmatpush1.msra.mxu0 0.0
        %5509 = vmatprep.subr.mxu0 0.0
        %5510 = vmatpush1.msra.mxu0 0.0
        %5511 = vmatprep.subr.mxu0 0.0
        %5512 = vmatpush1.msra.mxu0 0.0
        %5513 = vmatprep.subr.mxu0 0.0
        %5514 = vmatpush1.msra.mxu0 0.0
        %5515 = vmatprep.subr.mxu0 0.0
        %5516 = vmatpush1.msra.mxu0 0.0
        %5517 = vmatprep.subr.mxu0 0.0
        %5518 = vmatpush1.msra.mxu0 0.0
        %5519 = vmatprep.subr.mxu0 0.0
        %5520 = vmatpush1.msra.mxu0 0.0
        %5521 = vmatprep.subr.mxu0 0.0
        %5522 = vmatpush1.msra.mxu0 0.0
        %5523 = vmatprep.subr.mxu0 0.0
        %5524 = vmatpush1.msra.mxu0 0.0
        %5525 = vmatprep.subr.mxu0 0.0
        %5526 = vmatpush1.msra.mxu0 0.0
        %5527 = vmatprep.subr.mxu0 0.0
        %5528 = vmatpush1.msra.mxu0 0.0
        %5529 = vmatprep.subr.mxu0 0.0
        %5530 = vmatpush1.msra.mxu0 0.0
        %5531 = vmatprep.subr.mxu0 0.0
        %5532 = vmatpush1.msra.mxu0 0.0
        %5533 = vmatprep.subr.mxu0 0.0
        %5534 = vmatpush1.msra.mxu0 0.0
        %5535 = vmatprep.subr.mxu0 0.0
        %5536 = vmatpush1.msra.mxu0 0.0
        %5537 = vmatprep.subr.mxu0 0.0
        %5538 = vmatpush1.msra.mxu0 0.0
        %5539 = vmatprep.subr.mxu0 0.0
        %5540 = vmatpush1.msra.mxu0 0.0
        %5541 = vmatprep.subr.mxu0 0.0
        %5542 = vmatpush1.msra.mxu0 0.0
        %5543 = vmatprep.subr.mxu0 0.0
        %5544 = vmatpush1.msra.mxu0 0.0
        %5545 = vmatprep.subr.mxu0 0.0
        %5546 = vmatpush1.msra.mxu0 0.0
        %5547 = vmatprep.subr.mxu0 0.0
        %5548 = vmatpush1.msra.mxu0 0.0
        %5549 = vmatprep.subr.mxu0 0.0
        %5550 = vmatpush1.msra.mxu0 0.0
        %5551 = vmatprep.subr.mxu0 0.0
        %5552 = vmatpush1.msra.mxu0 0.0
        %5553 = vmatprep.subr.mxu0 0.0
        %5554 = vmatpush1.msra.mxu0 0.0
        %5555 = vmatprep.subr.mxu0 0.0
        %5556 = vmatpush1.msra.mxu0 0.0
        %5557 = vmatprep.subr.mxu0 0.0
        %5558 = vmatpush1.msra.mxu0 0.0
        %5559 = vmatprep.subr.mxu0 0.0
        %5560 = vmatpush1.msra.mxu0 0.0
        %5561 = vmatprep.subr.mxu0 0.0
        %5562 = vmatpush1.msra.mxu0 0.0
        %5563 = vmatprep.mubr.f32.mxu0 0.0
        %5564 = vmatmul.mubr.f32.gmra.mrb[0].mxu0 %v5497
        %v5565 = vpop.f32.mrb[0].mxu0
        %v5566 = vadd.f32 0.0, %v5565
        %v5567 = vpop.f32.mrb[0].mxu0
        %5568 = vdwg.mxu0
        %5569 = vrot.lane.b32.xlu0 %v5254, 120
        %v5570 = vpop.permute.xlu0 %5569
        %5571 = vrot.lane.b32.xlu0 %v5330, 120
        %v5572 = vpop.permute.xlu0 %5571
        %v5573 = vsel %vm1467, %v5570, 0
        %v5575 = vsel %vm1467, %v5572, 0
        %5577 = vmatprep.subr.mxu0 0.0
        %5578 = vmatpush1.xpose.msra.mxu0 %v5575
        %5579 = vmatprep.subr.mxu0 0.0
        %5580 = vmatpush1.xpose.msra.mxu0 0.0
        %5581 = vmatprep.subr.mxu0 0.0
        %5582 = vmatpush1.xpose.msra.mxu0 0.0
        %5583 = vmatprep.subr.mxu0 0.0
        %5584 = vmatpush1.xpose.msra.mxu0 0.0
        %5585 = vmatprep.subr.mxu0 0.0
        %5586 = vmatpush1.xpose.msra.mxu0 0.0
        %5587 = vmatprep.subr.mxu0 0.0
        %5588 = vmatpush1.xpose.msra.mxu0 0.0
        %5589 = vmatprep.subr.mxu0 0.0
        %5590 = vmatpush1.xpose.msra.mxu0 0.0
        %5591 = vmatprep.subr.mxu0 0.0
        %5592 = vmatpush1.xpose.msra.mxu0 0.0
        %5593 = vmatprep.subr.mxu0 0.0
        %5594 = vmatpush1.xpose.msra.mxu0 0.0
        %5595 = vmatprep.subr.mxu0 0.0
        %5596 = vmatpush1.xpose.msra.mxu0 0.0
        %5597 = vmatprep.subr.mxu0 0.0
        %5598 = vmatpush1.xpose.msra.mxu0 0.0
        %5599 = vmatprep.subr.mxu0 0.0
        %5600 = vmatpush1.xpose.msra.mxu0 0.0
        %5601 = vmatprep.subr.mxu0 0.0
        %5602 = vmatpush1.xpose.msra.mxu0 0.0
        %5603 = vmatprep.subr.mxu0 0.0
        %5604 = vmatpush1.xpose.msra.mxu0 0.0
        %5605 = vmatprep.subr.mxu0 0.0
        %5606 = vmatpush1.xpose.msra.mxu0 0.0
        %5607 = vmatprep.subr.mxu0 0.0
        %5608 = vmatpush1.xpose.msra.mxu0 0.0
        %5609 = vmatprep.subr.mxu0 0.0
        %5610 = vmatpush1.xpose.msra.mxu0 0.0
        %5611 = vmatprep.subr.mxu0 0.0
        %5612 = vmatpush1.xpose.msra.mxu0 0.0
        %5613 = vmatprep.subr.mxu0 0.0
        %5614 = vmatpush1.xpose.msra.mxu0 0.0
        %5615 = vmatprep.subr.mxu0 0.0
        %5616 = vmatpush1.xpose.msra.mxu0 0.0
        %5617 = vmatprep.subr.mxu0 0.0
        %5618 = vmatpush1.xpose.msra.mxu0 0.0
        %5619 = vmatprep.subr.mxu0 0.0
        %5620 = vmatpush1.xpose.msra.mxu0 0.0
        %5621 = vmatprep.subr.mxu0 0.0
        %5622 = vmatpush1.xpose.msra.mxu0 0.0
        %5623 = vmatprep.subr.mxu0 0.0
        %5624 = vmatpush1.xpose.msra.mxu0 0.0
        %5625 = vmatprep.subr.mxu0 0.0
        %5626 = vmatpush1.xpose.msra.mxu0 0.0
        %5627 = vmatprep.subr.mxu0 0.0
        %5628 = vmatpush1.xpose.msra.mxu0 0.0
        %5629 = vmatprep.subr.mxu0 0.0
        %5630 = vmatpush1.xpose.msra.mxu0 0.0
        %5631 = vmatprep.subr.mxu0 0.0
        %5632 = vmatpush1.xpose.msra.mxu0 0.0
        %5633 = vmatprep.subr.mxu0 0.0
        %5634 = vmatpush1.xpose.msra.mxu0 0.0
        %5635 = vmatprep.subr.mxu0 0.0
        %5636 = vmatpush1.xpose.msra.mxu0 0.0
        %5637 = vmatprep.subr.mxu0 0.0
        %5638 = vmatpush1.xpose.msra.mxu0 0.0
        %5639 = vmatprep.subr.mxu0 0.0
        %5640 = vmatpush1.xpose.msra.mxu0 0.0
        %5641 = vmatprep.mubr.f32.mxu0 0.0
        %5642 = vmatmul.mubr.f32.gmra.mrb[0].mxu0 %v5573
        %v5643 = vpop.f32.mrb[0].mxu0
        %v5644 = vadd.f32 0.0, %v5643
        %v5645 = vpop.f32.mrb[0].mxu0
        %5646 = vdwg.mxu0
        %v5647 = vsel %vm1467, %v5644, -inf
        %5648 = vmax.xlane.f32.xlu0 %v5647
        %v5649 = vpop.xlane.xlu0 %5648
        %v5650 = vsub.f32 %v5644, %v5649
        %v5651 = vmul.f32 %v5650, 1.442695
        %v5652 = vpow.pop %v5651
        %v5653 = vsel %vm1467, %v5652, 0.0
        %5654 = vadd.xlane.f32.xlu0 %v5653
        %v5655 = vpop.xlane.xlu0 %5654
        %v5656 = vrcp.pop %v5655
        %v5657 = vmul.f32 %v5652, %v5656
        %5659 = vrot.lane.b32.xlu0 %v5406, 120
        %v5660 = vpop.permute.xlu0 %5659
        %v5663 = vsel %vm1467, %v5657, 0
        %5665 = vmatprep.subr.mxu0 0.0
        %5666 = vmatpush1.msra.mxu0 %v5660
        %5667 = vmatprep.subr.mxu0 0.0
        %5668 = vmatpush1.msra.mxu0 0.0
        %5669 = vmatprep.subr.mxu0 0.0
        %5670 = vmatpush1.msra.mxu0 0.0
        %5671 = vmatprep.subr.mxu0 0.0
        %5672 = vmatpush1.msra.mxu0 0.0
        %5673 = vmatprep.subr.mxu0 0.0
        %5674 = vmatpush1.msra.mxu0 0.0
        %5675 = vmatprep.subr.mxu0 0.0
        %5676 = vmatpush1.msra.mxu0 0.0
        %5677 = vmatprep.subr.mxu0 0.0
        %5678 = vmatpush1.msra.mxu0 0.0
        %5679 = vmatprep.subr.mxu0 0.0
        %5680 = vmatpush1.msra.mxu0 0.0
        %5681 = vmatprep.subr.mxu0 0.0
        %5682 = vmatpush1.msra.mxu0 0.0
        %5683 = vmatprep.subr.mxu0 0.0
        %5684 = vmatpush1.msra.mxu0 0.0
        %5685 = vmatprep.subr.mxu0 0.0
        %5686 = vmatpush1.msra.mxu0 0.0
        %5687 = vmatprep.subr.mxu0 0.0
        %5688 = vmatpush1.msra.mxu0 0.0
        %5689 = vmatprep.subr.mxu0 0.0
        %5690 = vmatpush1.msra.mxu0 0.0
        %5691 = vmatprep.subr.mxu0 0.0
        %5692 = vmatpush1.msra.mxu0 0.0
        %5693 = vmatprep.subr.mxu0 0.0
        %5694 = vmatpush1.msra.mxu0 0.0
        %5695 = vmatprep.subr.mxu0 0.0
        %5696 = vmatpush1.msra.mxu0 0.0
        %5697 = vmatprep.subr.mxu0 0.0
        %5698 = vmatpush1.msra.mxu0 0.0
        %5699 = vmatprep.subr.mxu0 0.0
        %5700 = vmatpush1.msra.mxu0 0.0
        %5701 = vmatprep.subr.mxu0 0.0
        %5702 = vmatpush1.msra.mxu0 0.0
        %5703 = vmatprep.subr.mxu0 0.0
        %5704 = vmatpush1.msra.mxu0 0.0
        %5705 = vmatprep.subr.mxu0 0.0
        %5706 = vmatpush1.msra.mxu0 0.0
        %5707 = vmatprep.subr.mxu0 0.0
        %5708 = vmatpush1.msra.mxu0 0.0
        %5709 = vmatprep.subr.mxu0 0.0
        %5710 = vmatpush1.msra.mxu0 0.0
        %5711 = vmatprep.subr.mxu0 0.0
        %5712 = vmatpush1.msra.mxu0 0.0
        %5713 = vmatprep.subr.mxu0 0.0
        %5714 = vmatpush1.msra.mxu0 0.0
        %5715 = vmatprep.subr.mxu0 0.0
        %5716 = vmatpush1.msra.mxu0 0.0
        %5717 = vmatprep.subr.mxu0 0.0
        %5718 = vmatpush1.msra.mxu0 0.0
        %5719 = vmatprep.subr.mxu0 0.0
        %5720 = vmatpush1.msra.mxu0 0.0
        %5721 = vmatprep.subr.mxu0 0.0
        %5722 = vmatpush1.msra.mxu0 0.0
        %5723 = vmatprep.subr.mxu0 0.0
        %5724 = vmatpush1.msra.mxu0 0.0
        %5725 = vmatprep.subr.mxu0 0.0
        %5726 = vmatpush1.msra.mxu0 0.0
        %5727 = vmatprep.subr.mxu0 0.0
        %5728 = vmatpush1.msra.mxu0 0.0
        %5729 = vmatprep.mubr.f32.mxu0 0.0
        %5730 = vmatmul.mubr.f32.gmra.mrb[0].mxu0 %v5663
        %v5731 = vpop.f32.mrb[0].mxu0
        %v5732 = vadd.f32 0.0, %v5731
        %v5733 = vpop.f32.mrb[0].mxu0
        %5734 = vdwg.mxu0
        %v5736 = vsel %vm1467, %v5732, 0
        %5738 = vmatprep.subr.mxu0 0.0
        %5739 = vmatpush1.msra.mxu0 %v5173
        %5740 = vmatprep.subr.mxu0 0.0
        %5741 = vmatpush1.msra.mxu0 0.0
        %5742 = vmatprep.subr.mxu0 0.0
        %5743 = vmatpush1.msra.mxu0 0.0
        %5744 = vmatprep.subr.mxu0 0.0
        %5745 = vmatpush1.msra.mxu0 0.0
        %5746 = vmatprep.subr.mxu0 0.0
        %5747 = vmatpush1.msra.mxu0 0.0
        %5748 = vmatprep.subr.mxu0 0.0
        %5749 = vmatpush1.msra.mxu0 0.0
        %5750 = vmatprep.subr.mxu0 0.0
        %5751 = vmatpush1.msra.mxu0 0.0
        %5752 = vmatprep.subr.mxu0 0.0
        %5753 = vmatpush1.msra.mxu0 0.0
        %5754 = vmatprep.subr.mxu0 0.0
        %5755 = vmatpush1.msra.mxu0 0.0
        %5756 = vmatprep.subr.mxu0 0.0
        %5757 = vmatpush1.msra.mxu0 0.0
        %5758 = vmatprep.subr.mxu0 0.0
        %5759 = vmatpush1.msra.mxu0 0.0
        %5760 = vmatprep.subr.mxu0 0.0
        %5761 = vmatpush1.msra.mxu0 0.0
        %5762 = vmatprep.subr.mxu0 0.0
        %5763 = vmatpush1.msra.mxu0 0.0
        %5764 = vmatprep.subr.mxu0 0.0
        %5765 = vmatpush1.msra.mxu0 0.0
        %5766 = vmatprep.subr.mxu0 0.0
        %5767 = vmatpush1.msra.mxu0 0.0
        %5768 = vmatprep.subr.mxu0 0.0
        %5769 = vmatpush1.msra.mxu0 0.0
        %5770 = vmatprep.subr.mxu0 0.0
        %5771 = vmatpush1.msra.mxu0 0.0
        %5772 = vmatprep.subr.mxu0 0.0
        %5773 = vmatpush1.msra.mxu0 0.0
        %5774 = vmatprep.subr.mxu0 0.0
        %5775 = vmatpush1.msra.mxu0 0.0
        %5776 = vmatprep.subr.mxu0 0.0
        %5777 = vmatpush1.msra.mxu0 0.0
        %5778 = vmatprep.subr.mxu0 0.0
        %5779 = vmatpush1.msra.mxu0 0.0
        %5780 = vmatprep.subr.mxu0 0.0
        %5781 = vmatpush1.msra.mxu0 0.0
        %5782 = vmatprep.subr.mxu0 0.0
        %5783 = vmatpush1.msra.mxu0 0.0
        %5784 = vmatprep.subr.mxu0 0.0
        %5785 = vmatpush1.msra.mxu0 0.0
        %5786 = vmatprep.subr.mxu0 0.0
        %5787 = vmatpush1.msra.mxu0 0.0
        %5788 = vmatprep.subr.mxu0 0.0
        %5789 = vmatpush1.msra.mxu0 0.0
        %5790 = vmatprep.subr.mxu0 0.0
        %5791 = vmatpush1.msra.mxu0 0.0
        %5792 = vmatprep.subr.mxu0 0.0
        %5793 = vmatpush1.msra.mxu0 0.0
        %5794 = vmatprep.subr.mxu0 0.0
        %5795 = vmatpush1.msra.mxu0 0.0
        %5796 = vmatprep.subr.mxu0 0.0
        %5797 = vmatpush1.msra.mxu0 0.0
        %5798 = vmatprep.subr.mxu0 0.0
        %5799 = vmatpush1.msra.mxu0 0.0
        %5800 = vmatprep.subr.mxu0 0.0
        %5801 = vmatpush1.msra.mxu0 0.0
        %5802 = vmatprep.mubr.f32.mxu0 0.0
        %5803 = vmatmul.mubr.f32.gmra.mrb[0].mxu0 %v5736
        %v5804 = vpop.f32.mrb[0].mxu0
        %v5805 = vadd.f32 0.0, %v5804
        %v5806 = vpop.f32.mrb[0].mxu0
        %5807 = vdwg.mxu0
        %v5809 = vsel %vm1467, %v5566, 0
        %5811 = vmatprep.subr.mxu0 0.0
        %5812 = vmatpush1.msra.mxu0 %v5172
        %5813 = vmatprep.subr.mxu0 0.0
        %5814 = vmatpush1.msra.mxu0 0.0
        %5815 = vmatprep.subr.mxu0 0.0
        %5816 = vmatpush1.msra.mxu0 0.0
        %5817 = vmatprep.subr.mxu0 0.0
        %5818 = vmatpush1.msra.mxu0 0.0
        %5819 = vmatprep.subr.mxu0 0.0
        %5820 = vmatpush1.msra.mxu0 0.0
        %5821 = vmatprep.subr.mxu0 0.0
        %5822 = vmatpush1.msra.mxu0 0.0
        %5823 = vmatprep.subr.mxu0 0.0
        %5824 = vmatpush1.msra.mxu0 0.0
        %5825 = vmatprep.subr.mxu0 0.0
        %5826 = vmatpush1.msra.mxu0 0.0
        %5827 = vmatprep.subr.mxu0 0.0
        %5828 = vmatpush1.msra.mxu0 0.0
        %5829 = vmatprep.subr.mxu0 0.0
        %5830 = vmatpush1.msra.mxu0 0.0
        %5831 = vmatprep.subr.mxu0 0.0
        %5832 = vmatpush1.msra.mxu0 0.0
        %5833 = vmatprep.subr.mxu0 0.0
        %5834 = vmatpush1.msra.mxu0 0.0
        %5835 = vmatprep.subr.mxu0 0.0
        %5836 = vmatpush1.msra.mxu0 0.0
        %5837 = vmatprep.subr.mxu0 0.0
        %5838 = vmatpush1.msra.mxu0 0.0
        %5839 = vmatprep.subr.mxu0 0.0
        %5840 = vmatpush1.msra.mxu0 0.0
        %5841 = vmatprep.subr.mxu0 0.0
        %5842 = vmatpush1.msra.mxu0 0.0
        %5843 = vmatprep.subr.mxu0 0.0
        %5844 = vmatpush1.msra.mxu0 0.0
        %5845 = vmatprep.subr.mxu0 0.0
        %5846 = vmatpush1.msra.mxu0 0.0
        %5847 = vmatprep.subr.mxu0 0.0
        %5848 = vmatpush1.msra.mxu0 0.0
        %5849 = vmatprep.subr.mxu0 0.0
        %5850 = vmatpush1.msra.mxu0 0.0
        %5851 = vmatprep.subr.mxu0 0.0
        %5852 = vmatpush1.msra.mxu0 0.0
        %5853 = vmatprep.subr.mxu0 0.0
        %5854 = vmatpush1.msra.mxu0 0.0
        %5855 = vmatprep.subr.mxu0 0.0
        %5856 = vmatpush1.msra.mxu0 0.0
        %5857 = vmatprep.subr.mxu0 0.0
        %5858 = vmatpush1.msra.mxu0 0.0
        %5859 = vmatprep.subr.mxu0 0.0
        %5860 = vmatpush1.msra.mxu0 0.0
        %5861 = vmatprep.subr.mxu0 0.0
        %5862 = vmatpush1.msra.mxu0 0.0
        %5863 = vmatprep.subr.mxu0 0.0
        %5864 = vmatpush1.msra.mxu0 0.0
        %5865 = vmatprep.subr.mxu0 0.0
        %5866 = vmatpush1.msra.mxu0 0.0
        %5867 = vmatprep.subr.mxu0 0.0
        %5868 = vmatpush1.msra.mxu0 0.0
        %5869 = vmatprep.subr.mxu0 0.0
        %5870 = vmatpush1.msra.mxu0 0.0
        %5871 = vmatprep.subr.mxu0 0.0
        %5872 = vmatpush1.msra.mxu0 0.0
        %5873 = vmatprep.subr.mxu0 0.0
        %5874 = vmatpush1.msra.mxu0 0.0
        %5875 = vmatprep.mubr.f32.mxu0 0.0
        %5876 = vmatmul.mubr.f32.gmra.mrb[0].mxu0 %v5809
        %v5877 = vpop.f32.mrb[0].mxu0
        %v5878 = vadd.f32 %v5805, %v5877
        %v5879 = vpop.f32.mrb[0].mxu0
        %5880 = vdwg.mxu0
        %5881 = vrot.lane.b32.xlu0 %v5254, 112
        %v5882 = vpop.permute.xlu0 %5881
        %5883 = vrot.lane.b32.xlu0 %v5330, 112
        %v5884 = vpop.permute.xlu0 %5883
        %v5885 = vsel %vm1467, %v5882, 0
        %v5887 = vsel %vm1467, %v5884, 0
        %5889 = vmatprep.subr.mxu0 0.0
        %5890 = vmatpush1.xpose.msra.mxu0 %v5887
        %5891 = vmatprep.subr.mxu0 0.0
        %5892 = vmatpush1.xpose.msra.mxu0 0.0
        %5893 = vmatprep.subr.mxu0 0.0
        %5894 = vmatpush1.xpose.msra.mxu0 0.0
        %5895 = vmatprep.subr.mxu0 0.0
        %5896 = vmatpush1.xpose.msra.mxu0 0.0
        %5897 = vmatprep.subr.mxu0 0.0
        %5898 = vmatpush1.xpose.msra.mxu0 0.0
        %5899 = vmatprep.subr.mxu0 0.0
        %5900 = vmatpush1.xpose.msra.mxu0 0.0
        %5901 = vmatprep.subr.mxu0 0.0
        %5902 = vmatpush1.xpose.msra.mxu0 0.0
        %5903 = vmatprep.subr.mxu0 0.0
        %5904 = vmatpush1.xpose.msra.mxu0 0.0
        %5905 = vmatprep.subr.mxu0 0.0
        %5906 = vmatpush1.xpose.msra.mxu0 0.0
        %5907 = vmatprep.subr.mxu0 0.0
        %5908 = vmatpush1.xpose.msra.mxu0 0.0
        %5909 = vmatprep.subr.mxu0 0.0
        %5910 = vmatpush1.xpose.msra.mxu0 0.0
        %5911 = vmatprep.subr.mxu0 0.0
        %5912 = vmatpush1.xpose.msra.mxu0 0.0
        %5913 = vmatprep.subr.mxu0 0.0
        %5914 = vmatpush1.xpose.msra.mxu0 0.0
        %5915 = vmatprep.subr.mxu0 0.0
        %5916 = vmatpush1.xpose.msra.mxu0 0.0
        %5917 = vmatprep.subr.mxu0 0.0
        %5918 = vmatpush1.xpose.msra.mxu0 0.0
        %5919 = vmatprep.subr.mxu0 0.0
        %5920 = vmatpush1.xpose.msra.mxu0 0.0
        %5921 = vmatprep.subr.mxu0 0.0
        %5922 = vmatpush1.xpose.msra.mxu0 0.0
        %5923 = vmatprep.subr.mxu0 0.0
        %5924 = vmatpush1.xpose.msra.mxu0 0.0
        %5925 = vmatprep.subr.mxu0 0.0
        %5926 = vmatpush1.xpose.msra.mxu0 0.0
        %5927 = vmatprep.subr.mxu0 0.0
        %5928 = vmatpush1.xpose.msra.mxu0 0.0
        %5929 = vmatprep.subr.mxu0 0.0
        %5930 = vmatpush1.xpose.msra.mxu0 0.0
        %5931 = vmatprep.subr.mxu0 0.0
        %5932 = vmatpush1.xpose.msra.mxu0 0.0
        %5933 = vmatprep.subr.mxu0 0.0
        %5934 = vmatpush1.xpose.msra.mxu0 0.0
        %5935 = vmatprep.subr.mxu0 0.0
        %5936 = vmatpush1.xpose.msra.mxu0 0.0
        %5937 = vmatprep.subr.mxu0 0.0
        %5938 = vmatpush1.xpose.msra.mxu0 0.0
        %5939 = vmatprep.subr.mxu0 0.0
        %5940 = vmatpush1.xpose.msra.mxu0 0.0
        %5941 = vmatprep.subr.mxu0 0.0
        %5942 = vmatpush1.xpose.msra.mxu0 0.0
        %5943 = vmatprep.subr.mxu0 0.0
        %5944 = vmatpush1.xpose.msra.mxu0 0.0
        %5945 = vmatprep.subr.mxu0 0.0
        %5946 = vmatpush1.xpose.msra.mxu0 0.0
        %5947 = vmatprep.subr.mxu0 0.0
        %5948 = vmatpush1.xpose.msra.mxu0 0.0
        %5949 = vmatprep.subr.mxu0 0.0
        %5950 = vmatpush1.xpose.msra.mxu0 0.0
        %5951 = vmatprep.subr.mxu0 0.0
        %5952 = vmatpush1.xpose.msra.mxu0 0.0
        %5953 = vmatprep.mubr.f32.mxu0 0.0
        %5954 = vmatmul.mubr.f32.gmra.mrb[0].mxu0 %v5885
        %v5955 = vpop.f32.mrb[0].mxu0
        %v5956 = vadd.f32 0.0, %v5955
        %v5957 = vpop.f32.mrb[0].mxu0
        %5958 = vdwg.mxu0
        %v5959 = vsel %vm1467, %v5956, -inf
        %5960 = vmax.xlane.f32.xlu0 %v5959
        %v5961 = vpop.xlane.xlu0 %5960
        %v5962 = vsub.f32 %v5956, %v5961
        %v5963 = vmul.f32 %v5962, 1.442695
        %v5964 = vpow.pop %v5963
        %v5965 = vsel %vm1467, %v5964, 0.0
        %5966 = vadd.xlane.f32.xlu0 %v5965
        %v5967 = vpop.xlane.xlu0 %5966
        %v5968 = vrcp.pop %v5967
        %v5969 = vmul.f32 %v5964, %v5968
        %5970 = vrot.lane.b32.xlu0 %v5406, 112
        %v5971 = vpop.permute.xlu0 %5970
        %v5974 = vsel %vm1467, %v5969, 0
        %5976 = vmatprep.subr.mxu0 0.0
        %5977 = vmatpush1.msra.mxu0 %v5971
        %5978 = vmatprep.subr.mxu0 0.0
        %5979 = vmatpush1.msra.mxu0 0.0
        %5980 = vmatprep.subr.mxu0 0.0
        %5981 = vmatpush1.msra.mxu0 0.0
        %5982 = vmatprep.subr.mxu0 0.0
        %5983 = vmatpush1.msra.mxu0 0.0
        %5984 = vmatprep.subr.mxu0 0.0
        %5985 = vmatpush1.msra.mxu0 0.0
        %5986 = vmatprep.subr.mxu0 0.0
        %5987 = vmatpush1.msra.mxu0 0.0
        %5988 = vmatprep.subr.mxu0 0.0
        %5989 = vmatpush1.msra.mxu0 0.0
        %5990 = vmatprep.subr.mxu0 0.0
        %5991 = vmatpush1.msra.mxu0 0.0
        %5992 = vmatprep.subr.mxu0 0.0
        %5993 = vmatpush1.msra.mxu0 0.0
        %5994 = vmatprep.subr.mxu0 0.0
        %5995 = vmatpush1.msra.mxu0 0.0
        %5996 = vmatprep.subr.mxu0 0.0
        %5997 = vmatpush1.msra.mxu0 0.0
        %5998 = vmatprep.subr.mxu0 0.0
        %5999 = vmatpush1.msra.mxu0 0.0
        %6000 = vmatprep.subr.mxu0 0.0
        %6001 = vmatpush1.msra.mxu0 0.0
        %6002 = vmatprep.subr.mxu0 0.0
        %6003 = vmatpush1.msra.mxu0 0.0
        %6004 = vmatprep.subr.mxu0 0.0
        %6005 = vmatpush1.msra.mxu0 0.0
        %6006 = vmatprep.subr.mxu0 0.0
        %6007 = vmatpush1.msra.mxu0 0.0
        %6008 = vmatprep.subr.mxu0 0.0
        %6009 = vmatpush1.msra.mxu0 0.0
        %6010 = vmatprep.subr.mxu0 0.0
        %6011 = vmatpush1.msra.mxu0 0.0
        %6012 = vmatprep.subr.mxu0 0.0
        %6013 = vmatpush1.msra.mxu0 0.0
        %6014 = vmatprep.subr.mxu0 0.0
        %6015 = vmatpush1.msra.mxu0 0.0
        %6016 = vmatprep.subr.mxu0 0.0
        %6017 = vmatpush1.msra.mxu0 0.0
        %6018 = vmatprep.subr.mxu0 0.0
        %6019 = vmatpush1.msra.mxu0 0.0
        %6020 = vmatprep.subr.mxu0 0.0
        %6021 = vmatpush1.msra.mxu0 0.0
        %6022 = vmatprep.subr.mxu0 0.0
        %6023 = vmatpush1.msra.mxu0 0.0
        %6024 = vmatprep.subr.mxu0 0.0
        %6025 = vmatpush1.msra.mxu0 0.0
        %6026 = vmatprep.subr.mxu0 0.0
        %6027 = vmatpush1.msra.mxu0 0.0
        %6028 = vmatprep.subr.mxu0 0.0
        %6029 = vmatpush1.msra.mxu0 0.0
        %6030 = vmatprep.subr.mxu0 0.0
        %6031 = vmatpush1.msra.mxu0 0.0
        %6032 = vmatprep.subr.mxu0 0.0
        %6033 = vmatpush1.msra.mxu0 0.0
        %6034 = vmatprep.subr.mxu0 0.0
        %6035 = vmatpush1.msra.mxu0 0.0
        %6036 = vmatprep.subr.mxu0 0.0
        %6037 = vmatpush1.msra.mxu0 0.0
        %6038 = vmatprep.subr.mxu0 0.0
        %6039 = vmatpush1.msra.mxu0 0.0
        %6040 = vmatprep.mubr.f32.mxu0 0.0
        %6041 = vmatmul.mubr.f32.gmra.mrb[0].mxu0 %v5974
        %v6042 = vpop.f32.mrb[0].mxu0
        %v6043 = vadd.f32 0.0, %v6042
        %v6044 = vpop.f32.mrb[0].mxu0
        %6045 = vdwg.mxu0
        %v6047 = vsel %vm1467, %v6043, 0
        %6049 = vmatprep.subr.mxu0 0.0
        %6050 = vmatpush1.msra.mxu0 %v5174
        %6051 = vmatprep.subr.mxu0 0.0
        %6052 = vmatpush1.msra.mxu0 0.0
        %6053 = vmatprep.subr.mxu0 0.0
        %6054 = vmatpush1.msra.mxu0 0.0
        %6055 = vmatprep.subr.mxu0 0.0
        %6056 = vmatpush1.msra.mxu0 0.0
        %6057 = vmatprep.subr.mxu0 0.0
        %6058 = vmatpush1.msra.mxu0 0.0
        %6059 = vmatprep.subr.mxu0 0.0
        %6060 = vmatpush1.msra.mxu0 0.0
        %6061 = vmatprep.subr.mxu0 0.0
        %6062 = vmatpush1.msra.mxu0 0.0
        %6063 = vmatprep.subr.mxu0 0.0
        %6064 = vmatpush1.msra.mxu0 0.0
        %6065 = vmatprep.subr.mxu0 0.0
        %6066 = vmatpush1.msra.mxu0 0.0
        %6067 = vmatprep.subr.mxu0 0.0
        %6068 = vmatpush1.msra.mxu0 0.0
        %6069 = vmatprep.subr.mxu0 0.0
        %6070 = vmatpush1.msra.mxu0 0.0
        %6071 = vmatprep.subr.mxu0 0.0
        %6072 = vmatpush1.msra.mxu0 0.0
        %6073 = vmatprep.subr.mxu0 0.0
        %6074 = vmatpush1.msra.mxu0 0.0
        %6075 = vmatprep.subr.mxu0 0.0
        %6076 = vmatpush1.msra.mxu0 0.0
        %6077 = vmatprep.subr.mxu0 0.0
        %6078 = vmatpush1.msra.mxu0 0.0
        %6079 = vmatprep.subr.mxu0 0.0
        %6080 = vmatpush1.msra.mxu0 0.0
        %6081 = vmatprep.subr.mxu0 0.0
        %6082 = vmatpush1.msra.mxu0 0.0
        %6083 = vmatprep.subr.mxu0 0.0
        %6084 = vmatpush1.msra.mxu0 0.0
        %6085 = vmatprep.subr.mxu0 0.0
        %6086 = vmatpush1.msra.mxu0 0.0
        %6087 = vmatprep.subr.mxu0 0.0
        %6088 = vmatpush1.msra.mxu0 0.0
        %6089 = vmatprep.subr.mxu0 0.0
        %6090 = vmatpush1.msra.mxu0 0.0
        %6091 = vmatprep.subr.mxu0 0.0
        %6092 = vmatpush1.msra.mxu0 0.0
        %6093 = vmatprep.subr.mxu0 0.0
        %6094 = vmatpush1.msra.mxu0 0.0
        %6095 = vmatprep.subr.mxu0 0.0
        %6096 = vmatpush1.msra.mxu0 0.0
        %6097 = vmatprep.subr.mxu0 0.0
        %6098 = vmatpush1.msra.mxu0 0.0
        %6099 = vmatprep.subr.mxu0 0.0
        %6100 = vmatpush1.msra.mxu0 0.0
        %6101 = vmatprep.subr.mxu0 0.0
        %6102 = vmatpush1.msra.mxu0 0.0
        %6103 = vmatprep.subr.mxu0 0.0
        %6104 = vmatpush1.msra.mxu0 0.0
        %6105 = vmatprep.subr.mxu0 0.0
        %6106 = vmatpush1.msra.mxu0 0.0
        %6107 = vmatprep.subr.mxu0 0.0
        %6108 = vmatpush1.msra.mxu0 0.0
        %6109 = vmatprep.subr.mxu0 0.0
        %6110 = vmatpush1.msra.mxu0 0.0
        %6111 = vmatprep.subr.mxu0 0.0
        %6112 = vmatpush1.msra.mxu0 0.0
        %6113 = vmatprep.mubr.f32.mxu0 0.0
        %6114 = vmatmul.mubr.f32.gmra.mrb[0].mxu0 %v6047
        %v6115 = vpop.f32.mrb[0].mxu0
        %v6116 = vadd.f32 0.0, %v6115
        %v6117 = vpop.f32.mrb[0].mxu0
        %6118 = vdwg.mxu0
        %v6119 = vadd.f32 %v5878, %v6116
        %6120 = vrot.lane.b32.xlu0 %v5254, 104
        %v6121 = vpop.permute.xlu0 %6120
        %6122 = vrot.lane.b32.xlu0 %v5330, 104
        %v6123 = vpop.permute.xlu0 %6122
        %v6124 = vsel %vm1467, %v6121, 0
        %v6126 = vsel %vm1467, %v6123, 0
        %6128 = vmatprep.subr.mxu0 0.0
        %6129 = vmatpush1.xpose.msra.mxu0 %v6126
        %6130 = vmatprep.subr.mxu0 0.0
        %6131 = vmatpush1.xpose.msra.mxu0 0.0
        %6132 = vmatprep.subr.mxu0 0.0
        %6133 = vmatpush1.xpose.msra.mxu0 0.0
        %6134 = vmatprep.subr.mxu0 0.0
        %6135 = vmatpush1.xpose.msra.mxu0 0.0
        %6136 = vmatprep.subr.mxu0 0.0
        %6137 = vmatpush1.xpose.msra.mxu0 0.0
        %6138 = vmatprep.subr.mxu0 0.0
        %6139 = vmatpush1.xpose.msra.mxu0 0.0
        %6140 = vmatprep.subr.mxu0 0.0
        %6141 = vmatpush1.xpose.msra.mxu0 0.0
        %6142 = vmatprep.subr.mxu0 0.0
        %6143 = vmatpush1.xpose.msra.mxu0 0.0
        %6144 = vmatprep.subr.mxu0 0.0
        %6145 = vmatpush1.xpose.msra.mxu0 0.0
        %6146 = vmatprep.subr.mxu0 0.0
        %6147 = vmatpush1.xpose.msra.mxu0 0.0
        %6148 = vmatprep.subr.mxu0 0.0
        %6149 = vmatpush1.xpose.msra.mxu0 0.0
        %6150 = vmatprep.subr.mxu0 0.0
        %6151 = vmatpush1.xpose.msra.mxu0 0.0
        %6152 = vmatprep.subr.mxu0 0.0
        %6153 = vmatpush1.xpose.msra.mxu0 0.0
        %6154 = vmatprep.subr.mxu0 0.0
        %6155 = vmatpush1.xpose.msra.mxu0 0.0
        %6156 = vmatprep.subr.mxu0 0.0
        %6157 = vmatpush1.xpose.msra.mxu0 0.0
        %6158 = vmatprep.subr.mxu0 0.0
        %6159 = vmatpush1.xpose.msra.mxu0 0.0
        %6160 = vmatprep.subr.mxu0 0.0
        %6161 = vmatpush1.xpose.msra.mxu0 0.0
        %6162 = vmatprep.subr.mxu0 0.0
        %6163 = vmatpush1.xpose.msra.mxu0 0.0
        %6164 = vmatprep.subr.mxu0 0.0
        %6165 = vmatpush1.xpose.msra.mxu0 0.0
        %6166 = vmatprep.subr.mxu0 0.0
        %6167 = vmatpush1.xpose.msra.mxu0 0.0
        %6168 = vmatprep.subr.mxu0 0.0
        %6169 = vmatpush1.xpose.msra.mxu0 0.0
        %6170 = vmatprep.subr.mxu0 0.0
        %6171 = vmatpush1.xpose.msra.mxu0 0.0
        %6172 = vmatprep.subr.mxu0 0.0
        %6173 = vmatpush1.xpose.msra.mxu0 0.0
        %6174 = vmatprep.subr.mxu0 0.0
        %6175 = vmatpush1.xpose.msra.mxu0 0.0
        %6176 = vmatprep.subr.mxu0 0.0
        %6177 = vmatpush1.xpose.msra.mxu0 0.0
        %6178 = vmatprep.subr.mxu0 0.0
        %6179 = vmatpush1.xpose.msra.mxu0 0.0
        %6180 = vmatprep.subr.mxu0 0.0
        %6181 = vmatpush1.xpose.msra.mxu0 0.0
        %6182 = vmatprep.subr.mxu0 0.0
        %6183 = vmatpush1.xpose.msra.mxu0 0.0
        %6184 = vmatprep.subr.mxu0 0.0
        %6185 = vmatpush1.xpose.msra.mxu0 0.0
        %6186 = vmatprep.subr.mxu0 0.0
        %6187 = vmatpush1.xpose.msra.mxu0 0.0
        %6188 = vmatprep.subr.mxu0 0.0
        %6189 = vmatpush1.xpose.msra.mxu0 0.0
        %6190 = vmatprep.subr.mxu0 0.0
        %6191 = vmatpush1.xpose.msra.mxu0 0.0
        %6192 = vmatprep.mubr.f32.mxu0 0.0
        %6193 = vmatmul.mubr.f32.gmra.mrb[0].mxu0 %v6124
        %v6194 = vpop.f32.mrb[0].mxu0
        %v6195 = vadd.f32 0.0, %v6194
        %v6196 = vpop.f32.mrb[0].mxu0
        %6197 = vdwg.mxu0
        %v6198 = vsel %vm1467, %v6195, -inf
        %6199 = vmax.xlane.f32.xlu0 %v6198
        %v6200 = vpop.xlane.xlu0 %6199
        %v6201 = vsub.f32 %v6195, %v6200
        %v6202 = vmul.f32 %v6201, 1.442695
        %v6203 = vpow.pop %v6202
        %v6204 = vsel %vm1467, %v6203, 0.0
        %6205 = vadd.xlane.f32.xlu0 %v6204
        %v6206 = vpop.xlane.xlu0 %6205
        %v6207 = vrcp.pop %v6206
        %v6208 = vmul.f32 %v6203, %v6207
        %6209 = vrot.lane.b32.xlu0 %v5406, 104
        %v6210 = vpop.permute.xlu0 %6209
        %v6213 = vsel %vm1467, %v6208, 0
        %6215 = vmatprep.subr.mxu0 0.0
        %6216 = vmatpush1.msra.mxu0 %v6210
        %6217 = vmatprep.subr.mxu0 0.0
        %6218 = vmatpush1.msra.mxu0 0.0
        %6219 = vmatprep.subr.mxu0 0.0
        %6220 = vmatpush1.msra.mxu0 0.0
        %6221 = vmatprep.subr.mxu0 0.0
        %6222 = vmatpush1.msra.mxu0 0.0
        %6223 = vmatprep.subr.mxu0 0.0
        %6224 = vmatpush1.msra.mxu0 0.0
        %6225 = vmatprep.subr.mxu0 0.0
        %6226 = vmatpush1.msra.mxu0 0.0
        %6227 = vmatprep.subr.mxu0 0.0
        %6228 = vmatpush1.msra.mxu0 0.0
        %6229 = vmatprep.subr.mxu0 0.0
        %6230 = vmatpush1.msra.mxu0 0.0
        %6231 = vmatprep.subr.mxu0 0.0
        %6232 = vmatpush1.msra.mxu0 0.0
        %6233 = vmatprep.subr.mxu0 0.0
        %6234 = vmatpush1.msra.mxu0 0.0
        %6235 = vmatprep.subr.mxu0 0.0
        %6236 = vmatpush1.msra.mxu0 0.0
        %6237 = vmatprep.subr.mxu0 0.0
        %6238 = vmatpush1.msra.mxu0 0.0
        %6239 = vmatprep.subr.mxu0 0.0
        %6240 = vmatpush1.msra.mxu0 0.0
        %6241 = vmatprep.subr.mxu0 0.0
        %6242 = vmatpush1.msra.mxu0 0.0
        %6243 = vmatprep.subr.mxu0 0.0
        %6244 = vmatpush1.msra.mxu0 0.0
        %6245 = vmatprep.subr.mxu0 0.0
        %6246 = vmatpush1.msra.mxu0 0.0
        %6247 = vmatprep.subr.mxu0 0.0
        %6248 = vmatpush1.msra.mxu0 0.0
        %6249 = vmatprep.subr.mxu0 0.0
        %6250 = vmatpush1.msra.mxu0 0.0
        %6251 = vmatprep.subr.mxu0 0.0
        %6252 = vmatpush1.msra.mxu0 0.0
        %6253 = vmatprep.subr.mxu0 0.0
        %6254 = vmatpush1.msra.mxu0 0.0
        %6255 = vmatprep.subr.mxu0 0.0
        %6256 = vmatpush1.msra.mxu0 0.0
        %6257 = vmatprep.subr.mxu0 0.0
        %6258 = vmatpush1.msra.mxu0 0.0
        %6259 = vmatprep.subr.mxu0 0.0
        %6260 = vmatpush1.msra.mxu0 0.0
        %6261 = vmatprep.subr.mxu0 0.0
        %6262 = vmatpush1.msra.mxu0 0.0
        %6263 = vmatprep.subr.mxu0 0.0
        %6264 = vmatpush1.msra.mxu0 0.0
        %6265 = vmatprep.subr.mxu0 0.0
        %6266 = vmatpush1.msra.mxu0 0.0
        %6267 = vmatprep.subr.mxu0 0.0
        %6268 = vmatpush1.msra.mxu0 0.0
        %6269 = vmatprep.subr.mxu0 0.0
        %6270 = vmatpush1.msra.mxu0 0.0
        %6271 = vmatprep.subr.mxu0 0.0
        %6272 = vmatpush1.msra.mxu0 0.0
        %6273 = vmatprep.subr.mxu0 0.0
        %6274 = vmatpush1.msra.mxu0 0.0
        %6275 = vmatprep.subr.mxu0 0.0
        %6276 = vmatpush1.msra.mxu0 0.0
        %6277 = vmatprep.subr.mxu0 0.0
        %6278 = vmatpush1.msra.mxu0 0.0
        %6279 = vmatprep.mubr.f32.mxu0 0.0
        %6280 = vmatmul.mubr.f32.gmra.mrb[0].mxu0 %v6213
        %v6281 = vpop.f32.mrb[0].mxu0
        %v6282 = vadd.f32 0.0, %v6281
        %v6283 = vpop.f32.mrb[0].mxu0
        %6284 = vdwg.mxu0
        %v6286 = vsel %vm1467, %v6282, 0
        %6288 = vmatprep.subr.mxu0 0.0
        %6289 = vmatpush1.msra.mxu0 %v5175
        %6290 = vmatprep.subr.mxu0 0.0
        %6291 = vmatpush1.msra.mxu0 0.0
        %6292 = vmatprep.subr.mxu0 0.0
        %6293 = vmatpush1.msra.mxu0 0.0
        %6294 = vmatprep.subr.mxu0 0.0
        %6295 = vmatpush1.msra.mxu0 0.0
        %6296 = vmatprep.subr.mxu0 0.0
        %6297 = vmatpush1.msra.mxu0 0.0
        %6298 = vmatprep.subr.mxu0 0.0
        %6299 = vmatpush1.msra.mxu0 0.0
        %6300 = vmatprep.subr.mxu0 0.0
        %6301 = vmatpush1.msra.mxu0 0.0
        %6302 = vmatprep.subr.mxu0 0.0
        %6303 = vmatpush1.msra.mxu0 0.0
        %6304 = vmatprep.subr.mxu0 0.0
        %6305 = vmatpush1.msra.mxu0 0.0
        %6306 = vmatprep.subr.mxu0 0.0
        %6307 = vmatpush1.msra.mxu0 0.0
        %6308 = vmatprep.subr.mxu0 0.0
        %6309 = vmatpush1.msra.mxu0 0.0
        %6310 = vmatprep.subr.mxu0 0.0
        %6311 = vmatpush1.msra.mxu0 0.0
        %6312 = vmatprep.subr.mxu0 0.0
        %6313 = vmatpush1.msra.mxu0 0.0
        %6314 = vmatprep.subr.mxu0 0.0
        %6315 = vmatpush1.msra.mxu0 0.0
        %6316 = vmatprep.subr.mxu0 0.0
        %6317 = vmatpush1.msra.mxu0 0.0
        %6318 = vmatprep.subr.mxu0 0.0
        %6319 = vmatpush1.msra.mxu0 0.0
        %6320 = vmatprep.subr.mxu0 0.0
        %6321 = vmatpush1.msra.mxu0 0.0
        %6322 = vmatprep.subr.mxu0 0.0
        %6323 = vmatpush1.msra.mxu0 0.0
        %6324 = vmatprep.subr.mxu0 0.0
        %6325 = vmatpush1.msra.mxu0 0.0
        %6326 = vmatprep.subr.mxu0 0.0
        %6327 = vmatpush1.msra.mxu0 0.0
        %6328 = vmatprep.subr.mxu0 0.0
        %6329 = vmatpush1.msra.mxu0 0.0
        %6330 = vmatprep.subr.mxu0 0.0
        %6331 = vmatpush1.msra.mxu0 0.0
        %6332 = vmatprep.subr.mxu0 0.0
        %6333 = vmatpush1.msra.mxu0 0.0
        %6334 = vmatprep.subr.mxu0 0.0
        %6335 = vmatpush1.msra.mxu0 0.0
        %6336 = vmatprep.subr.mxu0 0.0
        %6337 = vmatpush1.msra.mxu0 0.0
        %6338 = vmatprep.subr.mxu0 0.0
        %6339 = vmatpush1.msra.mxu0 0.0
        %6340 = vmatprep.subr.mxu0 0.0
        %6341 = vmatpush1.msra.mxu0 0.0
        %6342 = vmatprep.subr.mxu0 0.0
        %6343 = vmatpush1.msra.mxu0 0.0
        %6344 = vmatprep.subr.mxu0 0.0
        %6345 = vmatpush1.msra.mxu0 0.0
        %6346 = vmatprep.subr.mxu0 0.0
        %6347 = vmatpush1.msra.mxu0 0.0
        %6348 = vmatprep.subr.mxu0 0.0
        %6349 = vmatpush1.msra.mxu0 0.0
        %6350 = vmatprep.subr.mxu0 0.0
        %6351 = vmatpush1.msra.mxu0 0.0
        %6352 = vmatprep.mubr.f32.mxu0 0.0
        %6353 = vmatmul.mubr.f32.gmra.mrb[0].mxu0 %v6286
        %v6354 = vpop.f32.mrb[0].mxu0
        %v6355 = vadd.f32 0.0, %v6354
        %v6356 = vpop.f32.mrb[0].mxu0
        %6357 = vdwg.mxu0
        %v6358 = vadd.f32 %v6119, %v6355
        %v6359 = vadd.f32 %v5149, %v6358
        %v6361 = vlaneseq
        %v6362 = vshrl.u32 %v6361, 7
        %v6363 = vsub.s32 0, %v6362
        %v6364 = vrot.slane %v5177, %v6363
        %v6366 = vadd.f32 %v6359, %v6364
        %s6367 = scalar_lea.vmem [#allocation19], 1
        %v6368 = vld [vmem:[%s6367] sm:$0x1]
        %s6369 = scalar_lea.vmem [#allocation20], 1
        %v6370 = vld [vmem:[%s6369] sm:$0x1]
        %v6371 = vsel %vm1241, %v6366, 0.0
        %6372 = vadd.xlane.f32.xlu0 %v6371
        %v6373 = vpop.xlane.xlu0 %6372
        %v6374 = vmul.f32 %v6373, %v2431
        %v6375 = vsub.f32 %v6366, %v6374
        %v6376 = vmul.f32 %v6375, %v6375
        %v6377 = vsel %vm1241, %v6376, 0.0
        %6378 = vadd.xlane.f32.xlu0 %v6377
        %v6379 = vpop.xlane.xlu0 %6378
        %v6380 = vmul.f32 %v6379, %v2431
        %v6381 = vadd.f32 %v6380, 1e-05
        %v6382 = vrsqrt.pop %v6381
        %v6383 = vmul.f32 %v6375, %v6382
        %v6385 = vlaneseq
        %v6386 = vshrl.u32 %v6385, 7
        %v6387 = vsub.s32 0, %v6386
        %v6388 = vrot.slane %v6368, %v6387
        %v6390 = vmul.f32 %v6383, %v6388
        %v6392 = vlaneseq
        %v6393 = vshrl.u32 %v6392, 7
        %v6394 = vsub.s32 0, %v6393
        %v6395 = vrot.slane %v6370, %v6394
        %v6397 = vadd.f32 %v6390, %v6395
        %s6398 = scalar_lea.vmem [#allocation22], 32
        %v6399 = vld [vmem:[%s6398] sm:$0xff]
        %v6400 = vld [vmem:[%s6398 + $0x8] sm:$0xff]
        %v6401 = vld [vmem:[%s6398 + $0x10] sm:$0xff]
        %v6402 = vld [vmem:[%s6398 + $0x18] sm:$0xff]
        %s6403 = scalar_lea.vmem %s49, 64
        %v6404 = vld [vmem:[%s6403] sm:$0xff]
        %v6405 = vld [vmem:[%s6403 + $0x8] sm:$0xff]
        %v6406 = vld [vmem:[%s6403 + $0x10] sm:$0xff]
        %v6407 = vld [vmem:[%s6403 + $0x18] sm:$0xff]
        %v6408 = vld [vmem:[%s6403 + $0x20] sm:$0xff]
        %v6409 = vld [vmem:[%s6403 + $0x28] sm:$0xff]
        %v6410 = vld [vmem:[%s6403 + $0x30] sm:$0xff]
        %v6411 = vld [vmem:[%s6403 + $0x38] sm:$0xff]
        %s6412 = scalar_lea.vmem [#allocation23], 1
        %v6413 = vld [vmem:[%s6412] sm:$0x1]
        %v6415 = vlaneseq
        %v6416 = vshrl.u32 %v6415, 7
        %v6417 = vsub.s32 0, %v6416
        %v6418 = vrot.slane %v6413, %v6417
        %v6421 = vsel %vm1241, %v6397, 0
        %6423 = vmatprep.subr.mxu0 0.0
        %6424 = vmatpush1.msra.mxu0 %v6399
        %6425 = vmatprep.subr.mxu0 0.0
        %6426 = vmatpush1.msra.mxu0 %v6400
        %6427 = vmatprep.subr.mxu0 0.0
        %6428 = vmatpush1.msra.mxu0 %v6401
        %6429 = vmatprep.subr.mxu0 0.0
        %6430 = vmatpush1.msra.mxu0 %v6402
        %6431 = vmatprep.subr.mxu0 0.0
        %6432 = vmatpush1.msra.mxu0 0.0
        %6433 = vmatprep.subr.mxu0 0.0
        %6434 = vmatpush1.msra.mxu0 0.0
        %6435 = vmatprep.subr.mxu0 0.0
        %6436 = vmatpush1.msra.mxu0 0.0
        %6437 = vmatprep.subr.mxu0 0.0
        %6438 = vmatpush1.msra.mxu0 0.0
        %6439 = vmatprep.subr.mxu0 0.0
        %6440 = vmatpush1.msra.mxu0 0.0
        %6441 = vmatprep.subr.mxu0 0.0
        %6442 = vmatpush1.msra.mxu0 0.0
        %6443 = vmatprep.subr.mxu0 0.0
        %6444 = vmatpush1.msra.mxu0 0.0
        %6445 = vmatprep.subr.mxu0 0.0
        %6446 = vmatpush1.msra.mxu0 0.0
        %6447 = vmatprep.subr.mxu0 0.0
        %6448 = vmatpush1.msra.mxu0 0.0
        %6449 = vmatprep.subr.mxu0 0.0
        %6450 = vmatpush1.msra.mxu0 0.0
        %6451 = vmatprep.subr.mxu0 0.0
        %6452 = vmatpush1.msra.mxu0 0.0
        %6453 = vmatprep.subr.mxu0 0.0
        %6454 = vmatpush1.msra.mxu0 0.0
        %6455 = vmatprep.subr.mxu0 0.0
        %6456 = vmatpush1.msra.mxu0 0.0
        %6457 = vmatprep.subr.mxu0 0.0
        %6458 = vmatpush1.msra.mxu0 0.0
        %6459 = vmatprep.subr.mxu0 0.0
        %6460 = vmatpush1.msra.mxu0 0.0
        %6461 = vmatprep.subr.mxu0 0.0
        %6462 = vmatpush1.msra.mxu0 0.0
        %6463 = vmatprep.subr.mxu0 0.0
        %6464 = vmatpush1.msra.mxu0 0.0
        %6465 = vmatprep.subr.mxu0 0.0
        %6466 = vmatpush1.msra.mxu0 0.0
        %6467 = vmatprep.subr.mxu0 0.0
        %6468 = vmatpush1.msra.mxu0 0.0
        %6469 = vmatprep.subr.mxu0 0.0
        %6470 = vmatpush1.msra.mxu0 0.0
        %6471 = vmatprep.subr.mxu0 0.0
        %6472 = vmatpush1.msra.mxu0 0.0
        %6473 = vmatprep.subr.mxu0 0.0
        %6474 = vmatpush1.msra.mxu0 0.0
        %6475 = vmatprep.subr.mxu0 0.0
        %6476 = vmatpush1.msra.mxu0 0.0
        %6477 = vmatprep.subr.mxu0 0.0
        %6478 = vmatpush1.msra.mxu0 0.0
        %6479 = vmatprep.subr.mxu0 0.0
        %6480 = vmatpush1.msra.mxu0 0.0
        %6481 = vmatprep.subr.mxu0 0.0
        %6482 = vmatpush1.msra.mxu0 0.0
        %6483 = vmatprep.subr.mxu0 0.0
        %6484 = vmatpush1.msra.mxu0 0.0
        %6485 = vmatprep.subr.mxu0 0.0
        %6486 = vmatpush1.msra.mxu0 0.0
        %6487 = vmatprep.mubr.f32.mxu0 0.0
        %6488 = vmatmul.mubr.f32.gmra.mrb[0].mxu0 %v6421
        %v6489 = vpop.f32.mrb[0].mxu0
        %v6490 = vadd.f32 %v6418, %v6489
        %v6491 = vpop.f32.mrb[0].mxu0
        %6492 = vdwg.mxu0
        %v6493 = vmax.f32 %v6490, 0.0
        %v6495 = vsel %vm3790, %v6493, 0
        %6497 = vmatprep.subr.mxu0 0.0
        %6498 = vmatpush1.msra.mxu0 %v6404
        %6499 = vmatprep.subr.mxu0 0.0
        %6500 = vmatpush1.msra.mxu0 %v6405
        %6501 = vmatprep.subr.mxu0 0.0
        %6502 = vmatpush1.msra.mxu0 %v6406
        %6503 = vmatprep.subr.mxu0 0.0
        %6504 = vmatpush1.msra.mxu0 %v6407
        %6505 = vmatprep.subr.mxu0 0.0
        %6506 = vmatpush1.msra.mxu0 %v6408
        %6507 = vmatprep.subr.mxu0 0.0
        %6508 = vmatpush1.msra.mxu0 %v6409
        %6509 = vmatprep.subr.mxu0 0.0
        %6510 = vmatpush1.msra.mxu0 %v6410
        %6511 = vmatprep.subr.mxu0 0.0
        %6512 = vmatpush1.msra.mxu0 %v6411
        %6513 = vmatprep.subr.mxu0 0.0
        %6514 = vmatpush1.msra.mxu0 0.0
        %6515 = vmatprep.subr.mxu0 0.0
        %6516 = vmatpush1.msra.mxu0 0.0
        %6517 = vmatprep.subr.mxu0 0.0
        %6518 = vmatpush1.msra.mxu0 0.0
        %6519 = vmatprep.subr.mxu0 0.0
        %6520 = vmatpush1.msra.mxu0 0.0
        %6521 = vmatprep.subr.mxu0 0.0
        %6522 = vmatpush1.msra.mxu0 0.0
        %6523 = vmatprep.subr.mxu0 0.0
        %6524 = vmatpush1.msra.mxu0 0.0
        %6525 = vmatprep.subr.mxu0 0.0
        %6526 = vmatpush1.msra.mxu0 0.0
        %6527 = vmatprep.subr.mxu0 0.0
        %6528 = vmatpush1.msra.mxu0 0.0
        %6529 = vmatprep.subr.mxu0 0.0
        %6530 = vmatpush1.msra.mxu0 0.0
        %6531 = vmatprep.subr.mxu0 0.0
        %6532 = vmatpush1.msra.mxu0 0.0
        %6533 = vmatprep.subr.mxu0 0.0
        %6534 = vmatpush1.msra.mxu0 0.0
        %6535 = vmatprep.subr.mxu0 0.0
        %6536 = vmatpush1.msra.mxu0 0.0
        %6537 = vmatprep.subr.mxu0 0.0
        %6538 = vmatpush1.msra.mxu0 0.0
        %6539 = vmatprep.subr.mxu0 0.0
        %6540 = vmatpush1.msra.mxu0 0.0
        %6541 = vmatprep.subr.mxu0 0.0
        %6542 = vmatpush1.msra.mxu0 0.0
        %6543 = vmatprep.subr.mxu0 0.0
        %6544 = vmatpush1.msra.mxu0 0.0
        %6545 = vmatprep.subr.mxu0 0.0
        %6546 = vmatpush1.msra.mxu0 0.0
        %6547 = vmatprep.subr.mxu0 0.0
        %6548 = vmatpush1.msra.mxu0 0.0
        %6549 = vmatprep.subr.mxu0 0.0
        %6550 = vmatpush1.msra.mxu0 0.0
        %6551 = vmatprep.subr.mxu0 0.0
        %6552 = vmatpush1.msra.mxu0 0.0
        %6553 = vmatprep.subr.mxu0 0.0
        %6554 = vmatpush1.msra.mxu0 0.0
        %6555 = vmatprep.subr.mxu0 0.0
        %6556 = vmatpush1.msra.mxu0 0.0
        %6557 = vmatprep.subr.mxu0 0.0
        %6558 = vmatpush1.msra.mxu0 0.0
        %6559 = vmatprep.subr.mxu0 0.0
        %6560 = vmatpush1.msra.mxu0 0.0
        %6561 = vmatprep.mubr.f32.mxu0 0.0
        %6562 = vmatmul.mubr.f32.gmra.mrb[0].mxu0 %v6495
        %v6563 = vpop.f32.mrb[0].mxu0
        %v6564 = vadd.f32 0.0, %v6563
        %v6565 = vpop.f32.mrb[0].mxu0
        %6566 = vdwg.mxu0
        %v6567 = vadd.f32 %v6397, %v6564
        %s6568 = scalar_lea.vmem [#allocation25], 1
        %v6569 = vld [vmem:[%s6568] sm:$0x1]
        %v6571 = vlaneseq
        %v6572 = vshrl.u32 %v6571, 7
        %v6573 = vsub.s32 0, %v6572
        %v6574 = vrot.slane %v6569, %v6573
        %v6576 = vadd.f32 %v6567, %v6574
        %s6577 = scalar_lea.vmem [#allocation26], 1
        %v6578 = vld [vmem:[%s6577] sm:$0x1]
        %s6579 = scalar_lea.vmem [#allocation28], 1
        %v6580 = vld [vmem:[%s6579] sm:$0x1]
        %v6581 = vsel %vm1241, %v6576, 0.0
        %6582 = vadd.xlane.f32.xlu0 %v6581
        %v6583 = vpop.xlane.xlu0 %6582
        %v6584 = vmul.f32 %v6583, %v2431
        %v6585 = vsub.f32 %v6576, %v6584
        %v6586 = vmul.f32 %v6585, %v6585
        %v6587 = vsel %vm1241, %v6586, 0.0
        %6588 = vadd.xlane.f32.xlu0 %v6587
        %v6589 = vpop.xlane.xlu0 %6588
        %v6590 = vmul.f32 %v6589, %v2431
        %v6591 = vadd.f32 %v6590, 1e-05
        %v6592 = vrsqrt.pop %v6591
        %v6593 = vmul.f32 %v6585, %v6592
        %v6595 = vlaneseq
        %v6596 = vshrl.u32 %v6595, 7
        %v6597 = vsub.s32 0, %v6596
        %v6598 = vrot.slane %v6578, %v6597
        %v6600 = vmul.f32 %v6593, %v6598
        %v6602 = vlaneseq
        %v6603 = vshrl.u32 %v6602, 7
        %v6604 = vsub.s32 0, %v6603
        %v6605 = vrot.slane %v6580, %v6604
        %v6607 = vadd.f32 %v6600, %v6605
        %v6608 = vld [vmem:[%s57] sm:$0x1]
        %v6609 = vld [vmem:[#allocation29] sm:$0x1]
        %v6610 = vsel %vm1241, %v6607, 0.0
        %6611 = vadd.xlane.f32.xlu0 %v6610
        %v6612 = vpop.xlane.xlu0 %6611
        %v6613 = vmul.f32 %v6612, %v2431
        %v6614 = vsub.f32 %v6607, %v6613
        %v6615 = vmul.f32 %v6614, %v6614
        %v6616 = vsel %vm1241, %v6615, 0.0
        %6617 = vadd.xlane.f32.xlu0 %v6616
        %v6618 = vpop.xlane.xlu0 %6617
        %v6619 = vmul.f32 %v6618, %v2431
        %v6620 = vadd.f32 %v6619, 1e-05
        %v6621 = vrsqrt.pop %v6620
        %v6622 = vmul.f32 %v6614, %v6621
        %v6624 = vlaneseq
        %v6625 = vshrl.u32 %v6624, 7
        %v6626 = vsub.s32 0, %v6625
        %v6627 = vrot.slane %v6608, %v6626
        %v6629 = vmul.f32 %v6622, %v6627
        %v6631 = vlaneseq
        %v6632 = vshrl.u32 %v6631, 7
        %v6633 = vsub.s32 0, %v6632
        %v6634 = vrot.slane %v6609, %v6633
        %v6636 = vadd.f32 %v6629, %v6634
        %6637 = vst.msk [vmem:[%s1212] sm:$0xff] %vm1241, %v6636
        %s6638 = sand.u32 %s737, 1
        %s6639 = scalar_lea.sflag [#allocation4], %s6638
        %s6640 = sand.u32 %s737, 1
        %s6641 = smul.addr %s6640, 8
        %s6642 = scalar_lea.vmem [#allocation31], %s6641
        // Predicated region
        $region213: #{miss_decoder_forward.1} parent=139 // pred_check
          %p6643 = pneg %p747
        $region214: #{miss_decoder_forward.1} parent=139 // pred_check_branch
          %6645 = sbr.rel (%p6643) target = $region216
        $region215: #{miss_decoder_forward.1} parent=139 // pred_region
          %s6647 = ssub.s32 128, 128
          %6648 = vsyncadd %s6639, %s6647
          %s6649 = smul.addr %s89, 128
          %s6650 = scalar_lea.hbm %s61, %s6649
          %s6652 = sshll.u32 %s6642, 4
          %s6653 = int_to_ptr.vmem [resolvable:$true] %s6652
          %6655 = dma.vmem_to_hbm [thread:$0]  %s6653, 128, %s6650, %s6639
        $region216: #{miss_decoder_forward.1} parent=139 // pred_fallthru
          _
      $region140: #{miss_decoder_forward.1} parent=5 // pred_fallthru
        _
      %p6656 = scmp.le.s32.totalorder 2, %s84
      // Predicated region
      $region217: #{miss_decoder_forward.1} parent=5 // pred_check
        %p6657 = pneg %p6656
      $region218: #{miss_decoder_forward.1} parent=5 // pred_check_branch
        %6659 = sbr.rel (%p6657) target = $region220
      $region219: #{miss_decoder_forward.1} parent=5 // pred_region
        %s6660 = ssub.s32 %s84, 2
        // Predicated region
        $region221: #{miss_decoder_forward.1} parent=219 // pred_check
          %p6661 = pneg %p753
        $region222: #{miss_decoder_forward.1} parent=219 // pred_check_branch
          %6663 = sbr.rel (%p6661) target = $region224
        $region223: #{miss_decoder_forward.1} parent=219 // pred_region
          %s6664 = sand.u32 %s738, 1
          %s6665 = scalar_lea.sflag [#allocation4], %s6664
          %s6666 = sand.u32 %s738, 1
          %s6667 = smul.addr %s6666, 8
          %s6668 = scalar_lea.vmem [#allocation31], %s6667
          %6669 = dma.done %s6665, 128
        $region224: #{miss_decoder_forward.1} parent=219 // pred_fallthru
          _
      $region220: #{miss_decoder_forward.1} parent=5 // pred_fallthru
        _
    $region6: #{miss_decoder_forward.1} parent=1 // loop_footer
      %s88 = sadd.s32 1, %s84
    $region7: #{miss_decoder_forward.1} parent=1 // loop_footer_branch
      %83 = sbr.rel target = $region3
    $region8: #{miss_decoder_forward.1} parent=1 // loop_exit
      _
    %6670 = vsyncpa [#allocation3], 1
    %s6671 = scalar_lea.sflag [#allocation3], 1
    %6672 = vsyncpa %s6671, 1
    %6673 = vsyncpa [#allocation6], 1
    %s6674 = scalar_lea.sflag [#allocation6], 1
    %6675 = vsyncpa %s6674, 1
    %6676 = vsyncpa [#allocation9], 1
    %6677 = vsyncpa [#allocation12], 1
    %6678 = vsyncpa [#allocation15], 1
    %6679 = vsyncpa [#allocation18], 1
    %6680 = vsyncpa [#allocation21], 1
    %6681 = vsyncpa [#allocation24], 1
    %6682 = vsyncpa [#allocation27], 1
    %6683 = vsyncpa [#allocation30], 1
    %6684 = vsyncpa [#allocation4], 1
    %s6685 = scalar_lea.sflag [#allocation4], 1
    %6686 = vsyncpa %s6685, 1

</llo_original>
